<compile_context>
chip_gen: v7x
topology: tpu7x:2x2x1
jax: 0.10.0
libtpu: 0.0.40
codegen_flags: <defaults>
</compile_context>

<pallas_src>
import functools

import jax
import jax.numpy as jnp
import numpy as np
from jax import lax
from jax.experimental import pallas as pl
from jax.experimental.pallas import tpu as pltpu

# Full f32 matmul precision so the f32 kernels match the pure-JAX reference tightly.
# (Irrelevant / harmless when compute_dtype=bf16 is used for the weights.)
jax.config.update("jax_default_matmul_precision", "highest")

_EPS = 1e-5            # nn.LayerNorm default
_SEQ_TILE_PREF = 256   # good for v6e/v7x (256-wide MXU); use 128 on v5e.


# ---------------------------------------------------------------------------
# Shared helpers
# ---------------------------------------------------------------------------

def _ln_rows(x, g, b):
    """LayerNorm over the last dim. x: (T, D); g, b: (1, D)."""
    mu = jnp.mean(x, axis=-1, keepdims=True)
    xc = x - mu
    var = jnp.mean(xc * xc, axis=-1, keepdims=True)
    return xc * lax.rsqrt(var + _EPS) * g + b


def _seq_tile(s, pref=_SEQ_TILE_PREF):
    """Largest 'nice' row tile (multiple of 8 when possible) that divides s."""
    for t in (pref, 128, 64, 32, 16, 8):
        if t <= s and s % t == 0:
            return t
    return s


def _compiler_params(semantics, vmem_bytes):
    """Explicit scoped-VMEM limit sized from the actual buffer math (+headroom)."""
    limit = int(min(max(vmem_bytes * 1.3 + (2 << 20), 8 << 20), 64 << 20))
    return pltpu.CompilerParams(dimension_semantics=semantics,
                                vmem_limit_bytes=limit)


# ---------------------------------------------------------------------------
# Kernel 1: pos-embed add + pre LayerNorm     (grid: B x seq-tiles, both parallel)
# ---------------------------------------------------------------------------

def _embed_ln_kernel(x_ref, pos_ref, g_ref, b_ref, o_ref):
    x = x_ref[0] + pos_ref[0]
    o_ref[0] = _ln_rows(x, g_ref[...], b_ref[...]).astype(o_ref.dtype)


def embed_ln(x, pos, g, b):
    B, S, D = x.shape
    ts = _seq_tile(S)
    vmem = 2 * (2 * ts * D * 4 + 2 * D * 4) + 2 * ts * D * 4
    return pl.pallas_call(
        _embed_ln_kernel,
        out_shape=jax.ShapeDtypeStruct((B, S, D), x.dtype),
        grid=(B, S // ts),
        in_specs=[
            pl.BlockSpec((1, ts, D), lambda bb, ss: (bb, ss, 0)),
            pl.BlockSpec((1, ts, D), lambda bb, ss: (0, ss, 0)),
            pl.BlockSpec((1, D), lambda bb, ss: (0, 0)),
            pl.BlockSpec((1, D), lambda bb, ss: (0, 0)),
        ],
        out_specs=pl.BlockSpec((1, ts, D), lambda bb, ss: (bb, ss, 0)),
        compiler_params=_compiler_params(("parallel", "parallel"), vmem),
    )(x, pos, g.reshape(1, D), b.reshape(1, D))


# ---------------------------------------------------------------------------
# Kernel 2: LN1 + fused QKV projection (hoisted out of the flash kv loop)
# ---------------------------------------------------------------------------

def _qkv_proj_kernel(x_ref, g_ref, b_ref, w_ref, o_ref):
    ln = _ln_rows(x_ref[0], g_ref[...], b_ref[...])
    o_ref[0] = jnp.dot(ln.astype(w_ref.dtype), w_ref[...],
                       preferred_element_type=jnp.float32).astype(o_ref.dtype)


def qkv_proj(x, p, n_heads):
    """Returns head-major q, k, v of shape (B, H, S, dh); 1/sqrt(dh) folded into q."""
    B, S, D = x.shape
    H = n_heads
    dh = D // H
    ts = _seq_tile(S)
    w = p['wqkvT']                         # (D, 3D), compute dtype
    ib = w.dtype.itemsize
    vmem = 2 * (ts * D * 4 + D * 3 * D * ib + 2 * D * 4) + 2 * ts * 3 * D * ib
    qkv = pl.pallas_call(
        _qkv_proj_kernel,
        out_shape=jax.ShapeDtypeStruct((B, S, 3 * D), w.dtype),
        grid=(B, S // ts),
        in_specs=[
            pl.BlockSpec((1, ts, D), lambda b, s: (b, s, 0)),
            pl.BlockSpec((1, D), lambda b, s: (0, 0)),
            pl.BlockSpec((1, D), lambda b, s: (0, 0)),
            pl.BlockSpec((D, 3 * D), lambda b, s: (0, 0)),
        ],
        out_specs=pl.BlockSpec((1, ts, 3 * D), lambda b, s: (b, s, 0)),
        compiler_params=_compiler_params(("parallel", "parallel"), vmem),
    )(x, p['ln1_g'].reshape(1, D), p['ln1_b'].reshape(1, D), w)
    # Head-major layout for the attention kernel: pure layout plumbing between the
    # two pallas_calls, handled by XLA (lane-dense last dim stays dh).
    q, k, v = jnp.split(qkv, 3, axis=-1)

    def heads(t):
        return t.reshape(B, S, H, dh).transpose(0, 2, 1, 3)

    return heads(q), heads(k), heads(v)


# ---------------------------------------------------------------------------
# Kernel 3: flash causal attention + out-proj + LN_post + residual
#   grid (B, T) where T enumerates only the lower-triangular (q_tile, kv_tile) pairs
#   via scalar-prefetched index tables (no DMA of fully-masked kv tiles).
# ---------------------------------------------------------------------------

def _attn_kernel(qi_tbl, ki_tbl, x_ref, q_ref, k_ref, v_ref, wo_ref,
                 lng_ref, lnb_ref, o_ref, acc_scr, m_scr, l_scr,
                 *, n_heads, tq, tk):
    t = pl.program_id(1)
    qi = qi_tbl[t]
    ki = ki_tbl[t]

    @pl.when(ki == 0)
    def _init():
        acc_scr[...] = jnp.zeros_like(acc_scr)
        m_scr[...] = jnp.full_like(m_scr, -jnp.inf)
        l_scr[...] = jnp.zeros_like(l_scr)

    q = q_ref[0]                                   # (H, tq, dh), pre-scaled
    k = k_ref[0]                                   # (H, tk, dh)
    v = v_ref[0]                                   # (H, tk, dh)
    s = jnp.einsum('hqd,hkd->hqk', q, k,
                   preferred_element_type=jnp.float32)          # (H, tq, tk)
    # Causal additive mask generated in-kernel (only the diagonal tile is partial).
    row = qi * tq + lax.broadcasted_iota(jnp.int32, (tq, tk), 0)
    col = ki * tk + lax.broadcasted_iota(jnp.int32, (tq, tk), 1)
    s = s + jnp.where(col <= row, 0.0, -1e9).astype(jnp.float32)[None]

    m_prev = m_scr[...]
    m_new = jnp.maximum(m_prev, s.max(axis=-1, keepdims=True))
    alpha = jnp.exp(m_prev - m_new)
    pmat = jnp.exp(s - m_new)
    l_scr[...] = alpha * l_scr[...] + pmat.sum(axis=-1, keepdims=True)
    acc_scr[...] = alpha * acc_scr[...] + jnp.einsum(
        'hqk,hkd->hqd', pmat.astype(v.dtype), v,
        preferred_element_type=jnp.float32)
    m_scr[...] = m_new

    @pl.when(ki == qi)       # diagonal tile == last valid kv tile for this q tile
    def _final():
        # Exact reciprocal: runs once per q tile, keeps numerics tight.
        acc = acc_scr[...] * (1.0 / l_scr[...])            # (H, tq, dh)
        acc = acc.astype(wo_ref.dtype)
        # Out-projection accumulated per head: acc[h] / wo_ref[h] are full
        # (tq, dh)/(dh, D) slabs (no lane-granular scratch slicing).
        out = jnp.dot(acc[0], wo_ref[0], preferred_element_type=jnp.float32)
        for h in range(1, n_heads):
            out = out + jnp.dot(acc[h], wo_ref[h],
                                preferred_element_type=jnp.float32)
        post = _ln_rows(out, lng_ref[...], lnb_ref[...])
        o_ref[0] = (x_ref[0] + post).astype(o_ref.dtype)


def attn_block(x, q, k, v, p, n_heads):
    B, S, D = x.shape
    H = n_heads
    dh = D // H
    ts = _seq_tile(S)
    nq = S // ts
    # Lower-triangular (q_tile, kv_tile) schedule, qi-major -> output block index is
    # non-decreasing over the "arbitrary" axis (standard revisiting accumulator).
    pairs = np.array([(i, j) for i in range(nq) for j in range(i + 1)], np.int32)
    qi_tbl = jnp.asarray(pairs[:, 0])
    ki_tbl = jnp.asarray(pairs[:, 1])
    T = int(pairs.shape[0])

    ib = q.dtype.itemsize
    vmem = (2 * (ts * D * 4                       # x tile
                 + 3 * H * ts * dh * ib           # q, k, v tiles
                 + H * dh * D * ib                # wo (head-major)
                 + 2 * D * 4)                     # ln_post params
            + 2 * ts * D * 4                      # out tile
            + H * ts * dh * 4 + 2 * H * ts * 4)   # scratch acc + m/l

    kern = functools.partial(_attn_kernel, n_heads=H, tq=ts, tk=ts)
    return pl.pallas_call(
        kern,
        out_shape=jax.ShapeDtypeStruct((B, S, D), x.dtype),
        grid_spec=pltpu.PrefetchScalarGridSpec(
            num_scalar_prefetch=2,
            grid=(B, T),
            in_specs=[
                pl.BlockSpec((1, ts, D), lambda b, i, qi, ki: (b, qi[i], 0)),       # x
                pl.BlockSpec((1, H, ts, dh), lambda b, i, qi, ki: (b, 0, qi[i], 0)),  # q
                pl.BlockSpec((1, H, ts, dh), lambda b, i, qi, ki: (b, 0, ki[i], 0)),  # k
                pl.BlockSpec((1, H, ts, dh), lambda b, i, qi, ki: (b, 0, ki[i], 0)),  # v
                pl.BlockSpec((H, dh, D), lambda b, i, qi, ki: (0, 0, 0)),             # woT
                pl.BlockSpec((1, D), lambda b, i, qi, ki: (0, 0)),                    # lnp g
                pl.BlockSpec((1, D), lambda b, i, qi, ki: (0, 0)),                    # lnp b
            ],
            out_specs=pl.BlockSpec((1, ts, D), lambda b, i, qi, ki: (b, qi[i], 0)),
            scratch_shapes=[
                pltpu.VMEM((H, ts, dh), jnp.float32),   # online-softmax accumulator
                pltpu.VMEM((H, ts, 1), jnp.float32),    # running max
                pltpu.VMEM((H, ts, 1), jnp.float32),    # running sum
            ]),
        compiler_params=_compiler_params(("parallel", "arbitrary"), vmem),
    )(qi_tbl, ki_tbl, x, q, k, v, p['woT_h'],
      p['ln_post_g'].reshape(1, D), p['ln_post_b'].reshape(1, D))


# ---------------------------------------------------------------------------
# Kernel 4: fused MLP block  out = x + W2( LN_mlp( SwiGLU( W1( LN2(x) ) ) ) )
# ---------------------------------------------------------------------------

def _mlp_block_kernel(x_ref, ln2g_ref, ln2b_ref, w1_ref, lng_ref, lnb_ref,
                      w2_ref, o_ref):
    x = x_ref[0]                                                    # (ts, D)
    ln = _ln_rows(x, ln2g_ref[...], ln2b_ref[...])
    h = jnp.dot(ln.astype(w1_ref.dtype), w1_ref[...],
                preferred_element_type=jnp.float32)                 # (ts, 2*Hm)
    hm = h.shape[-1] // 2
    x_half = h[:, :hm]                 # chunk(2, dim=-1)[0]
    gate = h[:, hm:]                   # chunk(2, dim=-1)[1]
    s = x_half * (gate * jax.nn.sigmoid(gate))                      # silu(gate) * x
    sn = _ln_rows(s, lng_ref[...], lnb_ref[...])
    out = jnp.dot(sn.astype(w2_ref.dtype), w2_ref[...],
                  preferred_element_type=jnp.float32)
    o_ref[0] = (x + out).astype(o_ref.dtype)


def mlp_block(x, p):
    B, S, D = x.shape
    Hm = p['w2T'].shape[0]
    ts = _seq_tile(S)
    ib = p['w1T'].dtype.itemsize
    vmem = (2 * (ts * D * 4 + 2 * D * 4
                 + D * 2 * Hm * ib + 2 * Hm * 4 + Hm * D * ib)
            + 2 * ts * D * 4)
    return pl.pallas_call(
        _mlp_block_kernel,
        out_shape=jax.ShapeDtypeStruct((B, S, D), x.dtype),
        grid=(B, S // ts),
        in_specs=[
            pl.BlockSpec((1, ts, D), lambda b, s: (b, s, 0)),
            pl.BlockSpec((1, D), lambda b, s: (0, 0)),
            pl.BlockSpec((1, D), lambda b, s: (0, 0)),
            pl.BlockSpec((D, 2 * Hm), lambda b, s: (0, 0)),
            pl.BlockSpec((1, Hm), lambda b, s: (0, 0)),
            pl.BlockSpec((1, Hm), lambda b, s: (0, 0)),
            pl.BlockSpec((Hm, D), lambda b, s: (0, 0)),
        ],
        out_specs=pl.BlockSpec((1, ts, D), lambda b, s: (b, s, 0)),
        compiler_params=_compiler_params(("parallel", "parallel"), vmem),
    )(x, p['ln2_g'].reshape(1, D), p['ln2_b'].reshape(1, D),
      p['w1T'], p['ln_mlp_g'].reshape(1, Hm), p['ln_mlp_b'].reshape(1, Hm),
      p['w2T'])


# ---------------------------------------------------------------------------
# Model wiring
# ---------------------------------------------------------------------------

def transformer_block(x, p, n_heads):
    q, k, v = qkv_proj(x, p, n_heads)        # LN1 + QKV, once per token
    x = attn_block(x, q, k, v, p, n_heads)   # x + LN_post(MHA)
    x = mlp_block(x, p)                      # x + MLP(LN2(x))
    return x


def transformer_forward(x, params, n_heads):
    x = embed_ln(x, params['pos_embed'], params['ln_pre_g'], params['ln_pre_b'])
    for p in params['layers']:
        x = transformer_block(x, p, n_heads)
    return x


# ---------------------------------------------------------------------------
# Deterministic parameter init (shapes from the PyTorch __init__)
# ---------------------------------------------------------------------------

def init_params(key, n_context, n_embed, n_heads, n_layers, mlp_scale,
                compute_dtype=jnp.float32):
    d = n_embed
    hm = d * mlp_scale
    dh = d // n_heads
    scale = 1.0 / float(dh) ** 0.5
    keys = jax.random.split(key, 1 + n_layers)
    params = {
        'pos_embed': jax.random.normal(keys[0], (1, n_context, d), jnp.float32),
        'ln_pre_g': jnp.ones((d,), jnp.float32),
        'ln_pre_b': jnp.zeros((d,), jnp.float32),
    }
    layers = []
    for li in range(n_layers):
        ks = jax.random.split(keys[1 + li], 8)
        in_proj = jax.random.normal(ks[0], (3 * d, d), jnp.float32) / d ** 0.5
        wq, wk, wv = in_proj[:d], in_proj[d:2 * d], in_proj[2 * d:]
        wo = jax.random.normal(ks[1], (d, d), jnp.float32) / d ** 0.5
        w1 = jax.random.normal(ks[2], (2 * hm, d), jnp.float32) / d ** 0.5
        w2 = jax.random.normal(ks[3], (d, hm), jnp.float32) / hm ** 0.5
        layers.append(dict(
            ln1_g=1.0 + 0.1 * jax.random.normal(ks[4], (d,), jnp.float32),
            ln1_b=0.1 * jax.random.normal(ks[5], (d,), jnp.float32),
            ln_post_g=jnp.ones((d,), jnp.float32),
            ln_post_b=jnp.zeros((d,), jnp.float32),
            ln2_g=jnp.ones((d,), jnp.float32),
            ln2_b=jnp.zeros((d,), jnp.float32),
            ln_mlp_g=1.0 + 0.1 * jax.random.normal(ks[6], (hm,), jnp.float32),
            ln_mlp_b=0.1 * jax.random.normal(ks[7], (hm,), jnp.float32),
            # raw transposed projections (used by the pure-JAX reference)
            wqT=wq.T, wkT=wk.T, wvT=wv.T, woT=wo.T,
            # kernel-form weights (compute dtype; pass bf16 for MXU fast path):
            #   fused QKV with 1/sqrt(dh) folded into the Q columns
            wqkvT=jnp.concatenate([wq.T * scale, wk.T, wv.T],
                                  axis=1).astype(compute_dtype),
            #   out-projection in head-major form (H, dh, D)
            woT_h=wo.T.reshape(n_heads, dh, d).astype(compute_dtype),
            w1T=w1.T.astype(compute_dtype),
            w2T=w2.T.astype(compute_dtype),
        ))
    params['layers'] = layers
    return params


# ---------------------------------------------------------------------------
# Pure-JAX reference (mirrors the PyTorch forward) for correctness checking
# ---------------------------------------------------------------------------

def _ref_ln(x, g, b):
    mu = x.mean(-1, keepdims=True)
    var = ((x - mu) ** 2).mean(-1, keepdims=True)
    return (x - mu) / jnp.sqrt(var + _EPS) * g + b


def ref_forward(x, params, n_heads):
    B, S, D = x.shape
    dh = D // n_heads
    x = x + params['pos_embed'][:, :S]
    x = _ref_ln(x, params['ln_pre_g'], params['ln_pre_b'])
    mask = jnp.where(jnp.tril(jnp.ones((S, S), bool)), 0.0, -1e9).astype(jnp.float32)
    for p in params['layers']:
        h = _ref_ln(x, p['ln1_g'], p['ln1_b'])
        q = (h @ p['wqT']).reshape(B, S, n_heads, dh).transpose(0, 2, 1, 3)
        k = (h @ p['wkT']).reshape(B, S, n_heads, dh).transpose(0, 2, 1, 3)
        v = (h @ p['wvT']).reshape(B, S, n_heads, dh).transpose(0, 2, 1, 3)
        s = jnp.einsum('bhqd,bhkd->bhqk', q, k) / jnp.sqrt(dh) + mask
        pm = jax.nn.softmax(s, axis=-1)
        o = jnp.einsum('bhqk,bhkd->bhqd', pm, v).transpose(0, 2, 1, 3).reshape(B, S, D)
        attn = o @ p['woT']
        x = x + _ref_ln(attn, p['ln_post_g'], p['ln_post_b'])
        h2 = _ref_ln(x, p['ln2_g'], p['ln2_b'])
        hh = h2 @ p['w1T']
        hm = hh.shape[-1] // 2
        sg = jax.nn.silu(hh[..., hm:]) * hh[..., :hm]
        sg = _ref_ln(sg, p['ln_mlp_g'], p['ln_mlp_b'])
        x = x + sg @ p['w2T']
    return x


# ---------------------------------------------------------------------------

if __name__ == "__main__":
    n_context, n_embed, n_heads, n_layers, mlp_scale = 16, 32, 4, 2, 4
    B, S = 2, 8

    key = jax.random.PRNGKey(0)
    kx, kp = jax.random.split(key)
    x = jax.random.normal(kx, (B, S, n_embed), jnp.float32)
    # compute_dtype=f32 keeps the correctness check against the f32 reference tight;
    # switch to jnp.bfloat16 in production for MXU throughput (f32 accumulation kept).
    params = init_params(kp, n_context, n_embed, n_heads, n_layers, mlp_scale,
                         compute_dtype=jnp.float32)

    fwd = jax.jit(lambda xx, pp: transformer_forward(xx, pp, n_heads))
    out = jax.block_until_ready(fwd(x, params))

    assert out.shape == (B, S, n_embed)
    ref = ref_forward(x, params, n_heads)
    np.testing.assert_allclose(np.asarray(out), np.asarray(ref),
                               rtol=2e-3, atol=2e-3)
    print("KERNEL_OK")
</pallas_src>

<mosaic_0001>
module attributes {stable_mosaic.version = 11 : i64} {
  func.func @_embed_ln_kernel(%arg0: i32, %arg1: i32, %arg2: memref<1x8x32xf32, #tpu.memory_space<vmem>>, %arg3: memref<1x8x32xf32, #tpu.memory_space<vmem>>, %arg4: memref<1x32xf32, #tpu.memory_space<vmem>>, %arg5: memref<1x32xf32, #tpu.memory_space<vmem>>, %arg6: memref<1x8x32xf32, #tpu.memory_space<vmem>>) attributes {dimension_semantics = [#tpu.dimension_semantics<parallel>, #tpu.dimension_semantics<parallel>], iteration_bounds = array<i64: 2, 1>, scalar_prefetch = 0 : i64, scratch_operands = 0 : i64, tpu.core_type = #tpu.core_type<tc>, window_params = [{transform_indices = @transform_0, window_bounds = array<i64: 1, 8, 32>}, {transform_indices = @transform_1, window_bounds = array<i64: 1, 8, 32>}, {pipeline_mode = #tpu.pipeline_mode<synchronous>, transform_indices = @transform_2, window_bounds = array<i64: 1, 32>}, {pipeline_mode = #tpu.pipeline_mode<synchronous>, transform_indices = @transform_3, window_bounds = array<i64: 1, 32>}, {transform_indices = @transform_4, window_bounds = array<i64: 1, 8, 32>}]} {
    %c0 = arith.constant 0 : index
    %c0_0 = arith.constant 0 : index
    %c0_1 = arith.constant 0 : index
    %0 = vector.load %arg2[%c0, %c0_0, %c0_1] : memref<1x8x32xf32, #tpu.memory_space<vmem>>, vector<1x8x32xf32>
    %1 = vector.shape_cast %0 : vector<1x8x32xf32> to vector<8x32xf32>
    %c0_2 = arith.constant 0 : index
    %c0_3 = arith.constant 0 : index
    %c0_4 = arith.constant 0 : index
    %2 = vector.load %arg3[%c0_2, %c0_3, %c0_4] : memref<1x8x32xf32, #tpu.memory_space<vmem>>, vector<1x8x32xf32>
    %3 = vector.shape_cast %2 : vector<1x8x32xf32> to vector<8x32xf32>
    %4 = arith.addf %1, %3 : vector<8x32xf32>
    %c0_5 = arith.constant 0 : index
    %c0_6 = arith.constant 0 : index
    %5 = vector.load %arg4[%c0_5, %c0_6] : memref<1x32xf32, #tpu.memory_space<vmem>>, vector<1x32xf32>
    %c0_7 = arith.constant 0 : index
    %c0_8 = arith.constant 0 : index
    %6 = vector.load %arg5[%c0_7, %c0_8] : memref<1x32xf32, #tpu.memory_space<vmem>>, vector<1x32xf32>
    %cst = arith.constant dense<0.000000e+00> : vector<8xf32>
    %7 = vector.multi_reduction <add>, %4, %cst [1] : vector<8x32xf32> to vector<8xf32>
    %8 = vector.shape_cast %7 : vector<8xf32> to vector<8x1xf32>
    %cst_9 = arith.constant 3.200000e+01 : f32
    %9 = vector.broadcast %cst_9 : f32 to vector<8x1xf32>
    %10 = arith.divf %8, %9 : vector<8x1xf32>
    %11 = vector.broadcast %10 : vector<8x1xf32> to vector<8x32xf32>
    %12 = arith.subf %4, %11 : vector<8x32xf32>
    %13 = arith.mulf %12, %12 : vector<8x32xf32>
    %cst_10 = arith.constant dense<0.000000e+00> : vector<8xf32>
    %14 = vector.multi_reduction <add>, %13, %cst_10 [1] : vector<8x32xf32> to vector<8xf32>
    %15 = vector.shape_cast %14 : vector<8xf32> to vector<8x1xf32>
    %cst_11 = arith.constant 3.200000e+01 : f32
    %16 = vector.broadcast %cst_11 : f32 to vector<8x1xf32>
    %17 = arith.divf %15, %16 : vector<8x1xf32>
    %cst_12 = arith.constant 9.99999974E-6 : f32
    %18 = vector.broadcast %cst_12 : f32 to vector<8x1xf32>
    %19 = arith.addf %17, %18 : vector<8x1xf32>
    %20 = math.rsqrt %19 : vector<8x1xf32>
    %21 = vector.broadcast %20 : vector<8x1xf32> to vector<8x32xf32>
    %22 = arith.mulf %12, %21 : vector<8x32xf32>
    %23 = vector.broadcast %5 : vector<1x32xf32> to vector<8x32xf32>
    %24 = arith.mulf %22, %23 : vector<8x32xf32>
    %25 = vector.broadcast %6 : vector<1x32xf32> to vector<8x32xf32>
    %26 = arith.addf %24, %25 : vector<8x32xf32>
    %c0_13 = arith.constant 0 : index
    %c0_14 = arith.constant 0 : index
    %c0_15 = arith.constant 0 : index
    %27 = vector.load %arg6[%c0_13, %c0_14, %c0_15] : memref<1x8x32xf32, #tpu.memory_space<vmem>>, vector<1x8x32xf32>
    %28 = vector.shape_cast %27 : vector<1x8x32xf32> to vector<8x32xf32>
    %29 = vector.shape_cast %26 : vector<8x32xf32> to vector<1x8x32xf32>
    tpu.vector_store %arg6[%c0_13, %c0_14, %c0_15], %29 {strides = array<i32>} : memref<1x8x32xf32, #tpu.memory_space<vmem>>, vector<1x8x32xf32>,
    return
  }
  func.func @transform_0(%arg0: i32, %arg1: i32) -> (i32, i32, i32) {
    %c0_i32 = arith.constant 0 : i32
    %c0_i32_0 = arith.constant 0 : i32
    return %arg0, %arg1, %c0_i32 : i32, i32, i32
  }
  func.func @transform_1(%arg0: i32, %arg1: i32) -> (i32, i32, i32) {
    %c0_i32 = arith.constant 0 : i32
    %c0_i32_0 = arith.constant 0 : i32
    %c0_i32_1 = arith.constant 0 : i32
    return %c0_i32, %arg1, %c0_i32_0 : i32, i32, i32
  }
  func.func @transform_2(%arg0: i32, %arg1: i32) -> (i32, i32) {
    %c0_i32 = arith.constant 0 : i32
    %c0_i32_0 = arith.constant 0 : i32
    %c0_i32_1 = arith.constant 0 : i32
    return %c0_i32, %c0_i32_0 : i32, i32
  }
  func.func @transform_3(%arg0: i32, %arg1: i32) -> (i32, i32) {
    %c0_i32 = arith.constant 0 : i32
    %c0_i32_0 = arith.constant 0 : i32
    %c0_i32_1 = arith.constant 0 : i32
    return %c0_i32, %c0_i32_0 : i32, i32
  }
  func.func @transform_4(%arg0: i32, %arg1: i32) -> (i32, i32, i32) {
    %c0_i32 = arith.constant 0 : i32
    %c0_i32_0 = arith.constant 0 : i32
    return %arg0, %arg1, %c0_i32 : i32, i32, i32
  }
}

module attributes {stable_mosaic.version = 11 : i64} {
  func.func @_qkv_proj_kernel(%arg0: i32, %arg1: i32, %arg2: memref<1x8x32xf32, #tpu.memory_space<vmem>>, %arg3: memref<1x32xf32, #tpu.memory_space<vmem>>, %arg4: memref<1x32xf32, #tpu.memory_space<vmem>>, %arg5: memref<32x96xf32, #tpu.memory_space<vmem>>, %arg6: memref<1x8x96xf32, #tpu.memory_space<vmem>>) attributes {dimension_semantics = [#tpu.dimension_semantics<parallel>, #tpu.dimension_semantics<parallel>], iteration_bounds = array<i64: 2, 1>, scalar_prefetch = 0 : i64, scratch_operands = 0 : i64, tpu.core_type = #tpu.core_type<tc>, window_params = [{transform_indices = @transform_0, window_bounds = array<i64: 1, 8, 32>}, {pipeline_mode = #tpu.pipeline_mode<synchronous>, transform_indices = @transform_1, window_bounds = array<i64: 1, 32>}, {pipeline_mode = #tpu.pipeline_mode<synchronous>, transform_indices = @transform_2, window_bounds = array<i64: 1, 32>}, {pipeline_mode = #tpu.pipeline_mode<synchronous>, transform_indices = @transform_3, window_bounds = array<i64: 32, 96>}, {transform_indices = @transform_4, window_bounds = array<i64: 1, 8, 96>}]} {
    %c0 = arith.constant 0 : index
    %c0_0 = arith.constant 0 : index
    %c0_1 = arith.constant 0 : index
    %0 = vector.load %arg2[%c0, %c0_0, %c0_1] : memref<1x8x32xf32, #tpu.memory_space<vmem>>, vector<1x8x32xf32>
    %1 = vector.shape_cast %0 : vector<1x8x32xf32> to vector<8x32xf32>
    %c0_2 = arith.constant 0 : index
    %c0_3 = arith.constant 0 : index
    %2 = vector.load %arg3[%c0_2, %c0_3] : memref<1x32xf32, #tpu.memory_space<vmem>>, vector<1x32xf32>
    %c0_4 = arith.constant 0 : index
    %c0_5 = arith.constant 0 : index
    %3 = vector.load %arg4[%c0_4, %c0_5] : memref<1x32xf32, #tpu.memory_space<vmem>>, vector<1x32xf32>
    %cst = arith.constant dense<0.000000e+00> : vector<8xf32>
    %4 = vector.multi_reduction <add>, %1, %cst [1] : vector<8x32xf32> to vector<8xf32>
    %5 = vector.shape_cast %4 : vector<8xf32> to vector<8x1xf32>
    %cst_6 = arith.constant 3.200000e+01 : f32
    %6 = vector.broadcast %cst_6 : f32 to vector<8x1xf32>
    %7 = arith.divf %5, %6 : vector<8x1xf32>
    %8 = vector.broadcast %7 : vector<8x1xf32> to vector<8x32xf32>
    %9 = arith.subf %1, %8 : vector<8x32xf32>
    %10 = arith.mulf %9, %9 : vector<8x32xf32>
    %cst_7 = arith.constant dense<0.000000e+00> : vector<8xf32>
    %11 = vector.multi_reduction <add>, %10, %cst_7 [1] : vector<8x32xf32> to vector<8xf32>
    %12 = vector.shape_cast %11 : vector<8xf32> to vector<8x1xf32>
    %cst_8 = arith.constant 3.200000e+01 : f32
    %13 = vector.broadcast %cst_8 : f32 to vector<8x1xf32>
    %14 = arith.divf %12, %13 : vector<8x1xf32>
    %cst_9 = arith.constant 9.99999974E-6 : f32
    %15 = vector.broadcast %cst_9 : f32 to vector<8x1xf32>
    %16 = arith.addf %14, %15 : vector<8x1xf32>
    %17 = math.rsqrt %16 : vector<8x1xf32>
    %18 = vector.broadcast %17 : vector<8x1xf32> to vector<8x32xf32>
    %19 = arith.mulf %9, %18 : vector<8x32xf32>
    %20 = vector.broadcast %2 : vector<1x32xf32> to vector<8x32xf32>
    %21 = arith.mulf %19, %20 : vector<8x32xf32>
    %22 = vector.broadcast %3 : vector<1x32xf32> to vector<8x32xf32>
    %23 = arith.addf %21, %22 : vector<8x32xf32>
    %c0_10 = arith.constant 0 : index
    %c0_11 = arith.constant 0 : index
    %24 = vector.load %arg5[%c0_10, %c0_11] : memref<32x96xf32, #tpu.memory_space<vmem>>, vector<32x96xf32>
    %cst_12 = arith.constant dense<0.000000e+00> : vector<8x96xf32>
    %25 = tpu.matmul %23, %24, %cst_12 {dimension_numbers = #tpu.dot_dimension_numbers<[1], [0], [0], [1], [0, 0, 1, 1], [], []>, precision = #tpu.contract_precision<fp32>} : vector<8x32xf32>, vector<32x96xf32>, vector<8x96xf32> -> vector<8x96xf32>
    %c0_13 = arith.constant 0 : index
    %c0_14 = arith.constant 0 : index
    %c0_15 = arith.constant 0 : index
    %26 = vector.load %arg6[%c0_13, %c0_14, %c0_15] : memref<1x8x96xf32, #tpu.memory_space<vmem>>, vector<1x8x96xf32>
    %27 = vector.shape_cast %26 : vector<1x8x96xf32> to vector<8x96xf32>
    %28 = vector.shape_cast %25 : vector<8x96xf32> to vector<1x8x96xf32>
    tpu.vector_store %arg6[%c0_13, %c0_14, %c0_15], %28 {strides = array<i32>} : memref<1x8x96xf32, #tpu.memory_space<vmem>>, vector<1x8x96xf32>,
    return
  }
  func.func @transform_0(%arg0: i32, %arg1: i32) -> (i32, i32, i32) {
    %c0_i32 = arith.constant 0 : i32
    %c0_i32_0 = arith.constant 0 : i32
    return %arg0, %arg1, %c0_i32 : i32, i32, i32
  }
  func.func @transform_1(%arg0: i32, %arg1: i32) -> (i32, i32) {
    %c0_i32 = arith.constant 0 : i32
    %c0_i32_0 = arith.constant 0 : i32
    %c0_i32_1 = arith.constant 0 : i32
    return %c0_i32, %c0_i32_0 : i32, i32
  }
  func.func @transform_2(%arg0: i32, %arg1: i32) -> (i32, i32) {
    %c0_i32 = arith.constant 0 : i32
    %c0_i32_0 = arith.constant 0 : i32
    %c0_i32_1 = arith.constant 0 : i32
    return %c0_i32, %c0_i32_0 : i32, i32
  }
  func.func @transform_3(%arg0: i32, %arg1: i32) -> (i32, i32) {
    %c0_i32 = arith.constant 0 : i32
    %c0_i32_0 = arith.constant 0 : i32
    %c0_i32_1 = arith.constant 0 : i32
    return %c0_i32, %c0_i32_0 : i32, i32
  }
  func.func @transform_4(%arg0: i32, %arg1: i32) -> (i32, i32, i32) {
    %c0_i32 = arith.constant 0 : i32
    %c0_i32_0 = arith.constant 0 : i32
    return %arg0, %arg1, %c0_i32 : i32, i32, i32
  }
}

module attributes {stable_mosaic.version = 11 : i64} {
  func.func @_attn_kernel(%arg0: i32, %arg1: i32, %arg2: memref<1xi32, #tpu.memory_space<smem>>, %arg3: memref<1xi32, #tpu.memory_space<smem>>, %arg4: memref<1x8x32xf32, #tpu.memory_space<vmem>>, %arg5: memref<1x4x8x8xf32, #tpu.memory_space<vmem>>, %arg6: memref<1x4x8x8xf32, #tpu.memory_space<vmem>>, %arg7: memref<1x4x8x8xf32, #tpu.memory_space<vmem>>, %arg8: memref<4x8x32xf32, #tpu.memory_space<vmem>>, %arg9: memref<1x32xf32, #tpu.memory_space<vmem>>, %arg10: memref<1x32xf32, #tpu.memory_space<vmem>>, %arg11: memref<1x8x32xf32, #tpu.memory_space<vmem>>, %arg12: memref<4x8x8xf32, #tpu.memory_space<vmem>>, %arg13: memref<4x8x1xf32, #tpu.memory_space<vmem>>, %arg14: memref<4x8x1xf32, #tpu.memory_space<vmem>>) attributes {dimension_semantics = [#tpu.dimension_semantics<parallel>, #tpu.dimension_semantics<arbitrary>], iteration_bounds = array<i64: 2, 1>, scalar_prefetch = 2 : i64, scratch_operands = 3 : i64, tpu.core_type = #tpu.core_type<tc>, window_params = [{transform_indices = @transform_0, window_bounds = array<i64: 1, 8, 32>}, {transform_indices = @transform_1, window_bounds = array<i64: 1, 4, 8, 8>}, {transform_indices = @transform_2, window_bounds = array<i64: 1, 4, 8, 8>}, {transform_indices = @transform_3, window_bounds = array<i64: 1, 4, 8, 8>}, {pipeline_mode = #tpu.pipeline_mode<synchronous>, transform_indices = @transform_4, window_bounds = array<i64: 4, 8, 32>}, {pipeline_mode = #tpu.pipeline_mode<synchronous>, transform_indices = @transform_5, window_bounds = array<i64: 1, 32>}, {pipeline_mode = #tpu.pipeline_mode<synchronous>, transform_indices = @transform_6, window_bounds = array<i64: 1, 32>}, {transform_indices = @transform_7, window_bounds = array<i64: 1, 8, 32>}]} {
    %0 = arith.index_cast %arg1 : i32 to index
    %1 = memref.load %arg2[%0] : memref<1xi32, #tpu.memory_space<smem>>
    %2 = arith.index_cast %arg1 : i32 to index
    %3 = memref.load %arg3[%2] : memref<1xi32, #tpu.memory_space<smem>>
    %c0_i32 = arith.constant 0 : i32
    %4 = arith.cmpi eq, %3, %c0_i32 : i32
    %5 = arith.extui %4 : i1 to i32
    %c0_i32_0 = arith.constant 0 : i32
    %6 = arith.cmpi ne, %5, %c0_i32_0 : i32
    scf.if %6 {
      %cst_37 = arith.constant 0.000000e+00 : f32
      %54 = vector.broadcast %cst_37 : f32 to vector<4x8x8xf32>
      %c0_38 = arith.constant 0 : index
      %c0_39 = arith.constant 0 : index
      %c0_40 = arith.constant 0 : index
      %55 = vector.load %arg12[%c0_38, %c0_39, %c0_40] : memref<4x8x8xf32, #tpu.memory_space<vmem>>, vector<4x8x8xf32>
      tpu.vector_store %arg12[%c0_38, %c0_39, %c0_40], %54 {strides = array<i32>} : memref<4x8x8xf32, #tpu.memory_space<vmem>>, vector<4x8x8xf32>,
      %cst_41 = arith.constant 0xFF800000 : f32
      %56 = vector.broadcast %cst_41 : f32 to vector<4x8x1xf32>
      %c0_42 = arith.constant 0 : index
      %c0_43 = arith.constant 0 : index
      %c0_44 = arith.constant 0 : index
      %57 = vector.load %arg13[%c0_42, %c0_43, %c0_44] : memref<4x8x1xf32, #tpu.memory_space<vmem>>, vector<4x8x1xf32>
      tpu.vector_store %arg13[%c0_42, %c0_43, %c0_44], %56 {strides = array<i32>} : memref<4x8x1xf32, #tpu.memory_space<vmem>>, vector<4x8x1xf32>,
      %cst_45 = arith.constant 0.000000e+00 : f32
      %58 = vector.broadcast %cst_45 : f32 to vector<4x8x1xf32>
      %c0_46 = arith.constant 0 : index
      %c0_47 = arith.constant 0 : index
      %c0_48 = arith.constant 0 : index
      %59 = vector.load %arg14[%c0_46, %c0_47, %c0_48] : memref<4x8x1xf32, #tpu.memory_space<vmem>>, vector<4x8x1xf32>
      tpu.vector_store %arg14[%c0_46, %c0_47, %c0_48], %58 {strides = array<i32>} : memref<4x8x1xf32, #tpu.memory_space<vmem>>, vector<4x8x1xf32>,
    } else {
    }
    %c0 = arith.constant 0 : index
    %c0_1 = arith.constant 0 : index
    %c0_2 = arith.constant 0 : index
    %c0_3 = arith.constant 0 : index
    %7 = vector.load %arg5[%c0, %c0_1, %c0_2, %c0_3] : memref<1x4x8x8xf32, #tpu.memory_space<vmem>>, vector<1x4x8x8xf32>
    %8 = vector.shape_cast %7 : vector<1x4x8x8xf32> to vector<4x8x8xf32>
    %c0_4 = arith.constant 0 : index
    %c0_5 = arith.constant 0 : index
    %c0_6 = arith.constant 0 : index
    %c0_7 = arith.constant 0 : index
    %9 = vector.load %arg6[%c0_4, %c0_5, %c0_6, %c0_7] : memref<1x4x8x8xf32, #tpu.memory_space<vmem>>, vector<1x4x8x8xf32>
    %10 = vector.shape_cast %9 : vector<1x4x8x8xf32> to vector<4x8x8xf32>
    %c0_8 = arith.constant 0 : index
    %c0_9 = arith.constant 0 : index
    %c0_10 = arith.constant 0 : index
    %c0_11 = arith.constant 0 : index
    %11 = vector.load %arg7[%c0_8, %c0_9, %c0_10, %c0_11] : memref<1x4x8x8xf32, #tpu.memory_space<vmem>>, vector<1x4x8x8xf32>
    %12 = vector.shape_cast %11 : vector<1x4x8x8xf32> to vector<4x8x8xf32>
    "tpu.trace_start"() <{level = 10 : i32, message = "hqd,hkd->hqk"}> : () -> ()
    %cst = arith.constant dense<0.000000e+00> : vector<4x8x8xf32>
    %13 = tpu.matmul %8, %10, %cst {dimension_numbers = #tpu.dot_dimension_numbers<[2], [2], [1], [1], [0, 0, 0, 1, 1, 1], [0], [0]>, precision = #tpu.contract_precision<fp32>} : vector<4x8x8xf32>, vector<4x8x8xf32>, vector<4x8x8xf32> -> vector<4x8x8xf32>
    "tpu.trace_stop"() : () -> ()
    %c8_i32 = arith.constant 8 : i32
    %14 = arith.muli %1, %c8_i32 : i32
    %15 = tpu.iota {dimensions = array<i32: 0>} : vector<8x8xi32>
    %16 = vector.broadcast %14 : i32 to vector<8x8xi32>
    %17 = arith.addi %16, %15 : vector<8x8xi32>
    %c8_i32_12 = arith.constant 8 : i32
    %18 = arith.muli %3, %c8_i32_12 : i32
    %19 = tpu.iota {dimensions = array<i32: 1>} : vector<8x8xi32>
    %20 = vector.broadcast %18 : i32 to vector<8x8xi32>
    %21 = arith.addi %20, %19 : vector<8x8xi32>
    %22 = arith.cmpi sle, %21, %17 : vector<8x8xi32>
    %cst_13 = arith.constant 0.000000e+00 : f32
    %cst_14 = arith.constant -1.000000e+09 : f32
    %23 = vector.broadcast %cst_13 : f32 to vector<8x8xf32>
    %24 = vector.broadcast %cst_14 : f32 to vector<8x8xf32>
    %25 = arith.select %22, %23, %24 : vector<8x8xi1>, vector<8x8xf32>
    %26 = vector.shape_cast %25 : vector<8x8xf32> to vector<1x8x8xf32>
    %27 = vector.broadcast %26 : vector<1x8x8xf32> to vector<4x8x8xf32>
    %28 = arith.addf %13, %27 : vector<4x8x8xf32>
    %c0_15 = arith.constant 0 : index
    %c0_16 = arith.constant 0 : index
    %c0_17 = arith.constant 0 : index
    %29 = vector.load %arg13[%c0_15, %c0_16, %c0_17] : memref<4x8x1xf32, #tpu.memory_space<vmem>>, vector<4x8x1xf32>
    %cst_18 = arith.constant dense<0xFF800000> : vector<4x8xf32>
    %30 = vector.multi_reduction <maximumf>, %28, %cst_18 [2] : vector<4x8x8xf32> to vector<4x8xf32>
    %31 = vector.shape_cast %30 : vector<4x8xf32> to vector<4x8x1xf32>
    %32 = arith.maximumf %29, %31 : vector<4x8x1xf32>
    %33 = arith.subf %29, %32 : vector<4x8x1xf32>
    %34 = math.exp %33 : vector<4x8x1xf32>
    %35 = vector.broadcast %32 : vector<4x8x1xf32> to vector<4x8x8xf32>
    %36 = arith.subf %28, %35 : vector<4x8x8xf32>
    %37 = math.exp %36 : vector<4x8x8xf32>
    %c0_19 = arith.constant 0 : index
    %c0_20 = arith.constant 0 : index
    %c0_21 = arith.constant 0 : index
    %38 = vector.load %arg14[%c0_19, %c0_20, %c0_21] : memref<4x8x1xf32, #tpu.memory_space<vmem>>, vector<4x8x1xf32>
    %39 = arith.mulf %34, %38 : vector<4x8x1xf32>
    %cst_22 = arith.constant dense<0.000000e+00> : vector<4x8xf32>
    %40 = vector.multi_reduction <add>, %37, %cst_22 [2] : vector<4x8x8xf32> to vector<4x8xf32>
    %41 = vector.shape_cast %40 : vector<4x8xf32> to vector<4x8x1xf32>
    %42 = arith.addf %39, %41 : vector<4x8x1xf32>
    %c0_23 = arith.constant 0 : index
    %c0_24 = arith.constant 0 : index
    %c0_25 = arith.constant 0 : index
    %43 = vector.load %arg14[%c0_23, %c0_24, %c0_25] : memref<4x8x1xf32, #tpu.memory_space<vmem>>, vector<4x8x1xf32>
    tpu.vector_store %arg14[%c0_23, %c0_24, %c0_25], %42 {strides = array<i32>} : memref<4x8x1xf32, #tpu.memory_space<vmem>>, vector<4x8x1xf32>,
    %c0_26 = arith.constant 0 : index
    %c0_27 = arith.constant 0 : index
    %c0_28 = arith.constant 0 : index
    %44 = vector.load %arg12[%c0_26, %c0_27, %c0_28] : memref<4x8x8xf32, #tpu.memory_space<vmem>>, vector<4x8x8xf32>
    %45 = vector.broadcast %34 : vector<4x8x1xf32> to vector<4x8x8xf32>
    %46 = arith.mulf %45, %44 : vector<4x8x8xf32>
    "tpu.trace_start"() <{level = 10 : i32, message = "hqk,hkd->hqd"}> : () -> ()
    %cst_29 = arith.constant dense<0.000000e+00> : vector<4x8x8xf32>
    %47 = tpu.matmul %37, %12, %cst_29 {dimension_numbers = #tpu.dot_dimension_numbers<[2], [1], [1], [2], [0, 0, 0, 1, 1, 2], [0], [0]>, precision = #tpu.contract_precision<fp32>} : vector<4x8x8xf32>, vector<4x8x8xf32>, vector<4x8x8xf32> -> vector<4x8x8xf32>
    "tpu.trace_stop"() : () -> ()
    %48 = arith.addf %46, %47 : vector<4x8x8xf32>
    %c0_30 = arith.constant 0 : index
    %c0_31 = arith.constant 0 : index
    %c0_32 = arith.constant 0 : index
    %49 = vector.load %arg12[%c0_30, %c0_31, %c0_32] : memref<4x8x8xf32, #tpu.memory_space<vmem>>, vector<4x8x8xf32>
    tpu.vector_store %arg12[%c0_30, %c0_31, %c0_32], %48 {strides = array<i32>} : memref<4x8x8xf32, #tpu.memory_space<vmem>>, vector<4x8x8xf32>,
    %c0_33 = arith.constant 0 : index
    %c0_34 = arith.constant 0 : index
    %c0_35 = arith.constant 0 : index
    %50 = vector.load %arg13[%c0_33, %c0_34, %c0_35] : memref<4x8x1xf32, #tpu.memory_space<vmem>>, vector<4x8x1xf32>
    tpu.vector_store %arg13[%c0_33, %c0_34, %c0_35], %32 {strides = array<i32>} : memref<4x8x1xf32, #tpu.memory_space<vmem>>, vector<4x8x1xf32>,
    %51 = arith.cmpi eq, %3, %1 : i32
    %52 = arith.extui %51 : i1 to i32
    %c0_i32_36 = arith.constant 0 : i32
    %53 = arith.cmpi ne, %52, %c0_i32_36 : i32
    scf.if %53 {
      %c0_37 = arith.constant 0 : index
      %c0_38 = arith.constant 0 : index
      %c0_39 = arith.constant 0 : index
      %54 = vector.load %arg12[%c0_37, %c0_38, %c0_39] : memref<4x8x8xf32, #tpu.memory_space<vmem>>, vector<4x8x8xf32>
      %c0_40 = arith.constant 0 : index
      %c0_41 = arith.constant 0 : index
      %c0_42 = arith.constant 0 : index
      %55 = vector.load %arg14[%c0_40, %c0_41, %c0_42] : memref<4x8x1xf32, #tpu.memory_space<vmem>>, vector<4x8x1xf32>
      %cst_43 = arith.constant 1.000000e+00 : f32
      %56 = vector.broadcast %cst_43 : f32 to vector<4x8x1xf32>
      %57 = arith.divf %56, %55 : vector<4x8x1xf32>
      %58 = vector.broadcast %57 : vector<4x8x1xf32> to vector<4x8x8xf32>
      %59 = arith.mulf %54, %58 : vector<4x8x8xf32>
      %60 = vector.extract_strided_slice %59 {offsets = [0, 0, 0], sizes = [1, 8, 8], strides = [1, 1, 1]} : vector<4x8x8xf32> to vector<1x8x8xf32>
      %61 = vector.shape_cast %60 : vector<1x8x8xf32> to vector<8x8xf32>
      %c0_44 = arith.constant 0 : index
      %c0_45 = arith.constant 0 : index
      %c0_46 = arith.constant 0 : index
      %62 = vector.load %arg8[%c0_44, %c0_45, %c0_46] : memref<4x8x32xf32, #tpu.memory_space<vmem>>, vector<1x8x32xf32>
      %63 = vector.shape_cast %62 : vector<1x8x32xf32> to vector<8x32xf32>
      %cst_47 = arith.constant dense<0.000000e+00> : vector<8x32xf32>
      %64 = tpu.matmul %61, %63, %cst_47 {dimension_numbers = #tpu.dot_dimension_numbers<[1], [0], [0], [1], [0, 0, 1, 1], [], []>, precision = #tpu.contract_precision<fp32>} : vector<8x8xf32>, vector<8x32xf32>, vector<8x32xf32> -> vector<8x32xf32>
      %65 = vector.extract_strided_slice %59 {offsets = [1, 0, 0], sizes = [1, 8, 8], strides = [1, 1, 1]} : vector<4x8x8xf32> to vector<1x8x8xf32>
      %66 = vector.shape_cast %65 : vector<1x8x8xf32> to vector<8x8xf32>
      %c1 = arith.constant 1 : index
      %c0_48 = arith.constant 0 : index
      %c0_49 = arith.constant 0 : index
      %67 = vector.load %arg8[%c1, %c0_48, %c0_49] : memref<4x8x32xf32, #tpu.memory_space<vmem>>, vector<1x8x32xf32>
      %68 = vector.shape_cast %67 : vector<1x8x32xf32> to vector<8x32xf32>
      %cst_50 = arith.constant dense<0.000000e+00> : vector<8x32xf32>
      %69 = tpu.matmul %66, %68, %cst_50 {dimension_numbers = #tpu.dot_dimension_numbers<[1], [0], [0], [1], [0, 0, 1, 1], [], []>, precision = #tpu.contract_precision<fp32>} : vector<8x8xf32>, vector<8x32xf32>, vector<8x32xf32> -> vector<8x32xf32>
      %70 = arith.addf %64, %69 : vector<8x32xf32>
      %71 = vector.extract_strided_slice %59 {offsets = [2, 0, 0], sizes = [1, 8, 8], strides = [1, 1, 1]} : vector<4x8x8xf32> to vector<1x8x8xf32>
      %72 = vector.shape_cast %71 : vector<1x8x8xf32> to vector<8x8xf32>
      %c2 = arith.constant 2 : index
      %c0_51 = arith.constant 0 : index
      %c0_52 = arith.constant 0 : index
      %73 = vector.load %arg8[%c2, %c0_51, %c0_52] : memref<4x8x32xf32, #tpu.memory_space<vmem>>, vector<1x8x32xf32>
      %74 = vector.shape_cast %73 : vector<1x8x32xf32> to vector<8x32xf32>
      %cst_53 = arith.constant dense<0.000000e+00> : vector<8x32xf32>
      %75 = tpu.matmul %72, %74, %cst_53 {dimension_numbers = #tpu.dot_dimension_numbers<[1], [0], [0], [1], [0, 0, 1, 1], [], []>, precision = #tpu.contract_precision<fp32>} : vector<8x8xf32>, vector<8x32xf32>, vector<8x32xf32> -> vector<8x32xf32>
      %76 = arith.addf %70, %75 : vector<8x32xf32>
      %77 = vector.extract_strided_slice %59 {offsets = [3, 0, 0], sizes = [1, 8, 8], strides = [1, 1, 1]} : vector<4x8x8xf32> to vector<1x8x8xf32>
      %78 = vector.shape_cast %77 : vector<1x8x8xf32> to vector<8x8xf32>
      %c3 = arith.constant 3 : index
      %c0_54 = arith.constant 0 : index
      %c0_55 = arith.constant 0 : index
      %79 = vector.load %arg8[%c3, %c0_54, %c0_55] : memref<4x8x32xf32, #tpu.memory_space<vmem>>, vector<1x8x32xf32>
      %80 = vector.shape_cast %79 : vector<1x8x32xf32> to vector<8x32xf32>
      %cst_56 = arith.constant dense<0.000000e+00> : vector<8x32xf32>
      %81 = tpu.matmul %78, %80, %cst_56 {dimension_numbers = #tpu.dot_dimension_numbers<[1], [0], [0], [1], [0, 0, 1, 1], [], []>, precision = #tpu.contract_precision<fp32>} : vector<8x8xf32>, vector<8x32xf32>, vector<8x32xf32> -> vector<8x32xf32>
      %82 = arith.addf %76, %81 : vector<8x32xf32>
      %c0_57 = arith.constant 0 : index
      %c0_58 = arith.constant 0 : index
      %83 = vector.load %arg9[%c0_57, %c0_58] : memref<1x32xf32, #tpu.memory_space<vmem>>, vector<1x32xf32>
      %c0_59 = arith.constant 0 : index
      %c0_60 = arith.constant 0 : index
      %84 = vector.load %arg10[%c0_59, %c0_60] : memref<1x32xf32, #tpu.memory_space<vmem>>, vector<1x32xf32>
      %cst_61 = arith.constant dense<0.000000e+00> : vector<8xf32>
      %85 = vector.multi_reduction <add>, %82, %cst_61 [1] : vector<8x32xf32> to vector<8xf32>
      %86 = vector.shape_cast %85 : vector<8xf32> to vector<8x1xf32>
      %cst_62 = arith.constant 3.200000e+01 : f32
      %87 = vector.broadcast %cst_62 : f32 to vector<8x1xf32>
      %88 = arith.divf %86, %87 : vector<8x1xf32>
      %89 = vector.broadcast %88 : vector<8x1xf32> to vector<8x32xf32>
      %90 = arith.subf %82, %89 : vector<8x32xf32>
      %91 = arith.mulf %90, %90 : vector<8x32xf32>
      %cst_63 = arith.constant dense<0.000000e+00> : vector<8xf32>
      %92 = vector.multi_reduction <add>, %91, %cst_63 [1] : vector<8x32xf32> to vector<8xf32>
      %93 = vector.shape_cast %92 : vector<8xf32> to vector<8x1xf32>
      %cst_64 = arith.constant 3.200000e+01 : f32
      %94 = vector.broadcast %cst_64 : f32 to vector<8x1xf32>
      %95 = arith.divf %93, %94 : vector<8x1xf32>
      %cst_65 = arith.constant 9.99999974E-6 : f32
      %96 = vector.broadcast %cst_65 : f32 to vector<8x1xf32>
      %97 = arith.addf %95, %96 : vector<8x1xf32>
      %98 = math.rsqrt %97 : vector<8x1xf32>
      %99 = vector.broadcast %98 : vector<8x1xf32> to vector<8x32xf32>
      %100 = arith.mulf %90, %99 : vector<8x32xf32>
      %101 = vector.broadcast %83 : vector<1x32xf32> to vector<8x32xf32>
      %102 = arith.mulf %100, %101 : vector<8x32xf32>
      %103 = vector.broadcast %84 : vector<1x32xf32> to vector<8x32xf32>
      %104 = arith.addf %102, %103 : vector<8x32xf32>
      %c0_66 = arith.constant 0 : index
      %c0_67 = arith.constant 0 : index
      %c0_68 = arith.constant 0 : index
      %105 = vector.load %arg4[%c0_66, %c0_67, %c0_68] : memref<1x8x32xf32, #tpu.memory_space<vmem>>, vector<1x8x32xf32>
      %106 = vector.shape_cast %105 : vector<1x8x32xf32> to vector<8x32xf32>
      %107 = arith.addf %106, %104 : vector<8x32xf32>
      %c0_69 = arith.constant 0 : index
      %c0_70 = arith.constant 0 : index
      %c0_71 = arith.constant 0 : index
      %108 = vector.load %arg11[%c0_69, %c0_70, %c0_71] : memref<1x8x32xf32, #tpu.memory_space<vmem>>, vector<1x8x32xf32>
      %109 = vector.shape_cast %108 : vector<1x8x32xf32> to vector<8x32xf32>
      %110 = vector.shape_cast %107 : vector<8x32xf32> to vector<1x8x32xf32>
      tpu.vector_store %arg11[%c0_69, %c0_70, %c0_71], %110 {strides = array<i32>} : memref<1x8x32xf32, #tpu.memory_space<vmem>>, vector<1x8x32xf32>,
    } else {
    }
    return
  }
  func.func @transform_0(%arg0: i32, %arg1: i32, %arg2: memref<1xi32, #tpu.memory_space<smem>>, %arg3: memref<1xi32, #tpu.memory_space<smem>>) -> (i32, i32, i32) {
    %0 = arith.index_cast %arg1 : i32 to index
    %1 = memref.load %arg2[%0] : memref<1xi32, #tpu.memory_space<smem>>
    %c0_i32 = arith.constant 0 : i32
    %c0_i32_0 = arith.constant 0 : i32
    return %arg0, %1, %c0_i32 : i32, i32, i32
  }
  func.func @transform_1(%arg0: i32, %arg1: i32, %arg2: memref<1xi32, #tpu.memory_space<smem>>, %arg3: memref<1xi32, #tpu.memory_space<smem>>) -> (i32, i32, i32, i32) {
    %0 = arith.index_cast %arg1 : i32 to index
    %1 = memref.load %arg2[%0] : memref<1xi32, #tpu.memory_space<smem>>
    %c0_i32 = arith.constant 0 : i32
    %c0_i32_0 = arith.constant 0 : i32
    %c0_i32_1 = arith.constant 0 : i32
    return %arg0, %c0_i32, %1, %c0_i32_0 : i32, i32, i32, i32
  }
  func.func @transform_2(%arg0: i32, %arg1: i32, %arg2: memref<1xi32, #tpu.memory_space<smem>>, %arg3: memref<1xi32, #tpu.memory_space<smem>>) -> (i32, i32, i32, i32) {
    %0 = arith.index_cast %arg1 : i32 to index
    %1 = memref.load %arg3[%0] : memref<1xi32, #tpu.memory_space<smem>>
    %c0_i32 = arith.constant 0 : i32
    %c0_i32_0 = arith.constant 0 : i32
    %c0_i32_1 = arith.constant 0 : i32
    return %arg0, %c0_i32, %1, %c0_i32_0 : i32, i32, i32, i32
  }
  func.func @transform_3(%arg0: i32, %arg1: i32, %arg2: memref<1xi32, #tpu.memory_space<smem>>, %arg3: memref<1xi32, #tpu.memory_space<smem>>) -> (i32, i32, i32, i32) {
    %0 = arith.index_cast %arg1 : i32 to index
    %1 = memref.load %arg3[%0] : memref<1xi32, #tpu.memory_space<smem>>
    %c0_i32 = arith.constant 0 : i32
    %c0_i32_0 = arith.constant 0 : i32
    %c0_i32_1 = arith.constant 0 : i32
    return %arg0, %c0_i32, %1, %c0_i32_0 : i32, i32, i32, i32
  }
  func.func @transform_4(%arg0: i32, %arg1: i32, %arg2: memref<1xi32, #tpu.memory_space<smem>>, %arg3: memref<1xi32, #tpu.memory_space<smem>>) -> (i32, i32, i32) {
    %c0_i32 = arith.constant 0 : i32
    %c0_i32_0 = arith.constant 0 : i32
    %c0_i32_1 = arith.constant 0 : i32
    %c0_i32_2 = arith.constant 0 : i32
    return %c0_i32, %c0_i32_0, %c0_i32_1 : i32, i32, i32
  }
  func.func @transform_5(%arg0: i32, %arg1: i32, %arg2: memref<1xi32, #tpu.memory_space<smem>>, %arg3: memref<1xi32, #tpu.memory_space<smem>>) -> (i32, i32) {
    %c0_i32 = arith.constant 0 : i32
    %c0_i32_0 = arith.constant 0 : i32
    %c0_i32_1 = arith.constant 0 : i32
    return %c0_i32, %c0_i32_0 : i32, i32
  }
  func.func @transform_6(%arg0: i32, %arg1: i32, %arg2: memref<1xi32, #tpu.memory_space<smem>>, %arg3: memref<1xi32, #tpu.memory_space<smem>>) -> (i32, i32) {
    %c0_i32 = arith.constant 0 : i32
    %c0_i32_0 = arith.constant 0 : i32
    %c0_i32_1 = arith.constant 0 : i32
    return %c0_i32, %c0_i32_0 : i32, i32
  }
  func.func @transform_7(%arg0: i32, %arg1: i32, %arg2: memref<1xi32, #tpu.memory_space<smem>>, %arg3: memref<1xi32, #tpu.memory_space<smem>>) -> (i32, i32, i32) {
    %0 = arith.index_cast %arg1 : i32 to index
    %1 = memref.load %arg2[%0] : memref<1xi32, #tpu.memory_space<smem>>
    %c0_i32 = arith.constant 0 : i32
    %c0_i32_0 = arith.constant 0 : i32
    return %arg0, %1, %c0_i32 : i32, i32, i32
  }
}

module attributes {stable_mosaic.version = 11 : i64} {
  func.func @_mlp_block_kernel(%arg0: i32, %arg1: i32, %arg2: memref<1x8x32xf32, #tpu.memory_space<vmem>>, %arg3: memref<1x32xf32, #tpu.memory_space<vmem>>, %arg4: memref<1x32xf32, #tpu.memory_space<vmem>>, %arg5: memref<32x256xf32, #tpu.memory_space<vmem>>, %arg6: memref<1x128xf32, #tpu.memory_space<vmem>>, %arg7: memref<1x128xf32, #tpu.memory_space<vmem>>, %arg8: memref<128x32xf32, #tpu.memory_space<vmem>>, %arg9: memref<1x8x32xf32, #tpu.memory_space<vmem>>) attributes {dimension_semantics = [#tpu.dimension_semantics<parallel>, #tpu.dimension_semantics<parallel>], iteration_bounds = array<i64: 2, 1>, scalar_prefetch = 0 : i64, scratch_operands = 0 : i64, tpu.core_type = #tpu.core_type<tc>, window_params = [{transform_indices = @transform_0, window_bounds = array<i64: 1, 8, 32>}, {pipeline_mode = #tpu.pipeline_mode<synchronous>, transform_indices = @transform_1, window_bounds = array<i64: 1, 32>}, {pipeline_mode = #tpu.pipeline_mode<synchronous>, transform_indices = @transform_2, window_bounds = array<i64: 1, 32>}, {pipeline_mode = #tpu.pipeline_mode<synchronous>, transform_indices = @transform_3, window_bounds = array<i64: 32, 256>}, {pipeline_mode = #tpu.pipeline_mode<synchronous>, transform_indices = @transform_4, window_bounds = array<i64: 1, 128>}, {pipeline_mode = #tpu.pipeline_mode<synchronous>, transform_indices = @transform_5, window_bounds = array<i64: 1, 128>}, {pipeline_mode = #tpu.pipeline_mode<synchronous>, transform_indices = @transform_6, window_bounds = array<i64: 128, 32>}, {transform_indices = @transform_7, window_bounds = array<i64: 1, 8, 32>}]} {
    %c0 = arith.constant 0 : index
    %c0_0 = arith.constant 0 : index
    %c0_1 = arith.constant 0 : index
    %0 = vector.load %arg2[%c0, %c0_0, %c0_1] : memref<1x8x32xf32, #tpu.memory_space<vmem>>, vector<1x8x32xf32>
    %1 = vector.shape_cast %0 : vector<1x8x32xf32> to vector<8x32xf32>
    %c0_2 = arith.constant 0 : index
    %c0_3 = arith.constant 0 : index
    %2 = vector.load %arg3[%c0_2, %c0_3] : memref<1x32xf32, #tpu.memory_space<vmem>>, vector<1x32xf32>
    %c0_4 = arith.constant 0 : index
    %c0_5 = arith.constant 0 : index
    %3 = vector.load %arg4[%c0_4, %c0_5] : memref<1x32xf32, #tpu.memory_space<vmem>>, vector<1x32xf32>
    %cst = arith.constant dense<0.000000e+00> : vector<8xf32>
    %4 = vector.multi_reduction <add>, %1, %cst [1] : vector<8x32xf32> to vector<8xf32>
    %5 = vector.shape_cast %4 : vector<8xf32> to vector<8x1xf32>
    %cst_6 = arith.constant 3.200000e+01 : f32
    %6 = vector.broadcast %cst_6 : f32 to vector<8x1xf32>
    %7 = arith.divf %5, %6 : vector<8x1xf32>
    %8 = vector.broadcast %7 : vector<8x1xf32> to vector<8x32xf32>
    %9 = arith.subf %1, %8 : vector<8x32xf32>
    %10 = arith.mulf %9, %9 : vector<8x32xf32>
    %cst_7 = arith.constant dense<0.000000e+00> : vector<8xf32>
    %11 = vector.multi_reduction <add>, %10, %cst_7 [1] : vector<8x32xf32> to vector<8xf32>
    %12 = vector.shape_cast %11 : vector<8xf32> to vector<8x1xf32>
    %cst_8 = arith.constant 3.200000e+01 : f32
    %13 = vector.broadcast %cst_8 : f32 to vector<8x1xf32>
    %14 = arith.divf %12, %13 : vector<8x1xf32>
    %cst_9 = arith.constant 9.99999974E-6 : f32
    %15 = vector.broadcast %cst_9 : f32 to vector<8x1xf32>
    %16 = arith.addf %14, %15 : vector<8x1xf32>
    %17 = math.rsqrt %16 : vector<8x1xf32>
    %18 = vector.broadcast %17 : vector<8x1xf32> to vector<8x32xf32>
    %19 = arith.mulf %9, %18 : vector<8x32xf32>
    %20 = vector.broadcast %2 : vector<1x32xf32> to vector<8x32xf32>
    %21 = arith.mulf %19, %20 : vector<8x32xf32>
    %22 = vector.broadcast %3 : vector<1x32xf32> to vector<8x32xf32>
    %23 = arith.addf %21, %22 : vector<8x32xf32>
    %c0_10 = arith.constant 0 : index
    %c0_11 = arith.constant 0 : index
    %24 = vector.load %arg5[%c0_10, %c0_11] : memref<32x256xf32, #tpu.memory_space<vmem>>, vector<32x256xf32>
    %cst_12 = arith.constant dense<0.000000e+00> : vector<8x256xf32>
    %25 = tpu.matmul %23, %24, %cst_12 {dimension_numbers = #tpu.dot_dimension_numbers<[1], [0], [0], [1], [0, 0, 1, 1], [], []>, precision = #tpu.contract_precision<fp32>} : vector<8x32xf32>, vector<32x256xf32>, vector<8x256xf32> -> vector<8x256xf32>
    %26 = vector.extract_strided_slice %25 {offsets = [0, 0], sizes = [8, 128], strides = [1, 1]} : vector<8x256xf32> to vector<8x128xf32>
    %27 = vector.extract_strided_slice %25 {offsets = [0, 128], sizes = [8, 128], strides = [1, 1]} : vector<8x256xf32> to vector<8x128xf32>
    %28 = arith.negf %27 : vector<8x128xf32>
    %29 = math.exp %28 : vector<8x128xf32>
    %cst_13 = arith.constant 1.000000e+00 : f32
    %30 = vector.broadcast %cst_13 : f32 to vector<8x128xf32>
    %31 = arith.addf %30, %29 : vector<8x128xf32>
    %32 = arith.divf %30, %31 : vector<8x128xf32>
    %33 = arith.mulf %27, %32 : vector<8x128xf32>
    %34 = arith.mulf %26, %33 : vector<8x128xf32>
    %c0_14 = arith.constant 0 : index
    %c0_15 = arith.constant 0 : index
    %35 = vector.load %arg6[%c0_14, %c0_15] : memref<1x128xf32, #tpu.memory_space<vmem>>, vector<1x128xf32>
    %c0_16 = arith.constant 0 : index
    %c0_17 = arith.constant 0 : index
    %36 = vector.load %arg7[%c0_16, %c0_17] : memref<1x128xf32, #tpu.memory_space<vmem>>, vector<1x128xf32>
    %cst_18 = arith.constant dense<0.000000e+00> : vector<8xf32>
    %37 = vector.multi_reduction <add>, %34, %cst_18 [1] : vector<8x128xf32> to vector<8xf32>
    %38 = vector.shape_cast %37 : vector<8xf32> to vector<8x1xf32>
    %cst_19 = arith.constant 1.280000e+02 : f32
    %39 = vector.broadcast %cst_19 : f32 to vector<8x1xf32>
    %40 = arith.divf %38, %39 : vector<8x1xf32>
    %41 = vector.broadcast %40 : vector<8x1xf32> to vector<8x128xf32>
    %42 = arith.subf %34, %41 : vector<8x128xf32>
    %43 = arith.mulf %42, %42 : vector<8x128xf32>
    %cst_20 = arith.constant dense<0.000000e+00> : vector<8xf32>
    %44 = vector.multi_reduction <add>, %43, %cst_20 [1] : vector<8x128xf32> to vector<8xf32>
    %45 = vector.shape_cast %44 : vector<8xf32> to vector<8x1xf32>
    %cst_21 = arith.constant 1.280000e+02 : f32
    %46 = vector.broadcast %cst_21 : f32 to vector<8x1xf32>
    %47 = arith.divf %45, %46 : vector<8x1xf32>
    %cst_22 = arith.constant 9.99999974E-6 : f32
    %48 = vector.broadcast %cst_22 : f32 to vector<8x1xf32>
    %49 = arith.addf %47, %48 : vector<8x1xf32>
    %50 = math.rsqrt %49 : vector<8x1xf32>
    %51 = vector.broadcast %50 : vector<8x1xf32> to vector<8x128xf32>
    %52 = arith.mulf %42, %51 : vector<8x128xf32>
    %53 = vector.broadcast %35 : vector<1x128xf32> to vector<8x128xf32>
    %54 = arith.mulf %52, %53 : vector<8x128xf32>
    %55 = vector.broadcast %36 : vector<1x128xf32> to vector<8x128xf32>
    %56 = arith.addf %54, %55 : vector<8x128xf32>
    %c0_23 = arith.constant 0 : index
    %c0_24 = arith.constant 0 : index
    %57 = vector.load %arg8[%c0_23, %c0_24] : memref<128x32xf32, #tpu.memory_space<vmem>>, vector<128x32xf32>
    %cst_25 = arith.constant dense<0.000000e+00> : vector<8x32xf32>
    %58 = tpu.matmul %56, %57, %cst_25 {dimension_numbers = #tpu.dot_dimension_numbers<[1], [0], [0], [1], [0, 0, 1, 1], [], []>, precision = #tpu.contract_precision<fp32>} : vector<8x128xf32>, vector<128x32xf32>, vector<8x32xf32> -> vector<8x32xf32>
    %59 = arith.addf %1, %58 : vector<8x32xf32>
    %c0_26 = arith.constant 0 : index
    %c0_27 = arith.constant 0 : index
    %c0_28 = arith.constant 0 : index
    %60 = vector.load %arg9[%c0_26, %c0_27, %c0_28] : memref<1x8x32xf32, #tpu.memory_space<vmem>>, vector<1x8x32xf32>
    %61 = vector.shape_cast %60 : vector<1x8x32xf32> to vector<8x32xf32>
    %62 = vector.shape_cast %59 : vector<8x32xf32> to vector<1x8x32xf32>
    tpu.vector_store %arg9[%c0_26, %c0_27, %c0_28], %62 {strides = array<i32>} : memref<1x8x32xf32, #tpu.memory_space<vmem>>, vector<1x8x32xf32>,
    return
  }
  func.func @transform_0(%arg0: i32, %arg1: i32) -> (i32, i32, i32) {
    %c0_i32 = arith.constant 0 : i32
    %c0_i32_0 = arith.constant 0 : i32
    return %arg0, %arg1, %c0_i32 : i32, i32, i32
  }
  func.func @transform_1(%arg0: i32, %arg1: i32) -> (i32, i32) {
    %c0_i32 = arith.constant 0 : i32
    %c0_i32_0 = arith.constant 0 : i32
    %c0_i32_1 = arith.constant 0 : i32
    return %c0_i32, %c0_i32_0 : i32, i32
  }
  func.func @transform_2(%arg0: i32, %arg1: i32) -> (i32, i32) {
    %c0_i32 = arith.constant 0 : i32
    %c0_i32_0 = arith.constant 0 : i32
    %c0_i32_1 = arith.constant 0 : i32
    return %c0_i32, %c0_i32_0 : i32, i32
  }
  func.func @transform_3(%arg0: i32, %arg1: i32) -> (i32, i32) {
    %c0_i32 = arith.constant 0 : i32
    %c0_i32_0 = arith.constant 0 : i32
    %c0_i32_1 = arith.constant 0 : i32
    return %c0_i32, %c0_i32_0 : i32, i32
  }
  func.func @transform_4(%arg0: i32, %arg1: i32) -> (i32, i32) {
    %c0_i32 = arith.constant 0 : i32
    %c0_i32_0 = arith.constant 0 : i32
    %c0_i32_1 = arith.constant 0 : i32
    return %c0_i32, %c0_i32_0 : i32, i32
  }
  func.func @transform_5(%arg0: i32, %arg1: i32) -> (i32, i32) {
    %c0_i32 = arith.constant 0 : i32
    %c0_i32_0 = arith.constant 0 : i32
    %c0_i32_1 = arith.constant 0 : i32
    return %c0_i32, %c0_i32_0 : i32, i32
  }
  func.func @transform_6(%arg0: i32, %arg1: i32) -> (i32, i32) {
    %c0_i32 = arith.constant 0 : i32
    %c0_i32_0 = arith.constant 0 : i32
    %c0_i32_1 = arith.constant 0 : i32
    return %c0_i32, %c0_i32_0 : i32, i32
  }
  func.func @transform_7(%arg0: i32, %arg1: i32) -> (i32, i32, i32) {
    %c0_i32 = arith.constant 0 : i32
    %c0_i32_0 = arith.constant 0 : i32
    return %arg0, %arg1, %c0_i32 : i32, i32, i32
  }
}

module attributes {stable_mosaic.version = 11 : i64} {
  func.func @_mlp_block_kernel(%arg0: i32, %arg1: i32, %arg2: memref<1x8x32xf32, #tpu.memory_space<vmem>>, %arg3: memref<1x32xf32, #tpu.memory_space<vmem>>, %arg4: memref<1x32xf32, #tpu.memory_space<vmem>>, %arg5: memref<32x256xf32, #tpu.memory_space<vmem>>, %arg6: memref<1x128xf32, #tpu.memory_space<vmem>>, %arg7: memref<1x128xf32, #tpu.memory_space<vmem>>, %arg8: memref<128x32xf32, #tpu.memory_space<vmem>>, %arg9: memref<1x8x32xf32, #tpu.memory_space<vmem>>) attributes {dimension_semantics = [#tpu.dimension_semantics<parallel>, #tpu.dimension_semantics<parallel>], iteration_bounds = array<i64: 2, 1>, scalar_prefetch = 0 : i64, scratch_operands = 0 : i64, tpu.core_type = #tpu.core_type<tc>, window_params = [{transform_indices = @transform_0, window_bounds = array<i64: 1, 8, 32>}, {pipeline_mode = #tpu.pipeline_mode<synchronous>, transform_indices = @transform_1, window_bounds = array<i64: 1, 32>}, {pipeline_mode = #tpu.pipeline_mode<synchronous>, transform_indices = @transform_2, window_bounds = array<i64: 1, 32>}, {pipeline_mode = #tpu.pipeline_mode<synchronous>, transform_indices = @transform_3, window_bounds = array<i64: 32, 256>}, {pipeline_mode = #tpu.pipeline_mode<synchronous>, transform_indices = @transform_4, window_bounds = array<i64: 1, 128>}, {pipeline_mode = #tpu.pipeline_mode<synchronous>, transform_indices = @transform_5, window_bounds = array<i64: 1, 128>}, {pipeline_mode = #tpu.pipeline_mode<synchronous>, transform_indices = @transform_6, window_bounds = array<i64: 128, 32>}, {transform_indices = @transform_7, window_bounds = array<i64: 1, 8, 32>}]} {
    %c0 = arith.constant 0 : index
    %c0_0 = arith.constant 0 : index
    %c0_1 = arith.constant 0 : index
    %0 = vector.load %arg2[%c0, %c0_0, %c0_1] : memref<1x8x32xf32, #tpu.memory_space<vmem>>, vector<1x8x32xf32>
    %1 = vector.shape_cast %0 : vector<1x8x32xf32> to vector<8x32xf32>
    %c0_2 = arith.constant 0 : index
    %c0_3 = arith.constant 0 : index
    %2 = vector.load %arg3[%c0_2, %c0_3] : memref<1x32xf32, #tpu.memory_space<vmem>>, vector<1x32xf32>
    %c0_4 = arith.constant 0 : index
    %c0_5 = arith.constant 0 : index
    %3 = vector.load %arg4[%c0_4, %c0_5] : memref<1x32xf32, #tpu.memory_space<vmem>>, vector<1x32xf32>
    %cst = arith.constant dense<0.000000e+00> : vector<8xf32>
    %4 = vector.multi_reduction <add>, %1, %cst [1] : vector<8x32xf32> to vector<8xf32>
    %5 = vector.shape_cast %4 : vector<8xf32> to vector<8x1xf32>
    %cst_6 = arith.constant 3.200000e+01 : f32
    %6 = vector.broadcast %cst_6 : f32 to vector<8x1xf32>
    %7 = arith.divf %5, %6 : vector<8x1xf32>
    %8 = vector.broadcast %7 : vector<8x1xf32> to vector<8x32xf32>
    %9 = arith.subf %1, %8 : vector<8x32xf32>
    %10 = arith.mulf %9, %9 : vector<8x32xf32>
    %cst_7 = arith.constant dense<0.000000e+00> : vector<8xf32>
    %11 = vector.multi_reduction <add>, %10, %cst_7 [1] : vector<8x32xf32> to vector<8xf32>
    %12 = vector.shape_cast %11 : vector<8xf32> to vector<8x1xf32>
    %cst_8 = arith.constant 3.200000e+01 : f32
    %13 = vector.broadcast %cst_8 : f32 to vector<8x1xf32>
    %14 = arith.divf %12, %13 : vector<8x1xf32>
    %cst_9 = arith.constant 9.99999974E-6 : f32
    %15 = vector.broadcast %cst_9 : f32 to vector<8x1xf32>
    %16 = arith.addf %14, %15 : vector<8x1xf32>
    %17 = math.rsqrt %16 : vector<8x1xf32>
    %18 = vector.broadcast %17 : vector<8x1xf32> to vector<8x32xf32>
    %19 = arith.mulf %9, %18 : vector<8x32xf32>
    %20 = vector.broadcast %2 : vector<1x32xf32> to vector<8x32xf32>
    %21 = arith.mulf %19, %20 : vector<8x32xf32>
    %22 = vector.broadcast %3 : vector<1x32xf32> to vector<8x32xf32>
    %23 = arith.addf %21, %22 : vector<8x32xf32>
    %c0_10 = arith.constant 0 : index
    %c0_11 = arith.constant 0 : index
    %24 = vector.load %arg5[%c0_10, %c0_11] : memref<32x256xf32, #tpu.memory_space<vmem>>, vector<32x256xf32>
    %cst_12 = arith.constant dense<0.000000e+00> : vector<8x256xf32>
    %25 = tpu.matmul %23, %24, %cst_12 {dimension_numbers = #tpu.dot_dimension_numbers<[1], [0], [0], [1], [0, 0, 1, 1], [], []>, precision = #tpu.contract_precision<fp32>} : vector<8x32xf32>, vector<32x256xf32>, vector<8x256xf32> -> vector<8x256xf32>
    %26 = vector.extract_strided_slice %25 {offsets = [0, 0], sizes = [8, 128], strides = [1, 1]} : vector<8x256xf32> to vector<8x128xf32>
    %27 = vector.extract_strided_slice %25 {offsets = [0, 128], sizes = [8, 128], strides = [1, 1]} : vector<8x256xf32> to vector<8x128xf32>
    %28 = arith.negf %27 : vector<8x128xf32>
    %29 = math.exp %28 : vector<8x128xf32>
    %cst_13 = arith.constant 1.000000e+00 : f32
    %30 = vector.broadcast %cst_13 : f32 to vector<8x128xf32>
    %31 = arith.addf %30, %29 : vector<8x128xf32>
    %32 = arith.divf %30, %31 : vector<8x128xf32>
    %33 = arith.mulf %27, %32 : vector<8x128xf32>
    %34 = arith.mulf %26, %33 : vector<8x128xf32>
    %c0_14 = arith.constant 0 : index
    %c0_15 = arith.constant 0 : index
    %35 = vector.load %arg6[%c0_14, %c0_15] : memref<1x128xf32, #tpu.memory_space<vmem>>, vector<1x128xf32>
    %c0_16 = arith.constant 0 : index
    %c0_17 = arith.constant 0 : index
    %36 = vector.load %arg7[%c0_16, %c0_17] : memref<1x128xf32, #tpu.memory_space<vmem>>, vector<1x128xf32>
    %cst_18 = arith.constant dense<0.000000e+00> : vector<8xf32>
    %37 = vector.multi_reduction <add>, %34, %cst_18 [1] : vector<8x128xf32> to vector<8xf32>
    %38 = vector.shape_cast %37 : vector<8xf32> to vector<8x1xf32>
    %cst_19 = arith.constant 1.280000e+02 : f32
    %39 = vector.broadcast %cst_19 : f32 to vector<8x1xf32>
    %40 = arith.divf %38, %39 : vector<8x1xf32>
    %41 = vector.broadcast %40 : vector<8x1xf32> to vector<8x128xf32>
    %42 = arith.subf %34, %41 : vector<8x128xf32>
    %43 = arith.mulf %42, %42 : vector<8x128xf32>
    %cst_20 = arith.constant dense<0.000000e+00> : vector<8xf32>
    %44 = vector.multi_reduction <add>, %43, %cst_20 [1] : vector<8x128xf32> to vector<8xf32>
    %45 = vector.shape_cast %44 : vector<8xf32> to vector<8x1xf32>
    %cst_21 = arith.constant 1.280000e+02 : f32
    %46 = vector.broadcast %cst_21 : f32 to vector<8x1xf32>
    %47 = arith.divf %45, %46 : vector<8x1xf32>
    %cst_22 = arith.constant 9.99999974E-6 : f32
    %48 = vector.broadcast %cst_22 : f32 to vector<8x1xf32>
    %49 = arith.addf %47, %48 : vector<8x1xf32>
    %50 = math.rsqrt %49 : vector<8x1xf32>
    %51 = vector.broadcast %50 : vector<8x1xf32> to vector<8x128xf32>
    %52 = arith.mulf %42, %51 : vector<8x128xf32>
    %53 = vector.broadcast %35 : vector<1x128xf32> to vector<8x128xf32>
    %54 = arith.mulf %52, %53 : vector<8x128xf32>
    %55 = vector.broadcast %36 : vector<1x128xf32> to vector<8x128xf32>
    %56 = arith.addf %54, %55 : vector<8x128xf32>
    %c0_23 = arith.constant 0 : index
    %c0_24 = arith.constant 0 : index
    %57 = vector.load %arg8[%c0_23, %c0_24] : memref<128x32xf32, #tpu.memory_space<vmem>>, vector<128x32xf32>
    %cst_25 = arith.constant dense<0.000000e+00> : vector<8x32xf32>
    %58 = tpu.matmul %56, %57, %cst_25 {dimension_numbers = #tpu.dot_dimension_numbers<[1], [0], [0], [1], [0, 0, 1, 1], [], []>, precision = #tpu.contract_precision<fp32>} : vector<8x128xf32>, vector<128x32xf32>, vector<8x32xf32> -> vector<8x32xf32>
    %59 = arith.addf %1, %58 : vector<8x32xf32>
    %c0_26 = arith.constant 0 : index
    %c0_27 = arith.constant 0 : index
    %c0_28 = arith.constant 0 : index
    %60 = vector.load %arg9[%c0_26, %c0_27, %c0_28] : memref<1x8x32xf32, #tpu.memory_space<vmem>>, vector<1x8x32xf32>
    %61 = vector.shape_cast %60 : vector<1x8x32xf32> to vector<8x32xf32>
    %62 = vector.shape_cast %59 : vector<8x32xf32> to vector<1x8x32xf32>
    tpu.vector_store %arg9[%c0_26, %c0_27, %c0_28], %62 {strides = array<i32>} : memref<1x8x32xf32, #tpu.memory_space<vmem>>, vector<1x8x32xf32>,
    return
  }
  func.func @transform_0(%arg0: i32, %arg1: i32) -> (i32, i32, i32) {
    %c0_i32 = arith.constant 0 : i32
    %c0_i32_0 = arith.constant 0 : i32
    return %arg0, %arg1, %c0_i32 : i32, i32, i32
  }
  func.func @transform_1(%arg0: i32, %arg1: i32) -> (i32, i32) {
    %c0_i32 = arith.constant 0 : i32
    %c0_i32_0 = arith.constant 0 : i32
    %c0_i32_1 = arith.constant 0 : i32
    return %c0_i32, %c0_i32_0 : i32, i32
  }
  func.func @transform_2(%arg0: i32, %arg1: i32) -> (i32, i32) {
    %c0_i32 = arith.constant 0 : i32
    %c0_i32_0 = arith.constant 0 : i32
    %c0_i32_1 = arith.constant 0 : i32
    return %c0_i32, %c0_i32_0 : i32, i32
  }
  func.func @transform_3(%arg0: i32, %arg1: i32) -> (i32, i32) {
    %c0_i32 = arith.constant 0 : i32
    %c0_i32_0 = arith.constant 0 : i32
    %c0_i32_1 = arith.constant 0 : i32
    return %c0_i32, %c0_i32_0 : i32, i32
  }
  func.func @transform_4(%arg0: i32, %arg1: i32) -> (i32, i32) {
    %c0_i32 = arith.constant 0 : i32
    %c0_i32_0 = arith.constant 0 : i32
    %c0_i32_1 = arith.constant 0 : i32
    return %c0_i32, %c0_i32_0 : i32, i32
  }
  func.func @transform_5(%arg0: i32, %arg1: i32) -> (i32, i32) {
    %c0_i32 = arith.constant 0 : i32
    %c0_i32_0 = arith.constant 0 : i32
    %c0_i32_1 = arith.constant 0 : i32
    return %c0_i32, %c0_i32_0 : i32, i32
  }
  func.func @transform_6(%arg0: i32, %arg1: i32) -> (i32, i32) {
    %c0_i32 = arith.constant 0 : i32
    %c0_i32_0 = arith.constant 0 : i32
    %c0_i32_1 = arith.constant 0 : i32
    return %c0_i32, %c0_i32_0 : i32, i32
  }
  func.func @transform_7(%arg0: i32, %arg1: i32) -> (i32, i32, i32) {
    %c0_i32 = arith.constant 0 : i32
    %c0_i32_0 = arith.constant 0 : i32
    return %arg0, %arg1, %c0_i32 : i32, i32, i32
  }
}

</mosaic_0001>

<llo_original>
// kernel: _lambda_.7
$region0: #{_lambda_.7}
  #allocation0 [shape = 'u32[]', space=smem, size = 0x4, offset = 0x4, fixed_abs, tag = 'smem constant byte address 0x4 - core index']
  #allocation1 [shape = 'u32[144,128]{1,0:T(1,128)}', space=vmem, size = 0x12000, scoped, tag = 'internal scratch']
  %s0 = inlined_call_operand.vmem [shape: f32[2,8,32], index: 0, kind: input, shape index: {}]
  %s1 = inlined_call_operand.vmem [shape: f32[1,16,32], index: 1, kind: input, shape index: {}]
  %s2 = inlined_call_operand.vmem [shape: f32[1,32], index: 2, kind: input, shape index: {}]
  %s3 = inlined_call_operand.vmem [shape: f32[1,32], index: 3, kind: input, shape index: {}]
  %s4 = inlined_call_operand.vmem [shape: f32[2,8,32], index: 4, kind: output, shape index: {}]
  %s5 = sld [smem:[#allocation0]]
  $region49: #{_lambda_.7} parent=0
    _
  %s7 = ssub.s32 1, %s5
  %s8 = scalar_select 0, %s7, %s5
  loop: start=0, step=1, limit=4
  $region2: #{_lambda_.7} parent=0 // loop_pre_header
    _
  $region3: #{_lambda_.7} parent=0 // loop_header
    %s10 = sphi 0, %s14
    %p11 = scmp.ge.s32.totalorder %s10, 4
    %s17 = sphi 0, %s29
    %s18 = sphi 0, %s25
    %s19 = sphi 0, %s17
    %s20 = sphi 0, %s18
    %s21 = sphi 0, %s19
    %s22 = sphi 0, %s20
    %s34 = sphi 0, %s36
    %s37 = sphi 0, %s34
    %s38 = sphi 0, %s37
    %s54 = sphi 0, %s38
    %s60 = sphi 0, %s62
    %s63 = sphi 0, %s60
    %s64 = sphi 0, %s63
    %s80 = sphi 0, %s64
    %s84 = sphi 0, %s84
    %s86 = sphi 0, %s84
    %s87 = sphi 0, %s86
    %s101 = sphi 0, %s87
    %s105 = sphi 0, %s105
    %s107 = sphi 0, %s105
    %s108 = sphi 0, %s107
    %s122 = sphi 0, %s108
    %s130 = sphi 0, %s132
    %s133 = sphi 0, %s130
    %s134 = sphi 0, %s133
    %s150 = sphi 0, %s134
  $region4: #{_lambda_.7} parent=0 // loop_header_branch
    %13 = sbr.rel (%p11) target = $region8
  $region5: #{_lambda_.7} parent=0 // loop_body
    %s15 = ssub.s32 %s10, 1
    %s16 = ssub.s32 %s10, 2
    %s23 = sadd.s32 1, %s18
    %p24 = scmp.ge.s32.totalorder %s23, 1
    %s25 = scalar_select %p24, 0, %s23
    %s26 = sadd.s32 1, %s17
    %s27 = scalar_select %p24, %s26, %s17
    %p28 = scmp.ge.s32.totalorder %s27, 2
    %s29 = scalar_select %p28, 0, %s27
    %s30 = ssub.s32 %s17, %s29
    %s31 = ssub.s32 %s18, %s25
    %s32 = sor.u32 %s30, %s31
    %p33 = scmp.eq.s32.totalorder %s32, 0
    %s35 = sadd.s32 %s34, 1
    %s36 = scalar_select %p33, %s34, %s35
    %p39 = pneg %p33
    %p40 = scmp.eq.s32.totalorder %s10, 1
    %p41 = por %p39, %p40
    %p42 = scmp.ne.s32.totalorder %s34, %s37
    %p43 = scmp.eq.s32.totalorder %s10, 0
    %p44 = por %p42, %p43
    %p45 = scmp.ne.s32.totalorder %s34, %s37
    %p46 = scmp.eq.s32.totalorder %s15, 1
    %p47 = por %p45, %p46
    %p48 = scmp.ne.s32.totalorder %s37, %s38
    %p49 = scmp.eq.s32.totalorder %s15, 0
    %p50 = por %p48, %p49
    %p51 = scmp.ne.s32.totalorder %s37, %s38
    %p52 = scmp.eq.s32.totalorder %s16, 1
    %p53 = por %p51, %p52
    %p55 = scmp.ne.s32.totalorder %s38, %s54
    %p56 = scmp.eq.s32.totalorder %s16, 0
    %p57 = por %p55, %p56
    %s58 = ssub.s32 %s18, %s25
    %p59 = scmp.eq.s32.totalorder %s58, 0
    %s61 = sadd.s32 %s60, 1
    %s62 = scalar_select %p59, %s60, %s61
    %p65 = pneg %p59
    %p66 = scmp.eq.s32.totalorder %s10, 1
    %p67 = por %p65, %p66
    %p68 = scmp.ne.s32.totalorder %s60, %s63
    %p69 = scmp.eq.s32.totalorder %s10, 0
    %p70 = por %p68, %p69
    %p71 = scmp.ne.s32.totalorder %s60, %s63
    %p72 = scmp.eq.s32.totalorder %s15, 1
    %p73 = por %p71, %p72
    %p74 = scmp.ne.s32.totalorder %s63, %s64
    %p75 = scmp.eq.s32.totalorder %s15, 0
    %p76 = por %p74, %p75
    %p77 = scmp.ne.s32.totalorder %s63, %s64
    %p78 = scmp.eq.s32.totalorder %s16, 1
    %p79 = por %p77, %p78
    %p81 = scmp.ne.s32.totalorder %s64, %s80
    %p82 = scmp.eq.s32.totalorder %s16, 0
    %p83 = por %p81, %p82
    %s85 = sadd.s32 %s84, 1
    %p88 = scmp.eq.s32.totalorder %s10, 1
    %p89 = scmp.ne.s32.totalorder %s84, %s86
    %p90 = scmp.eq.s32.totalorder %s10, 0
    %p91 = por %p89, %p90
    %p92 = scmp.ne.s32.totalorder %s84, %s86
    %p93 = scmp.eq.s32.totalorder %s15, 1
    %p94 = por %p92, %p93
    %p95 = scmp.ne.s32.totalorder %s86, %s87
    %p96 = scmp.eq.s32.totalorder %s15, 0
    %p97 = por %p95, %p96
    %p98 = scmp.ne.s32.totalorder %s86, %s87
    %p99 = scmp.eq.s32.totalorder %s16, 1
    %p100 = por %p98, %p99
    %p102 = scmp.ne.s32.totalorder %s87, %s101
    %p103 = scmp.eq.s32.totalorder %s16, 0
    %p104 = por %p102, %p103
    %s106 = sadd.s32 %s105, 1
    %p109 = scmp.eq.s32.totalorder %s10, 1
    %p110 = scmp.ne.s32.totalorder %s105, %s107
    %p111 = scmp.eq.s32.totalorder %s10, 0
    %p112 = por %p110, %p111
    %p113 = scmp.ne.s32.totalorder %s105, %s107
    %p114 = scmp.eq.s32.totalorder %s15, 1
    %p115 = por %p113, %p114
    %p116 = scmp.ne.s32.totalorder %s107, %s108
    %p117 = scmp.eq.s32.totalorder %s15, 0
    %p118 = por %p116, %p117
    %p119 = scmp.ne.s32.totalorder %s107, %s108
    %p120 = scmp.eq.s32.totalorder %s16, 1
    %p121 = por %p119, %p120
    %p123 = scmp.ne.s32.totalorder %s108, %s122
    %p124 = scmp.eq.s32.totalorder %s16, 0
    %p125 = por %p123, %p124
    %s126 = ssub.s32 %s17, %s29
    %s127 = ssub.s32 %s18, %s25
    %s128 = sor.u32 %s126, %s127
    %p129 = scmp.eq.s32.totalorder %s128, 0
    %s131 = sadd.s32 %s130, 1
    %s132 = scalar_select %p129, %s130, %s131
    %p135 = pneg %p129
    %p136 = scmp.eq.s32.totalorder %s10, 1
    %p137 = por %p135, %p136
    %p138 = scmp.ne.s32.totalorder %s130, %s133
    %p139 = scmp.eq.s32.totalorder %s10, 0
    %p140 = por %p138, %p139
    %p141 = scmp.ne.s32.totalorder %s130, %s133
    %p142 = scmp.eq.s32.totalorder %s15, 1
    %p143 = por %p141, %p142
    %p144 = scmp.ne.s32.totalorder %s133, %s134
    %p145 = scmp.eq.s32.totalorder %s15, 0
    %p146 = por %p144, %p145
    %p147 = scmp.ne.s32.totalorder %s133, %s134
    %p148 = scmp.eq.s32.totalorder %s16, 1
    %p149 = por %p147, %p148
    %p151 = scmp.ne.s32.totalorder %s134, %s150
    %p152 = scmp.eq.s32.totalorder %s16, 0
    %p153 = por %p151, %p152
    %p154 = scmp.le.s32.totalorder 1, %s10
    %p155 = scmp.lt.s32.totalorder %s10, 3
    %p156 = pnand %p154, %p155
    %p157 = pneg %p156
    // Predicated region
    $region9: #{_lambda_.7} parent=5 // pred_check
      _
    $region10: #{_lambda_.7} parent=5 // pred_check_branch
      %159 = sbr.rel (%p156) target = $region12
    $region11: #{_lambda_.7} parent=5 // pred_region
      %s160 = ssub.s32 %s10, 1
      // Predicated region
      $region13: #{_lambda_.7} parent=11 // pred_check
        %p161 = pneg %p76
      $region14: #{_lambda_.7} parent=11 // pred_check_branch
        %163 = sbr.rel (%p161) target = $region16
      $region15: #{_lambda_.7} parent=11 // pred_region
        %p164 = scmp.lt.s32.totalorder %s20, 1
        %s165 = scalar_select %p164, %s20, 1
        %s166 = smul.addr %s165, 8
        %s167 = scalar_lea.vmem %s1, %s166
      $region16: #{_lambda_.7} parent=11 // pred_fallthru
        _
      // Predicated region
      $region17: #{_lambda_.7} parent=11 // pred_check
        %p168 = pneg %p97
      $region18: #{_lambda_.7} parent=11 // pred_check_branch
        %170 = sbr.rel (%p168) target = $region20
      $region19: #{_lambda_.7} parent=11 // pred_region
        _
      $region20: #{_lambda_.7} parent=11 // pred_fallthru
        _
      // Predicated region
      $region21: #{_lambda_.7} parent=11 // pred_check
        %p171 = pneg %p118
      $region22: #{_lambda_.7} parent=11 // pred_check_branch
        %173 = sbr.rel (%p171) target = $region24
      $region23: #{_lambda_.7} parent=11 // pred_region
        _
      $region24: #{_lambda_.7} parent=11 // pred_fallthru
        _
    $region12: #{_lambda_.7} parent=5 // pred_fallthru
      _
    %p174 = scmp.lt.s32.totalorder %s10, 2
    // Predicated region
    $region25: #{_lambda_.7} parent=5 // pred_check
      %p175 = pneg %p174
    $region26: #{_lambda_.7} parent=5 // pred_check_branch
      %177 = sbr.rel (%p175) target = $region28
    $region27: #{_lambda_.7} parent=5 // pred_region
      // Predicated region
      $region29: #{_lambda_.7} parent=27 // pred_check
        %p178 = pneg %p44
      $region30: #{_lambda_.7} parent=27 // pred_check_branch
        %180 = sbr.rel (%p178) target = $region32
      $region31: #{_lambda_.7} parent=27 // pred_region
        %p181 = scmp.lt.s32.totalorder %s17, 1
        %s182 = scalar_select %p181, %s17, 1
        %p183 = scmp.lt.s32.totalorder %s18, 0
        %s184 = scalar_select %p183, %s18, 0
        %s185 = sadd.s32 %s184, %s182
        %s186 = smul.addr %s185, 8
        %s187 = scalar_lea.vmem %s0, %s186
      $region32: #{_lambda_.7} parent=27 // pred_fallthru
        _
    $region28: #{_lambda_.7} parent=5 // pred_fallthru
      _
    %p188 = scmp.le.s32.totalorder 1, %s10
    %p189 = scmp.lt.s32.totalorder %s10, 3
    %p190 = pnand %p188, %p189
    %p191 = pneg %p190
    // Predicated region
    $region33: #{_lambda_.7} parent=5 // pred_check
      _
    $region34: #{_lambda_.7} parent=5 // pred_check_branch
      %193 = sbr.rel (%p190) target = $region36
    $region35: #{_lambda_.7} parent=5 // pred_region
      %s194 = ssub.s32 %s10, 1
      %p195 = scmp.lt.s32.totalorder %s19, 1
      %s196 = scalar_select %p195, %s19, 1
      %p197 = scmp.lt.s32.totalorder %s20, 0
      %s198 = scalar_select %p197, %s20, 0
      %s199 = sadd.s32 %s198, %s196
      %s200 = smul.addr %s199, 8
      %s201 = scalar_lea.vmem %s0, %s200
      %p202 = pneg %p50
      %p203 = pneg %p47
      %p204 = scmp.lt.s32.totalorder %s20, 1
      %s205 = scalar_select %p204, %s20, 1
      %s206 = smul.addr %s205, 8
      %s207 = scalar_lea.vmem %s1, %s206
      %p208 = pneg %p76
      %p209 = pneg %p73
      %p210 = pneg %p97
      %p211 = pneg %p94
      %p212 = pneg %p118
      %p213 = pneg %p115
      %p214 = pneg %p146
      %p215 = pneg %p143
      %p216 = scmp.lt.s32.totalorder %s19, 1
      %s217 = scalar_select %p216, %s19, 1
      %p218 = scmp.lt.s32.totalorder %s20, 0
      %s219 = scalar_select %p218, %s20, 0
      %s220 = sadd.s32 %s219, %s217
      %s221 = smul.addr %s220, 8
      %s222 = scalar_lea.vmem %s4, %s221
      %p223 = scmp.lt.s32.totalorder %s19, 1
      %s224 = scalar_select %p223, %s19, 1
      %p225 = scmp.lt.s32.totalorder %s20, 0
      %s226 = scalar_select %p225, %s20, 0
      %s227 = sadd.s32 %s226, %s224
      %s228 = smul.addr %s227, 8
      %s229 = scalar_lea.vmem %s0, %s228
      %p230 = scmp.lt.s32.totalorder %s20, 1
      %s231 = scalar_select %p230, %s20, 1
      %s232 = smul.addr %s231, 8
      %s233 = scalar_lea.vmem %s1, %s232
      %p234 = scmp.lt.s32.totalorder %s19, 1
      %s235 = scalar_select %p234, %s19, 1
      %p236 = scmp.lt.s32.totalorder %s20, 0
      %s237 = scalar_select %p236, %s20, 0
      %s238 = sadd.s32 %s237, %s235
      %s239 = smul.addr %s238, 8
      %s240 = scalar_lea.vmem %s4, %s239
      %v241 = vld [vmem:[%s229] sm:$0xff]
      %v242 = vld [vmem:[%s233] sm:$0xff]
      %v243 = vadd.f32 %v241, %v242
      %v244 = vld [vmem:[%s2] sm:$0x1]
      %v245 = vld [vmem:[%s3] sm:$0x1]
      %vm246 = vcmask 261120
      %v247 = vsel %vm246, %v243, 0.0
      %248 = vadd.xlane.f32.xlu0 %v247
      %v249 = vpop.xlane.xlu0 %248
      %v250 = vrcp.pop 32.0
      %v251 = vmul.f32 %v249, %v250
      %v252 = vsub.f32 %v243, %v251
      %v253 = vmul.f32 %v252, %v252
      %v254 = vsel %vm246, %v253, 0.0
      %255 = vadd.xlane.f32.xlu0 %v254
      %v256 = vpop.xlane.xlu0 %255
      %v257 = vmul.f32 %v256, %v250
      %v258 = vadd.f32 %v257, 1e-05
      %v259 = vrsqrt.pop %v258
      %v260 = vmul.f32 %v252, %v259
      %v262 = vlaneseq
      %v263 = vshrl.u32 %v262, 7
      %v264 = vsub.s32 0, %v263
      %v265 = vrot.slane %v244, %v264
      %v267 = vmul.f32 %v260, %v265
      %v269 = vlaneseq
      %v270 = vshrl.u32 %v269, 7
      %v271 = vsub.s32 0, %v270
      %v272 = vrot.slane %v245, %v271
      %v274 = vadd.f32 %v267, %v272
      %275 = vst.msk [vmem:[%s240] sm:$0xff] %vm246, %v274
      %p276 = scmp.lt.s32.totalorder %s19, 1
      %s277 = scalar_select %p276, %s19, 1
      %p278 = scmp.lt.s32.totalorder %s20, 0
      %s279 = scalar_select %p278, %s20, 0
      %s280 = sadd.s32 %s279, %s277
      %s281 = smul.addr %s280, 8
      %s282 = scalar_lea.vmem %s4, %s281
      // Predicated region
      $region37: #{_lambda_.7} parent=35 // pred_check
        %p283 = pneg %p143
      $region38: #{_lambda_.7} parent=35 // pred_check_branch
        %285 = sbr.rel (%p283) target = $region40
      $region39: #{_lambda_.7} parent=35 // pred_region
        _
      $region40: #{_lambda_.7} parent=35 // pred_fallthru
        _
    $region36: #{_lambda_.7} parent=5 // pred_fallthru
      _
    %p286 = scmp.le.s32.totalorder 2, %s10
    // Predicated region
    $region41: #{_lambda_.7} parent=5 // pred_check
      %p287 = pneg %p286
    $region42: #{_lambda_.7} parent=5 // pred_check_branch
      %289 = sbr.rel (%p287) target = $region44
    $region43: #{_lambda_.7} parent=5 // pred_region
      %s290 = ssub.s32 %s10, 2
      // Predicated region
      $region45: #{_lambda_.7} parent=43 // pred_check
        %p291 = pneg %p149
      $region46: #{_lambda_.7} parent=43 // pred_check_branch
        %293 = sbr.rel (%p291) target = $region48
      $region47: #{_lambda_.7} parent=43 // pred_region
        %p294 = scmp.lt.s32.totalorder %s21, 1
        %s295 = scalar_select %p294, %s21, 1
        %p296 = scmp.lt.s32.totalorder %s22, 0
        %s297 = scalar_select %p296, %s22, 0
        %s298 = sadd.s32 %s297, %s295
        %s299 = smul.addr %s298, 8
        %s300 = scalar_lea.vmem %s4, %s299
      $region48: #{_lambda_.7} parent=43 // pred_fallthru
        _
    $region44: #{_lambda_.7} parent=5 // pred_fallthru
      _
  $region6: #{_lambda_.7} parent=0 // loop_footer
    %s14 = sadd.s32 1, %s10
  $region7: #{_lambda_.7} parent=0 // loop_footer_branch
    %9 = sbr.rel target = $region3
  $region8: #{_lambda_.7} parent=0 // loop_exit
    _

// kernel: _lambda_.8
$region0: #{_lambda_.8}
  #allocation0 [shape = 'u32[]', space=smem, size = 0x4, offset = 0x4, fixed_abs, tag = 'smem constant byte address 0x4 - core index']
  #allocation1 [shape = 'u32[144,128]{1,0:T(1,128)}', space=vmem, size = 0x12000, scoped, tag = 'internal scratch']
  %s0 = inlined_call_operand.vmem [shape: f32[2,8,32], index: 0, kind: input, shape index: {}]
  %s1 = inlined_call_operand.vmem [shape: f32[1,32], index: 1, kind: input, shape index: {}]
  %s2 = inlined_call_operand.vmem [shape: f32[1,32], index: 2, kind: input, shape index: {}]
  %s3 = inlined_call_operand.vmem [shape: f32[32,96], index: 3, kind: input, shape index: {}]
  %s4 = inlined_call_operand.vmem [shape: f32[2,8,96], index: 4, kind: output, shape index: {}]
  %s5 = sld [smem:[#allocation0]]
  $region49: #{_lambda_.8} parent=0
    _
  %s7 = ssub.s32 1, %s5
  %s8 = scalar_select 0, %s7, %s5
  loop: start=0, step=1, limit=4
  $region2: #{_lambda_.8} parent=0 // loop_pre_header
    _
  $region3: #{_lambda_.8} parent=0 // loop_header
    %s10 = sphi 0, %s14
    %p11 = scmp.ge.s32.totalorder %s10, 4
    %s17 = sphi 0, %s29
    %s18 = sphi 0, %s25
    %s19 = sphi 0, %s17
    %s20 = sphi 0, %s18
    %s21 = sphi 0, %s19
    %s22 = sphi 0, %s20
    %s34 = sphi 0, %s36
    %s37 = sphi 0, %s34
    %s38 = sphi 0, %s37
    %s54 = sphi 0, %s38
    %s58 = sphi 0, %s58
    %s60 = sphi 0, %s58
    %s61 = sphi 0, %s60
    %s75 = sphi 0, %s61
    %s79 = sphi 0, %s79
    %s81 = sphi 0, %s79
    %s82 = sphi 0, %s81
    %s96 = sphi 0, %s82
    %s100 = sphi 0, %s100
    %s102 = sphi 0, %s100
    %s103 = sphi 0, %s102
    %s117 = sphi 0, %s103
    %s125 = sphi 0, %s127
    %s128 = sphi 0, %s125
    %s129 = sphi 0, %s128
    %s145 = sphi 0, %s129
  $region4: #{_lambda_.8} parent=0 // loop_header_branch
    %13 = sbr.rel (%p11) target = $region8
  $region5: #{_lambda_.8} parent=0 // loop_body
    %s15 = ssub.s32 %s10, 1
    %s16 = ssub.s32 %s10, 2
    %s23 = sadd.s32 1, %s18
    %p24 = scmp.ge.s32.totalorder %s23, 1
    %s25 = scalar_select %p24, 0, %s23
    %s26 = sadd.s32 1, %s17
    %s27 = scalar_select %p24, %s26, %s17
    %p28 = scmp.ge.s32.totalorder %s27, 2
    %s29 = scalar_select %p28, 0, %s27
    %s30 = ssub.s32 %s17, %s29
    %s31 = ssub.s32 %s18, %s25
    %s32 = sor.u32 %s30, %s31
    %p33 = scmp.eq.s32.totalorder %s32, 0
    %s35 = sadd.s32 %s34, 1
    %s36 = scalar_select %p33, %s34, %s35
    %p39 = pneg %p33
    %p40 = scmp.eq.s32.totalorder %s10, 1
    %p41 = por %p39, %p40
    %p42 = scmp.ne.s32.totalorder %s34, %s37
    %p43 = scmp.eq.s32.totalorder %s10, 0
    %p44 = por %p42, %p43
    %p45 = scmp.ne.s32.totalorder %s34, %s37
    %p46 = scmp.eq.s32.totalorder %s15, 1
    %p47 = por %p45, %p46
    %p48 = scmp.ne.s32.totalorder %s37, %s38
    %p49 = scmp.eq.s32.totalorder %s15, 0
    %p50 = por %p48, %p49
    %p51 = scmp.ne.s32.totalorder %s37, %s38
    %p52 = scmp.eq.s32.totalorder %s16, 1
    %p53 = por %p51, %p52
    %p55 = scmp.ne.s32.totalorder %s38, %s54
    %p56 = scmp.eq.s32.totalorder %s16, 0
    %p57 = por %p55, %p56
    %s59 = sadd.s32 %s58, 1
    %p62 = scmp.eq.s32.totalorder %s10, 1
    %p63 = scmp.ne.s32.totalorder %s58, %s60
    %p64 = scmp.eq.s32.totalorder %s10, 0
    %p65 = por %p63, %p64
    %p66 = scmp.ne.s32.totalorder %s58, %s60
    %p67 = scmp.eq.s32.totalorder %s15, 1
    %p68 = por %p66, %p67
    %p69 = scmp.ne.s32.totalorder %s60, %s61
    %p70 = scmp.eq.s32.totalorder %s15, 0
    %p71 = por %p69, %p70
    %p72 = scmp.ne.s32.totalorder %s60, %s61
    %p73 = scmp.eq.s32.totalorder %s16, 1
    %p74 = por %p72, %p73
    %p76 = scmp.ne.s32.totalorder %s61, %s75
    %p77 = scmp.eq.s32.totalorder %s16, 0
    %p78 = por %p76, %p77
    %s80 = sadd.s32 %s79, 1
    %p83 = scmp.eq.s32.totalorder %s10, 1
    %p84 = scmp.ne.s32.totalorder %s79, %s81
    %p85 = scmp.eq.s32.totalorder %s10, 0
    %p86 = por %p84, %p85
    %p87 = scmp.ne.s32.totalorder %s79, %s81
    %p88 = scmp.eq.s32.totalorder %s15, 1
    %p89 = por %p87, %p88
    %p90 = scmp.ne.s32.totalorder %s81, %s82
    %p91 = scmp.eq.s32.totalorder %s15, 0
    %p92 = por %p90, %p91
    %p93 = scmp.ne.s32.totalorder %s81, %s82
    %p94 = scmp.eq.s32.totalorder %s16, 1
    %p95 = por %p93, %p94
    %p97 = scmp.ne.s32.totalorder %s82, %s96
    %p98 = scmp.eq.s32.totalorder %s16, 0
    %p99 = por %p97, %p98
    %s101 = sadd.s32 %s100, 1
    %p104 = scmp.eq.s32.totalorder %s10, 1
    %p105 = scmp.ne.s32.totalorder %s100, %s102
    %p106 = scmp.eq.s32.totalorder %s10, 0
    %p107 = por %p105, %p106
    %p108 = scmp.ne.s32.totalorder %s100, %s102
    %p109 = scmp.eq.s32.totalorder %s15, 1
    %p110 = por %p108, %p109
    %p111 = scmp.ne.s32.totalorder %s102, %s103
    %p112 = scmp.eq.s32.totalorder %s15, 0
    %p113 = por %p111, %p112
    %p114 = scmp.ne.s32.totalorder %s102, %s103
    %p115 = scmp.eq.s32.totalorder %s16, 1
    %p116 = por %p114, %p115
    %p118 = scmp.ne.s32.totalorder %s103, %s117
    %p119 = scmp.eq.s32.totalorder %s16, 0
    %p120 = por %p118, %p119
    %s121 = ssub.s32 %s17, %s29
    %s122 = ssub.s32 %s18, %s25
    %s123 = sor.u32 %s121, %s122
    %p124 = scmp.eq.s32.totalorder %s123, 0
    %s126 = sadd.s32 %s125, 1
    %s127 = scalar_select %p124, %s125, %s126
    %p130 = pneg %p124
    %p131 = scmp.eq.s32.totalorder %s10, 1
    %p132 = por %p130, %p131
    %p133 = scmp.ne.s32.totalorder %s125, %s128
    %p134 = scmp.eq.s32.totalorder %s10, 0
    %p135 = por %p133, %p134
    %p136 = scmp.ne.s32.totalorder %s125, %s128
    %p137 = scmp.eq.s32.totalorder %s15, 1
    %p138 = por %p136, %p137
    %p139 = scmp.ne.s32.totalorder %s128, %s129
    %p140 = scmp.eq.s32.totalorder %s15, 0
    %p141 = por %p139, %p140
    %p142 = scmp.ne.s32.totalorder %s128, %s129
    %p143 = scmp.eq.s32.totalorder %s16, 1
    %p144 = por %p142, %p143
    %p146 = scmp.ne.s32.totalorder %s129, %s145
    %p147 = scmp.eq.s32.totalorder %s16, 0
    %p148 = por %p146, %p147
    %p149 = scmp.le.s32.totalorder 1, %s10
    %p150 = scmp.lt.s32.totalorder %s10, 3
    %p151 = pnand %p149, %p150
    %p152 = pneg %p151
    // Predicated region
    $region9: #{_lambda_.8} parent=5 // pred_check
      _
    $region10: #{_lambda_.8} parent=5 // pred_check_branch
      %154 = sbr.rel (%p151) target = $region12
    $region11: #{_lambda_.8} parent=5 // pred_region
      %s155 = ssub.s32 %s10, 1
      // Predicated region
      $region13: #{_lambda_.8} parent=11 // pred_check
        %p156 = pneg %p71
      $region14: #{_lambda_.8} parent=11 // pred_check_branch
        %158 = sbr.rel (%p156) target = $region16
      $region15: #{_lambda_.8} parent=11 // pred_region
        _
      $region16: #{_lambda_.8} parent=11 // pred_fallthru
        _
      // Predicated region
      $region17: #{_lambda_.8} parent=11 // pred_check
        %p159 = pneg %p92
      $region18: #{_lambda_.8} parent=11 // pred_check_branch
        %161 = sbr.rel (%p159) target = $region20
      $region19: #{_lambda_.8} parent=11 // pred_region
        _
      $region20: #{_lambda_.8} parent=11 // pred_fallthru
        _
      // Predicated region
      $region21: #{_lambda_.8} parent=11 // pred_check
        %p162 = pneg %p113
      $region22: #{_lambda_.8} parent=11 // pred_check_branch
        %164 = sbr.rel (%p162) target = $region24
      $region23: #{_lambda_.8} parent=11 // pred_region
        _
      $region24: #{_lambda_.8} parent=11 // pred_fallthru
        _
    $region12: #{_lambda_.8} parent=5 // pred_fallthru
      _
    %p165 = scmp.lt.s32.totalorder %s10, 2
    // Predicated region
    $region25: #{_lambda_.8} parent=5 // pred_check
      %p166 = pneg %p165
    $region26: #{_lambda_.8} parent=5 // pred_check_branch
      %168 = sbr.rel (%p166) target = $region28
    $region27: #{_lambda_.8} parent=5 // pred_region
      // Predicated region
      $region29: #{_lambda_.8} parent=27 // pred_check
        %p169 = pneg %p44
      $region30: #{_lambda_.8} parent=27 // pred_check_branch
        %171 = sbr.rel (%p169) target = $region32
      $region31: #{_lambda_.8} parent=27 // pred_region
        %p172 = scmp.lt.s32.totalorder %s17, 1
        %s173 = scalar_select %p172, %s17, 1
        %p174 = scmp.lt.s32.totalorder %s18, 0
        %s175 = scalar_select %p174, %s18, 0
        %s176 = sadd.s32 %s175, %s173
        %s177 = smul.addr %s176, 8
        %s178 = scalar_lea.vmem %s0, %s177
      $region32: #{_lambda_.8} parent=27 // pred_fallthru
        _
    $region28: #{_lambda_.8} parent=5 // pred_fallthru
      _
    %p179 = scmp.le.s32.totalorder 1, %s10
    %p180 = scmp.lt.s32.totalorder %s10, 3
    %p181 = pnand %p179, %p180
    %p182 = pneg %p181
    // Predicated region
    $region33: #{_lambda_.8} parent=5 // pred_check
      _
    $region34: #{_lambda_.8} parent=5 // pred_check_branch
      %184 = sbr.rel (%p181) target = $region36
    $region35: #{_lambda_.8} parent=5 // pred_region
      %s185 = ssub.s32 %s10, 1
      %p186 = scmp.lt.s32.totalorder %s19, 1
      %s187 = scalar_select %p186, %s19, 1
      %p188 = scmp.lt.s32.totalorder %s20, 0
      %s189 = scalar_select %p188, %s20, 0
      %s190 = sadd.s32 %s189, %s187
      %s191 = smul.addr %s190, 8
      %s192 = scalar_lea.vmem %s0, %s191
      %p193 = pneg %p50
      %p194 = pneg %p47
      %p195 = pneg %p71
      %p196 = pneg %p68
      %p197 = pneg %p92
      %p198 = pneg %p89
      %p199 = pneg %p113
      %p200 = pneg %p110
      %p201 = pneg %p141
      %p202 = pneg %p138
      %p203 = scmp.lt.s32.totalorder %s19, 1
      %s204 = scalar_select %p203, %s19, 1
      %p205 = scmp.lt.s32.totalorder %s20, 0
      %s206 = scalar_select %p205, %s20, 0
      %s207 = sadd.s32 %s206, %s204
      %s208 = smul.addr %s207, 8
      %s209 = scalar_lea.vmem %s4, %s208
      %p210 = scmp.lt.s32.totalorder %s19, 1
      %s211 = scalar_select %p210, %s19, 1
      %p212 = scmp.lt.s32.totalorder %s20, 0
      %s213 = scalar_select %p212, %s20, 0
      %s214 = sadd.s32 %s213, %s211
      %s215 = smul.addr %s214, 8
      %s216 = scalar_lea.vmem %s0, %s215
      %p217 = scmp.lt.s32.totalorder %s19, 1
      %s218 = scalar_select %p217, %s19, 1
      %p219 = scmp.lt.s32.totalorder %s20, 0
      %s220 = scalar_select %p219, %s20, 0
      %s221 = sadd.s32 %s220, %s218
      %s222 = smul.addr %s221, 8
      %s223 = scalar_lea.vmem %s4, %s222
      %v224 = vld [vmem:[%s216] sm:$0xff]
      %v225 = vld [vmem:[%s1] sm:$0x1]
      %v226 = vld [vmem:[%s2] sm:$0x1]
      %vm227 = vcmask 261120
      %v228 = vsel %vm227, %v224, 0.0
      %229 = vadd.xlane.f32.xlu0 %v228
      %v230 = vpop.xlane.xlu0 %229
      %v231 = vrcp.pop 32.0
      %v232 = vmul.f32 %v230, %v231
      %v233 = vsub.f32 %v224, %v232
      %v234 = vmul.f32 %v233, %v233
      %v235 = vsel %vm227, %v234, 0.0
      %236 = vadd.xlane.f32.xlu0 %v235
      %v237 = vpop.xlane.xlu0 %236
      %v238 = vmul.f32 %v237, %v231
      %v239 = vadd.f32 %v238, 1e-05
      %v240 = vrsqrt.pop %v239
      %v241 = vmul.f32 %v233, %v240
      %v243 = vlaneseq
      %v244 = vshrl.u32 %v243, 7
      %v245 = vsub.s32 0, %v244
      %v246 = vrot.slane %v225, %v245
      %v248 = vmul.f32 %v241, %v246
      %v250 = vlaneseq
      %v251 = vshrl.u32 %v250, 7
      %v252 = vsub.s32 0, %v251
      %v253 = vrot.slane %v226, %v252
      %v255 = vadd.f32 %v248, %v253
      %v256 = vld [vmem:[%s3] sm:$0xff]
      %v257 = vld [vmem:[%s3 + $0x8] sm:$0xff]
      %v258 = vld [vmem:[%s3 + $0x10] sm:$0xff]
      %v259 = vld [vmem:[%s3 + $0x18] sm:$0xff]
      %v261 = vsel %vm227, %v255, 0
      %263 = vmatprep.subr.mxu0 0.0
      %v264 = vand.u32 %v256, 4294901760
      %265 = vmatpush1.msra.mxu0 %v264
      %266 = vmatprep.subr.mxu0 0.0
      %v267 = vand.u32 %v257, 4294901760
      %268 = vmatpush1.msra.mxu0 %v267
      %269 = vmatprep.subr.mxu0 0.0
      %v270 = vand.u32 %v258, 4294901760
      %271 = vmatpush1.msra.mxu0 %v270
      %272 = vmatprep.subr.mxu0 0.0
      %v273 = vand.u32 %v259, 4294901760
      %274 = vmatpush1.msra.mxu0 %v273
      %275 = vmatprep.subr.mxu0 0.0
      %276 = vmatpush1.msra.mxu0 0.0
      %277 = vmatprep.subr.mxu0 0.0
      %278 = vmatpush1.msra.mxu0 0.0
      %279 = vmatprep.subr.mxu0 0.0
      %280 = vmatpush1.msra.mxu0 0.0
      %281 = vmatprep.subr.mxu0 0.0
      %282 = vmatpush1.msra.mxu0 0.0
      %283 = vmatprep.subr.mxu0 0.0
      %284 = vmatpush1.msra.mxu0 0.0
      %285 = vmatprep.subr.mxu0 0.0
      %286 = vmatpush1.msra.mxu0 0.0
      %287 = vmatprep.subr.mxu0 0.0
      %288 = vmatpush1.msra.mxu0 0.0
      %289 = vmatprep.subr.mxu0 0.0
      %290 = vmatpush1.msra.mxu0 0.0
      %291 = vmatprep.subr.mxu0 0.0
      %292 = vmatpush1.msra.mxu0 0.0
      %293 = vmatprep.subr.mxu0 0.0
      %294 = vmatpush1.msra.mxu0 0.0
      %295 = vmatprep.subr.mxu0 0.0
      %296 = vmatpush1.msra.mxu0 0.0
      %297 = vmatprep.subr.mxu0 0.0
      %298 = vmatpush1.msra.mxu0 0.0
      %299 = vmatprep.subr.mxu0 0.0
      %300 = vmatpush1.msra.mxu0 0.0
      %301 = vmatprep.subr.mxu0 0.0
      %302 = vmatpush1.msra.mxu0 0.0
      %303 = vmatprep.subr.mxu0 0.0
      %304 = vmatpush1.msra.mxu0 0.0
      %305 = vmatprep.subr.mxu0 0.0
      %306 = vmatpush1.msra.mxu0 0.0
      %307 = vmatprep.subr.mxu0 0.0
      %308 = vmatpush1.msra.mxu0 0.0
      %309 = vmatprep.subr.mxu0 0.0
      %310 = vmatpush1.msra.mxu0 0.0
      %311 = vmatprep.subr.mxu0 0.0
      %312 = vmatpush1.msra.mxu0 0.0
      %313 = vmatprep.subr.mxu0 0.0
      %314 = vmatpush1.msra.mxu0 0.0
      %315 = vmatprep.subr.mxu0 0.0
      %316 = vmatpush1.msra.mxu0 0.0
      %317 = vmatprep.subr.mxu0 0.0
      %318 = vmatpush1.msra.mxu0 0.0
      %319 = vmatprep.subr.mxu0 0.0
      %320 = vmatpush1.msra.mxu0 0.0
      %321 = vmatprep.subr.mxu0 0.0
      %322 = vmatpush1.msra.mxu0 0.0
      %323 = vmatprep.subr.mxu0 0.0
      %324 = vmatpush1.msra.mxu0 0.0
      %325 = vmatprep.subr.mxu0 0.0
      %326 = vmatpush1.msra.mxu0 0.0
      %327 = vmatprep.subr.mxu0 0.0
      %328 = vmatpush1.msra.mxu0 0.0
      %329 = vmatprep.subr.mxu0 0.0
      %330 = vmatpush1.msra.mxu0 0.0
      %331 = vmatprep.mubr.f32.mxu0 0.0
      %v332 = vand.u32 %v261, 4294901760
      %v333 = vsub.f32 %v261, %v332
      %v334 = vand.u32 %v333, 4294901760
      %v335 = vsub.f32 %v333, %v334
      %v336 = vand.u32 %v335, 4294901760
      %337 = vmatmul.mubr.f32.gmra.mrb[0].mxu0 %v336
      %v338 = vpop.f32.mrb[0].mxu0
      %v339 = vadd.f32 0.0, %v338
      %v340 = vpop.f32.mrb[0].mxu0
      %341 = vdwg.mxu0
      %342 = vmatprep.subr.mxu0 0.0
      %v343 = vand.u32 %v256, 4294901760
      %v344 = vsub.f32 %v256, %v343
      %v345 = vand.u32 %v344, 4294901760
      %v346 = vsub.f32 %v344, %v345
      %v347 = vand.u32 %v346, 4294901760
      %348 = vmatpush1.msra.mxu0 %v347
      %349 = vmatprep.subr.mxu0 0.0
      %v350 = vand.u32 %v257, 4294901760
      %v351 = vsub.f32 %v257, %v350
      %v352 = vand.u32 %v351, 4294901760
      %v353 = vsub.f32 %v351, %v352
      %v354 = vand.u32 %v353, 4294901760
      %355 = vmatpush1.msra.mxu0 %v354
      %356 = vmatprep.subr.mxu0 0.0
      %v357 = vand.u32 %v258, 4294901760
      %v358 = vsub.f32 %v258, %v357
      %v359 = vand.u32 %v358, 4294901760
      %v360 = vsub.f32 %v358, %v359
      %v361 = vand.u32 %v360, 4294901760
      %362 = vmatpush1.msra.mxu0 %v361
      %363 = vmatprep.subr.mxu0 0.0
      %v364 = vand.u32 %v259, 4294901760
      %v365 = vsub.f32 %v259, %v364
      %v366 = vand.u32 %v365, 4294901760
      %v367 = vsub.f32 %v365, %v366
      %v368 = vand.u32 %v367, 4294901760
      %369 = vmatpush1.msra.mxu0 %v368
      %370 = vmatprep.subr.mxu0 0.0
      %371 = vmatpush1.msra.mxu0 0.0
      %372 = vmatprep.subr.mxu0 0.0
      %373 = vmatpush1.msra.mxu0 0.0
      %374 = vmatprep.subr.mxu0 0.0
      %375 = vmatpush1.msra.mxu0 0.0
      %376 = vmatprep.subr.mxu0 0.0
      %377 = vmatpush1.msra.mxu0 0.0
      %378 = vmatprep.subr.mxu0 0.0
      %379 = vmatpush1.msra.mxu0 0.0
      %380 = vmatprep.subr.mxu0 0.0
      %381 = vmatpush1.msra.mxu0 0.0
      %382 = vmatprep.subr.mxu0 0.0
      %383 = vmatpush1.msra.mxu0 0.0
      %384 = vmatprep.subr.mxu0 0.0
      %385 = vmatpush1.msra.mxu0 0.0
      %386 = vmatprep.subr.mxu0 0.0
      %387 = vmatpush1.msra.mxu0 0.0
      %388 = vmatprep.subr.mxu0 0.0
      %389 = vmatpush1.msra.mxu0 0.0
      %390 = vmatprep.subr.mxu0 0.0
      %391 = vmatpush1.msra.mxu0 0.0
      %392 = vmatprep.subr.mxu0 0.0
      %393 = vmatpush1.msra.mxu0 0.0
      %394 = vmatprep.subr.mxu0 0.0
      %395 = vmatpush1.msra.mxu0 0.0
      %396 = vmatprep.subr.mxu0 0.0
      %397 = vmatpush1.msra.mxu0 0.0
      %398 = vmatprep.subr.mxu0 0.0
      %399 = vmatpush1.msra.mxu0 0.0
      %400 = vmatprep.subr.mxu0 0.0
      %401 = vmatpush1.msra.mxu0 0.0
      %402 = vmatprep.subr.mxu0 0.0
      %403 = vmatpush1.msra.mxu0 0.0
      %404 = vmatprep.subr.mxu0 0.0
      %405 = vmatpush1.msra.mxu0 0.0
      %406 = vmatprep.subr.mxu0 0.0
      %407 = vmatpush1.msra.mxu0 0.0
      %408 = vmatprep.subr.mxu0 0.0
      %409 = vmatpush1.msra.mxu0 0.0
      %410 = vmatprep.subr.mxu0 0.0
      %411 = vmatpush1.msra.mxu0 0.0
      %412 = vmatprep.subr.mxu0 0.0
      %413 = vmatpush1.msra.mxu0 0.0
      %414 = vmatprep.subr.mxu0 0.0
      %415 = vmatpush1.msra.mxu0 0.0
      %416 = vmatprep.subr.mxu0 0.0
      %417 = vmatpush1.msra.mxu0 0.0
      %418 = vmatprep.subr.mxu0 0.0
      %419 = vmatpush1.msra.mxu0 0.0
      %420 = vmatprep.subr.mxu0 0.0
      %421 = vmatpush1.msra.mxu0 0.0
      %422 = vmatprep.subr.mxu0 0.0
      %423 = vmatpush1.msra.mxu0 0.0
      %424 = vmatprep.subr.mxu0 0.0
      %425 = vmatpush1.msra.mxu0 0.0
      %426 = vmatprep.mubr.f32.mxu0 0.0
      %v427 = vand.u32 %v261, 4294901760
      %428 = vmatmul.mubr.f32.gmra.mrb[0].mxu0 %v427
      %v429 = vpop.f32.mrb[0].mxu0
      %v430 = vadd.f32 %v339, %v429
      %v431 = vpop.f32.mrb[0].mxu0
      %432 = vdwg.mxu0
      %433 = vmatprep.subr.mxu0 0.0
      %v434 = vand.u32 %v256, 4294901760
      %v435 = vsub.f32 %v256, %v434
      %436 = vmatpush1.msra.mxu0 %v435
      %437 = vmatprep.subr.mxu0 0.0
      %v438 = vand.u32 %v257, 4294901760
      %v439 = vsub.f32 %v257, %v438
      %440 = vmatpush1.msra.mxu0 %v439
      %441 = vmatprep.subr.mxu0 0.0
      %v442 = vand.u32 %v258, 4294901760
      %v443 = vsub.f32 %v258, %v442
      %444 = vmatpush1.msra.mxu0 %v443
      %445 = vmatprep.subr.mxu0 0.0
      %v446 = vand.u32 %v259, 4294901760
      %v447 = vsub.f32 %v259, %v446
      %448 = vmatpush1.msra.mxu0 %v447
      %449 = vmatprep.subr.mxu0 0.0
      %450 = vmatpush1.msra.mxu0 0.0
      %451 = vmatprep.subr.mxu0 0.0
      %452 = vmatpush1.msra.mxu0 0.0
      %453 = vmatprep.subr.mxu0 0.0
      %454 = vmatpush1.msra.mxu0 0.0
      %455 = vmatprep.subr.mxu0 0.0
      %456 = vmatpush1.msra.mxu0 0.0
      %457 = vmatprep.subr.mxu0 0.0
      %458 = vmatpush1.msra.mxu0 0.0
      %459 = vmatprep.subr.mxu0 0.0
      %460 = vmatpush1.msra.mxu0 0.0
      %461 = vmatprep.subr.mxu0 0.0
      %462 = vmatpush1.msra.mxu0 0.0
      %463 = vmatprep.subr.mxu0 0.0
      %464 = vmatpush1.msra.mxu0 0.0
      %465 = vmatprep.subr.mxu0 0.0
      %466 = vmatpush1.msra.mxu0 0.0
      %467 = vmatprep.subr.mxu0 0.0
      %468 = vmatpush1.msra.mxu0 0.0
      %469 = vmatprep.subr.mxu0 0.0
      %470 = vmatpush1.msra.mxu0 0.0
      %471 = vmatprep.subr.mxu0 0.0
      %472 = vmatpush1.msra.mxu0 0.0
      %473 = vmatprep.subr.mxu0 0.0
      %474 = vmatpush1.msra.mxu0 0.0
      %475 = vmatprep.subr.mxu0 0.0
      %476 = vmatpush1.msra.mxu0 0.0
      %477 = vmatprep.subr.mxu0 0.0
      %478 = vmatpush1.msra.mxu0 0.0
      %479 = vmatprep.subr.mxu0 0.0
      %480 = vmatpush1.msra.mxu0 0.0
      %481 = vmatprep.subr.mxu0 0.0
      %482 = vmatpush1.msra.mxu0 0.0
      %483 = vmatprep.subr.mxu0 0.0
      %484 = vmatpush1.msra.mxu0 0.0
      %485 = vmatprep.subr.mxu0 0.0
      %486 = vmatpush1.msra.mxu0 0.0
      %487 = vmatprep.subr.mxu0 0.0
      %488 = vmatpush1.msra.mxu0 0.0
      %489 = vmatprep.subr.mxu0 0.0
      %490 = vmatpush1.msra.mxu0 0.0
      %491 = vmatprep.subr.mxu0 0.0
      %492 = vmatpush1.msra.mxu0 0.0
      %493 = vmatprep.subr.mxu0 0.0
      %494 = vmatpush1.msra.mxu0 0.0
      %495 = vmatprep.subr.mxu0 0.0
      %496 = vmatpush1.msra.mxu0 0.0
      %497 = vmatprep.subr.mxu0 0.0
      %498 = vmatpush1.msra.mxu0 0.0
      %499 = vmatprep.subr.mxu0 0.0
      %500 = vmatpush1.msra.mxu0 0.0
      %501 = vmatprep.subr.mxu0 0.0
      %502 = vmatpush1.msra.mxu0 0.0
      %503 = vmatprep.subr.mxu0 0.0
      %504 = vmatpush1.msra.mxu0 0.0
      %505 = vmatprep.mubr.f32.mxu0 0.0
      %v506 = vand.u32 %v261, 4294901760
      %v507 = vsub.f32 %v261, %v506
      %508 = vmatmul.mubr.f32.gmra.mrb[0].mxu0 %v507
      %v509 = vpop.f32.mrb[0].mxu0
      %v510 = vadd.f32 %v430, %v509
      %v511 = vpop.f32.mrb[0].mxu0
      %512 = vdwg.mxu0
      %513 = vmatprep.subr.mxu0 0.0
      %v514 = vand.u32 %v256, 4294901760
      %515 = vmatpush1.msra.mxu0 %v514
      %516 = vmatprep.subr.mxu0 0.0
      %v517 = vand.u32 %v257, 4294901760
      %518 = vmatpush1.msra.mxu0 %v517
      %519 = vmatprep.subr.mxu0 0.0
      %v520 = vand.u32 %v258, 4294901760
      %521 = vmatpush1.msra.mxu0 %v520
      %522 = vmatprep.subr.mxu0 0.0
      %v523 = vand.u32 %v259, 4294901760
      %524 = vmatpush1.msra.mxu0 %v523
      %525 = vmatprep.subr.mxu0 0.0
      %526 = vmatpush1.msra.mxu0 0.0
      %527 = vmatprep.subr.mxu0 0.0
      %528 = vmatpush1.msra.mxu0 0.0
      %529 = vmatprep.subr.mxu0 0.0
      %530 = vmatpush1.msra.mxu0 0.0
      %531 = vmatprep.subr.mxu0 0.0
      %532 = vmatpush1.msra.mxu0 0.0
      %533 = vmatprep.subr.mxu0 0.0
      %534 = vmatpush1.msra.mxu0 0.0
      %535 = vmatprep.subr.mxu0 0.0
      %536 = vmatpush1.msra.mxu0 0.0
      %537 = vmatprep.subr.mxu0 0.0
      %538 = vmatpush1.msra.mxu0 0.0
      %539 = vmatprep.subr.mxu0 0.0
      %540 = vmatpush1.msra.mxu0 0.0
      %541 = vmatprep.subr.mxu0 0.0
      %542 = vmatpush1.msra.mxu0 0.0
      %543 = vmatprep.subr.mxu0 0.0
      %544 = vmatpush1.msra.mxu0 0.0
      %545 = vmatprep.subr.mxu0 0.0
      %546 = vmatpush1.msra.mxu0 0.0
      %547 = vmatprep.subr.mxu0 0.0
      %548 = vmatpush1.msra.mxu0 0.0
      %549 = vmatprep.subr.mxu0 0.0
      %550 = vmatpush1.msra.mxu0 0.0
      %551 = vmatprep.subr.mxu0 0.0
      %552 = vmatpush1.msra.mxu0 0.0
      %553 = vmatprep.subr.mxu0 0.0
      %554 = vmatpush1.msra.mxu0 0.0
      %555 = vmatprep.subr.mxu0 0.0
      %556 = vmatpush1.msra.mxu0 0.0
      %557 = vmatprep.subr.mxu0 0.0
      %558 = vmatpush1.msra.mxu0 0.0
      %559 = vmatprep.subr.mxu0 0.0
      %560 = vmatpush1.msra.mxu0 0.0
      %561 = vmatprep.subr.mxu0 0.0
      %562 = vmatpush1.msra.mxu0 0.0
      %563 = vmatprep.subr.mxu0 0.0
      %564 = vmatpush1.msra.mxu0 0.0
      %565 = vmatprep.subr.mxu0 0.0
      %566 = vmatpush1.msra.mxu0 0.0
      %567 = vmatprep.subr.mxu0 0.0
      %568 = vmatpush1.msra.mxu0 0.0
      %569 = vmatprep.subr.mxu0 0.0
      %570 = vmatpush1.msra.mxu0 0.0
      %571 = vmatprep.subr.mxu0 0.0
      %572 = vmatpush1.msra.mxu0 0.0
      %573 = vmatprep.subr.mxu0 0.0
      %574 = vmatpush1.msra.mxu0 0.0
      %575 = vmatprep.subr.mxu0 0.0
      %576 = vmatpush1.msra.mxu0 0.0
      %577 = vmatprep.subr.mxu0 0.0
      %578 = vmatpush1.msra.mxu0 0.0
      %579 = vmatprep.subr.mxu0 0.0
      %580 = vmatpush1.msra.mxu0 0.0
      %581 = vmatprep.mubr.f32.mxu0 0.0
      %v582 = vand.u32 %v261, 4294901760
      %v583 = vsub.f32 %v261, %v582
      %v584 = vand.u32 %v583, 4294901760
      %585 = vmatmul.mubr.f32.gmra.mrb[0].mxu0 %v584
      %v586 = vpop.f32.mrb[0].mxu0
      %v587 = vadd.f32 %v510, %v586
      %v588 = vpop.f32.mrb[0].mxu0
      %589 = vdwg.mxu0
      %590 = vmatprep.subr.mxu0 0.0
      %v591 = vand.u32 %v256, 4294901760
      %v592 = vsub.f32 %v256, %v591
      %v593 = vand.u32 %v592, 4294901760
      %594 = vmatpush1.msra.mxu0 %v593
      %595 = vmatprep.subr.mxu0 0.0
      %v596 = vand.u32 %v257, 4294901760
      %v597 = vsub.f32 %v257, %v596
      %v598 = vand.u32 %v597, 4294901760
      %599 = vmatpush1.msra.mxu0 %v598
      %600 = vmatprep.subr.mxu0 0.0
      %v601 = vand.u32 %v258, 4294901760
      %v602 = vsub.f32 %v258, %v601
      %v603 = vand.u32 %v602, 4294901760
      %604 = vmatpush1.msra.mxu0 %v603
      %605 = vmatprep.subr.mxu0 0.0
      %v606 = vand.u32 %v259, 4294901760
      %v607 = vsub.f32 %v259, %v606
      %v608 = vand.u32 %v607, 4294901760
      %609 = vmatpush1.msra.mxu0 %v608
      %610 = vmatprep.subr.mxu0 0.0
      %611 = vmatpush1.msra.mxu0 0.0
      %612 = vmatprep.subr.mxu0 0.0
      %613 = vmatpush1.msra.mxu0 0.0
      %614 = vmatprep.subr.mxu0 0.0
      %615 = vmatpush1.msra.mxu0 0.0
      %616 = vmatprep.subr.mxu0 0.0
      %617 = vmatpush1.msra.mxu0 0.0
      %618 = vmatprep.subr.mxu0 0.0
      %619 = vmatpush1.msra.mxu0 0.0
      %620 = vmatprep.subr.mxu0 0.0
      %621 = vmatpush1.msra.mxu0 0.0
      %622 = vmatprep.subr.mxu0 0.0
      %623 = vmatpush1.msra.mxu0 0.0
      %624 = vmatprep.subr.mxu0 0.0
      %625 = vmatpush1.msra.mxu0 0.0
      %626 = vmatprep.subr.mxu0 0.0
      %627 = vmatpush1.msra.mxu0 0.0
      %628 = vmatprep.subr.mxu0 0.0
      %629 = vmatpush1.msra.mxu0 0.0
      %630 = vmatprep.subr.mxu0 0.0
      %631 = vmatpush1.msra.mxu0 0.0
      %632 = vmatprep.subr.mxu0 0.0
      %633 = vmatpush1.msra.mxu0 0.0
      %634 = vmatprep.subr.mxu0 0.0
      %635 = vmatpush1.msra.mxu0 0.0
      %636 = vmatprep.subr.mxu0 0.0
      %637 = vmatpush1.msra.mxu0 0.0
      %638 = vmatprep.subr.mxu0 0.0
      %639 = vmatpush1.msra.mxu0 0.0
      %640 = vmatprep.subr.mxu0 0.0
      %641 = vmatpush1.msra.mxu0 0.0
      %642 = vmatprep.subr.mxu0 0.0
      %643 = vmatpush1.msra.mxu0 0.0
      %644 = vmatprep.subr.mxu0 0.0
      %645 = vmatpush1.msra.mxu0 0.0
      %646 = vmatprep.subr.mxu0 0.0
      %647 = vmatpush1.msra.mxu0 0.0
      %648 = vmatprep.subr.mxu0 0.0
      %649 = vmatpush1.msra.mxu0 0.0
      %650 = vmatprep.subr.mxu0 0.0
      %651 = vmatpush1.msra.mxu0 0.0
      %652 = vmatprep.subr.mxu0 0.0
      %653 = vmatpush1.msra.mxu0 0.0
      %654 = vmatprep.subr.mxu0 0.0
      %655 = vmatpush1.msra.mxu0 0.0
      %656 = vmatprep.subr.mxu0 0.0
      %657 = vmatpush1.msra.mxu0 0.0
      %658 = vmatprep.subr.mxu0 0.0
      %659 = vmatpush1.msra.mxu0 0.0
      %660 = vmatprep.subr.mxu0 0.0
      %661 = vmatpush1.msra.mxu0 0.0
      %662 = vmatprep.subr.mxu0 0.0
      %663 = vmatpush1.msra.mxu0 0.0
      %664 = vmatprep.subr.mxu0 0.0
      %665 = vmatpush1.msra.mxu0 0.0
      %666 = vmatprep.mubr.f32.mxu0 0.0
      %v667 = vand.u32 %v261, 4294901760
      %668 = vmatmul.mubr.f32.gmra.mrb[0].mxu0 %v667
      %v669 = vpop.f32.mrb[0].mxu0
      %v670 = vadd.f32 %v587, %v669
      %v671 = vpop.f32.mrb[0].mxu0
      %672 = vdwg.mxu0
      %673 = vmatprep.subr.mxu0 0.0
      %v674 = vand.u32 %v256, 4294901760
      %675 = vmatpush1.msra.mxu0 %v674
      %676 = vmatprep.subr.mxu0 0.0
      %v677 = vand.u32 %v257, 4294901760
      %678 = vmatpush1.msra.mxu0 %v677
      %679 = vmatprep.subr.mxu0 0.0
      %v680 = vand.u32 %v258, 4294901760
      %681 = vmatpush1.msra.mxu0 %v680
      %682 = vmatprep.subr.mxu0 0.0
      %v683 = vand.u32 %v259, 4294901760
      %684 = vmatpush1.msra.mxu0 %v683
      %685 = vmatprep.subr.mxu0 0.0
      %686 = vmatpush1.msra.mxu0 0.0
      %687 = vmatprep.subr.mxu0 0.0
      %688 = vmatpush1.msra.mxu0 0.0
      %689 = vmatprep.subr.mxu0 0.0
      %690 = vmatpush1.msra.mxu0 0.0
      %691 = vmatprep.subr.mxu0 0.0
      %692 = vmatpush1.msra.mxu0 0.0
      %693 = vmatprep.subr.mxu0 0.0
      %694 = vmatpush1.msra.mxu0 0.0
      %695 = vmatprep.subr.mxu0 0.0
      %696 = vmatpush1.msra.mxu0 0.0
      %697 = vmatprep.subr.mxu0 0.0
      %698 = vmatpush1.msra.mxu0 0.0
      %699 = vmatprep.subr.mxu0 0.0
      %700 = vmatpush1.msra.mxu0 0.0
      %701 = vmatprep.subr.mxu0 0.0
      %702 = vmatpush1.msra.mxu0 0.0
      %703 = vmatprep.subr.mxu0 0.0
      %704 = vmatpush1.msra.mxu0 0.0
      %705 = vmatprep.subr.mxu0 0.0
      %706 = vmatpush1.msra.mxu0 0.0
      %707 = vmatprep.subr.mxu0 0.0
      %708 = vmatpush1.msra.mxu0 0.0
      %709 = vmatprep.subr.mxu0 0.0
      %710 = vmatpush1.msra.mxu0 0.0
      %711 = vmatprep.subr.mxu0 0.0
      %712 = vmatpush1.msra.mxu0 0.0
      %713 = vmatprep.subr.mxu0 0.0
      %714 = vmatpush1.msra.mxu0 0.0
      %715 = vmatprep.subr.mxu0 0.0
      %716 = vmatpush1.msra.mxu0 0.0
      %717 = vmatprep.subr.mxu0 0.0
      %718 = vmatpush1.msra.mxu0 0.0
      %719 = vmatprep.subr.mxu0 0.0
      %720 = vmatpush1.msra.mxu0 0.0
      %721 = vmatprep.subr.mxu0 0.0
      %722 = vmatpush1.msra.mxu0 0.0
      %723 = vmatprep.subr.mxu0 0.0
      %724 = vmatpush1.msra.mxu0 0.0
      %725 = vmatprep.subr.mxu0 0.0
      %726 = vmatpush1.msra.mxu0 0.0
      %727 = vmatprep.subr.mxu0 0.0
      %728 = vmatpush1.msra.mxu0 0.0
      %729 = vmatprep.subr.mxu0 0.0
      %730 = vmatpush1.msra.mxu0 0.0
      %731 = vmatprep.subr.mxu0 0.0
      %732 = vmatpush1.msra.mxu0 0.0
      %733 = vmatprep.subr.mxu0 0.0
      %734 = vmatpush1.msra.mxu0 0.0
      %735 = vmatprep.subr.mxu0 0.0
      %736 = vmatpush1.msra.mxu0 0.0
      %737 = vmatprep.subr.mxu0 0.0
      %738 = vmatpush1.msra.mxu0 0.0
      %739 = vmatprep.subr.mxu0 0.0
      %740 = vmatpush1.msra.mxu0 0.0
      %741 = vmatprep.mubr.f32.mxu0 0.0
      %v742 = vand.u32 %v261, 4294901760
      %743 = vmatmul.mubr.f32.gmra.mrb[0].mxu0 %v742
      %v744 = vpop.f32.mrb[0].mxu0
      %v745 = vadd.f32 %v670, %v744
      %v746 = vpop.f32.mrb[0].mxu0
      %747 = vdwg.mxu0
      %vm748 = vcmask 785408
      %749 = vst.msk [vmem:[%s223] sm:$0xff] %vm748, %v745
      %p750 = scmp.lt.s32.totalorder %s19, 1
      %s751 = scalar_select %p750, %s19, 1
      %p752 = scmp.lt.s32.totalorder %s20, 0
      %s753 = scalar_select %p752, %s20, 0
      %s754 = sadd.s32 %s753, %s751
      %s755 = smul.addr %s754, 8
      %s756 = scalar_lea.vmem %s4, %s755
      // Predicated region
      $region37: #{_lambda_.8} parent=35 // pred_check
        %p757 = pneg %p138
      $region38: #{_lambda_.8} parent=35 // pred_check_branch
        %759 = sbr.rel (%p757) target = $region40
      $region39: #{_lambda_.8} parent=35 // pred_region
        _
      $region40: #{_lambda_.8} parent=35 // pred_fallthru
        _
    $region36: #{_lambda_.8} parent=5 // pred_fallthru
      _
    %p760 = scmp.le.s32.totalorder 2, %s10
    // Predicated region
    $region41: #{_lambda_.8} parent=5 // pred_check
      %p761 = pneg %p760
    $region42: #{_lambda_.8} parent=5 // pred_check_branch
      %763 = sbr.rel (%p761) target = $region44
    $region43: #{_lambda_.8} parent=5 // pred_region
      %s764 = ssub.s32 %s10, 2
      // Predicated region
      $region45: #{_lambda_.8} parent=43 // pred_check
        %p765 = pneg %p144
      $region46: #{_lambda_.8} parent=43 // pred_check_branch
        %767 = sbr.rel (%p765) target = $region48
      $region47: #{_lambda_.8} parent=43 // pred_region
        %p768 = scmp.lt.s32.totalorder %s21, 1
        %s769 = scalar_select %p768, %s21, 1
        %p770 = scmp.lt.s32.totalorder %s22, 0
        %s771 = scalar_select %p770, %s22, 0
        %s772 = sadd.s32 %s771, %s769
        %s773 = smul.addr %s772, 8
        %s774 = scalar_lea.vmem %s4, %s773
      $region48: #{_lambda_.8} parent=43 // pred_fallthru
        _
    $region44: #{_lambda_.8} parent=5 // pred_fallthru
      _
  $region6: #{_lambda_.8} parent=0 // loop_footer
    %s14 = sadd.s32 1, %s10
  $region7: #{_lambda_.8} parent=0 // loop_footer_branch
    %9 = sbr.rel target = $region3
  $region8: #{_lambda_.8} parent=0 // loop_exit
    _

// kernel: _lambda_.10
$region0: #{_lambda_.10}
  #allocation0 [shape = 'u32[]', space=smem, size = 0x4, offset = 0x4, fixed_abs, tag = 'smem constant byte address 0x4 - core index']
  #allocation1 [shape = 'u32[144,128]{1,0:T(1,128)}', space=vmem, size = 0x12000, scoped, tag = 'internal scratch']
  %s0 = inlined_call_operand.vmem [shape: f32[2,8,32], index: 0, kind: input, shape index: {}]
  %s1 = inlined_call_operand.vmem [shape: f32[1,32], index: 1, kind: input, shape index: {}]
  %s2 = inlined_call_operand.vmem [shape: f32[1,32], index: 2, kind: input, shape index: {}]
  %s3 = inlined_call_operand.vmem [shape: f32[32,256], index: 3, kind: input, shape index: {}]
  %s4 = inlined_call_operand.vmem [shape: f32[1,128], index: 4, kind: input, shape index: {}]
  %s5 = inlined_call_operand.vmem [shape: f32[1,128], index: 5, kind: input, shape index: {}]
  %s6 = inlined_call_operand.vmem [shape: f32[128,32], index: 6, kind: input, shape index: {}]
  %s7 = inlined_call_operand.vmem [shape: f32[2,8,32], index: 7, kind: output, shape index: {}]
  %s8 = sld [smem:[#allocation0]]
  $region61: #{_lambda_.10} parent=0
    _
  %s10 = ssub.s32 1, %s8
  %s11 = scalar_select 0, %s10, %s8
  loop: start=0, step=1, limit=4
  $region2: #{_lambda_.10} parent=0 // loop_pre_header
    _
  $region3: #{_lambda_.10} parent=0 // loop_header
    %s13 = sphi 0, %s17
    %p14 = scmp.ge.s32.totalorder %s13, 4
    %s20 = sphi 0, %s32
    %s21 = sphi 0, %s28
    %s22 = sphi 0, %s20
    %s23 = sphi 0, %s21
    %s24 = sphi 0, %s22
    %s25 = sphi 0, %s23
    %s37 = sphi 0, %s39
    %s40 = sphi 0, %s37
    %s41 = sphi 0, %s40
    %s57 = sphi 0, %s41
    %s61 = sphi 0, %s61
    %s63 = sphi 0, %s61
    %s64 = sphi 0, %s63
    %s78 = sphi 0, %s64
    %s82 = sphi 0, %s82
    %s84 = sphi 0, %s82
    %s85 = sphi 0, %s84
    %s99 = sphi 0, %s85
    %s103 = sphi 0, %s103
    %s105 = sphi 0, %s103
    %s106 = sphi 0, %s105
    %s120 = sphi 0, %s106
    %s124 = sphi 0, %s124
    %s126 = sphi 0, %s124
    %s127 = sphi 0, %s126
    %s141 = sphi 0, %s127
    %s145 = sphi 0, %s145
    %s147 = sphi 0, %s145
    %s148 = sphi 0, %s147
    %s162 = sphi 0, %s148
    %s166 = sphi 0, %s166
    %s168 = sphi 0, %s166
    %s169 = sphi 0, %s168
    %s183 = sphi 0, %s169
    %s191 = sphi 0, %s193
    %s194 = sphi 0, %s191
    %s195 = sphi 0, %s194
    %s211 = sphi 0, %s195
  $region4: #{_lambda_.10} parent=0 // loop_header_branch
    %16 = sbr.rel (%p14) target = $region8
  $region5: #{_lambda_.10} parent=0 // loop_body
    %s18 = ssub.s32 %s13, 1
    %s19 = ssub.s32 %s13, 2
    %s26 = sadd.s32 1, %s21
    %p27 = scmp.ge.s32.totalorder %s26, 1
    %s28 = scalar_select %p27, 0, %s26
    %s29 = sadd.s32 1, %s20
    %s30 = scalar_select %p27, %s29, %s20
    %p31 = scmp.ge.s32.totalorder %s30, 2
    %s32 = scalar_select %p31, 0, %s30
    %s33 = ssub.s32 %s20, %s32
    %s34 = ssub.s32 %s21, %s28
    %s35 = sor.u32 %s33, %s34
    %p36 = scmp.eq.s32.totalorder %s35, 0
    %s38 = sadd.s32 %s37, 1
    %s39 = scalar_select %p36, %s37, %s38
    %p42 = pneg %p36
    %p43 = scmp.eq.s32.totalorder %s13, 1
    %p44 = por %p42, %p43
    %p45 = scmp.ne.s32.totalorder %s37, %s40
    %p46 = scmp.eq.s32.totalorder %s13, 0
    %p47 = por %p45, %p46
    %p48 = scmp.ne.s32.totalorder %s37, %s40
    %p49 = scmp.eq.s32.totalorder %s18, 1
    %p50 = por %p48, %p49
    %p51 = scmp.ne.s32.totalorder %s40, %s41
    %p52 = scmp.eq.s32.totalorder %s18, 0
    %p53 = por %p51, %p52
    %p54 = scmp.ne.s32.totalorder %s40, %s41
    %p55 = scmp.eq.s32.totalorder %s19, 1
    %p56 = por %p54, %p55
    %p58 = scmp.ne.s32.totalorder %s41, %s57
    %p59 = scmp.eq.s32.totalorder %s19, 0
    %p60 = por %p58, %p59
    %s62 = sadd.s32 %s61, 1
    %p65 = scmp.eq.s32.totalorder %s13, 1
    %p66 = scmp.ne.s32.totalorder %s61, %s63
    %p67 = scmp.eq.s32.totalorder %s13, 0
    %p68 = por %p66, %p67
    %p69 = scmp.ne.s32.totalorder %s61, %s63
    %p70 = scmp.eq.s32.totalorder %s18, 1
    %p71 = por %p69, %p70
    %p72 = scmp.ne.s32.totalorder %s63, %s64
    %p73 = scmp.eq.s32.totalorder %s18, 0
    %p74 = por %p72, %p73
    %p75 = scmp.ne.s32.totalorder %s63, %s64
    %p76 = scmp.eq.s32.totalorder %s19, 1
    %p77 = por %p75, %p76
    %p79 = scmp.ne.s32.totalorder %s64, %s78
    %p80 = scmp.eq.s32.totalorder %s19, 0
    %p81 = por %p79, %p80
    %s83 = sadd.s32 %s82, 1
    %p86 = scmp.eq.s32.totalorder %s13, 1
    %p87 = scmp.ne.s32.totalorder %s82, %s84
    %p88 = scmp.eq.s32.totalorder %s13, 0
    %p89 = por %p87, %p88
    %p90 = scmp.ne.s32.totalorder %s82, %s84
    %p91 = scmp.eq.s32.totalorder %s18, 1
    %p92 = por %p90, %p91
    %p93 = scmp.ne.s32.totalorder %s84, %s85
    %p94 = scmp.eq.s32.totalorder %s18, 0
    %p95 = por %p93, %p94
    %p96 = scmp.ne.s32.totalorder %s84, %s85
    %p97 = scmp.eq.s32.totalorder %s19, 1
    %p98 = por %p96, %p97
    %p100 = scmp.ne.s32.totalorder %s85, %s99
    %p101 = scmp.eq.s32.totalorder %s19, 0
    %p102 = por %p100, %p101
    %s104 = sadd.s32 %s103, 1
    %p107 = scmp.eq.s32.totalorder %s13, 1
    %p108 = scmp.ne.s32.totalorder %s103, %s105
    %p109 = scmp.eq.s32.totalorder %s13, 0
    %p110 = por %p108, %p109
    %p111 = scmp.ne.s32.totalorder %s103, %s105
    %p112 = scmp.eq.s32.totalorder %s18, 1
    %p113 = por %p111, %p112
    %p114 = scmp.ne.s32.totalorder %s105, %s106
    %p115 = scmp.eq.s32.totalorder %s18, 0
    %p116 = por %p114, %p115
    %p117 = scmp.ne.s32.totalorder %s105, %s106
    %p118 = scmp.eq.s32.totalorder %s19, 1
    %p119 = por %p117, %p118
    %p121 = scmp.ne.s32.totalorder %s106, %s120
    %p122 = scmp.eq.s32.totalorder %s19, 0
    %p123 = por %p121, %p122
    %s125 = sadd.s32 %s124, 1
    %p128 = scmp.eq.s32.totalorder %s13, 1
    %p129 = scmp.ne.s32.totalorder %s124, %s126
    %p130 = scmp.eq.s32.totalorder %s13, 0
    %p131 = por %p129, %p130
    %p132 = scmp.ne.s32.totalorder %s124, %s126
    %p133 = scmp.eq.s32.totalorder %s18, 1
    %p134 = por %p132, %p133
    %p135 = scmp.ne.s32.totalorder %s126, %s127
    %p136 = scmp.eq.s32.totalorder %s18, 0
    %p137 = por %p135, %p136
    %p138 = scmp.ne.s32.totalorder %s126, %s127
    %p139 = scmp.eq.s32.totalorder %s19, 1
    %p140 = por %p138, %p139
    %p142 = scmp.ne.s32.totalorder %s127, %s141
    %p143 = scmp.eq.s32.totalorder %s19, 0
    %p144 = por %p142, %p143
    %s146 = sadd.s32 %s145, 1
    %p149 = scmp.eq.s32.totalorder %s13, 1
    %p150 = scmp.ne.s32.totalorder %s145, %s147
    %p151 = scmp.eq.s32.totalorder %s13, 0
    %p152 = por %p150, %p151
    %p153 = scmp.ne.s32.totalorder %s145, %s147
    %p154 = scmp.eq.s32.totalorder %s18, 1
    %p155 = por %p153, %p154
    %p156 = scmp.ne.s32.totalorder %s147, %s148
    %p157 = scmp.eq.s32.totalorder %s18, 0
    %p158 = por %p156, %p157
    %p159 = scmp.ne.s32.totalorder %s147, %s148
    %p160 = scmp.eq.s32.totalorder %s19, 1
    %p161 = por %p159, %p160
    %p163 = scmp.ne.s32.totalorder %s148, %s162
    %p164 = scmp.eq.s32.totalorder %s19, 0
    %p165 = por %p163, %p164
    %s167 = sadd.s32 %s166, 1
    %p170 = scmp.eq.s32.totalorder %s13, 1
    %p171 = scmp.ne.s32.totalorder %s166, %s168
    %p172 = scmp.eq.s32.totalorder %s13, 0
    %p173 = por %p171, %p172
    %p174 = scmp.ne.s32.totalorder %s166, %s168
    %p175 = scmp.eq.s32.totalorder %s18, 1
    %p176 = por %p174, %p175
    %p177 = scmp.ne.s32.totalorder %s168, %s169
    %p178 = scmp.eq.s32.totalorder %s18, 0
    %p179 = por %p177, %p178
    %p180 = scmp.ne.s32.totalorder %s168, %s169
    %p181 = scmp.eq.s32.totalorder %s19, 1
    %p182 = por %p180, %p181
    %p184 = scmp.ne.s32.totalorder %s169, %s183
    %p185 = scmp.eq.s32.totalorder %s19, 0
    %p186 = por %p184, %p185
    %s187 = ssub.s32 %s20, %s32
    %s188 = ssub.s32 %s21, %s28
    %s189 = sor.u32 %s187, %s188
    %p190 = scmp.eq.s32.totalorder %s189, 0
    %s192 = sadd.s32 %s191, 1
    %s193 = scalar_select %p190, %s191, %s192
    %p196 = pneg %p190
    %p197 = scmp.eq.s32.totalorder %s13, 1
    %p198 = por %p196, %p197
    %p199 = scmp.ne.s32.totalorder %s191, %s194
    %p200 = scmp.eq.s32.totalorder %s13, 0
    %p201 = por %p199, %p200
    %p202 = scmp.ne.s32.totalorder %s191, %s194
    %p203 = scmp.eq.s32.totalorder %s18, 1
    %p204 = por %p202, %p203
    %p205 = scmp.ne.s32.totalorder %s194, %s195
    %p206 = scmp.eq.s32.totalorder %s18, 0
    %p207 = por %p205, %p206
    %p208 = scmp.ne.s32.totalorder %s194, %s195
    %p209 = scmp.eq.s32.totalorder %s19, 1
    %p210 = por %p208, %p209
    %p212 = scmp.ne.s32.totalorder %s195, %s211
    %p213 = scmp.eq.s32.totalorder %s19, 0
    %p214 = por %p212, %p213
    %p215 = scmp.le.s32.totalorder 1, %s13
    %p216 = scmp.lt.s32.totalorder %s13, 3
    %p217 = pnand %p215, %p216
    %p218 = pneg %p217
    // Predicated region
    $region9: #{_lambda_.10} parent=5 // pred_check
      _
    $region10: #{_lambda_.10} parent=5 // pred_check_branch
      %220 = sbr.rel (%p217) target = $region12
    $region11: #{_lambda_.10} parent=5 // pred_region
      %s221 = ssub.s32 %s13, 1
      // Predicated region
      $region13: #{_lambda_.10} parent=11 // pred_check
        %p222 = pneg %p74
      $region14: #{_lambda_.10} parent=11 // pred_check_branch
        %224 = sbr.rel (%p222) target = $region16
      $region15: #{_lambda_.10} parent=11 // pred_region
        _
      $region16: #{_lambda_.10} parent=11 // pred_fallthru
        _
      // Predicated region
      $region17: #{_lambda_.10} parent=11 // pred_check
        %p225 = pneg %p95
      $region18: #{_lambda_.10} parent=11 // pred_check_branch
        %227 = sbr.rel (%p225) target = $region20
      $region19: #{_lambda_.10} parent=11 // pred_region
        _
      $region20: #{_lambda_.10} parent=11 // pred_fallthru
        _
      // Predicated region
      $region21: #{_lambda_.10} parent=11 // pred_check
        %p228 = pneg %p116
      $region22: #{_lambda_.10} parent=11 // pred_check_branch
        %230 = sbr.rel (%p228) target = $region24
      $region23: #{_lambda_.10} parent=11 // pred_region
        _
      $region24: #{_lambda_.10} parent=11 // pred_fallthru
        _
      // Predicated region
      $region25: #{_lambda_.10} parent=11 // pred_check
        %p231 = pneg %p137
      $region26: #{_lambda_.10} parent=11 // pred_check_branch
        %233 = sbr.rel (%p231) target = $region28
      $region27: #{_lambda_.10} parent=11 // pred_region
        _
      $region28: #{_lambda_.10} parent=11 // pred_fallthru
        _
      // Predicated region
      $region29: #{_lambda_.10} parent=11 // pred_check
        %p234 = pneg %p158
      $region30: #{_lambda_.10} parent=11 // pred_check_branch
        %236 = sbr.rel (%p234) target = $region32
      $region31: #{_lambda_.10} parent=11 // pred_region
        _
      $region32: #{_lambda_.10} parent=11 // pred_fallthru
        _
      // Predicated region
      $region33: #{_lambda_.10} parent=11 // pred_check
        %p237 = pneg %p179
      $region34: #{_lambda_.10} parent=11 // pred_check_branch
        %239 = sbr.rel (%p237) target = $region36
      $region35: #{_lambda_.10} parent=11 // pred_region
        _
      $region36: #{_lambda_.10} parent=11 // pred_fallthru
        _
    $region12: #{_lambda_.10} parent=5 // pred_fallthru
      _
    %p240 = scmp.lt.s32.totalorder %s13, 2
    // Predicated region
    $region37: #{_lambda_.10} parent=5 // pred_check
      %p241 = pneg %p240
    $region38: #{_lambda_.10} parent=5 // pred_check_branch
      %243 = sbr.rel (%p241) target = $region40
    $region39: #{_lambda_.10} parent=5 // pred_region
      // Predicated region
      $region41: #{_lambda_.10} parent=39 // pred_check
        %p244 = pneg %p47
      $region42: #{_lambda_.10} parent=39 // pred_check_branch
        %246 = sbr.rel (%p244) target = $region44
      $region43: #{_lambda_.10} parent=39 // pred_region
        %p247 = scmp.lt.s32.totalorder %s20, 1
        %s248 = scalar_select %p247, %s20, 1
        %p249 = scmp.lt.s32.totalorder %s21, 0
        %s250 = scalar_select %p249, %s21, 0
        %s251 = sadd.s32 %s250, %s248
        %s252 = smul.addr %s251, 8
        %s253 = scalar_lea.vmem %s0, %s252
      $region44: #{_lambda_.10} parent=39 // pred_fallthru
        _
    $region40: #{_lambda_.10} parent=5 // pred_fallthru
      _
    %p254 = scmp.le.s32.totalorder 1, %s13
    %p255 = scmp.lt.s32.totalorder %s13, 3
    %p256 = pnand %p254, %p255
    %p257 = pneg %p256
    // Predicated region
    $region45: #{_lambda_.10} parent=5 // pred_check
      _
    $region46: #{_lambda_.10} parent=5 // pred_check_branch
      %259 = sbr.rel (%p256) target = $region48
    $region47: #{_lambda_.10} parent=5 // pred_region
      %s260 = ssub.s32 %s13, 1
      %p261 = scmp.lt.s32.totalorder %s22, 1
      %s262 = scalar_select %p261, %s22, 1
      %p263 = scmp.lt.s32.totalorder %s23, 0
      %s264 = scalar_select %p263, %s23, 0
      %s265 = sadd.s32 %s264, %s262
      %s266 = smul.addr %s265, 8
      %s267 = scalar_lea.vmem %s0, %s266
      %p268 = pneg %p53
      %p269 = pneg %p50
      %p270 = pneg %p74
      %p271 = pneg %p71
      %p272 = pneg %p95
      %p273 = pneg %p92
      %p274 = pneg %p116
      %p275 = pneg %p113
      %p276 = pneg %p137
      %p277 = pneg %p134
      %p278 = pneg %p158
      %p279 = pneg %p155
      %p280 = pneg %p179
      %p281 = pneg %p176
      %p282 = pneg %p207
      %p283 = pneg %p204
      %p284 = scmp.lt.s32.totalorder %s22, 1
      %s285 = scalar_select %p284, %s22, 1
      %p286 = scmp.lt.s32.totalorder %s23, 0
      %s287 = scalar_select %p286, %s23, 0
      %s288 = sadd.s32 %s287, %s285
      %s289 = smul.addr %s288, 8
      %s290 = scalar_lea.vmem %s7, %s289
      %p291 = scmp.lt.s32.totalorder %s22, 1
      %s292 = scalar_select %p291, %s22, 1
      %p293 = scmp.lt.s32.totalorder %s23, 0
      %s294 = scalar_select %p293, %s23, 0
      %s295 = sadd.s32 %s294, %s292
      %s296 = smul.addr %s295, 8
      %s297 = scalar_lea.vmem %s0, %s296
      %p298 = scmp.lt.s32.totalorder %s22, 1
      %s299 = scalar_select %p298, %s22, 1
      %p300 = scmp.lt.s32.totalorder %s23, 0
      %s301 = scalar_select %p300, %s23, 0
      %s302 = sadd.s32 %s301, %s299
      %s303 = smul.addr %s302, 8
      %s304 = scalar_lea.vmem %s7, %s303
      %v305 = vld [vmem:[%s297] sm:$0xff]
      %v306 = vld [vmem:[%s1] sm:$0x1]
      %v307 = vld [vmem:[%s2] sm:$0x1]
      %vm308 = vcmask 261120
      %v309 = vsel %vm308, %v305, 0.0
      %310 = vadd.xlane.f32.xlu0 %v309
      %v311 = vpop.xlane.xlu0 %310
      %v312 = vrcp.pop 32.0
      %v313 = vmul.f32 %v311, %v312
      %v314 = vsub.f32 %v305, %v313
      %v315 = vmul.f32 %v314, %v314
      %v316 = vsel %vm308, %v315, 0.0
      %317 = vadd.xlane.f32.xlu0 %v316
      %v318 = vpop.xlane.xlu0 %317
      %v319 = vmul.f32 %v318, %v312
      %v320 = vadd.f32 %v319, 1e-05
      %v321 = vrsqrt.pop %v320
      %v322 = vmul.f32 %v314, %v321
      %v324 = vlaneseq
      %v325 = vshrl.u32 %v324, 7
      %v326 = vsub.s32 0, %v325
      %v327 = vrot.slane %v306, %v326
      %v329 = vmul.f32 %v322, %v327
      %v331 = vlaneseq
      %v332 = vshrl.u32 %v331, 7
      %v333 = vsub.s32 0, %v332
      %v334 = vrot.slane %v307, %v333
      %v336 = vadd.f32 %v329, %v334
      %v337 = vld [vmem:[%s3] sm:$0xff]
      %v338 = vld [vmem:[%s3 + $0x8] sm:$0xff]
      %v339 = vld [vmem:[%s3 + $0x10] sm:$0xff]
      %v340 = vld [vmem:[%s3 + $0x18] sm:$0xff]
      %v341 = vld [vmem:[%s3 + $0x20] sm:$0xff]
      %v342 = vld [vmem:[%s3 + $0x28] sm:$0xff]
      %v343 = vld [vmem:[%s3 + $0x30] sm:$0xff]
      %v344 = vld [vmem:[%s3 + $0x38] sm:$0xff]
      %v346 = vsel %vm308, %v336, 0
      %v348 = vand.u32 %v338, 4294901760
      %349 = vmatprep.subr.mxu0 %v348
      %v350 = vand.u32 %v337, 4294901760
      %351 = vmatpush1.msra.mxu0 %v350
      %v352 = vand.u32 %v340, 4294901760
      %353 = vmatprep.subr.mxu0 %v352
      %v354 = vand.u32 %v339, 4294901760
      %355 = vmatpush1.msra.mxu0 %v354
      %v356 = vand.u32 %v342, 4294901760
      %357 = vmatprep.subr.mxu0 %v356
      %v358 = vand.u32 %v341, 4294901760
      %359 = vmatpush1.msra.mxu0 %v358
      %v360 = vand.u32 %v344, 4294901760
      %361 = vmatprep.subr.mxu0 %v360
      %v362 = vand.u32 %v343, 4294901760
      %363 = vmatpush1.msra.mxu0 %v362
      %364 = vmatprep.subr.mxu0 0.0
      %365 = vmatpush1.msra.mxu0 0.0
      %366 = vmatprep.subr.mxu0 0.0
      %367 = vmatpush1.msra.mxu0 0.0
      %368 = vmatprep.subr.mxu0 0.0
      %369 = vmatpush1.msra.mxu0 0.0
      %370 = vmatprep.subr.mxu0 0.0
      %371 = vmatpush1.msra.mxu0 0.0
      %372 = vmatprep.subr.mxu0 0.0
      %373 = vmatpush1.msra.mxu0 0.0
      %374 = vmatprep.subr.mxu0 0.0
      %375 = vmatpush1.msra.mxu0 0.0
      %376 = vmatprep.subr.mxu0 0.0
      %377 = vmatpush1.msra.mxu0 0.0
      %378 = vmatprep.subr.mxu0 0.0
      %379 = vmatpush1.msra.mxu0 0.0
      %380 = vmatprep.subr.mxu0 0.0
      %381 = vmatpush1.msra.mxu0 0.0
      %382 = vmatprep.subr.mxu0 0.0
      %383 = vmatpush1.msra.mxu0 0.0
      %384 = vmatprep.subr.mxu0 0.0
      %385 = vmatpush1.msra.mxu0 0.0
      %386 = vmatprep.subr.mxu0 0.0
      %387 = vmatpush1.msra.mxu0 0.0
      %388 = vmatprep.subr.mxu0 0.0
      %389 = vmatpush1.msra.mxu0 0.0
      %390 = vmatprep.subr.mxu0 0.0
      %391 = vmatpush1.msra.mxu0 0.0
      %392 = vmatprep.subr.mxu0 0.0
      %393 = vmatpush1.msra.mxu0 0.0
      %394 = vmatprep.subr.mxu0 0.0
      %395 = vmatpush1.msra.mxu0 0.0
      %396 = vmatprep.subr.mxu0 0.0
      %397 = vmatpush1.msra.mxu0 0.0
      %398 = vmatprep.subr.mxu0 0.0
      %399 = vmatpush1.msra.mxu0 0.0
      %400 = vmatprep.subr.mxu0 0.0
      %401 = vmatpush1.msra.mxu0 0.0
      %402 = vmatprep.subr.mxu0 0.0
      %403 = vmatpush1.msra.mxu0 0.0
      %404 = vmatprep.subr.mxu0 0.0
      %405 = vmatpush1.msra.mxu0 0.0
      %406 = vmatprep.subr.mxu0 0.0
      %407 = vmatpush1.msra.mxu0 0.0
      %408 = vmatprep.subr.mxu0 0.0
      %409 = vmatpush1.msra.mxu0 0.0
      %410 = vmatprep.subr.mxu0 0.0
      %411 = vmatpush1.msra.mxu0 0.0
      %412 = vmatprep.subr.mxu0 0.0
      %413 = vmatpush1.msra.mxu0 0.0
      %414 = vmatprep.subr.mxu0 0.0
      %415 = vmatpush1.msra.mxu0 0.0
      %416 = vmatprep.subr.mxu0 0.0
      %417 = vmatpush1.msra.mxu0 0.0
      %418 = vmatprep.subr.mxu0 0.0
      %419 = vmatpush1.msra.mxu0 0.0
      %420 = vmatprep.mubr.f32.mxu0 0.0
      %v421 = vand.u32 %v346, 4294901760
      %v422 = vsub.f32 %v346, %v421
      %v423 = vand.u32 %v422, 4294901760
      %v424 = vsub.f32 %v422, %v423
      %v425 = vand.u32 %v424, 4294901760
      %426 = vmatmul.mubr.f32.gmra.mrb[0].mxu0 %v425
      %v427 = vpop.f32.mrb[0].mxu0
      %v428 = vadd.f32 0.0, %v427
      %v429 = vpop.f32.mrb[0].mxu0
      %v430 = vadd.f32 0.0, %v429
      %431 = vdwg.mxu0
      %v432 = vand.u32 %v338, 4294901760
      %v433 = vsub.f32 %v338, %v432
      %v434 = vand.u32 %v433, 4294901760
      %v435 = vsub.f32 %v433, %v434
      %v436 = vand.u32 %v435, 4294901760
      %437 = vmatprep.subr.mxu0 %v436
      %v438 = vand.u32 %v337, 4294901760
      %v439 = vsub.f32 %v337, %v438
      %v440 = vand.u32 %v439, 4294901760
      %v441 = vsub.f32 %v439, %v440
      %v442 = vand.u32 %v441, 4294901760
      %443 = vmatpush1.msra.mxu0 %v442
      %v444 = vand.u32 %v340, 4294901760
      %v445 = vsub.f32 %v340, %v444
      %v446 = vand.u32 %v445, 4294901760
      %v447 = vsub.f32 %v445, %v446
      %v448 = vand.u32 %v447, 4294901760
      %449 = vmatprep.subr.mxu0 %v448
      %v450 = vand.u32 %v339, 4294901760
      %v451 = vsub.f32 %v339, %v450
      %v452 = vand.u32 %v451, 4294901760
      %v453 = vsub.f32 %v451, %v452
      %v454 = vand.u32 %v453, 4294901760
      %455 = vmatpush1.msra.mxu0 %v454
      %v456 = vand.u32 %v342, 4294901760
      %v457 = vsub.f32 %v342, %v456
      %v458 = vand.u32 %v457, 4294901760
      %v459 = vsub.f32 %v457, %v458
      %v460 = vand.u32 %v459, 4294901760
      %461 = vmatprep.subr.mxu0 %v460
      %v462 = vand.u32 %v341, 4294901760
      %v463 = vsub.f32 %v341, %v462
      %v464 = vand.u32 %v463, 4294901760
      %v465 = vsub.f32 %v463, %v464
      %v466 = vand.u32 %v465, 4294901760
      %467 = vmatpush1.msra.mxu0 %v466
      %v468 = vand.u32 %v344, 4294901760
      %v469 = vsub.f32 %v344, %v468
      %v470 = vand.u32 %v469, 4294901760
      %v471 = vsub.f32 %v469, %v470
      %v472 = vand.u32 %v471, 4294901760
      %473 = vmatprep.subr.mxu0 %v472
      %v474 = vand.u32 %v343, 4294901760
      %v475 = vsub.f32 %v343, %v474
      %v476 = vand.u32 %v475, 4294901760
      %v477 = vsub.f32 %v475, %v476
      %v478 = vand.u32 %v477, 4294901760
      %479 = vmatpush1.msra.mxu0 %v478
      %480 = vmatprep.subr.mxu0 0.0
      %481 = vmatpush1.msra.mxu0 0.0
      %482 = vmatprep.subr.mxu0 0.0
      %483 = vmatpush1.msra.mxu0 0.0
      %484 = vmatprep.subr.mxu0 0.0
      %485 = vmatpush1.msra.mxu0 0.0
      %486 = vmatprep.subr.mxu0 0.0
      %487 = vmatpush1.msra.mxu0 0.0
      %488 = vmatprep.subr.mxu0 0.0
      %489 = vmatpush1.msra.mxu0 0.0
      %490 = vmatprep.subr.mxu0 0.0
      %491 = vmatpush1.msra.mxu0 0.0
      %492 = vmatprep.subr.mxu0 0.0
      %493 = vmatpush1.msra.mxu0 0.0
      %494 = vmatprep.subr.mxu0 0.0
      %495 = vmatpush1.msra.mxu0 0.0
      %496 = vmatprep.subr.mxu0 0.0
      %497 = vmatpush1.msra.mxu0 0.0
      %498 = vmatprep.subr.mxu0 0.0
      %499 = vmatpush1.msra.mxu0 0.0
      %500 = vmatprep.subr.mxu0 0.0
      %501 = vmatpush1.msra.mxu0 0.0
      %502 = vmatprep.subr.mxu0 0.0
      %503 = vmatpush1.msra.mxu0 0.0
      %504 = vmatprep.subr.mxu0 0.0
      %505 = vmatpush1.msra.mxu0 0.0
      %506 = vmatprep.subr.mxu0 0.0
      %507 = vmatpush1.msra.mxu0 0.0
      %508 = vmatprep.subr.mxu0 0.0
      %509 = vmatpush1.msra.mxu0 0.0
      %510 = vmatprep.subr.mxu0 0.0
      %511 = vmatpush1.msra.mxu0 0.0
      %512 = vmatprep.subr.mxu0 0.0
      %513 = vmatpush1.msra.mxu0 0.0
      %514 = vmatprep.subr.mxu0 0.0
      %515 = vmatpush1.msra.mxu0 0.0
      %516 = vmatprep.subr.mxu0 0.0
      %517 = vmatpush1.msra.mxu0 0.0
      %518 = vmatprep.subr.mxu0 0.0
      %519 = vmatpush1.msra.mxu0 0.0
      %520 = vmatprep.subr.mxu0 0.0
      %521 = vmatpush1.msra.mxu0 0.0
      %522 = vmatprep.subr.mxu0 0.0
      %523 = vmatpush1.msra.mxu0 0.0
      %524 = vmatprep.subr.mxu0 0.0
      %525 = vmatpush1.msra.mxu0 0.0
      %526 = vmatprep.subr.mxu0 0.0
      %527 = vmatpush1.msra.mxu0 0.0
      %528 = vmatprep.subr.mxu0 0.0
      %529 = vmatpush1.msra.mxu0 0.0
      %530 = vmatprep.subr.mxu0 0.0
      %531 = vmatpush1.msra.mxu0 0.0
      %532 = vmatprep.subr.mxu0 0.0
      %533 = vmatpush1.msra.mxu0 0.0
      %534 = vmatprep.subr.mxu0 0.0
      %535 = vmatpush1.msra.mxu0 0.0
      %536 = vmatprep.mubr.f32.mxu0 0.0
      %v537 = vand.u32 %v346, 4294901760
      %538 = vmatmul.mubr.f32.gmra.mrb[0].mxu0 %v537
      %v539 = vpop.f32.mrb[0].mxu0
      %v540 = vadd.f32 %v428, %v539
      %v541 = vpop.f32.mrb[0].mxu0
      %v542 = vadd.f32 %v430, %v541
      %543 = vdwg.mxu0
      %v544 = vand.u32 %v338, 4294901760
      %v545 = vsub.f32 %v338, %v544
      %546 = vmatprep.subr.mxu0 %v545
      %v547 = vand.u32 %v337, 4294901760
      %v548 = vsub.f32 %v337, %v547
      %549 = vmatpush1.msra.mxu0 %v548
      %v550 = vand.u32 %v340, 4294901760
      %v551 = vsub.f32 %v340, %v550
      %552 = vmatprep.subr.mxu0 %v551
      %v553 = vand.u32 %v339, 4294901760
      %v554 = vsub.f32 %v339, %v553
      %555 = vmatpush1.msra.mxu0 %v554
      %v556 = vand.u32 %v342, 4294901760
      %v557 = vsub.f32 %v342, %v556
      %558 = vmatprep.subr.mxu0 %v557
      %v559 = vand.u32 %v341, 4294901760
      %v560 = vsub.f32 %v341, %v559
      %561 = vmatpush1.msra.mxu0 %v560
      %v562 = vand.u32 %v344, 4294901760
      %v563 = vsub.f32 %v344, %v562
      %564 = vmatprep.subr.mxu0 %v563
      %v565 = vand.u32 %v343, 4294901760
      %v566 = vsub.f32 %v343, %v565
      %567 = vmatpush1.msra.mxu0 %v566
      %568 = vmatprep.subr.mxu0 0.0
      %569 = vmatpush1.msra.mxu0 0.0
      %570 = vmatprep.subr.mxu0 0.0
      %571 = vmatpush1.msra.mxu0 0.0
      %572 = vmatprep.subr.mxu0 0.0
      %573 = vmatpush1.msra.mxu0 0.0
      %574 = vmatprep.subr.mxu0 0.0
      %575 = vmatpush1.msra.mxu0 0.0
      %576 = vmatprep.subr.mxu0 0.0
      %577 = vmatpush1.msra.mxu0 0.0
      %578 = vmatprep.subr.mxu0 0.0
      %579 = vmatpush1.msra.mxu0 0.0
      %580 = vmatprep.subr.mxu0 0.0
      %581 = vmatpush1.msra.mxu0 0.0
      %582 = vmatprep.subr.mxu0 0.0
      %583 = vmatpush1.msra.mxu0 0.0
      %584 = vmatprep.subr.mxu0 0.0
      %585 = vmatpush1.msra.mxu0 0.0
      %586 = vmatprep.subr.mxu0 0.0
      %587 = vmatpush1.msra.mxu0 0.0
      %588 = vmatprep.subr.mxu0 0.0
      %589 = vmatpush1.msra.mxu0 0.0
      %590 = vmatprep.subr.mxu0 0.0
      %591 = vmatpush1.msra.mxu0 0.0
      %592 = vmatprep.subr.mxu0 0.0
      %593 = vmatpush1.msra.mxu0 0.0
      %594 = vmatprep.subr.mxu0 0.0
      %595 = vmatpush1.msra.mxu0 0.0
      %596 = vmatprep.subr.mxu0 0.0
      %597 = vmatpush1.msra.mxu0 0.0
      %598 = vmatprep.subr.mxu0 0.0
      %599 = vmatpush1.msra.mxu0 0.0
      %600 = vmatprep.subr.mxu0 0.0
      %601 = vmatpush1.msra.mxu0 0.0
      %602 = vmatprep.subr.mxu0 0.0
      %603 = vmatpush1.msra.mxu0 0.0
      %604 = vmatprep.subr.mxu0 0.0
      %605 = vmatpush1.msra.mxu0 0.0
      %606 = vmatprep.subr.mxu0 0.0
      %607 = vmatpush1.msra.mxu0 0.0
      %608 = vmatprep.subr.mxu0 0.0
      %609 = vmatpush1.msra.mxu0 0.0
      %610 = vmatprep.subr.mxu0 0.0
      %611 = vmatpush1.msra.mxu0 0.0
      %612 = vmatprep.subr.mxu0 0.0
      %613 = vmatpush1.msra.mxu0 0.0
      %614 = vmatprep.subr.mxu0 0.0
      %615 = vmatpush1.msra.mxu0 0.0
      %616 = vmatprep.subr.mxu0 0.0
      %617 = vmatpush1.msra.mxu0 0.0
      %618 = vmatprep.subr.mxu0 0.0
      %619 = vmatpush1.msra.mxu0 0.0
      %620 = vmatprep.subr.mxu0 0.0
      %621 = vmatpush1.msra.mxu0 0.0
      %622 = vmatprep.subr.mxu0 0.0
      %623 = vmatpush1.msra.mxu0 0.0
      %624 = vmatprep.mubr.f32.mxu0 0.0
      %v625 = vand.u32 %v346, 4294901760
      %v626 = vsub.f32 %v346, %v625
      %627 = vmatmul.mubr.f32.gmra.mrb[0].mxu0 %v626
      %v628 = vpop.f32.mrb[0].mxu0
      %v629 = vadd.f32 %v540, %v628
      %v630 = vpop.f32.mrb[0].mxu0
      %v631 = vadd.f32 %v542, %v630
      %632 = vdwg.mxu0
      %v633 = vand.u32 %v338, 4294901760
      %634 = vmatprep.subr.mxu0 %v633
      %v635 = vand.u32 %v337, 4294901760
      %636 = vmatpush1.msra.mxu0 %v635
      %v637 = vand.u32 %v340, 4294901760
      %638 = vmatprep.subr.mxu0 %v637
      %v639 = vand.u32 %v339, 4294901760
      %640 = vmatpush1.msra.mxu0 %v639
      %v641 = vand.u32 %v342, 4294901760
      %642 = vmatprep.subr.mxu0 %v641
      %v643 = vand.u32 %v341, 4294901760
      %644 = vmatpush1.msra.mxu0 %v643
      %v645 = vand.u32 %v344, 4294901760
      %646 = vmatprep.subr.mxu0 %v645
      %v647 = vand.u32 %v343, 4294901760
      %648 = vmatpush1.msra.mxu0 %v647
      %649 = vmatprep.subr.mxu0 0.0
      %650 = vmatpush1.msra.mxu0 0.0
      %651 = vmatprep.subr.mxu0 0.0
      %652 = vmatpush1.msra.mxu0 0.0
      %653 = vmatprep.subr.mxu0 0.0
      %654 = vmatpush1.msra.mxu0 0.0
      %655 = vmatprep.subr.mxu0 0.0
      %656 = vmatpush1.msra.mxu0 0.0
      %657 = vmatprep.subr.mxu0 0.0
      %658 = vmatpush1.msra.mxu0 0.0
      %659 = vmatprep.subr.mxu0 0.0
      %660 = vmatpush1.msra.mxu0 0.0
      %661 = vmatprep.subr.mxu0 0.0
      %662 = vmatpush1.msra.mxu0 0.0
      %663 = vmatprep.subr.mxu0 0.0
      %664 = vmatpush1.msra.mxu0 0.0
      %665 = vmatprep.subr.mxu0 0.0
      %666 = vmatpush1.msra.mxu0 0.0
      %667 = vmatprep.subr.mxu0 0.0
      %668 = vmatpush1.msra.mxu0 0.0
      %669 = vmatprep.subr.mxu0 0.0
      %670 = vmatpush1.msra.mxu0 0.0
      %671 = vmatprep.subr.mxu0 0.0
      %672 = vmatpush1.msra.mxu0 0.0
      %673 = vmatprep.subr.mxu0 0.0
      %674 = vmatpush1.msra.mxu0 0.0
      %675 = vmatprep.subr.mxu0 0.0
      %676 = vmatpush1.msra.mxu0 0.0
      %677 = vmatprep.subr.mxu0 0.0
      %678 = vmatpush1.msra.mxu0 0.0
      %679 = vmatprep.subr.mxu0 0.0
      %680 = vmatpush1.msra.mxu0 0.0
      %681 = vmatprep.subr.mxu0 0.0
      %682 = vmatpush1.msra.mxu0 0.0
      %683 = vmatprep.subr.mxu0 0.0
      %684 = vmatpush1.msra.mxu0 0.0
      %685 = vmatprep.subr.mxu0 0.0
      %686 = vmatpush1.msra.mxu0 0.0
      %687 = vmatprep.subr.mxu0 0.0
      %688 = vmatpush1.msra.mxu0 0.0
      %689 = vmatprep.subr.mxu0 0.0
      %690 = vmatpush1.msra.mxu0 0.0
      %691 = vmatprep.subr.mxu0 0.0
      %692 = vmatpush1.msra.mxu0 0.0
      %693 = vmatprep.subr.mxu0 0.0
      %694 = vmatpush1.msra.mxu0 0.0
      %695 = vmatprep.subr.mxu0 0.0
      %696 = vmatpush1.msra.mxu0 0.0
      %697 = vmatprep.subr.mxu0 0.0
      %698 = vmatpush1.msra.mxu0 0.0
      %699 = vmatprep.subr.mxu0 0.0
      %700 = vmatpush1.msra.mxu0 0.0
      %701 = vmatprep.subr.mxu0 0.0
      %702 = vmatpush1.msra.mxu0 0.0
      %703 = vmatprep.subr.mxu0 0.0
      %704 = vmatpush1.msra.mxu0 0.0
      %705 = vmatprep.mubr.f32.mxu0 0.0
      %v706 = vand.u32 %v346, 4294901760
      %v707 = vsub.f32 %v346, %v706
      %v708 = vand.u32 %v707, 4294901760
      %709 = vmatmul.mubr.f32.gmra.mrb[0].mxu0 %v708
      %v710 = vpop.f32.mrb[0].mxu0
      %v711 = vadd.f32 %v629, %v710
      %v712 = vpop.f32.mrb[0].mxu0
      %v713 = vadd.f32 %v631, %v712
      %714 = vdwg.mxu0
      %v715 = vand.u32 %v338, 4294901760
      %v716 = vsub.f32 %v338, %v715
      %v717 = vand.u32 %v716, 4294901760
      %718 = vmatprep.subr.mxu0 %v717
      %v719 = vand.u32 %v337, 4294901760
      %v720 = vsub.f32 %v337, %v719
      %v721 = vand.u32 %v720, 4294901760
      %722 = vmatpush1.msra.mxu0 %v721
      %v723 = vand.u32 %v340, 4294901760
      %v724 = vsub.f32 %v340, %v723
      %v725 = vand.u32 %v724, 4294901760
      %726 = vmatprep.subr.mxu0 %v725
      %v727 = vand.u32 %v339, 4294901760
      %v728 = vsub.f32 %v339, %v727
      %v729 = vand.u32 %v728, 4294901760
      %730 = vmatpush1.msra.mxu0 %v729
      %v731 = vand.u32 %v342, 4294901760
      %v732 = vsub.f32 %v342, %v731
      %v733 = vand.u32 %v732, 4294901760
      %734 = vmatprep.subr.mxu0 %v733
      %v735 = vand.u32 %v341, 4294901760
      %v736 = vsub.f32 %v341, %v735
      %v737 = vand.u32 %v736, 4294901760
      %738 = vmatpush1.msra.mxu0 %v737
      %v739 = vand.u32 %v344, 4294901760
      %v740 = vsub.f32 %v344, %v739
      %v741 = vand.u32 %v740, 4294901760
      %742 = vmatprep.subr.mxu0 %v741
      %v743 = vand.u32 %v343, 4294901760
      %v744 = vsub.f32 %v343, %v743
      %v745 = vand.u32 %v744, 4294901760
      %746 = vmatpush1.msra.mxu0 %v745
      %747 = vmatprep.subr.mxu0 0.0
      %748 = vmatpush1.msra.mxu0 0.0
      %749 = vmatprep.subr.mxu0 0.0
      %750 = vmatpush1.msra.mxu0 0.0
      %751 = vmatprep.subr.mxu0 0.0
      %752 = vmatpush1.msra.mxu0 0.0
      %753 = vmatprep.subr.mxu0 0.0
      %754 = vmatpush1.msra.mxu0 0.0
      %755 = vmatprep.subr.mxu0 0.0
      %756 = vmatpush1.msra.mxu0 0.0
      %757 = vmatprep.subr.mxu0 0.0
      %758 = vmatpush1.msra.mxu0 0.0
      %759 = vmatprep.subr.mxu0 0.0
      %760 = vmatpush1.msra.mxu0 0.0
      %761 = vmatprep.subr.mxu0 0.0
      %762 = vmatpush1.msra.mxu0 0.0
      %763 = vmatprep.subr.mxu0 0.0
      %764 = vmatpush1.msra.mxu0 0.0
      %765 = vmatprep.subr.mxu0 0.0
      %766 = vmatpush1.msra.mxu0 0.0
      %767 = vmatprep.subr.mxu0 0.0
      %768 = vmatpush1.msra.mxu0 0.0
      %769 = vmatprep.subr.mxu0 0.0
      %770 = vmatpush1.msra.mxu0 0.0
      %771 = vmatprep.subr.mxu0 0.0
      %772 = vmatpush1.msra.mxu0 0.0
      %773 = vmatprep.subr.mxu0 0.0
      %774 = vmatpush1.msra.mxu0 0.0
      %775 = vmatprep.subr.mxu0 0.0
      %776 = vmatpush1.msra.mxu0 0.0
      %777 = vmatprep.subr.mxu0 0.0
      %778 = vmatpush1.msra.mxu0 0.0
      %779 = vmatprep.subr.mxu0 0.0
      %780 = vmatpush1.msra.mxu0 0.0
      %781 = vmatprep.subr.mxu0 0.0
      %782 = vmatpush1.msra.mxu0 0.0
      %783 = vmatprep.subr.mxu0 0.0
      %784 = vmatpush1.msra.mxu0 0.0
      %785 = vmatprep.subr.mxu0 0.0
      %786 = vmatpush1.msra.mxu0 0.0
      %787 = vmatprep.subr.mxu0 0.0
      %788 = vmatpush1.msra.mxu0 0.0
      %789 = vmatprep.subr.mxu0 0.0
      %790 = vmatpush1.msra.mxu0 0.0
      %791 = vmatprep.subr.mxu0 0.0
      %792 = vmatpush1.msra.mxu0 0.0
      %793 = vmatprep.subr.mxu0 0.0
      %794 = vmatpush1.msra.mxu0 0.0
      %795 = vmatprep.subr.mxu0 0.0
      %796 = vmatpush1.msra.mxu0 0.0
      %797 = vmatprep.subr.mxu0 0.0
      %798 = vmatpush1.msra.mxu0 0.0
      %799 = vmatprep.subr.mxu0 0.0
      %800 = vmatpush1.msra.mxu0 0.0
      %801 = vmatprep.subr.mxu0 0.0
      %802 = vmatpush1.msra.mxu0 0.0
      %803 = vmatprep.mubr.f32.mxu0 0.0
      %v804 = vand.u32 %v346, 4294901760
      %805 = vmatmul.mubr.f32.gmra.mrb[0].mxu0 %v804
      %v806 = vpop.f32.mrb[0].mxu0
      %v807 = vadd.f32 %v711, %v806
      %v808 = vpop.f32.mrb[0].mxu0
      %v809 = vadd.f32 %v713, %v808
      %810 = vdwg.mxu0
      %v811 = vand.u32 %v338, 4294901760
      %812 = vmatprep.subr.mxu0 %v811
      %v813 = vand.u32 %v337, 4294901760
      %814 = vmatpush1.msra.mxu0 %v813
      %v815 = vand.u32 %v340, 4294901760
      %816 = vmatprep.subr.mxu0 %v815
      %v817 = vand.u32 %v339, 4294901760
      %818 = vmatpush1.msra.mxu0 %v817
      %v819 = vand.u32 %v342, 4294901760
      %820 = vmatprep.subr.mxu0 %v819
      %v821 = vand.u32 %v341, 4294901760
      %822 = vmatpush1.msra.mxu0 %v821
      %v823 = vand.u32 %v344, 4294901760
      %824 = vmatprep.subr.mxu0 %v823
      %v825 = vand.u32 %v343, 4294901760
      %826 = vmatpush1.msra.mxu0 %v825
      %827 = vmatprep.subr.mxu0 0.0
      %828 = vmatpush1.msra.mxu0 0.0
      %829 = vmatprep.subr.mxu0 0.0
      %830 = vmatpush1.msra.mxu0 0.0
      %831 = vmatprep.subr.mxu0 0.0
      %832 = vmatpush1.msra.mxu0 0.0
      %833 = vmatprep.subr.mxu0 0.0
      %834 = vmatpush1.msra.mxu0 0.0
      %835 = vmatprep.subr.mxu0 0.0
      %836 = vmatpush1.msra.mxu0 0.0
      %837 = vmatprep.subr.mxu0 0.0
      %838 = vmatpush1.msra.mxu0 0.0
      %839 = vmatprep.subr.mxu0 0.0
      %840 = vmatpush1.msra.mxu0 0.0
      %841 = vmatprep.subr.mxu0 0.0
      %842 = vmatpush1.msra.mxu0 0.0
      %843 = vmatprep.subr.mxu0 0.0
      %844 = vmatpush1.msra.mxu0 0.0
      %845 = vmatprep.subr.mxu0 0.0
      %846 = vmatpush1.msra.mxu0 0.0
      %847 = vmatprep.subr.mxu0 0.0
      %848 = vmatpush1.msra.mxu0 0.0
      %849 = vmatprep.subr.mxu0 0.0
      %850 = vmatpush1.msra.mxu0 0.0
      %851 = vmatprep.subr.mxu0 0.0
      %852 = vmatpush1.msra.mxu0 0.0
      %853 = vmatprep.subr.mxu0 0.0
      %854 = vmatpush1.msra.mxu0 0.0
      %855 = vmatprep.subr.mxu0 0.0
      %856 = vmatpush1.msra.mxu0 0.0
      %857 = vmatprep.subr.mxu0 0.0
      %858 = vmatpush1.msra.mxu0 0.0
      %859 = vmatprep.subr.mxu0 0.0
      %860 = vmatpush1.msra.mxu0 0.0
      %861 = vmatprep.subr.mxu0 0.0
      %862 = vmatpush1.msra.mxu0 0.0
      %863 = vmatprep.subr.mxu0 0.0
      %864 = vmatpush1.msra.mxu0 0.0
      %865 = vmatprep.subr.mxu0 0.0
      %866 = vmatpush1.msra.mxu0 0.0
      %867 = vmatprep.subr.mxu0 0.0
      %868 = vmatpush1.msra.mxu0 0.0
      %869 = vmatprep.subr.mxu0 0.0
      %870 = vmatpush1.msra.mxu0 0.0
      %871 = vmatprep.subr.mxu0 0.0
      %872 = vmatpush1.msra.mxu0 0.0
      %873 = vmatprep.subr.mxu0 0.0
      %874 = vmatpush1.msra.mxu0 0.0
      %875 = vmatprep.subr.mxu0 0.0
      %876 = vmatpush1.msra.mxu0 0.0
      %877 = vmatprep.subr.mxu0 0.0
      %878 = vmatpush1.msra.mxu0 0.0
      %879 = vmatprep.subr.mxu0 0.0
      %880 = vmatpush1.msra.mxu0 0.0
      %881 = vmatprep.subr.mxu0 0.0
      %882 = vmatpush1.msra.mxu0 0.0
      %883 = vmatprep.mubr.f32.mxu0 0.0
      %v884 = vand.u32 %v346, 4294901760
      %885 = vmatmul.mubr.f32.gmra.mrb[0].mxu0 %v884
      %v886 = vpop.f32.mrb[0].mxu0
      %v887 = vadd.f32 %v807, %v886
      %v888 = vpop.f32.mrb[0].mxu0
      %v889 = vadd.f32 %v809, %v888
      %890 = vdwg.mxu0
      %v891 = vxor.u32 %v889, 2147483648
      %v892 = vmul.f32 %v891, 1.442695
      %v893 = vpow.pop %v892
      %v894 = vadd.f32 %v893, 1.0
      %v895 = vrcp.pop %v894
      %v896 = vmul.f32 1.0, %v895
      %v897 = vmul.f32 %v889, %v896
      %v898 = vmul.f32 %v887, %v897
      %v899 = vld [vmem:[%s4] sm:$0x1]
      %v900 = vld [vmem:[%s5] sm:$0x1]
      %901 = vadd.xlane.f32.xlu0 %v898
      %v902 = vpop.xlane.xlu0 %901
      %v903 = vrcp.pop 128.0
      %v904 = vmul.f32 %v902, %v903
      %v905 = vsub.f32 %v898, %v904
      %v906 = vmul.f32 %v905, %v905
      %907 = vadd.xlane.f32.xlu0 %v906
      %v908 = vpop.xlane.xlu0 %907
      %v909 = vmul.f32 %v908, %v903
      %v910 = vadd.f32 %v909, 1e-05
      %v911 = vrsqrt.pop %v910
      %v912 = vmul.f32 %v905, %v911
      %v914 = vlaneseq
      %v915 = vshrl.u32 %v914, 7
      %v916 = vsub.s32 0, %v915
      %v917 = vrot.slane %v899, %v916
      %v919 = vmul.f32 %v912, %v917
      %v921 = vlaneseq
      %v922 = vshrl.u32 %v921, 7
      %v923 = vsub.s32 0, %v922
      %v924 = vrot.slane %v900, %v923
      %v926 = vadd.f32 %v919, %v924
      %v927 = vld [vmem:[%s6] sm:$0xff]
      %v928 = vld [vmem:[%s6 + $0x8] sm:$0xff]
      %v929 = vld [vmem:[%s6 + $0x10] sm:$0xff]
      %v930 = vld [vmem:[%s6 + $0x18] sm:$0xff]
      %v931 = vld [vmem:[%s6 + $0x20] sm:$0xff]
      %v932 = vld [vmem:[%s6 + $0x28] sm:$0xff]
      %v933 = vld [vmem:[%s6 + $0x30] sm:$0xff]
      %v934 = vld [vmem:[%s6 + $0x38] sm:$0xff]
      %v935 = vld [vmem:[%s6 + $0x40] sm:$0xff]
      %v936 = vld [vmem:[%s6 + $0x48] sm:$0xff]
      %v937 = vld [vmem:[%s6 + $0x50] sm:$0xff]
      %v938 = vld [vmem:[%s6 + $0x58] sm:$0xff]
      %v939 = vld [vmem:[%s6 + $0x60] sm:$0xff]
      %v940 = vld [vmem:[%s6 + $0x68] sm:$0xff]
      %v941 = vld [vmem:[%s6 + $0x70] sm:$0xff]
      %v942 = vld [vmem:[%s6 + $0x78] sm:$0xff]
      %943 = vmatprep.subr.mxu0 0.0
      %v944 = vand.u32 %v927, 4294901760
      %945 = vmatpush1.msra.mxu0 %v944
      %946 = vmatprep.subr.mxu0 0.0
      %v947 = vand.u32 %v928, 4294901760
      %948 = vmatpush1.msra.mxu0 %v947
      %949 = vmatprep.subr.mxu0 0.0
      %v950 = vand.u32 %v929, 4294901760
      %951 = vmatpush1.msra.mxu0 %v950
      %952 = vmatprep.subr.mxu0 0.0
      %v953 = vand.u32 %v930, 4294901760
      %954 = vmatpush1.msra.mxu0 %v953
      %955 = vmatprep.subr.mxu0 0.0
      %v956 = vand.u32 %v931, 4294901760
      %957 = vmatpush1.msra.mxu0 %v956
      %958 = vmatprep.subr.mxu0 0.0
      %v959 = vand.u32 %v932, 4294901760
      %960 = vmatpush1.msra.mxu0 %v959
      %961 = vmatprep.subr.mxu0 0.0
      %v962 = vand.u32 %v933, 4294901760
      %963 = vmatpush1.msra.mxu0 %v962
      %964 = vmatprep.subr.mxu0 0.0
      %v965 = vand.u32 %v934, 4294901760
      %966 = vmatpush1.msra.mxu0 %v965
      %967 = vmatprep.subr.mxu0 0.0
      %v968 = vand.u32 %v935, 4294901760
      %969 = vmatpush1.msra.mxu0 %v968
      %970 = vmatprep.subr.mxu0 0.0
      %v971 = vand.u32 %v936, 4294901760
      %972 = vmatpush1.msra.mxu0 %v971
      %973 = vmatprep.subr.mxu0 0.0
      %v974 = vand.u32 %v937, 4294901760
      %975 = vmatpush1.msra.mxu0 %v974
      %976 = vmatprep.subr.mxu0 0.0
      %v977 = vand.u32 %v938, 4294901760
      %978 = vmatpush1.msra.mxu0 %v977
      %979 = vmatprep.subr.mxu0 0.0
      %v980 = vand.u32 %v939, 4294901760
      %981 = vmatpush1.msra.mxu0 %v980
      %982 = vmatprep.subr.mxu0 0.0
      %v983 = vand.u32 %v940, 4294901760
      %984 = vmatpush1.msra.mxu0 %v983
      %985 = vmatprep.subr.mxu0 0.0
      %v986 = vand.u32 %v941, 4294901760
      %987 = vmatpush1.msra.mxu0 %v986
      %988 = vmatprep.subr.mxu0 0.0
      %v989 = vand.u32 %v942, 4294901760
      %990 = vmatpush1.msra.mxu0 %v989
      %991 = vmatprep.subr.mxu0 0.0
      %992 = vmatpush1.msra.mxu0 0.0
      %993 = vmatprep.subr.mxu0 0.0
      %994 = vmatpush1.msra.mxu0 0.0
      %995 = vmatprep.subr.mxu0 0.0
      %996 = vmatpush1.msra.mxu0 0.0
      %997 = vmatprep.subr.mxu0 0.0
      %998 = vmatpush1.msra.mxu0 0.0
      %999 = vmatprep.subr.mxu0 0.0
      %1000 = vmatpush1.msra.mxu0 0.0
      %1001 = vmatprep.subr.mxu0 0.0
      %1002 = vmatpush1.msra.mxu0 0.0
      %1003 = vmatprep.subr.mxu0 0.0
      %1004 = vmatpush1.msra.mxu0 0.0
      %1005 = vmatprep.subr.mxu0 0.0
      %1006 = vmatpush1.msra.mxu0 0.0
      %1007 = vmatprep.subr.mxu0 0.0
      %1008 = vmatpush1.msra.mxu0 0.0
      %1009 = vmatprep.subr.mxu0 0.0
      %1010 = vmatpush1.msra.mxu0 0.0
      %1011 = vmatprep.subr.mxu0 0.0
      %1012 = vmatpush1.msra.mxu0 0.0
      %1013 = vmatprep.subr.mxu0 0.0
      %1014 = vmatpush1.msra.mxu0 0.0
      %1015 = vmatprep.subr.mxu0 0.0
      %1016 = vmatpush1.msra.mxu0 0.0
      %1017 = vmatprep.subr.mxu0 0.0
      %1018 = vmatpush1.msra.mxu0 0.0
      %1019 = vmatprep.subr.mxu0 0.0
      %1020 = vmatpush1.msra.mxu0 0.0
      %1021 = vmatprep.subr.mxu0 0.0
      %1022 = vmatpush1.msra.mxu0 0.0
      %1023 = vmatprep.mubr.f32.mxu0 0.0
      %v1024 = vand.u32 %v926, 4294901760
      %v1025 = vsub.f32 %v926, %v1024
      %v1026 = vand.u32 %v1025, 4294901760
      %v1027 = vsub.f32 %v1025, %v1026
      %v1028 = vand.u32 %v1027, 4294901760
      %1029 = vmatmul.mubr.f32.gmra.mrb[0].mxu0 %v1028
      %v1030 = vpop.f32.mrb[0].mxu0
      %v1031 = vadd.f32 0.0, %v1030
      %v1032 = vpop.f32.mrb[0].mxu0
      %1033 = vdwg.mxu0
      %1034 = vmatprep.subr.mxu0 0.0
      %v1035 = vand.u32 %v927, 4294901760
      %v1036 = vsub.f32 %v927, %v1035
      %v1037 = vand.u32 %v1036, 4294901760
      %v1038 = vsub.f32 %v1036, %v1037
      %v1039 = vand.u32 %v1038, 4294901760
      %1040 = vmatpush1.msra.mxu0 %v1039
      %1041 = vmatprep.subr.mxu0 0.0
      %v1042 = vand.u32 %v928, 4294901760
      %v1043 = vsub.f32 %v928, %v1042
      %v1044 = vand.u32 %v1043, 4294901760
      %v1045 = vsub.f32 %v1043, %v1044
      %v1046 = vand.u32 %v1045, 4294901760
      %1047 = vmatpush1.msra.mxu0 %v1046
      %1048 = vmatprep.subr.mxu0 0.0
      %v1049 = vand.u32 %v929, 4294901760
      %v1050 = vsub.f32 %v929, %v1049
      %v1051 = vand.u32 %v1050, 4294901760
      %v1052 = vsub.f32 %v1050, %v1051
      %v1053 = vand.u32 %v1052, 4294901760
      %1054 = vmatpush1.msra.mxu0 %v1053
      %1055 = vmatprep.subr.mxu0 0.0
      %v1056 = vand.u32 %v930, 4294901760
      %v1057 = vsub.f32 %v930, %v1056
      %v1058 = vand.u32 %v1057, 4294901760
      %v1059 = vsub.f32 %v1057, %v1058
      %v1060 = vand.u32 %v1059, 4294901760
      %1061 = vmatpush1.msra.mxu0 %v1060
      %1062 = vmatprep.subr.mxu0 0.0
      %v1063 = vand.u32 %v931, 4294901760
      %v1064 = vsub.f32 %v931, %v1063
      %v1065 = vand.u32 %v1064, 4294901760
      %v1066 = vsub.f32 %v1064, %v1065
      %v1067 = vand.u32 %v1066, 4294901760
      %1068 = vmatpush1.msra.mxu0 %v1067
      %1069 = vmatprep.subr.mxu0 0.0
      %v1070 = vand.u32 %v932, 4294901760
      %v1071 = vsub.f32 %v932, %v1070
      %v1072 = vand.u32 %v1071, 4294901760
      %v1073 = vsub.f32 %v1071, %v1072
      %v1074 = vand.u32 %v1073, 4294901760
      %1075 = vmatpush1.msra.mxu0 %v1074
      %1076 = vmatprep.subr.mxu0 0.0
      %v1077 = vand.u32 %v933, 4294901760
      %v1078 = vsub.f32 %v933, %v1077
      %v1079 = vand.u32 %v1078, 4294901760
      %v1080 = vsub.f32 %v1078, %v1079
      %v1081 = vand.u32 %v1080, 4294901760
      %1082 = vmatpush1.msra.mxu0 %v1081
      %1083 = vmatprep.subr.mxu0 0.0
      %v1084 = vand.u32 %v934, 4294901760
      %v1085 = vsub.f32 %v934, %v1084
      %v1086 = vand.u32 %v1085, 4294901760
      %v1087 = vsub.f32 %v1085, %v1086
      %v1088 = vand.u32 %v1087, 4294901760
      %1089 = vmatpush1.msra.mxu0 %v1088
      %1090 = vmatprep.subr.mxu0 0.0
      %v1091 = vand.u32 %v935, 4294901760
      %v1092 = vsub.f32 %v935, %v1091
      %v1093 = vand.u32 %v1092, 4294901760
      %v1094 = vsub.f32 %v1092, %v1093
      %v1095 = vand.u32 %v1094, 4294901760
      %1096 = vmatpush1.msra.mxu0 %v1095
      %1097 = vmatprep.subr.mxu0 0.0
      %v1098 = vand.u32 %v936, 4294901760
      %v1099 = vsub.f32 %v936, %v1098
      %v1100 = vand.u32 %v1099, 4294901760
      %v1101 = vsub.f32 %v1099, %v1100
      %v1102 = vand.u32 %v1101, 4294901760
      %1103 = vmatpush1.msra.mxu0 %v1102
      %1104 = vmatprep.subr.mxu0 0.0
      %v1105 = vand.u32 %v937, 4294901760
      %v1106 = vsub.f32 %v937, %v1105
      %v1107 = vand.u32 %v1106, 4294901760
      %v1108 = vsub.f32 %v1106, %v1107
      %v1109 = vand.u32 %v1108, 4294901760
      %1110 = vmatpush1.msra.mxu0 %v1109
      %1111 = vmatprep.subr.mxu0 0.0
      %v1112 = vand.u32 %v938, 4294901760
      %v1113 = vsub.f32 %v938, %v1112
      %v1114 = vand.u32 %v1113, 4294901760
      %v1115 = vsub.f32 %v1113, %v1114
      %v1116 = vand.u32 %v1115, 4294901760
      %1117 = vmatpush1.msra.mxu0 %v1116
      %1118 = vmatprep.subr.mxu0 0.0
      %v1119 = vand.u32 %v939, 4294901760
      %v1120 = vsub.f32 %v939, %v1119
      %v1121 = vand.u32 %v1120, 4294901760
      %v1122 = vsub.f32 %v1120, %v1121
      %v1123 = vand.u32 %v1122, 4294901760
      %1124 = vmatpush1.msra.mxu0 %v1123
      %1125 = vmatprep.subr.mxu0 0.0
      %v1126 = vand.u32 %v940, 4294901760
      %v1127 = vsub.f32 %v940, %v1126
      %v1128 = vand.u32 %v1127, 4294901760
      %v1129 = vsub.f32 %v1127, %v1128
      %v1130 = vand.u32 %v1129, 4294901760
      %1131 = vmatpush1.msra.mxu0 %v1130
      %1132 = vmatprep.subr.mxu0 0.0
      %v1133 = vand.u32 %v941, 4294901760
      %v1134 = vsub.f32 %v941, %v1133
      %v1135 = vand.u32 %v1134, 4294901760
      %v1136 = vsub.f32 %v1134, %v1135
      %v1137 = vand.u32 %v1136, 4294901760
      %1138 = vmatpush1.msra.mxu0 %v1137
      %1139 = vmatprep.subr.mxu0 0.0
      %v1140 = vand.u32 %v942, 4294901760
      %v1141 = vsub.f32 %v942, %v1140
      %v1142 = vand.u32 %v1141, 4294901760
      %v1143 = vsub.f32 %v1141, %v1142
      %v1144 = vand.u32 %v1143, 4294901760
      %1145 = vmatpush1.msra.mxu0 %v1144
      %1146 = vmatprep.subr.mxu0 0.0
      %1147 = vmatpush1.msra.mxu0 0.0
      %1148 = vmatprep.subr.mxu0 0.0
      %1149 = vmatpush1.msra.mxu0 0.0
      %1150 = vmatprep.subr.mxu0 0.0
      %1151 = vmatpush1.msra.mxu0 0.0
      %1152 = vmatprep.subr.mxu0 0.0
      %1153 = vmatpush1.msra.mxu0 0.0
      %1154 = vmatprep.subr.mxu0 0.0
      %1155 = vmatpush1.msra.mxu0 0.0
      %1156 = vmatprep.subr.mxu0 0.0
      %1157 = vmatpush1.msra.mxu0 0.0
      %1158 = vmatprep.subr.mxu0 0.0
      %1159 = vmatpush1.msra.mxu0 0.0
      %1160 = vmatprep.subr.mxu0 0.0
      %1161 = vmatpush1.msra.mxu0 0.0
      %1162 = vmatprep.subr.mxu0 0.0
      %1163 = vmatpush1.msra.mxu0 0.0
      %1164 = vmatprep.subr.mxu0 0.0
      %1165 = vmatpush1.msra.mxu0 0.0
      %1166 = vmatprep.subr.mxu0 0.0
      %1167 = vmatpush1.msra.mxu0 0.0
      %1168 = vmatprep.subr.mxu0 0.0
      %1169 = vmatpush1.msra.mxu0 0.0
      %1170 = vmatprep.subr.mxu0 0.0
      %1171 = vmatpush1.msra.mxu0 0.0
      %1172 = vmatprep.subr.mxu0 0.0
      %1173 = vmatpush1.msra.mxu0 0.0
      %1174 = vmatprep.subr.mxu0 0.0
      %1175 = vmatpush1.msra.mxu0 0.0
      %1176 = vmatprep.subr.mxu0 0.0
      %1177 = vmatpush1.msra.mxu0 0.0
      %1178 = vmatprep.mubr.f32.mxu0 0.0
      %v1179 = vand.u32 %v926, 4294901760
      %1180 = vmatmul.mubr.f32.gmra.mrb[0].mxu0 %v1179
      %v1181 = vpop.f32.mrb[0].mxu0
      %v1182 = vadd.f32 %v1031, %v1181
      %v1183 = vpop.f32.mrb[0].mxu0
      %1184 = vdwg.mxu0
      %1185 = vmatprep.subr.mxu0 0.0
      %v1186 = vand.u32 %v927, 4294901760
      %v1187 = vsub.f32 %v927, %v1186
      %1188 = vmatpush1.msra.mxu0 %v1187
      %1189 = vmatprep.subr.mxu0 0.0
      %v1190 = vand.u32 %v928, 4294901760
      %v1191 = vsub.f32 %v928, %v1190
      %1192 = vmatpush1.msra.mxu0 %v1191
      %1193 = vmatprep.subr.mxu0 0.0
      %v1194 = vand.u32 %v929, 4294901760
      %v1195 = vsub.f32 %v929, %v1194
      %1196 = vmatpush1.msra.mxu0 %v1195
      %1197 = vmatprep.subr.mxu0 0.0
      %v1198 = vand.u32 %v930, 4294901760
      %v1199 = vsub.f32 %v930, %v1198
      %1200 = vmatpush1.msra.mxu0 %v1199
      %1201 = vmatprep.subr.mxu0 0.0
      %v1202 = vand.u32 %v931, 4294901760
      %v1203 = vsub.f32 %v931, %v1202
      %1204 = vmatpush1.msra.mxu0 %v1203
      %1205 = vmatprep.subr.mxu0 0.0
      %v1206 = vand.u32 %v932, 4294901760
      %v1207 = vsub.f32 %v932, %v1206
      %1208 = vmatpush1.msra.mxu0 %v1207
      %1209 = vmatprep.subr.mxu0 0.0
      %v1210 = vand.u32 %v933, 4294901760
      %v1211 = vsub.f32 %v933, %v1210
      %1212 = vmatpush1.msra.mxu0 %v1211
      %1213 = vmatprep.subr.mxu0 0.0
      %v1214 = vand.u32 %v934, 4294901760
      %v1215 = vsub.f32 %v934, %v1214
      %1216 = vmatpush1.msra.mxu0 %v1215
      %1217 = vmatprep.subr.mxu0 0.0
      %v1218 = vand.u32 %v935, 4294901760
      %v1219 = vsub.f32 %v935, %v1218
      %1220 = vmatpush1.msra.mxu0 %v1219
      %1221 = vmatprep.subr.mxu0 0.0
      %v1222 = vand.u32 %v936, 4294901760
      %v1223 = vsub.f32 %v936, %v1222
      %1224 = vmatpush1.msra.mxu0 %v1223
      %1225 = vmatprep.subr.mxu0 0.0
      %v1226 = vand.u32 %v937, 4294901760
      %v1227 = vsub.f32 %v937, %v1226
      %1228 = vmatpush1.msra.mxu0 %v1227
      %1229 = vmatprep.subr.mxu0 0.0
      %v1230 = vand.u32 %v938, 4294901760
      %v1231 = vsub.f32 %v938, %v1230
      %1232 = vmatpush1.msra.mxu0 %v1231
      %1233 = vmatprep.subr.mxu0 0.0
      %v1234 = vand.u32 %v939, 4294901760
      %v1235 = vsub.f32 %v939, %v1234
      %1236 = vmatpush1.msra.mxu0 %v1235
      %1237 = vmatprep.subr.mxu0 0.0
      %v1238 = vand.u32 %v940, 4294901760
      %v1239 = vsub.f32 %v940, %v1238
      %1240 = vmatpush1.msra.mxu0 %v1239
      %1241 = vmatprep.subr.mxu0 0.0
      %v1242 = vand.u32 %v941, 4294901760
      %v1243 = vsub.f32 %v941, %v1242
      %1244 = vmatpush1.msra.mxu0 %v1243
      %1245 = vmatprep.subr.mxu0 0.0
      %v1246 = vand.u32 %v942, 4294901760
      %v1247 = vsub.f32 %v942, %v1246
      %1248 = vmatpush1.msra.mxu0 %v1247
      %1249 = vmatprep.subr.mxu0 0.0
      %1250 = vmatpush1.msra.mxu0 0.0
      %1251 = vmatprep.subr.mxu0 0.0
      %1252 = vmatpush1.msra.mxu0 0.0
      %1253 = vmatprep.subr.mxu0 0.0
      %1254 = vmatpush1.msra.mxu0 0.0
      %1255 = vmatprep.subr.mxu0 0.0
      %1256 = vmatpush1.msra.mxu0 0.0
      %1257 = vmatprep.subr.mxu0 0.0
      %1258 = vmatpush1.msra.mxu0 0.0
      %1259 = vmatprep.subr.mxu0 0.0
      %1260 = vmatpush1.msra.mxu0 0.0
      %1261 = vmatprep.subr.mxu0 0.0
      %1262 = vmatpush1.msra.mxu0 0.0
      %1263 = vmatprep.subr.mxu0 0.0
      %1264 = vmatpush1.msra.mxu0 0.0
      %1265 = vmatprep.subr.mxu0 0.0
      %1266 = vmatpush1.msra.mxu0 0.0
      %1267 = vmatprep.subr.mxu0 0.0
      %1268 = vmatpush1.msra.mxu0 0.0
      %1269 = vmatprep.subr.mxu0 0.0
      %1270 = vmatpush1.msra.mxu0 0.0
      %1271 = vmatprep.subr.mxu0 0.0
      %1272 = vmatpush1.msra.mxu0 0.0
      %1273 = vmatprep.subr.mxu0 0.0
      %1274 = vmatpush1.msra.mxu0 0.0
      %1275 = vmatprep.subr.mxu0 0.0
      %1276 = vmatpush1.msra.mxu0 0.0
      %1277 = vmatprep.subr.mxu0 0.0
      %1278 = vmatpush1.msra.mxu0 0.0
      %1279 = vmatprep.subr.mxu0 0.0
      %1280 = vmatpush1.msra.mxu0 0.0
      %1281 = vmatprep.mubr.f32.mxu0 0.0
      %v1282 = vand.u32 %v926, 4294901760
      %v1283 = vsub.f32 %v926, %v1282
      %1284 = vmatmul.mubr.f32.gmra.mrb[0].mxu0 %v1283
      %v1285 = vpop.f32.mrb[0].mxu0
      %v1286 = vadd.f32 %v1182, %v1285
      %v1287 = vpop.f32.mrb[0].mxu0
      %1288 = vdwg.mxu0
      %1289 = vmatprep.subr.mxu0 0.0
      %v1290 = vand.u32 %v927, 4294901760
      %1291 = vmatpush1.msra.mxu0 %v1290
      %1292 = vmatprep.subr.mxu0 0.0
      %v1293 = vand.u32 %v928, 4294901760
      %1294 = vmatpush1.msra.mxu0 %v1293
      %1295 = vmatprep.subr.mxu0 0.0
      %v1296 = vand.u32 %v929, 4294901760
      %1297 = vmatpush1.msra.mxu0 %v1296
      %1298 = vmatprep.subr.mxu0 0.0
      %v1299 = vand.u32 %v930, 4294901760
      %1300 = vmatpush1.msra.mxu0 %v1299
      %1301 = vmatprep.subr.mxu0 0.0
      %v1302 = vand.u32 %v931, 4294901760
      %1303 = vmatpush1.msra.mxu0 %v1302
      %1304 = vmatprep.subr.mxu0 0.0
      %v1305 = vand.u32 %v932, 4294901760
      %1306 = vmatpush1.msra.mxu0 %v1305
      %1307 = vmatprep.subr.mxu0 0.0
      %v1308 = vand.u32 %v933, 4294901760
      %1309 = vmatpush1.msra.mxu0 %v1308
      %1310 = vmatprep.subr.mxu0 0.0
      %v1311 = vand.u32 %v934, 4294901760
      %1312 = vmatpush1.msra.mxu0 %v1311
      %1313 = vmatprep.subr.mxu0 0.0
      %v1314 = vand.u32 %v935, 4294901760
      %1315 = vmatpush1.msra.mxu0 %v1314
      %1316 = vmatprep.subr.mxu0 0.0
      %v1317 = vand.u32 %v936, 4294901760
      %1318 = vmatpush1.msra.mxu0 %v1317
      %1319 = vmatprep.subr.mxu0 0.0
      %v1320 = vand.u32 %v937, 4294901760
      %1321 = vmatpush1.msra.mxu0 %v1320
      %1322 = vmatprep.subr.mxu0 0.0
      %v1323 = vand.u32 %v938, 4294901760
      %1324 = vmatpush1.msra.mxu0 %v1323
      %1325 = vmatprep.subr.mxu0 0.0
      %v1326 = vand.u32 %v939, 4294901760
      %1327 = vmatpush1.msra.mxu0 %v1326
      %1328 = vmatprep.subr.mxu0 0.0
      %v1329 = vand.u32 %v940, 4294901760
      %1330 = vmatpush1.msra.mxu0 %v1329
      %1331 = vmatprep.subr.mxu0 0.0
      %v1332 = vand.u32 %v941, 4294901760
      %1333 = vmatpush1.msra.mxu0 %v1332
      %1334 = vmatprep.subr.mxu0 0.0
      %v1335 = vand.u32 %v942, 4294901760
      %1336 = vmatpush1.msra.mxu0 %v1335
      %1337 = vmatprep.subr.mxu0 0.0
      %1338 = vmatpush1.msra.mxu0 0.0
      %1339 = vmatprep.subr.mxu0 0.0
      %1340 = vmatpush1.msra.mxu0 0.0
      %1341 = vmatprep.subr.mxu0 0.0
      %1342 = vmatpush1.msra.mxu0 0.0
      %1343 = vmatprep.subr.mxu0 0.0
      %1344 = vmatpush1.msra.mxu0 0.0
      %1345 = vmatprep.subr.mxu0 0.0
      %1346 = vmatpush1.msra.mxu0 0.0
      %1347 = vmatprep.subr.mxu0 0.0
      %1348 = vmatpush1.msra.mxu0 0.0
      %1349 = vmatprep.subr.mxu0 0.0
      %1350 = vmatpush1.msra.mxu0 0.0
      %1351 = vmatprep.subr.mxu0 0.0
      %1352 = vmatpush1.msra.mxu0 0.0
      %1353 = vmatprep.subr.mxu0 0.0
      %1354 = vmatpush1.msra.mxu0 0.0
      %1355 = vmatprep.subr.mxu0 0.0
      %1356 = vmatpush1.msra.mxu0 0.0
      %1357 = vmatprep.subr.mxu0 0.0
      %1358 = vmatpush1.msra.mxu0 0.0
      %1359 = vmatprep.subr.mxu0 0.0
      %1360 = vmatpush1.msra.mxu0 0.0
      %1361 = vmatprep.subr.mxu0 0.0
      %1362 = vmatpush1.msra.mxu0 0.0
      %1363 = vmatprep.subr.mxu0 0.0
      %1364 = vmatpush1.msra.mxu0 0.0
      %1365 = vmatprep.subr.mxu0 0.0
      %1366 = vmatpush1.msra.mxu0 0.0
      %1367 = vmatprep.subr.mxu0 0.0
      %1368 = vmatpush1.msra.mxu0 0.0
      %1369 = vmatprep.mubr.f32.mxu0 0.0
      %v1370 = vand.u32 %v926, 4294901760
      %v1371 = vsub.f32 %v926, %v1370
      %v1372 = vand.u32 %v1371, 4294901760
      %1373 = vmatmul.mubr.f32.gmra.mrb[0].mxu0 %v1372
      %v1374 = vpop.f32.mrb[0].mxu0
      %v1375 = vadd.f32 %v1286, %v1374
      %v1376 = vpop.f32.mrb[0].mxu0
      %1377 = vdwg.mxu0
      %1378 = vmatprep.subr.mxu0 0.0
      %v1379 = vand.u32 %v927, 4294901760
      %v1380 = vsub.f32 %v927, %v1379
      %v1381 = vand.u32 %v1380, 4294901760
      %1382 = vmatpush1.msra.mxu0 %v1381
      %1383 = vmatprep.subr.mxu0 0.0
      %v1384 = vand.u32 %v928, 4294901760
      %v1385 = vsub.f32 %v928, %v1384
      %v1386 = vand.u32 %v1385, 4294901760
      %1387 = vmatpush1.msra.mxu0 %v1386
      %1388 = vmatprep.subr.mxu0 0.0
      %v1389 = vand.u32 %v929, 4294901760
      %v1390 = vsub.f32 %v929, %v1389
      %v1391 = vand.u32 %v1390, 4294901760
      %1392 = vmatpush1.msra.mxu0 %v1391
      %1393 = vmatprep.subr.mxu0 0.0
      %v1394 = vand.u32 %v930, 4294901760
      %v1395 = vsub.f32 %v930, %v1394
      %v1396 = vand.u32 %v1395, 4294901760
      %1397 = vmatpush1.msra.mxu0 %v1396
      %1398 = vmatprep.subr.mxu0 0.0
      %v1399 = vand.u32 %v931, 4294901760
      %v1400 = vsub.f32 %v931, %v1399
      %v1401 = vand.u32 %v1400, 4294901760
      %1402 = vmatpush1.msra.mxu0 %v1401
      %1403 = vmatprep.subr.mxu0 0.0
      %v1404 = vand.u32 %v932, 4294901760
      %v1405 = vsub.f32 %v932, %v1404
      %v1406 = vand.u32 %v1405, 4294901760
      %1407 = vmatpush1.msra.mxu0 %v1406
      %1408 = vmatprep.subr.mxu0 0.0
      %v1409 = vand.u32 %v933, 4294901760
      %v1410 = vsub.f32 %v933, %v1409
      %v1411 = vand.u32 %v1410, 4294901760
      %1412 = vmatpush1.msra.mxu0 %v1411
      %1413 = vmatprep.subr.mxu0 0.0
      %v1414 = vand.u32 %v934, 4294901760
      %v1415 = vsub.f32 %v934, %v1414
      %v1416 = vand.u32 %v1415, 4294901760
      %1417 = vmatpush1.msra.mxu0 %v1416
      %1418 = vmatprep.subr.mxu0 0.0
      %v1419 = vand.u32 %v935, 4294901760
      %v1420 = vsub.f32 %v935, %v1419
      %v1421 = vand.u32 %v1420, 4294901760
      %1422 = vmatpush1.msra.mxu0 %v1421
      %1423 = vmatprep.subr.mxu0 0.0
      %v1424 = vand.u32 %v936, 4294901760
      %v1425 = vsub.f32 %v936, %v1424
      %v1426 = vand.u32 %v1425, 4294901760
      %1427 = vmatpush1.msra.mxu0 %v1426
      %1428 = vmatprep.subr.mxu0 0.0
      %v1429 = vand.u32 %v937, 4294901760
      %v1430 = vsub.f32 %v937, %v1429
      %v1431 = vand.u32 %v1430, 4294901760
      %1432 = vmatpush1.msra.mxu0 %v1431
      %1433 = vmatprep.subr.mxu0 0.0
      %v1434 = vand.u32 %v938, 4294901760
      %v1435 = vsub.f32 %v938, %v1434
      %v1436 = vand.u32 %v1435, 4294901760
      %1437 = vmatpush1.msra.mxu0 %v1436
      %1438 = vmatprep.subr.mxu0 0.0
      %v1439 = vand.u32 %v939, 4294901760
      %v1440 = vsub.f32 %v939, %v1439
      %v1441 = vand.u32 %v1440, 4294901760
      %1442 = vmatpush1.msra.mxu0 %v1441
      %1443 = vmatprep.subr.mxu0 0.0
      %v1444 = vand.u32 %v940, 4294901760
      %v1445 = vsub.f32 %v940, %v1444
      %v1446 = vand.u32 %v1445, 4294901760
      %1447 = vmatpush1.msra.mxu0 %v1446
      %1448 = vmatprep.subr.mxu0 0.0
      %v1449 = vand.u32 %v941, 4294901760
      %v1450 = vsub.f32 %v941, %v1449
      %v1451 = vand.u32 %v1450, 4294901760
      %1452 = vmatpush1.msra.mxu0 %v1451
      %1453 = vmatprep.subr.mxu0 0.0
      %v1454 = vand.u32 %v942, 4294901760
      %v1455 = vsub.f32 %v942, %v1454
      %v1456 = vand.u32 %v1455, 4294901760
      %1457 = vmatpush1.msra.mxu0 %v1456
      %1458 = vmatprep.subr.mxu0 0.0
      %1459 = vmatpush1.msra.mxu0 0.0
      %1460 = vmatprep.subr.mxu0 0.0
      %1461 = vmatpush1.msra.mxu0 0.0
      %1462 = vmatprep.subr.mxu0 0.0
      %1463 = vmatpush1.msra.mxu0 0.0
      %1464 = vmatprep.subr.mxu0 0.0
      %1465 = vmatpush1.msra.mxu0 0.0
      %1466 = vmatprep.subr.mxu0 0.0
      %1467 = vmatpush1.msra.mxu0 0.0
      %1468 = vmatprep.subr.mxu0 0.0
      %1469 = vmatpush1.msra.mxu0 0.0
      %1470 = vmatprep.subr.mxu0 0.0
      %1471 = vmatpush1.msra.mxu0 0.0
      %1472 = vmatprep.subr.mxu0 0.0
      %1473 = vmatpush1.msra.mxu0 0.0
      %1474 = vmatprep.subr.mxu0 0.0
      %1475 = vmatpush1.msra.mxu0 0.0
      %1476 = vmatprep.subr.mxu0 0.0
      %1477 = vmatpush1.msra.mxu0 0.0
      %1478 = vmatprep.subr.mxu0 0.0
      %1479 = vmatpush1.msra.mxu0 0.0
      %1480 = vmatprep.subr.mxu0 0.0
      %1481 = vmatpush1.msra.mxu0 0.0
      %1482 = vmatprep.subr.mxu0 0.0
      %1483 = vmatpush1.msra.mxu0 0.0
      %1484 = vmatprep.subr.mxu0 0.0
      %1485 = vmatpush1.msra.mxu0 0.0
      %1486 = vmatprep.subr.mxu0 0.0
      %1487 = vmatpush1.msra.mxu0 0.0
      %1488 = vmatprep.subr.mxu0 0.0
      %1489 = vmatpush1.msra.mxu0 0.0
      %1490 = vmatprep.mubr.f32.mxu0 0.0
      %v1491 = vand.u32 %v926, 4294901760
      %1492 = vmatmul.mubr.f32.gmra.mrb[0].mxu0 %v1491
      %v1493 = vpop.f32.mrb[0].mxu0
      %v1494 = vadd.f32 %v1375, %v1493
      %v1495 = vpop.f32.mrb[0].mxu0
      %1496 = vdwg.mxu0
      %1497 = vmatprep.subr.mxu0 0.0
      %v1498 = vand.u32 %v927, 4294901760
      %1499 = vmatpush1.msra.mxu0 %v1498
      %1500 = vmatprep.subr.mxu0 0.0
      %v1501 = vand.u32 %v928, 4294901760
      %1502 = vmatpush1.msra.mxu0 %v1501
      %1503 = vmatprep.subr.mxu0 0.0
      %v1504 = vand.u32 %v929, 4294901760
      %1505 = vmatpush1.msra.mxu0 %v1504
      %1506 = vmatprep.subr.mxu0 0.0
      %v1507 = vand.u32 %v930, 4294901760
      %1508 = vmatpush1.msra.mxu0 %v1507
      %1509 = vmatprep.subr.mxu0 0.0
      %v1510 = vand.u32 %v931, 4294901760
      %1511 = vmatpush1.msra.mxu0 %v1510
      %1512 = vmatprep.subr.mxu0 0.0
      %v1513 = vand.u32 %v932, 4294901760
      %1514 = vmatpush1.msra.mxu0 %v1513
      %1515 = vmatprep.subr.mxu0 0.0
      %v1516 = vand.u32 %v933, 4294901760
      %1517 = vmatpush1.msra.mxu0 %v1516
      %1518 = vmatprep.subr.mxu0 0.0
      %v1519 = vand.u32 %v934, 4294901760
      %1520 = vmatpush1.msra.mxu0 %v1519
      %1521 = vmatprep.subr.mxu0 0.0
      %v1522 = vand.u32 %v935, 4294901760
      %1523 = vmatpush1.msra.mxu0 %v1522
      %1524 = vmatprep.subr.mxu0 0.0
      %v1525 = vand.u32 %v936, 4294901760
      %1526 = vmatpush1.msra.mxu0 %v1525
      %1527 = vmatprep.subr.mxu0 0.0
      %v1528 = vand.u32 %v937, 4294901760
      %1529 = vmatpush1.msra.mxu0 %v1528
      %1530 = vmatprep.subr.mxu0 0.0
      %v1531 = vand.u32 %v938, 4294901760
      %1532 = vmatpush1.msra.mxu0 %v1531
      %1533 = vmatprep.subr.mxu0 0.0
      %v1534 = vand.u32 %v939, 4294901760
      %1535 = vmatpush1.msra.mxu0 %v1534
      %1536 = vmatprep.subr.mxu0 0.0
      %v1537 = vand.u32 %v940, 4294901760
      %1538 = vmatpush1.msra.mxu0 %v1537
      %1539 = vmatprep.subr.mxu0 0.0
      %v1540 = vand.u32 %v941, 4294901760
      %1541 = vmatpush1.msra.mxu0 %v1540
      %1542 = vmatprep.subr.mxu0 0.0
      %v1543 = vand.u32 %v942, 4294901760
      %1544 = vmatpush1.msra.mxu0 %v1543
      %1545 = vmatprep.subr.mxu0 0.0
      %1546 = vmatpush1.msra.mxu0 0.0
      %1547 = vmatprep.subr.mxu0 0.0
      %1548 = vmatpush1.msra.mxu0 0.0
      %1549 = vmatprep.subr.mxu0 0.0
      %1550 = vmatpush1.msra.mxu0 0.0
      %1551 = vmatprep.subr.mxu0 0.0
      %1552 = vmatpush1.msra.mxu0 0.0
      %1553 = vmatprep.subr.mxu0 0.0
      %1554 = vmatpush1.msra.mxu0 0.0
      %1555 = vmatprep.subr.mxu0 0.0
      %1556 = vmatpush1.msra.mxu0 0.0
      %1557 = vmatprep.subr.mxu0 0.0
      %1558 = vmatpush1.msra.mxu0 0.0
      %1559 = vmatprep.subr.mxu0 0.0
      %1560 = vmatpush1.msra.mxu0 0.0
      %1561 = vmatprep.subr.mxu0 0.0
      %1562 = vmatpush1.msra.mxu0 0.0
      %1563 = vmatprep.subr.mxu0 0.0
      %1564 = vmatpush1.msra.mxu0 0.0
      %1565 = vmatprep.subr.mxu0 0.0
      %1566 = vmatpush1.msra.mxu0 0.0
      %1567 = vmatprep.subr.mxu0 0.0
      %1568 = vmatpush1.msra.mxu0 0.0
      %1569 = vmatprep.subr.mxu0 0.0
      %1570 = vmatpush1.msra.mxu0 0.0
      %1571 = vmatprep.subr.mxu0 0.0
      %1572 = vmatpush1.msra.mxu0 0.0
      %1573 = vmatprep.subr.mxu0 0.0
      %1574 = vmatpush1.msra.mxu0 0.0
      %1575 = vmatprep.subr.mxu0 0.0
      %1576 = vmatpush1.msra.mxu0 0.0
      %1577 = vmatprep.mubr.f32.mxu0 0.0
      %v1578 = vand.u32 %v926, 4294901760
      %1579 = vmatmul.mubr.f32.gmra.mrb[0].mxu0 %v1578
      %v1580 = vpop.f32.mrb[0].mxu0
      %v1581 = vadd.f32 %v1494, %v1580
      %v1582 = vpop.f32.mrb[0].mxu0
      %1583 = vdwg.mxu0
      %v1584 = vadd.f32 %v305, %v1581
      %1585 = vst.msk [vmem:[%s304] sm:$0xff] %vm308, %v1584
      %p1586 = scmp.lt.s32.totalorder %s22, 1
      %s1587 = scalar_select %p1586, %s22, 1
      %p1588 = scmp.lt.s32.totalorder %s23, 0
      %s1589 = scalar_select %p1588, %s23, 0
      %s1590 = sadd.s32 %s1589, %s1587
      %s1591 = smul.addr %s1590, 8
      %s1592 = scalar_lea.vmem %s7, %s1591
      // Predicated region
      $region49: #{_lambda_.10} parent=47 // pred_check
        %p1593 = pneg %p204
      $region50: #{_lambda_.10} parent=47 // pred_check_branch
        %1595 = sbr.rel (%p1593) target = $region52
      $region51: #{_lambda_.10} parent=47 // pred_region
        _
      $region52: #{_lambda_.10} parent=47 // pred_fallthru
        _
    $region48: #{_lambda_.10} parent=5 // pred_fallthru
      _
    %p1596 = scmp.le.s32.totalorder 2, %s13
    // Predicated region
    $region53: #{_lambda_.10} parent=5 // pred_check
      %p1597 = pneg %p1596
    $region54: #{_lambda_.10} parent=5 // pred_check_branch
      %1599 = sbr.rel (%p1597) target = $region56
    $region55: #{_lambda_.10} parent=5 // pred_region
      %s1600 = ssub.s32 %s13, 2
      // Predicated region
      $region57: #{_lambda_.10} parent=55 // pred_check
        %p1601 = pneg %p210
      $region58: #{_lambda_.10} parent=55 // pred_check_branch
        %1603 = sbr.rel (%p1601) target = $region60
      $region59: #{_lambda_.10} parent=55 // pred_region
        %p1604 = scmp.lt.s32.totalorder %s24, 1
        %s1605 = scalar_select %p1604, %s24, 1
        %p1606 = scmp.lt.s32.totalorder %s25, 0
        %s1607 = scalar_select %p1606, %s25, 0
        %s1608 = sadd.s32 %s1607, %s1605
        %s1609 = smul.addr %s1608, 8
        %s1610 = scalar_lea.vmem %s7, %s1609
      $region60: #{_lambda_.10} parent=55 // pred_fallthru
        _
    $region56: #{_lambda_.10} parent=5 // pred_fallthru
      _
  $region6: #{_lambda_.10} parent=0 // loop_footer
    %s17 = sadd.s32 1, %s13
  $region7: #{_lambda_.10} parent=0 // loop_footer_branch
    %12 = sbr.rel target = $region3
  $region8: #{_lambda_.10} parent=0 // loop_exit
    _

// kernel: _lambda_.13
$region0: #{_lambda_.13}
  #allocation0 [shape = 'u32[]', space=smem, size = 0x4, offset = 0x4, fixed_abs, tag = 'smem constant byte address 0x4 - core index']
  #allocation1 [shape = 'u32[144,128]{1,0:T(1,128)}', space=vmem, size = 0x12000, scoped, tag = 'internal scratch']
  %s0 = inlined_call_operand.vmem [shape: f32[2,8,32], index: 0, kind: input, shape index: {}]
  %s1 = inlined_call_operand.vmem [shape: f32[1,32], index: 1, kind: input, shape index: {}]
  %s2 = inlined_call_operand.vmem [shape: f32[1,32], index: 2, kind: input, shape index: {}]
  %s3 = inlined_call_operand.vmem [shape: f32[32,256], index: 3, kind: input, shape index: {}]
  %s4 = inlined_call_operand.vmem [shape: f32[1,128], index: 4, kind: input, shape index: {}]
  %s5 = inlined_call_operand.vmem [shape: f32[1,128], index: 5, kind: input, shape index: {}]
  %s6 = inlined_call_operand.vmem [shape: f32[128,32], index: 6, kind: input, shape index: {}]
  %s7 = inlined_call_operand.hbm [shape: f32[2,8,32], index: 7, kind: output, shape index: {}]
  %s8 = sld [smem:[#allocation0]]
  $region61: #{_lambda_.13} parent=0
    _
  %s10 = ssub.s32 1, %s8
  %s11 = scalar_select 0, %s10, %s8
  $region1: #{_lambda_.13} parent=0
    #allocation2 [shape = 'u8[8192]{0}', space=vmem, size = 0x2000, scoped, tag = 'output window, operand 0']
    #allocation3 [shape = 's32[2]{0}', space=sflag, size = 0x8, scoped, tag = 'scoped memory for _lambda_.13']
    %12 = vsyncpa [#allocation3], 0
    %s13 = scalar_lea.sflag [#allocation3], 1
    %14 = vsyncpa %s13, 0
    loop: start=0, step=1, limit=4
    $region2: #{_lambda_.13} parent=1 // loop_pre_header
      _
    $region3: #{_lambda_.13} parent=1 // loop_header
      %s16 = sphi 0, %s20
      %p17 = scmp.ge.s32.totalorder %s16, 4
      %s23 = sphi 0, %s35
      %s24 = sphi 0, %s31
      %s25 = sphi 0, %s23
      %s26 = sphi 0, %s24
      %s27 = sphi 0, %s25
      %s28 = sphi 0, %s26
      %s40 = sphi 0, %s42
      %s43 = sphi 0, %s40
      %s44 = sphi 0, %s43
      %s60 = sphi 0, %s44
      %s64 = sphi 0, %s64
      %s66 = sphi 0, %s64
      %s67 = sphi 0, %s66
      %s81 = sphi 0, %s67
      %s85 = sphi 0, %s85
      %s87 = sphi 0, %s85
      %s88 = sphi 0, %s87
      %s102 = sphi 0, %s88
      %s106 = sphi 0, %s106
      %s108 = sphi 0, %s106
      %s109 = sphi 0, %s108
      %s123 = sphi 0, %s109
      %s127 = sphi 0, %s127
      %s129 = sphi 0, %s127
      %s130 = sphi 0, %s129
      %s144 = sphi 0, %s130
      %s148 = sphi 0, %s148
      %s150 = sphi 0, %s148
      %s151 = sphi 0, %s150
      %s165 = sphi 0, %s151
      %s169 = sphi 0, %s169
      %s171 = sphi 0, %s169
      %s172 = sphi 0, %s171
      %s186 = sphi 0, %s172
      %s194 = sphi 0, %s196
      %s197 = sphi 0, %s194
      %s198 = sphi 0, %s197
      %s214 = sphi 0, %s198
    $region4: #{_lambda_.13} parent=1 // loop_header_branch
      %19 = sbr.rel (%p17) target = $region8
    $region5: #{_lambda_.13} parent=1 // loop_body
      %s21 = ssub.s32 %s16, 1
      %s22 = ssub.s32 %s16, 2
      %s29 = sadd.s32 1, %s24
      %p30 = scmp.ge.s32.totalorder %s29, 1
      %s31 = scalar_select %p30, 0, %s29
      %s32 = sadd.s32 1, %s23
      %s33 = scalar_select %p30, %s32, %s23
      %p34 = scmp.ge.s32.totalorder %s33, 2
      %s35 = scalar_select %p34, 0, %s33
      %s36 = ssub.s32 %s23, %s35
      %s37 = ssub.s32 %s24, %s31
      %s38 = sor.u32 %s36, %s37
      %p39 = scmp.eq.s32.totalorder %s38, 0
      %s41 = sadd.s32 %s40, 1
      %s42 = scalar_select %p39, %s40, %s41
      %p45 = pneg %p39
      %p46 = scmp.eq.s32.totalorder %s16, 1
      %p47 = por %p45, %p46
      %p48 = scmp.ne.s32.totalorder %s40, %s43
      %p49 = scmp.eq.s32.totalorder %s16, 0
      %p50 = por %p48, %p49
      %p51 = scmp.ne.s32.totalorder %s40, %s43
      %p52 = scmp.eq.s32.totalorder %s21, 1
      %p53 = por %p51, %p52
      %p54 = scmp.ne.s32.totalorder %s43, %s44
      %p55 = scmp.eq.s32.totalorder %s21, 0
      %p56 = por %p54, %p55
      %p57 = scmp.ne.s32.totalorder %s43, %s44
      %p58 = scmp.eq.s32.totalorder %s22, 1
      %p59 = por %p57, %p58
      %p61 = scmp.ne.s32.totalorder %s44, %s60
      %p62 = scmp.eq.s32.totalorder %s22, 0
      %p63 = por %p61, %p62
      %s65 = sadd.s32 %s64, 1
      %p68 = scmp.eq.s32.totalorder %s16, 1
      %p69 = scmp.ne.s32.totalorder %s64, %s66
      %p70 = scmp.eq.s32.totalorder %s16, 0
      %p71 = por %p69, %p70
      %p72 = scmp.ne.s32.totalorder %s64, %s66
      %p73 = scmp.eq.s32.totalorder %s21, 1
      %p74 = por %p72, %p73
      %p75 = scmp.ne.s32.totalorder %s66, %s67
      %p76 = scmp.eq.s32.totalorder %s21, 0
      %p77 = por %p75, %p76
      %p78 = scmp.ne.s32.totalorder %s66, %s67
      %p79 = scmp.eq.s32.totalorder %s22, 1
      %p80 = por %p78, %p79
      %p82 = scmp.ne.s32.totalorder %s67, %s81
      %p83 = scmp.eq.s32.totalorder %s22, 0
      %p84 = por %p82, %p83
      %s86 = sadd.s32 %s85, 1
      %p89 = scmp.eq.s32.totalorder %s16, 1
      %p90 = scmp.ne.s32.totalorder %s85, %s87
      %p91 = scmp.eq.s32.totalorder %s16, 0
      %p92 = por %p90, %p91
      %p93 = scmp.ne.s32.totalorder %s85, %s87
      %p94 = scmp.eq.s32.totalorder %s21, 1
      %p95 = por %p93, %p94
      %p96 = scmp.ne.s32.totalorder %s87, %s88
      %p97 = scmp.eq.s32.totalorder %s21, 0
      %p98 = por %p96, %p97
      %p99 = scmp.ne.s32.totalorder %s87, %s88
      %p100 = scmp.eq.s32.totalorder %s22, 1
      %p101 = por %p99, %p100
      %p103 = scmp.ne.s32.totalorder %s88, %s102
      %p104 = scmp.eq.s32.totalorder %s22, 0
      %p105 = por %p103, %p104
      %s107 = sadd.s32 %s106, 1
      %p110 = scmp.eq.s32.totalorder %s16, 1
      %p111 = scmp.ne.s32.totalorder %s106, %s108
      %p112 = scmp.eq.s32.totalorder %s16, 0
      %p113 = por %p111, %p112
      %p114 = scmp.ne.s32.totalorder %s106, %s108
      %p115 = scmp.eq.s32.totalorder %s21, 1
      %p116 = por %p114, %p115
      %p117 = scmp.ne.s32.totalorder %s108, %s109
      %p118 = scmp.eq.s32.totalorder %s21, 0
      %p119 = por %p117, %p118
      %p120 = scmp.ne.s32.totalorder %s108, %s109
      %p121 = scmp.eq.s32.totalorder %s22, 1
      %p122 = por %p120, %p121
      %p124 = scmp.ne.s32.totalorder %s109, %s123
      %p125 = scmp.eq.s32.totalorder %s22, 0
      %p126 = por %p124, %p125
      %s128 = sadd.s32 %s127, 1
      %p131 = scmp.eq.s32.totalorder %s16, 1
      %p132 = scmp.ne.s32.totalorder %s127, %s129
      %p133 = scmp.eq.s32.totalorder %s16, 0
      %p134 = por %p132, %p133
      %p135 = scmp.ne.s32.totalorder %s127, %s129
      %p136 = scmp.eq.s32.totalorder %s21, 1
      %p137 = por %p135, %p136
      %p138 = scmp.ne.s32.totalorder %s129, %s130
      %p139 = scmp.eq.s32.totalorder %s21, 0
      %p140 = por %p138, %p139
      %p141 = scmp.ne.s32.totalorder %s129, %s130
      %p142 = scmp.eq.s32.totalorder %s22, 1
      %p143 = por %p141, %p142
      %p145 = scmp.ne.s32.totalorder %s130, %s144
      %p146 = scmp.eq.s32.totalorder %s22, 0
      %p147 = por %p145, %p146
      %s149 = sadd.s32 %s148, 1
      %p152 = scmp.eq.s32.totalorder %s16, 1
      %p153 = scmp.ne.s32.totalorder %s148, %s150
      %p154 = scmp.eq.s32.totalorder %s16, 0
      %p155 = por %p153, %p154
      %p156 = scmp.ne.s32.totalorder %s148, %s150
      %p157 = scmp.eq.s32.totalorder %s21, 1
      %p158 = por %p156, %p157
      %p159 = scmp.ne.s32.totalorder %s150, %s151
      %p160 = scmp.eq.s32.totalorder %s21, 0
      %p161 = por %p159, %p160
      %p162 = scmp.ne.s32.totalorder %s150, %s151
      %p163 = scmp.eq.s32.totalorder %s22, 1
      %p164 = por %p162, %p163
      %p166 = scmp.ne.s32.totalorder %s151, %s165
      %p167 = scmp.eq.s32.totalorder %s22, 0
      %p168 = por %p166, %p167
      %s170 = sadd.s32 %s169, 1
      %p173 = scmp.eq.s32.totalorder %s16, 1
      %p174 = scmp.ne.s32.totalorder %s169, %s171
      %p175 = scmp.eq.s32.totalorder %s16, 0
      %p176 = por %p174, %p175
      %p177 = scmp.ne.s32.totalorder %s169, %s171
      %p178 = scmp.eq.s32.totalorder %s21, 1
      %p179 = por %p177, %p178
      %p180 = scmp.ne.s32.totalorder %s171, %s172
      %p181 = scmp.eq.s32.totalorder %s21, 0
      %p182 = por %p180, %p181
      %p183 = scmp.ne.s32.totalorder %s171, %s172
      %p184 = scmp.eq.s32.totalorder %s22, 1
      %p185 = por %p183, %p184
      %p187 = scmp.ne.s32.totalorder %s172, %s186
      %p188 = scmp.eq.s32.totalorder %s22, 0
      %p189 = por %p187, %p188
      %s190 = ssub.s32 %s23, %s35
      %s191 = ssub.s32 %s24, %s31
      %s192 = sor.u32 %s190, %s191
      %p193 = scmp.eq.s32.totalorder %s192, 0
      %s195 = sadd.s32 %s194, 1
      %s196 = scalar_select %p193, %s194, %s195
      %p199 = pneg %p193
      %p200 = scmp.eq.s32.totalorder %s16, 1
      %p201 = por %p199, %p200
      %p202 = scmp.ne.s32.totalorder %s194, %s197
      %p203 = scmp.eq.s32.totalorder %s16, 0
      %p204 = por %p202, %p203
      %p205 = scmp.ne.s32.totalorder %s194, %s197
      %p206 = scmp.eq.s32.totalorder %s21, 1
      %p207 = por %p205, %p206
      %p208 = scmp.ne.s32.totalorder %s197, %s198
      %p209 = scmp.eq.s32.totalorder %s21, 0
      %p210 = por %p208, %p209
      %p211 = scmp.ne.s32.totalorder %s197, %s198
      %p212 = scmp.eq.s32.totalorder %s22, 1
      %p213 = por %p211, %p212
      %p215 = scmp.ne.s32.totalorder %s198, %s214
      %p216 = scmp.eq.s32.totalorder %s22, 0
      %p217 = por %p215, %p216
      %p218 = scmp.le.s32.totalorder 1, %s16
      %p219 = scmp.lt.s32.totalorder %s16, 3
      %p220 = pnand %p218, %p219
      %p221 = pneg %p220
      // Predicated region
      $region9: #{_lambda_.13} parent=5 // pred_check
        _
      $region10: #{_lambda_.13} parent=5 // pred_check_branch
        %223 = sbr.rel (%p220) target = $region12
      $region11: #{_lambda_.13} parent=5 // pred_region
        %s224 = ssub.s32 %s16, 1
        // Predicated region
        $region13: #{_lambda_.13} parent=11 // pred_check
          %p225 = pneg %p77
        $region14: #{_lambda_.13} parent=11 // pred_check_branch
          %227 = sbr.rel (%p225) target = $region16
        $region15: #{_lambda_.13} parent=11 // pred_region
          _
        $region16: #{_lambda_.13} parent=11 // pred_fallthru
          _
        // Predicated region
        $region17: #{_lambda_.13} parent=11 // pred_check
          %p228 = pneg %p98
        $region18: #{_lambda_.13} parent=11 // pred_check_branch
          %230 = sbr.rel (%p228) target = $region20
        $region19: #{_lambda_.13} parent=11 // pred_region
          _
        $region20: #{_lambda_.13} parent=11 // pred_fallthru
          _
        // Predicated region
        $region21: #{_lambda_.13} parent=11 // pred_check
          %p231 = pneg %p119
        $region22: #{_lambda_.13} parent=11 // pred_check_branch
          %233 = sbr.rel (%p231) target = $region24
        $region23: #{_lambda_.13} parent=11 // pred_region
          _
        $region24: #{_lambda_.13} parent=11 // pred_fallthru
          _
        // Predicated region
        $region25: #{_lambda_.13} parent=11 // pred_check
          %p234 = pneg %p140
        $region26: #{_lambda_.13} parent=11 // pred_check_branch
          %236 = sbr.rel (%p234) target = $region28
        $region27: #{_lambda_.13} parent=11 // pred_region
          _
        $region28: #{_lambda_.13} parent=11 // pred_fallthru
          _
        // Predicated region
        $region29: #{_lambda_.13} parent=11 // pred_check
          %p237 = pneg %p161
        $region30: #{_lambda_.13} parent=11 // pred_check_branch
          %239 = sbr.rel (%p237) target = $region32
        $region31: #{_lambda_.13} parent=11 // pred_region
          _
        $region32: #{_lambda_.13} parent=11 // pred_fallthru
          _
        // Predicated region
        $region33: #{_lambda_.13} parent=11 // pred_check
          %p240 = pneg %p182
        $region34: #{_lambda_.13} parent=11 // pred_check_branch
          %242 = sbr.rel (%p240) target = $region36
        $region35: #{_lambda_.13} parent=11 // pred_region
          _
        $region36: #{_lambda_.13} parent=11 // pred_fallthru
          _
      $region12: #{_lambda_.13} parent=5 // pred_fallthru
        _
      %p243 = scmp.lt.s32.totalorder %s16, 2
      // Predicated region
      $region37: #{_lambda_.13} parent=5 // pred_check
        %p244 = pneg %p243
      $region38: #{_lambda_.13} parent=5 // pred_check_branch
        %246 = sbr.rel (%p244) target = $region40
      $region39: #{_lambda_.13} parent=5 // pred_region
        // Predicated region
        $region41: #{_lambda_.13} parent=39 // pred_check
          %p247 = pneg %p50
        $region42: #{_lambda_.13} parent=39 // pred_check_branch
          %249 = sbr.rel (%p247) target = $region44
        $region43: #{_lambda_.13} parent=39 // pred_region
          %p250 = scmp.lt.s32.totalorder %s23, 1
          %s251 = scalar_select %p250, %s23, 1
          %p252 = scmp.lt.s32.totalorder %s24, 0
          %s253 = scalar_select %p252, %s24, 0
          %s254 = sadd.s32 %s253, %s251
          %s255 = smul.addr %s254, 8
          %s256 = scalar_lea.vmem %s0, %s255
        $region44: #{_lambda_.13} parent=39 // pred_fallthru
          _
      $region40: #{_lambda_.13} parent=5 // pred_fallthru
        _
      %p257 = scmp.le.s32.totalorder 1, %s16
      %p258 = scmp.lt.s32.totalorder %s16, 3
      %p259 = pnand %p257, %p258
      %p260 = pneg %p259
      // Predicated region
      $region45: #{_lambda_.13} parent=5 // pred_check
        _
      $region46: #{_lambda_.13} parent=5 // pred_check_branch
        %262 = sbr.rel (%p259) target = $region48
      $region47: #{_lambda_.13} parent=5 // pred_region
        %s263 = ssub.s32 %s16, 1
        %p264 = scmp.lt.s32.totalorder %s25, 1
        %s265 = scalar_select %p264, %s25, 1
        %p266 = scmp.lt.s32.totalorder %s26, 0
        %s267 = scalar_select %p266, %s26, 0
        %s268 = sadd.s32 %s267, %s265
        %s269 = smul.addr %s268, 8
        %s270 = scalar_lea.vmem %s0, %s269
        %p271 = pneg %p56
        %p272 = pneg %p53
        %p273 = pneg %p77
        %p274 = pneg %p74
        %p275 = pneg %p98
        %p276 = pneg %p95
        %p277 = pneg %p119
        %p278 = pneg %p116
        %p279 = pneg %p140
        %p280 = pneg %p137
        %p281 = pneg %p161
        %p282 = pneg %p158
        %p283 = pneg %p182
        %p284 = pneg %p179
        %p285 = pneg %p210
        %p286 = pneg %p207
        %s287 = sand.u32 %s197, 1
        %s288 = scalar_lea.sflag [#allocation3], %s287
        %s289 = sand.u32 %s197, 1
        %s290 = smul.addr %s289, 8
        %s291 = scalar_lea.vmem [#allocation2], %s290
        %p292 = scmp.lt.s32.totalorder %s25, 1
        %s293 = scalar_select %p292, %s25, 1
        %p294 = scmp.lt.s32.totalorder %s26, 0
        %s295 = scalar_select %p294, %s26, 0
        %s296 = sadd.s32 %s295, %s293
        %s297 = smul.addr %s296, 8
        %s298 = scalar_lea.vmem %s0, %s297
        %v299 = vld [vmem:[%s298] sm:$0xff]
        %v300 = vld [vmem:[%s1] sm:$0x1]
        %v301 = vld [vmem:[%s2] sm:$0x1]
        %vm302 = vcmask 261120
        %v303 = vsel %vm302, %v299, 0.0
        %304 = vadd.xlane.f32.xlu0 %v303
        %v305 = vpop.xlane.xlu0 %304
        %v306 = vrcp.pop 32.0
        %v307 = vmul.f32 %v305, %v306
        %v308 = vsub.f32 %v299, %v307
        %v309 = vmul.f32 %v308, %v308
        %v310 = vsel %vm302, %v309, 0.0
        %311 = vadd.xlane.f32.xlu0 %v310
        %v312 = vpop.xlane.xlu0 %311
        %v313 = vmul.f32 %v312, %v306
        %v314 = vadd.f32 %v313, 1e-05
        %v315 = vrsqrt.pop %v314
        %v316 = vmul.f32 %v308, %v315
        %v318 = vlaneseq
        %v319 = vshrl.u32 %v318, 7
        %v320 = vsub.s32 0, %v319
        %v321 = vrot.slane %v300, %v320
        %v323 = vmul.f32 %v316, %v321
        %v325 = vlaneseq
        %v326 = vshrl.u32 %v325, 7
        %v327 = vsub.s32 0, %v326
        %v328 = vrot.slane %v301, %v327
        %v330 = vadd.f32 %v323, %v328
        %v331 = vld [vmem:[%s3] sm:$0xff]
        %v332 = vld [vmem:[%s3 + $0x8] sm:$0xff]
        %v333 = vld [vmem:[%s3 + $0x10] sm:$0xff]
        %v334 = vld [vmem:[%s3 + $0x18] sm:$0xff]
        %v335 = vld [vmem:[%s3 + $0x20] sm:$0xff]
        %v336 = vld [vmem:[%s3 + $0x28] sm:$0xff]
        %v337 = vld [vmem:[%s3 + $0x30] sm:$0xff]
        %v338 = vld [vmem:[%s3 + $0x38] sm:$0xff]
        %v340 = vsel %vm302, %v330, 0
        %v342 = vand.u32 %v332, 4294901760
        %343 = vmatprep.subr.mxu0 %v342
        %v344 = vand.u32 %v331, 4294901760
        %345 = vmatpush1.msra.mxu0 %v344
        %v346 = vand.u32 %v334, 4294901760
        %347 = vmatprep.subr.mxu0 %v346
        %v348 = vand.u32 %v333, 4294901760
        %349 = vmatpush1.msra.mxu0 %v348
        %v350 = vand.u32 %v336, 4294901760
        %351 = vmatprep.subr.mxu0 %v350
        %v352 = vand.u32 %v335, 4294901760
        %353 = vmatpush1.msra.mxu0 %v352
        %v354 = vand.u32 %v338, 4294901760
        %355 = vmatprep.subr.mxu0 %v354
        %v356 = vand.u32 %v337, 4294901760
        %357 = vmatpush1.msra.mxu0 %v356
        %358 = vmatprep.subr.mxu0 0.0
        %359 = vmatpush1.msra.mxu0 0.0
        %360 = vmatprep.subr.mxu0 0.0
        %361 = vmatpush1.msra.mxu0 0.0
        %362 = vmatprep.subr.mxu0 0.0
        %363 = vmatpush1.msra.mxu0 0.0
        %364 = vmatprep.subr.mxu0 0.0
        %365 = vmatpush1.msra.mxu0 0.0
        %366 = vmatprep.subr.mxu0 0.0
        %367 = vmatpush1.msra.mxu0 0.0
        %368 = vmatprep.subr.mxu0 0.0
        %369 = vmatpush1.msra.mxu0 0.0
        %370 = vmatprep.subr.mxu0 0.0
        %371 = vmatpush1.msra.mxu0 0.0
        %372 = vmatprep.subr.mxu0 0.0
        %373 = vmatpush1.msra.mxu0 0.0
        %374 = vmatprep.subr.mxu0 0.0
        %375 = vmatpush1.msra.mxu0 0.0
        %376 = vmatprep.subr.mxu0 0.0
        %377 = vmatpush1.msra.mxu0 0.0
        %378 = vmatprep.subr.mxu0 0.0
        %379 = vmatpush1.msra.mxu0 0.0
        %380 = vmatprep.subr.mxu0 0.0
        %381 = vmatpush1.msra.mxu0 0.0
        %382 = vmatprep.subr.mxu0 0.0
        %383 = vmatpush1.msra.mxu0 0.0
        %384 = vmatprep.subr.mxu0 0.0
        %385 = vmatpush1.msra.mxu0 0.0
        %386 = vmatprep.subr.mxu0 0.0
        %387 = vmatpush1.msra.mxu0 0.0
        %388 = vmatprep.subr.mxu0 0.0
        %389 = vmatpush1.msra.mxu0 0.0
        %390 = vmatprep.subr.mxu0 0.0
        %391 = vmatpush1.msra.mxu0 0.0
        %392 = vmatprep.subr.mxu0 0.0
        %393 = vmatpush1.msra.mxu0 0.0
        %394 = vmatprep.subr.mxu0 0.0
        %395 = vmatpush1.msra.mxu0 0.0
        %396 = vmatprep.subr.mxu0 0.0
        %397 = vmatpush1.msra.mxu0 0.0
        %398 = vmatprep.subr.mxu0 0.0
        %399 = vmatpush1.msra.mxu0 0.0
        %400 = vmatprep.subr.mxu0 0.0
        %401 = vmatpush1.msra.mxu0 0.0
        %402 = vmatprep.subr.mxu0 0.0
        %403 = vmatpush1.msra.mxu0 0.0
        %404 = vmatprep.subr.mxu0 0.0
        %405 = vmatpush1.msra.mxu0 0.0
        %406 = vmatprep.subr.mxu0 0.0
        %407 = vmatpush1.msra.mxu0 0.0
        %408 = vmatprep.subr.mxu0 0.0
        %409 = vmatpush1.msra.mxu0 0.0
        %410 = vmatprep.subr.mxu0 0.0
        %411 = vmatpush1.msra.mxu0 0.0
        %412 = vmatprep.subr.mxu0 0.0
        %413 = vmatpush1.msra.mxu0 0.0
        %414 = vmatprep.mubr.f32.mxu0 0.0
        %v415 = vand.u32 %v340, 4294901760
        %v416 = vsub.f32 %v340, %v415
        %v417 = vand.u32 %v416, 4294901760
        %v418 = vsub.f32 %v416, %v417
        %v419 = vand.u32 %v418, 4294901760
        %420 = vmatmul.mubr.f32.gmra.mrb[0].mxu0 %v419
        %v421 = vpop.f32.mrb[0].mxu0
        %v422 = vadd.f32 0.0, %v421
        %v423 = vpop.f32.mrb[0].mxu0
        %v424 = vadd.f32 0.0, %v423
        %425 = vdwg.mxu0
        %v426 = vand.u32 %v332, 4294901760
        %v427 = vsub.f32 %v332, %v426
        %v428 = vand.u32 %v427, 4294901760
        %v429 = vsub.f32 %v427, %v428
        %v430 = vand.u32 %v429, 4294901760
        %431 = vmatprep.subr.mxu0 %v430
        %v432 = vand.u32 %v331, 4294901760
        %v433 = vsub.f32 %v331, %v432
        %v434 = vand.u32 %v433, 4294901760
        %v435 = vsub.f32 %v433, %v434
        %v436 = vand.u32 %v435, 4294901760
        %437 = vmatpush1.msra.mxu0 %v436
        %v438 = vand.u32 %v334, 4294901760
        %v439 = vsub.f32 %v334, %v438
        %v440 = vand.u32 %v439, 4294901760
        %v441 = vsub.f32 %v439, %v440
        %v442 = vand.u32 %v441, 4294901760
        %443 = vmatprep.subr.mxu0 %v442
        %v444 = vand.u32 %v333, 4294901760
        %v445 = vsub.f32 %v333, %v444
        %v446 = vand.u32 %v445, 4294901760
        %v447 = vsub.f32 %v445, %v446
        %v448 = vand.u32 %v447, 4294901760
        %449 = vmatpush1.msra.mxu0 %v448
        %v450 = vand.u32 %v336, 4294901760
        %v451 = vsub.f32 %v336, %v450
        %v452 = vand.u32 %v451, 4294901760
        %v453 = vsub.f32 %v451, %v452
        %v454 = vand.u32 %v453, 4294901760
        %455 = vmatprep.subr.mxu0 %v454
        %v456 = vand.u32 %v335, 4294901760
        %v457 = vsub.f32 %v335, %v456
        %v458 = vand.u32 %v457, 4294901760
        %v459 = vsub.f32 %v457, %v458
        %v460 = vand.u32 %v459, 4294901760
        %461 = vmatpush1.msra.mxu0 %v460
        %v462 = vand.u32 %v338, 4294901760
        %v463 = vsub.f32 %v338, %v462
        %v464 = vand.u32 %v463, 4294901760
        %v465 = vsub.f32 %v463, %v464
        %v466 = vand.u32 %v465, 4294901760
        %467 = vmatprep.subr.mxu0 %v466
        %v468 = vand.u32 %v337, 4294901760
        %v469 = vsub.f32 %v337, %v468
        %v470 = vand.u32 %v469, 4294901760
        %v471 = vsub.f32 %v469, %v470
        %v472 = vand.u32 %v471, 4294901760
        %473 = vmatpush1.msra.mxu0 %v472
        %474 = vmatprep.subr.mxu0 0.0
        %475 = vmatpush1.msra.mxu0 0.0
        %476 = vmatprep.subr.mxu0 0.0
        %477 = vmatpush1.msra.mxu0 0.0
        %478 = vmatprep.subr.mxu0 0.0
        %479 = vmatpush1.msra.mxu0 0.0
        %480 = vmatprep.subr.mxu0 0.0
        %481 = vmatpush1.msra.mxu0 0.0
        %482 = vmatprep.subr.mxu0 0.0
        %483 = vmatpush1.msra.mxu0 0.0
        %484 = vmatprep.subr.mxu0 0.0
        %485 = vmatpush1.msra.mxu0 0.0
        %486 = vmatprep.subr.mxu0 0.0
        %487 = vmatpush1.msra.mxu0 0.0
        %488 = vmatprep.subr.mxu0 0.0
        %489 = vmatpush1.msra.mxu0 0.0
        %490 = vmatprep.subr.mxu0 0.0
        %491 = vmatpush1.msra.mxu0 0.0
        %492 = vmatprep.subr.mxu0 0.0
        %493 = vmatpush1.msra.mxu0 0.0
        %494 = vmatprep.subr.mxu0 0.0
        %495 = vmatpush1.msra.mxu0 0.0
        %496 = vmatprep.subr.mxu0 0.0
        %497 = vmatpush1.msra.mxu0 0.0
        %498 = vmatprep.subr.mxu0 0.0
        %499 = vmatpush1.msra.mxu0 0.0
        %500 = vmatprep.subr.mxu0 0.0
        %501 = vmatpush1.msra.mxu0 0.0
        %502 = vmatprep.subr.mxu0 0.0
        %503 = vmatpush1.msra.mxu0 0.0
        %504 = vmatprep.subr.mxu0 0.0
        %505 = vmatpush1.msra.mxu0 0.0
        %506 = vmatprep.subr.mxu0 0.0
        %507 = vmatpush1.msra.mxu0 0.0
        %508 = vmatprep.subr.mxu0 0.0
        %509 = vmatpush1.msra.mxu0 0.0
        %510 = vmatprep.subr.mxu0 0.0
        %511 = vmatpush1.msra.mxu0 0.0
        %512 = vmatprep.subr.mxu0 0.0
        %513 = vmatpush1.msra.mxu0 0.0
        %514 = vmatprep.subr.mxu0 0.0
        %515 = vmatpush1.msra.mxu0 0.0
        %516 = vmatprep.subr.mxu0 0.0
        %517 = vmatpush1.msra.mxu0 0.0
        %518 = vmatprep.subr.mxu0 0.0
        %519 = vmatpush1.msra.mxu0 0.0
        %520 = vmatprep.subr.mxu0 0.0
        %521 = vmatpush1.msra.mxu0 0.0
        %522 = vmatprep.subr.mxu0 0.0
        %523 = vmatpush1.msra.mxu0 0.0
        %524 = vmatprep.subr.mxu0 0.0
        %525 = vmatpush1.msra.mxu0 0.0
        %526 = vmatprep.subr.mxu0 0.0
        %527 = vmatpush1.msra.mxu0 0.0
        %528 = vmatprep.subr.mxu0 0.0
        %529 = vmatpush1.msra.mxu0 0.0
        %530 = vmatprep.mubr.f32.mxu0 0.0
        %v531 = vand.u32 %v340, 4294901760
        %532 = vmatmul.mubr.f32.gmra.mrb[0].mxu0 %v531
        %v533 = vpop.f32.mrb[0].mxu0
        %v534 = vadd.f32 %v422, %v533
        %v535 = vpop.f32.mrb[0].mxu0
        %v536 = vadd.f32 %v424, %v535
        %537 = vdwg.mxu0
        %v538 = vand.u32 %v332, 4294901760
        %v539 = vsub.f32 %v332, %v538
        %540 = vmatprep.subr.mxu0 %v539
        %v541 = vand.u32 %v331, 4294901760
        %v542 = vsub.f32 %v331, %v541
        %543 = vmatpush1.msra.mxu0 %v542
        %v544 = vand.u32 %v334, 4294901760
        %v545 = vsub.f32 %v334, %v544
        %546 = vmatprep.subr.mxu0 %v545
        %v547 = vand.u32 %v333, 4294901760
        %v548 = vsub.f32 %v333, %v547
        %549 = vmatpush1.msra.mxu0 %v548
        %v550 = vand.u32 %v336, 4294901760
        %v551 = vsub.f32 %v336, %v550
        %552 = vmatprep.subr.mxu0 %v551
        %v553 = vand.u32 %v335, 4294901760
        %v554 = vsub.f32 %v335, %v553
        %555 = vmatpush1.msra.mxu0 %v554
        %v556 = vand.u32 %v338, 4294901760
        %v557 = vsub.f32 %v338, %v556
        %558 = vmatprep.subr.mxu0 %v557
        %v559 = vand.u32 %v337, 4294901760
        %v560 = vsub.f32 %v337, %v559
        %561 = vmatpush1.msra.mxu0 %v560
        %562 = vmatprep.subr.mxu0 0.0
        %563 = vmatpush1.msra.mxu0 0.0
        %564 = vmatprep.subr.mxu0 0.0
        %565 = vmatpush1.msra.mxu0 0.0
        %566 = vmatprep.subr.mxu0 0.0
        %567 = vmatpush1.msra.mxu0 0.0
        %568 = vmatprep.subr.mxu0 0.0
        %569 = vmatpush1.msra.mxu0 0.0
        %570 = vmatprep.subr.mxu0 0.0
        %571 = vmatpush1.msra.mxu0 0.0
        %572 = vmatprep.subr.mxu0 0.0
        %573 = vmatpush1.msra.mxu0 0.0
        %574 = vmatprep.subr.mxu0 0.0
        %575 = vmatpush1.msra.mxu0 0.0
        %576 = vmatprep.subr.mxu0 0.0
        %577 = vmatpush1.msra.mxu0 0.0
        %578 = vmatprep.subr.mxu0 0.0
        %579 = vmatpush1.msra.mxu0 0.0
        %580 = vmatprep.subr.mxu0 0.0
        %581 = vmatpush1.msra.mxu0 0.0
        %582 = vmatprep.subr.mxu0 0.0
        %583 = vmatpush1.msra.mxu0 0.0
        %584 = vmatprep.subr.mxu0 0.0
        %585 = vmatpush1.msra.mxu0 0.0
        %586 = vmatprep.subr.mxu0 0.0
        %587 = vmatpush1.msra.mxu0 0.0
        %588 = vmatprep.subr.mxu0 0.0
        %589 = vmatpush1.msra.mxu0 0.0
        %590 = vmatprep.subr.mxu0 0.0
        %591 = vmatpush1.msra.mxu0 0.0
        %592 = vmatprep.subr.mxu0 0.0
        %593 = vmatpush1.msra.mxu0 0.0
        %594 = vmatprep.subr.mxu0 0.0
        %595 = vmatpush1.msra.mxu0 0.0
        %596 = vmatprep.subr.mxu0 0.0
        %597 = vmatpush1.msra.mxu0 0.0
        %598 = vmatprep.subr.mxu0 0.0
        %599 = vmatpush1.msra.mxu0 0.0
        %600 = vmatprep.subr.mxu0 0.0
        %601 = vmatpush1.msra.mxu0 0.0
        %602 = vmatprep.subr.mxu0 0.0
        %603 = vmatpush1.msra.mxu0 0.0
        %604 = vmatprep.subr.mxu0 0.0
        %605 = vmatpush1.msra.mxu0 0.0
        %606 = vmatprep.subr.mxu0 0.0
        %607 = vmatpush1.msra.mxu0 0.0
        %608 = vmatprep.subr.mxu0 0.0
        %609 = vmatpush1.msra.mxu0 0.0
        %610 = vmatprep.subr.mxu0 0.0
        %611 = vmatpush1.msra.mxu0 0.0
        %612 = vmatprep.subr.mxu0 0.0
        %613 = vmatpush1.msra.mxu0 0.0
        %614 = vmatprep.subr.mxu0 0.0
        %615 = vmatpush1.msra.mxu0 0.0
        %616 = vmatprep.subr.mxu0 0.0
        %617 = vmatpush1.msra.mxu0 0.0
        %618 = vmatprep.mubr.f32.mxu0 0.0
        %v619 = vand.u32 %v340, 4294901760
        %v620 = vsub.f32 %v340, %v619
        %621 = vmatmul.mubr.f32.gmra.mrb[0].mxu0 %v620
        %v622 = vpop.f32.mrb[0].mxu0
        %v623 = vadd.f32 %v534, %v622
        %v624 = vpop.f32.mrb[0].mxu0
        %v625 = vadd.f32 %v536, %v624
        %626 = vdwg.mxu0
        %v627 = vand.u32 %v332, 4294901760
        %628 = vmatprep.subr.mxu0 %v627
        %v629 = vand.u32 %v331, 4294901760
        %630 = vmatpush1.msra.mxu0 %v629
        %v631 = vand.u32 %v334, 4294901760
        %632 = vmatprep.subr.mxu0 %v631
        %v633 = vand.u32 %v333, 4294901760
        %634 = vmatpush1.msra.mxu0 %v633
        %v635 = vand.u32 %v336, 4294901760
        %636 = vmatprep.subr.mxu0 %v635
        %v637 = vand.u32 %v335, 4294901760
        %638 = vmatpush1.msra.mxu0 %v637
        %v639 = vand.u32 %v338, 4294901760
        %640 = vmatprep.subr.mxu0 %v639
        %v641 = vand.u32 %v337, 4294901760
        %642 = vmatpush1.msra.mxu0 %v641
        %643 = vmatprep.subr.mxu0 0.0
        %644 = vmatpush1.msra.mxu0 0.0
        %645 = vmatprep.subr.mxu0 0.0
        %646 = vmatpush1.msra.mxu0 0.0
        %647 = vmatprep.subr.mxu0 0.0
        %648 = vmatpush1.msra.mxu0 0.0
        %649 = vmatprep.subr.mxu0 0.0
        %650 = vmatpush1.msra.mxu0 0.0
        %651 = vmatprep.subr.mxu0 0.0
        %652 = vmatpush1.msra.mxu0 0.0
        %653 = vmatprep.subr.mxu0 0.0
        %654 = vmatpush1.msra.mxu0 0.0
        %655 = vmatprep.subr.mxu0 0.0
        %656 = vmatpush1.msra.mxu0 0.0
        %657 = vmatprep.subr.mxu0 0.0
        %658 = vmatpush1.msra.mxu0 0.0
        %659 = vmatprep.subr.mxu0 0.0
        %660 = vmatpush1.msra.mxu0 0.0
        %661 = vmatprep.subr.mxu0 0.0
        %662 = vmatpush1.msra.mxu0 0.0
        %663 = vmatprep.subr.mxu0 0.0
        %664 = vmatpush1.msra.mxu0 0.0
        %665 = vmatprep.subr.mxu0 0.0
        %666 = vmatpush1.msra.mxu0 0.0
        %667 = vmatprep.subr.mxu0 0.0
        %668 = vmatpush1.msra.mxu0 0.0
        %669 = vmatprep.subr.mxu0 0.0
        %670 = vmatpush1.msra.mxu0 0.0
        %671 = vmatprep.subr.mxu0 0.0
        %672 = vmatpush1.msra.mxu0 0.0
        %673 = vmatprep.subr.mxu0 0.0
        %674 = vmatpush1.msra.mxu0 0.0
        %675 = vmatprep.subr.mxu0 0.0
        %676 = vmatpush1.msra.mxu0 0.0
        %677 = vmatprep.subr.mxu0 0.0
        %678 = vmatpush1.msra.mxu0 0.0
        %679 = vmatprep.subr.mxu0 0.0
        %680 = vmatpush1.msra.mxu0 0.0
        %681 = vmatprep.subr.mxu0 0.0
        %682 = vmatpush1.msra.mxu0 0.0
        %683 = vmatprep.subr.mxu0 0.0
        %684 = vmatpush1.msra.mxu0 0.0
        %685 = vmatprep.subr.mxu0 0.0
        %686 = vmatpush1.msra.mxu0 0.0
        %687 = vmatprep.subr.mxu0 0.0
        %688 = vmatpush1.msra.mxu0 0.0
        %689 = vmatprep.subr.mxu0 0.0
        %690 = vmatpush1.msra.mxu0 0.0
        %691 = vmatprep.subr.mxu0 0.0
        %692 = vmatpush1.msra.mxu0 0.0
        %693 = vmatprep.subr.mxu0 0.0
        %694 = vmatpush1.msra.mxu0 0.0
        %695 = vmatprep.subr.mxu0 0.0
        %696 = vmatpush1.msra.mxu0 0.0
        %697 = vmatprep.subr.mxu0 0.0
        %698 = vmatpush1.msra.mxu0 0.0
        %699 = vmatprep.mubr.f32.mxu0 0.0
        %v700 = vand.u32 %v340, 4294901760
        %v701 = vsub.f32 %v340, %v700
        %v702 = vand.u32 %v701, 4294901760
        %703 = vmatmul.mubr.f32.gmra.mrb[0].mxu0 %v702
        %v704 = vpop.f32.mrb[0].mxu0
        %v705 = vadd.f32 %v623, %v704
        %v706 = vpop.f32.mrb[0].mxu0
        %v707 = vadd.f32 %v625, %v706
        %708 = vdwg.mxu0
        %v709 = vand.u32 %v332, 4294901760
        %v710 = vsub.f32 %v332, %v709
        %v711 = vand.u32 %v710, 4294901760
        %712 = vmatprep.subr.mxu0 %v711
        %v713 = vand.u32 %v331, 4294901760
        %v714 = vsub.f32 %v331, %v713
        %v715 = vand.u32 %v714, 4294901760
        %716 = vmatpush1.msra.mxu0 %v715
        %v717 = vand.u32 %v334, 4294901760
        %v718 = vsub.f32 %v334, %v717
        %v719 = vand.u32 %v718, 4294901760
        %720 = vmatprep.subr.mxu0 %v719
        %v721 = vand.u32 %v333, 4294901760
        %v722 = vsub.f32 %v333, %v721
        %v723 = vand.u32 %v722, 4294901760
        %724 = vmatpush1.msra.mxu0 %v723
        %v725 = vand.u32 %v336, 4294901760
        %v726 = vsub.f32 %v336, %v725
        %v727 = vand.u32 %v726, 4294901760
        %728 = vmatprep.subr.mxu0 %v727
        %v729 = vand.u32 %v335, 4294901760
        %v730 = vsub.f32 %v335, %v729
        %v731 = vand.u32 %v730, 4294901760
        %732 = vmatpush1.msra.mxu0 %v731
        %v733 = vand.u32 %v338, 4294901760
        %v734 = vsub.f32 %v338, %v733
        %v735 = vand.u32 %v734, 4294901760
        %736 = vmatprep.subr.mxu0 %v735
        %v737 = vand.u32 %v337, 4294901760
        %v738 = vsub.f32 %v337, %v737
        %v739 = vand.u32 %v738, 4294901760
        %740 = vmatpush1.msra.mxu0 %v739
        %741 = vmatprep.subr.mxu0 0.0
        %742 = vmatpush1.msra.mxu0 0.0
        %743 = vmatprep.subr.mxu0 0.0
        %744 = vmatpush1.msra.mxu0 0.0
        %745 = vmatprep.subr.mxu0 0.0
        %746 = vmatpush1.msra.mxu0 0.0
        %747 = vmatprep.subr.mxu0 0.0
        %748 = vmatpush1.msra.mxu0 0.0
        %749 = vmatprep.subr.mxu0 0.0
        %750 = vmatpush1.msra.mxu0 0.0
        %751 = vmatprep.subr.mxu0 0.0
        %752 = vmatpush1.msra.mxu0 0.0
        %753 = vmatprep.subr.mxu0 0.0
        %754 = vmatpush1.msra.mxu0 0.0
        %755 = vmatprep.subr.mxu0 0.0
        %756 = vmatpush1.msra.mxu0 0.0
        %757 = vmatprep.subr.mxu0 0.0
        %758 = vmatpush1.msra.mxu0 0.0
        %759 = vmatprep.subr.mxu0 0.0
        %760 = vmatpush1.msra.mxu0 0.0
        %761 = vmatprep.subr.mxu0 0.0
        %762 = vmatpush1.msra.mxu0 0.0
        %763 = vmatprep.subr.mxu0 0.0
        %764 = vmatpush1.msra.mxu0 0.0
        %765 = vmatprep.subr.mxu0 0.0
        %766 = vmatpush1.msra.mxu0 0.0
        %767 = vmatprep.subr.mxu0 0.0
        %768 = vmatpush1.msra.mxu0 0.0
        %769 = vmatprep.subr.mxu0 0.0
        %770 = vmatpush1.msra.mxu0 0.0
        %771 = vmatprep.subr.mxu0 0.0
        %772 = vmatpush1.msra.mxu0 0.0
        %773 = vmatprep.subr.mxu0 0.0
        %774 = vmatpush1.msra.mxu0 0.0
        %775 = vmatprep.subr.mxu0 0.0
        %776 = vmatpush1.msra.mxu0 0.0
        %777 = vmatprep.subr.mxu0 0.0
        %778 = vmatpush1.msra.mxu0 0.0
        %779 = vmatprep.subr.mxu0 0.0
        %780 = vmatpush1.msra.mxu0 0.0
        %781 = vmatprep.subr.mxu0 0.0
        %782 = vmatpush1.msra.mxu0 0.0
        %783 = vmatprep.subr.mxu0 0.0
        %784 = vmatpush1.msra.mxu0 0.0
        %785 = vmatprep.subr.mxu0 0.0
        %786 = vmatpush1.msra.mxu0 0.0
        %787 = vmatprep.subr.mxu0 0.0
        %788 = vmatpush1.msra.mxu0 0.0
        %789 = vmatprep.subr.mxu0 0.0
        %790 = vmatpush1.msra.mxu0 0.0
        %791 = vmatprep.subr.mxu0 0.0
        %792 = vmatpush1.msra.mxu0 0.0
        %793 = vmatprep.subr.mxu0 0.0
        %794 = vmatpush1.msra.mxu0 0.0
        %795 = vmatprep.subr.mxu0 0.0
        %796 = vmatpush1.msra.mxu0 0.0
        %797 = vmatprep.mubr.f32.mxu0 0.0
        %v798 = vand.u32 %v340, 4294901760
        %799 = vmatmul.mubr.f32.gmra.mrb[0].mxu0 %v798
        %v800 = vpop.f32.mrb[0].mxu0
        %v801 = vadd.f32 %v705, %v800
        %v802 = vpop.f32.mrb[0].mxu0
        %v803 = vadd.f32 %v707, %v802
        %804 = vdwg.mxu0
        %v805 = vand.u32 %v332, 4294901760
        %806 = vmatprep.subr.mxu0 %v805
        %v807 = vand.u32 %v331, 4294901760
        %808 = vmatpush1.msra.mxu0 %v807
        %v809 = vand.u32 %v334, 4294901760
        %810 = vmatprep.subr.mxu0 %v809
        %v811 = vand.u32 %v333, 4294901760
        %812 = vmatpush1.msra.mxu0 %v811
        %v813 = vand.u32 %v336, 4294901760
        %814 = vmatprep.subr.mxu0 %v813
        %v815 = vand.u32 %v335, 4294901760
        %816 = vmatpush1.msra.mxu0 %v815
        %v817 = vand.u32 %v338, 4294901760
        %818 = vmatprep.subr.mxu0 %v817
        %v819 = vand.u32 %v337, 4294901760
        %820 = vmatpush1.msra.mxu0 %v819
        %821 = vmatprep.subr.mxu0 0.0
        %822 = vmatpush1.msra.mxu0 0.0
        %823 = vmatprep.subr.mxu0 0.0
        %824 = vmatpush1.msra.mxu0 0.0
        %825 = vmatprep.subr.mxu0 0.0
        %826 = vmatpush1.msra.mxu0 0.0
        %827 = vmatprep.subr.mxu0 0.0
        %828 = vmatpush1.msra.mxu0 0.0
        %829 = vmatprep.subr.mxu0 0.0
        %830 = vmatpush1.msra.mxu0 0.0
        %831 = vmatprep.subr.mxu0 0.0
        %832 = vmatpush1.msra.mxu0 0.0
        %833 = vmatprep.subr.mxu0 0.0
        %834 = vmatpush1.msra.mxu0 0.0
        %835 = vmatprep.subr.mxu0 0.0
        %836 = vmatpush1.msra.mxu0 0.0
        %837 = vmatprep.subr.mxu0 0.0
        %838 = vmatpush1.msra.mxu0 0.0
        %839 = vmatprep.subr.mxu0 0.0
        %840 = vmatpush1.msra.mxu0 0.0
        %841 = vmatprep.subr.mxu0 0.0
        %842 = vmatpush1.msra.mxu0 0.0
        %843 = vmatprep.subr.mxu0 0.0
        %844 = vmatpush1.msra.mxu0 0.0
        %845 = vmatprep.subr.mxu0 0.0
        %846 = vmatpush1.msra.mxu0 0.0
        %847 = vmatprep.subr.mxu0 0.0
        %848 = vmatpush1.msra.mxu0 0.0
        %849 = vmatprep.subr.mxu0 0.0
        %850 = vmatpush1.msra.mxu0 0.0
        %851 = vmatprep.subr.mxu0 0.0
        %852 = vmatpush1.msra.mxu0 0.0
        %853 = vmatprep.subr.mxu0 0.0
        %854 = vmatpush1.msra.mxu0 0.0
        %855 = vmatprep.subr.mxu0 0.0
        %856 = vmatpush1.msra.mxu0 0.0
        %857 = vmatprep.subr.mxu0 0.0
        %858 = vmatpush1.msra.mxu0 0.0
        %859 = vmatprep.subr.mxu0 0.0
        %860 = vmatpush1.msra.mxu0 0.0
        %861 = vmatprep.subr.mxu0 0.0
        %862 = vmatpush1.msra.mxu0 0.0
        %863 = vmatprep.subr.mxu0 0.0
        %864 = vmatpush1.msra.mxu0 0.0
        %865 = vmatprep.subr.mxu0 0.0
        %866 = vmatpush1.msra.mxu0 0.0
        %867 = vmatprep.subr.mxu0 0.0
        %868 = vmatpush1.msra.mxu0 0.0
        %869 = vmatprep.subr.mxu0 0.0
        %870 = vmatpush1.msra.mxu0 0.0
        %871 = vmatprep.subr.mxu0 0.0
        %872 = vmatpush1.msra.mxu0 0.0
        %873 = vmatprep.subr.mxu0 0.0
        %874 = vmatpush1.msra.mxu0 0.0
        %875 = vmatprep.subr.mxu0 0.0
        %876 = vmatpush1.msra.mxu0 0.0
        %877 = vmatprep.mubr.f32.mxu0 0.0
        %v878 = vand.u32 %v340, 4294901760
        %879 = vmatmul.mubr.f32.gmra.mrb[0].mxu0 %v878
        %v880 = vpop.f32.mrb[0].mxu0
        %v881 = vadd.f32 %v801, %v880
        %v882 = vpop.f32.mrb[0].mxu0
        %v883 = vadd.f32 %v803, %v882
        %884 = vdwg.mxu0
        %v885 = vxor.u32 %v883, 2147483648
        %v886 = vmul.f32 %v885, 1.442695
        %v887 = vpow.pop %v886
        %v888 = vadd.f32 %v887, 1.0
        %v889 = vrcp.pop %v888
        %v890 = vmul.f32 1.0, %v889
        %v891 = vmul.f32 %v883, %v890
        %v892 = vmul.f32 %v881, %v891
        %v893 = vld [vmem:[%s4] sm:$0x1]
        %v894 = vld [vmem:[%s5] sm:$0x1]
        %895 = vadd.xlane.f32.xlu0 %v892
        %v896 = vpop.xlane.xlu0 %895
        %v897 = vrcp.pop 128.0
        %v898 = vmul.f32 %v896, %v897
        %v899 = vsub.f32 %v892, %v898
        %v900 = vmul.f32 %v899, %v899
        %901 = vadd.xlane.f32.xlu0 %v900
        %v902 = vpop.xlane.xlu0 %901
        %v903 = vmul.f32 %v902, %v897
        %v904 = vadd.f32 %v903, 1e-05
        %v905 = vrsqrt.pop %v904
        %v906 = vmul.f32 %v899, %v905
        %v908 = vlaneseq
        %v909 = vshrl.u32 %v908, 7
        %v910 = vsub.s32 0, %v909
        %v911 = vrot.slane %v893, %v910
        %v913 = vmul.f32 %v906, %v911
        %v915 = vlaneseq
        %v916 = vshrl.u32 %v915, 7
        %v917 = vsub.s32 0, %v916
        %v918 = vrot.slane %v894, %v917
        %v920 = vadd.f32 %v913, %v918
        %v921 = vld [vmem:[%s6] sm:$0xff]
        %v922 = vld [vmem:[%s6 + $0x8] sm:$0xff]
        %v923 = vld [vmem:[%s6 + $0x10] sm:$0xff]
        %v924 = vld [vmem:[%s6 + $0x18] sm:$0xff]
        %v925 = vld [vmem:[%s6 + $0x20] sm:$0xff]
        %v926 = vld [vmem:[%s6 + $0x28] sm:$0xff]
        %v927 = vld [vmem:[%s6 + $0x30] sm:$0xff]
        %v928 = vld [vmem:[%s6 + $0x38] sm:$0xff]
        %v929 = vld [vmem:[%s6 + $0x40] sm:$0xff]
        %v930 = vld [vmem:[%s6 + $0x48] sm:$0xff]
        %v931 = vld [vmem:[%s6 + $0x50] sm:$0xff]
        %v932 = vld [vmem:[%s6 + $0x58] sm:$0xff]
        %v933 = vld [vmem:[%s6 + $0x60] sm:$0xff]
        %v934 = vld [vmem:[%s6 + $0x68] sm:$0xff]
        %v935 = vld [vmem:[%s6 + $0x70] sm:$0xff]
        %v936 = vld [vmem:[%s6 + $0x78] sm:$0xff]
        %937 = vmatprep.subr.mxu0 0.0
        %v938 = vand.u32 %v921, 4294901760
        %939 = vmatpush1.msra.mxu0 %v938
        %940 = vmatprep.subr.mxu0 0.0
        %v941 = vand.u32 %v922, 4294901760
        %942 = vmatpush1.msra.mxu0 %v941
        %943 = vmatprep.subr.mxu0 0.0
        %v944 = vand.u32 %v923, 4294901760
        %945 = vmatpush1.msra.mxu0 %v944
        %946 = vmatprep.subr.mxu0 0.0
        %v947 = vand.u32 %v924, 4294901760
        %948 = vmatpush1.msra.mxu0 %v947
        %949 = vmatprep.subr.mxu0 0.0
        %v950 = vand.u32 %v925, 4294901760
        %951 = vmatpush1.msra.mxu0 %v950
        %952 = vmatprep.subr.mxu0 0.0
        %v953 = vand.u32 %v926, 4294901760
        %954 = vmatpush1.msra.mxu0 %v953
        %955 = vmatprep.subr.mxu0 0.0
        %v956 = vand.u32 %v927, 4294901760
        %957 = vmatpush1.msra.mxu0 %v956
        %958 = vmatprep.subr.mxu0 0.0
        %v959 = vand.u32 %v928, 4294901760
        %960 = vmatpush1.msra.mxu0 %v959
        %961 = vmatprep.subr.mxu0 0.0
        %v962 = vand.u32 %v929, 4294901760
        %963 = vmatpush1.msra.mxu0 %v962
        %964 = vmatprep.subr.mxu0 0.0
        %v965 = vand.u32 %v930, 4294901760
        %966 = vmatpush1.msra.mxu0 %v965
        %967 = vmatprep.subr.mxu0 0.0
        %v968 = vand.u32 %v931, 4294901760
        %969 = vmatpush1.msra.mxu0 %v968
        %970 = vmatprep.subr.mxu0 0.0
        %v971 = vand.u32 %v932, 4294901760
        %972 = vmatpush1.msra.mxu0 %v971
        %973 = vmatprep.subr.mxu0 0.0
        %v974 = vand.u32 %v933, 4294901760
        %975 = vmatpush1.msra.mxu0 %v974
        %976 = vmatprep.subr.mxu0 0.0
        %v977 = vand.u32 %v934, 4294901760
        %978 = vmatpush1.msra.mxu0 %v977
        %979 = vmatprep.subr.mxu0 0.0
        %v980 = vand.u32 %v935, 4294901760
        %981 = vmatpush1.msra.mxu0 %v980
        %982 = vmatprep.subr.mxu0 0.0
        %v983 = vand.u32 %v936, 4294901760
        %984 = vmatpush1.msra.mxu0 %v983
        %985 = vmatprep.subr.mxu0 0.0
        %986 = vmatpush1.msra.mxu0 0.0
        %987 = vmatprep.subr.mxu0 0.0
        %988 = vmatpush1.msra.mxu0 0.0
        %989 = vmatprep.subr.mxu0 0.0
        %990 = vmatpush1.msra.mxu0 0.0
        %991 = vmatprep.subr.mxu0 0.0
        %992 = vmatpush1.msra.mxu0 0.0
        %993 = vmatprep.subr.mxu0 0.0
        %994 = vmatpush1.msra.mxu0 0.0
        %995 = vmatprep.subr.mxu0 0.0
        %996 = vmatpush1.msra.mxu0 0.0
        %997 = vmatprep.subr.mxu0 0.0
        %998 = vmatpush1.msra.mxu0 0.0
        %999 = vmatprep.subr.mxu0 0.0
        %1000 = vmatpush1.msra.mxu0 0.0
        %1001 = vmatprep.subr.mxu0 0.0
        %1002 = vmatpush1.msra.mxu0 0.0
        %1003 = vmatprep.subr.mxu0 0.0
        %1004 = vmatpush1.msra.mxu0 0.0
        %1005 = vmatprep.subr.mxu0 0.0
        %1006 = vmatpush1.msra.mxu0 0.0
        %1007 = vmatprep.subr.mxu0 0.0
        %1008 = vmatpush1.msra.mxu0 0.0
        %1009 = vmatprep.subr.mxu0 0.0
        %1010 = vmatpush1.msra.mxu0 0.0
        %1011 = vmatprep.subr.mxu0 0.0
        %1012 = vmatpush1.msra.mxu0 0.0
        %1013 = vmatprep.subr.mxu0 0.0
        %1014 = vmatpush1.msra.mxu0 0.0
        %1015 = vmatprep.subr.mxu0 0.0
        %1016 = vmatpush1.msra.mxu0 0.0
        %1017 = vmatprep.mubr.f32.mxu0 0.0
        %v1018 = vand.u32 %v920, 4294901760
        %v1019 = vsub.f32 %v920, %v1018
        %v1020 = vand.u32 %v1019, 4294901760
        %v1021 = vsub.f32 %v1019, %v1020
        %v1022 = vand.u32 %v1021, 4294901760
        %1023 = vmatmul.mubr.f32.gmra.mrb[0].mxu0 %v1022
        %v1024 = vpop.f32.mrb[0].mxu0
        %v1025 = vadd.f32 0.0, %v1024
        %v1026 = vpop.f32.mrb[0].mxu0
        %1027 = vdwg.mxu0
        %1028 = vmatprep.subr.mxu0 0.0
        %v1029 = vand.u32 %v921, 4294901760
        %v1030 = vsub.f32 %v921, %v1029
        %v1031 = vand.u32 %v1030, 4294901760
        %v1032 = vsub.f32 %v1030, %v1031
        %v1033 = vand.u32 %v1032, 4294901760
        %1034 = vmatpush1.msra.mxu0 %v1033
        %1035 = vmatprep.subr.mxu0 0.0
        %v1036 = vand.u32 %v922, 4294901760
        %v1037 = vsub.f32 %v922, %v1036
        %v1038 = vand.u32 %v1037, 4294901760
        %v1039 = vsub.f32 %v1037, %v1038
        %v1040 = vand.u32 %v1039, 4294901760
        %1041 = vmatpush1.msra.mxu0 %v1040
        %1042 = vmatprep.subr.mxu0 0.0
        %v1043 = vand.u32 %v923, 4294901760
        %v1044 = vsub.f32 %v923, %v1043
        %v1045 = vand.u32 %v1044, 4294901760
        %v1046 = vsub.f32 %v1044, %v1045
        %v1047 = vand.u32 %v1046, 4294901760
        %1048 = vmatpush1.msra.mxu0 %v1047
        %1049 = vmatprep.subr.mxu0 0.0
        %v1050 = vand.u32 %v924, 4294901760
        %v1051 = vsub.f32 %v924, %v1050
        %v1052 = vand.u32 %v1051, 4294901760
        %v1053 = vsub.f32 %v1051, %v1052
        %v1054 = vand.u32 %v1053, 4294901760
        %1055 = vmatpush1.msra.mxu0 %v1054
        %1056 = vmatprep.subr.mxu0 0.0
        %v1057 = vand.u32 %v925, 4294901760
        %v1058 = vsub.f32 %v925, %v1057
        %v1059 = vand.u32 %v1058, 4294901760
        %v1060 = vsub.f32 %v1058, %v1059
        %v1061 = vand.u32 %v1060, 4294901760
        %1062 = vmatpush1.msra.mxu0 %v1061
        %1063 = vmatprep.subr.mxu0 0.0
        %v1064 = vand.u32 %v926, 4294901760
        %v1065 = vsub.f32 %v926, %v1064
        %v1066 = vand.u32 %v1065, 4294901760
        %v1067 = vsub.f32 %v1065, %v1066
        %v1068 = vand.u32 %v1067, 4294901760
        %1069 = vmatpush1.msra.mxu0 %v1068
        %1070 = vmatprep.subr.mxu0 0.0
        %v1071 = vand.u32 %v927, 4294901760
        %v1072 = vsub.f32 %v927, %v1071
        %v1073 = vand.u32 %v1072, 4294901760
        %v1074 = vsub.f32 %v1072, %v1073
        %v1075 = vand.u32 %v1074, 4294901760
        %1076 = vmatpush1.msra.mxu0 %v1075
        %1077 = vmatprep.subr.mxu0 0.0
        %v1078 = vand.u32 %v928, 4294901760
        %v1079 = vsub.f32 %v928, %v1078
        %v1080 = vand.u32 %v1079, 4294901760
        %v1081 = vsub.f32 %v1079, %v1080
        %v1082 = vand.u32 %v1081, 4294901760
        %1083 = vmatpush1.msra.mxu0 %v1082
        %1084 = vmatprep.subr.mxu0 0.0
        %v1085 = vand.u32 %v929, 4294901760
        %v1086 = vsub.f32 %v929, %v1085
        %v1087 = vand.u32 %v1086, 4294901760
        %v1088 = vsub.f32 %v1086, %v1087
        %v1089 = vand.u32 %v1088, 4294901760
        %1090 = vmatpush1.msra.mxu0 %v1089
        %1091 = vmatprep.subr.mxu0 0.0
        %v1092 = vand.u32 %v930, 4294901760
        %v1093 = vsub.f32 %v930, %v1092
        %v1094 = vand.u32 %v1093, 4294901760
        %v1095 = vsub.f32 %v1093, %v1094
        %v1096 = vand.u32 %v1095, 4294901760
        %1097 = vmatpush1.msra.mxu0 %v1096
        %1098 = vmatprep.subr.mxu0 0.0
        %v1099 = vand.u32 %v931, 4294901760
        %v1100 = vsub.f32 %v931, %v1099
        %v1101 = vand.u32 %v1100, 4294901760
        %v1102 = vsub.f32 %v1100, %v1101
        %v1103 = vand.u32 %v1102, 4294901760
        %1104 = vmatpush1.msra.mxu0 %v1103
        %1105 = vmatprep.subr.mxu0 0.0
        %v1106 = vand.u32 %v932, 4294901760
        %v1107 = vsub.f32 %v932, %v1106
        %v1108 = vand.u32 %v1107, 4294901760
        %v1109 = vsub.f32 %v1107, %v1108
        %v1110 = vand.u32 %v1109, 4294901760
        %1111 = vmatpush1.msra.mxu0 %v1110
        %1112 = vmatprep.subr.mxu0 0.0
        %v1113 = vand.u32 %v933, 4294901760
        %v1114 = vsub.f32 %v933, %v1113
        %v1115 = vand.u32 %v1114, 4294901760
        %v1116 = vsub.f32 %v1114, %v1115
        %v1117 = vand.u32 %v1116, 4294901760
        %1118 = vmatpush1.msra.mxu0 %v1117
        %1119 = vmatprep.subr.mxu0 0.0
        %v1120 = vand.u32 %v934, 4294901760
        %v1121 = vsub.f32 %v934, %v1120
        %v1122 = vand.u32 %v1121, 4294901760
        %v1123 = vsub.f32 %v1121, %v1122
        %v1124 = vand.u32 %v1123, 4294901760
        %1125 = vmatpush1.msra.mxu0 %v1124
        %1126 = vmatprep.subr.mxu0 0.0
        %v1127 = vand.u32 %v935, 4294901760
        %v1128 = vsub.f32 %v935, %v1127
        %v1129 = vand.u32 %v1128, 4294901760
        %v1130 = vsub.f32 %v1128, %v1129
        %v1131 = vand.u32 %v1130, 4294901760
        %1132 = vmatpush1.msra.mxu0 %v1131
        %1133 = vmatprep.subr.mxu0 0.0
        %v1134 = vand.u32 %v936, 4294901760
        %v1135 = vsub.f32 %v936, %v1134
        %v1136 = vand.u32 %v1135, 4294901760
        %v1137 = vsub.f32 %v1135, %v1136
        %v1138 = vand.u32 %v1137, 4294901760
        %1139 = vmatpush1.msra.mxu0 %v1138
        %1140 = vmatprep.subr.mxu0 0.0
        %1141 = vmatpush1.msra.mxu0 0.0
        %1142 = vmatprep.subr.mxu0 0.0
        %1143 = vmatpush1.msra.mxu0 0.0
        %1144 = vmatprep.subr.mxu0 0.0
        %1145 = vmatpush1.msra.mxu0 0.0
        %1146 = vmatprep.subr.mxu0 0.0
        %1147 = vmatpush1.msra.mxu0 0.0
        %1148 = vmatprep.subr.mxu0 0.0
        %1149 = vmatpush1.msra.mxu0 0.0
        %1150 = vmatprep.subr.mxu0 0.0
        %1151 = vmatpush1.msra.mxu0 0.0
        %1152 = vmatprep.subr.mxu0 0.0
        %1153 = vmatpush1.msra.mxu0 0.0
        %1154 = vmatprep.subr.mxu0 0.0
        %1155 = vmatpush1.msra.mxu0 0.0
        %1156 = vmatprep.subr.mxu0 0.0
        %1157 = vmatpush1.msra.mxu0 0.0
        %1158 = vmatprep.subr.mxu0 0.0
        %1159 = vmatpush1.msra.mxu0 0.0
        %1160 = vmatprep.subr.mxu0 0.0
        %1161 = vmatpush1.msra.mxu0 0.0
        %1162 = vmatprep.subr.mxu0 0.0
        %1163 = vmatpush1.msra.mxu0 0.0
        %1164 = vmatprep.subr.mxu0 0.0
        %1165 = vmatpush1.msra.mxu0 0.0
        %1166 = vmatprep.subr.mxu0 0.0
        %1167 = vmatpush1.msra.mxu0 0.0
        %1168 = vmatprep.subr.mxu0 0.0
        %1169 = vmatpush1.msra.mxu0 0.0
        %1170 = vmatprep.subr.mxu0 0.0
        %1171 = vmatpush1.msra.mxu0 0.0
        %1172 = vmatprep.mubr.f32.mxu0 0.0
        %v1173 = vand.u32 %v920, 4294901760
        %1174 = vmatmul.mubr.f32.gmra.mrb[0].mxu0 %v1173
        %v1175 = vpop.f32.mrb[0].mxu0
        %v1176 = vadd.f32 %v1025, %v1175
        %v1177 = vpop.f32.mrb[0].mxu0
        %1178 = vdwg.mxu0
        %1179 = vmatprep.subr.mxu0 0.0
        %v1180 = vand.u32 %v921, 4294901760
        %v1181 = vsub.f32 %v921, %v1180
        %1182 = vmatpush1.msra.mxu0 %v1181
        %1183 = vmatprep.subr.mxu0 0.0
        %v1184 = vand.u32 %v922, 4294901760
        %v1185 = vsub.f32 %v922, %v1184
        %1186 = vmatpush1.msra.mxu0 %v1185
        %1187 = vmatprep.subr.mxu0 0.0
        %v1188 = vand.u32 %v923, 4294901760
        %v1189 = vsub.f32 %v923, %v1188
        %1190 = vmatpush1.msra.mxu0 %v1189
        %1191 = vmatprep.subr.mxu0 0.0
        %v1192 = vand.u32 %v924, 4294901760
        %v1193 = vsub.f32 %v924, %v1192
        %1194 = vmatpush1.msra.mxu0 %v1193
        %1195 = vmatprep.subr.mxu0 0.0
        %v1196 = vand.u32 %v925, 4294901760
        %v1197 = vsub.f32 %v925, %v1196
        %1198 = vmatpush1.msra.mxu0 %v1197
        %1199 = vmatprep.subr.mxu0 0.0
        %v1200 = vand.u32 %v926, 4294901760
        %v1201 = vsub.f32 %v926, %v1200
        %1202 = vmatpush1.msra.mxu0 %v1201
        %1203 = vmatprep.subr.mxu0 0.0
        %v1204 = vand.u32 %v927, 4294901760
        %v1205 = vsub.f32 %v927, %v1204
        %1206 = vmatpush1.msra.mxu0 %v1205
        %1207 = vmatprep.subr.mxu0 0.0
        %v1208 = vand.u32 %v928, 4294901760
        %v1209 = vsub.f32 %v928, %v1208
        %1210 = vmatpush1.msra.mxu0 %v1209
        %1211 = vmatprep.subr.mxu0 0.0
        %v1212 = vand.u32 %v929, 4294901760
        %v1213 = vsub.f32 %v929, %v1212
        %1214 = vmatpush1.msra.mxu0 %v1213
        %1215 = vmatprep.subr.mxu0 0.0
        %v1216 = vand.u32 %v930, 4294901760
        %v1217 = vsub.f32 %v930, %v1216
        %1218 = vmatpush1.msra.mxu0 %v1217
        %1219 = vmatprep.subr.mxu0 0.0
        %v1220 = vand.u32 %v931, 4294901760
        %v1221 = vsub.f32 %v931, %v1220
        %1222 = vmatpush1.msra.mxu0 %v1221
        %1223 = vmatprep.subr.mxu0 0.0
        %v1224 = vand.u32 %v932, 4294901760
        %v1225 = vsub.f32 %v932, %v1224
        %1226 = vmatpush1.msra.mxu0 %v1225
        %1227 = vmatprep.subr.mxu0 0.0
        %v1228 = vand.u32 %v933, 4294901760
        %v1229 = vsub.f32 %v933, %v1228
        %1230 = vmatpush1.msra.mxu0 %v1229
        %1231 = vmatprep.subr.mxu0 0.0
        %v1232 = vand.u32 %v934, 4294901760
        %v1233 = vsub.f32 %v934, %v1232
        %1234 = vmatpush1.msra.mxu0 %v1233
        %1235 = vmatprep.subr.mxu0 0.0
        %v1236 = vand.u32 %v935, 4294901760
        %v1237 = vsub.f32 %v935, %v1236
        %1238 = vmatpush1.msra.mxu0 %v1237
        %1239 = vmatprep.subr.mxu0 0.0
        %v1240 = vand.u32 %v936, 4294901760
        %v1241 = vsub.f32 %v936, %v1240
        %1242 = vmatpush1.msra.mxu0 %v1241
        %1243 = vmatprep.subr.mxu0 0.0
        %1244 = vmatpush1.msra.mxu0 0.0
        %1245 = vmatprep.subr.mxu0 0.0
        %1246 = vmatpush1.msra.mxu0 0.0
        %1247 = vmatprep.subr.mxu0 0.0
        %1248 = vmatpush1.msra.mxu0 0.0
        %1249 = vmatprep.subr.mxu0 0.0
        %1250 = vmatpush1.msra.mxu0 0.0
        %1251 = vmatprep.subr.mxu0 0.0
        %1252 = vmatpush1.msra.mxu0 0.0
        %1253 = vmatprep.subr.mxu0 0.0
        %1254 = vmatpush1.msra.mxu0 0.0
        %1255 = vmatprep.subr.mxu0 0.0
        %1256 = vmatpush1.msra.mxu0 0.0
        %1257 = vmatprep.subr.mxu0 0.0
        %1258 = vmatpush1.msra.mxu0 0.0
        %1259 = vmatprep.subr.mxu0 0.0
        %1260 = vmatpush1.msra.mxu0 0.0
        %1261 = vmatprep.subr.mxu0 0.0
        %1262 = vmatpush1.msra.mxu0 0.0
        %1263 = vmatprep.subr.mxu0 0.0
        %1264 = vmatpush1.msra.mxu0 0.0
        %1265 = vmatprep.subr.mxu0 0.0
        %1266 = vmatpush1.msra.mxu0 0.0
        %1267 = vmatprep.subr.mxu0 0.0
        %1268 = vmatpush1.msra.mxu0 0.0
        %1269 = vmatprep.subr.mxu0 0.0
        %1270 = vmatpush1.msra.mxu0 0.0
        %1271 = vmatprep.subr.mxu0 0.0
        %1272 = vmatpush1.msra.mxu0 0.0
        %1273 = vmatprep.subr.mxu0 0.0
        %1274 = vmatpush1.msra.mxu0 0.0
        %1275 = vmatprep.mubr.f32.mxu0 0.0
        %v1276 = vand.u32 %v920, 4294901760
        %v1277 = vsub.f32 %v920, %v1276
        %1278 = vmatmul.mubr.f32.gmra.mrb[0].mxu0 %v1277
        %v1279 = vpop.f32.mrb[0].mxu0
        %v1280 = vadd.f32 %v1176, %v1279
        %v1281 = vpop.f32.mrb[0].mxu0
        %1282 = vdwg.mxu0
        %1283 = vmatprep.subr.mxu0 0.0
        %v1284 = vand.u32 %v921, 4294901760
        %1285 = vmatpush1.msra.mxu0 %v1284
        %1286 = vmatprep.subr.mxu0 0.0
        %v1287 = vand.u32 %v922, 4294901760
        %1288 = vmatpush1.msra.mxu0 %v1287
        %1289 = vmatprep.subr.mxu0 0.0
        %v1290 = vand.u32 %v923, 4294901760
        %1291 = vmatpush1.msra.mxu0 %v1290
        %1292 = vmatprep.subr.mxu0 0.0
        %v1293 = vand.u32 %v924, 4294901760
        %1294 = vmatpush1.msra.mxu0 %v1293
        %1295 = vmatprep.subr.mxu0 0.0
        %v1296 = vand.u32 %v925, 4294901760
        %1297 = vmatpush1.msra.mxu0 %v1296
        %1298 = vmatprep.subr.mxu0 0.0
        %v1299 = vand.u32 %v926, 4294901760
        %1300 = vmatpush1.msra.mxu0 %v1299
        %1301 = vmatprep.subr.mxu0 0.0
        %v1302 = vand.u32 %v927, 4294901760
        %1303 = vmatpush1.msra.mxu0 %v1302
        %1304 = vmatprep.subr.mxu0 0.0
        %v1305 = vand.u32 %v928, 4294901760
        %1306 = vmatpush1.msra.mxu0 %v1305
        %1307 = vmatprep.subr.mxu0 0.0
        %v1308 = vand.u32 %v929, 4294901760
        %1309 = vmatpush1.msra.mxu0 %v1308
        %1310 = vmatprep.subr.mxu0 0.0
        %v1311 = vand.u32 %v930, 4294901760
        %1312 = vmatpush1.msra.mxu0 %v1311
        %1313 = vmatprep.subr.mxu0 0.0
        %v1314 = vand.u32 %v931, 4294901760
        %1315 = vmatpush1.msra.mxu0 %v1314
        %1316 = vmatprep.subr.mxu0 0.0
        %v1317 = vand.u32 %v932, 4294901760
        %1318 = vmatpush1.msra.mxu0 %v1317
        %1319 = vmatprep.subr.mxu0 0.0
        %v1320 = vand.u32 %v933, 4294901760
        %1321 = vmatpush1.msra.mxu0 %v1320
        %1322 = vmatprep.subr.mxu0 0.0
        %v1323 = vand.u32 %v934, 4294901760
        %1324 = vmatpush1.msra.mxu0 %v1323
        %1325 = vmatprep.subr.mxu0 0.0
        %v1326 = vand.u32 %v935, 4294901760
        %1327 = vmatpush1.msra.mxu0 %v1326
        %1328 = vmatprep.subr.mxu0 0.0
        %v1329 = vand.u32 %v936, 4294901760
        %1330 = vmatpush1.msra.mxu0 %v1329
        %1331 = vmatprep.subr.mxu0 0.0
        %1332 = vmatpush1.msra.mxu0 0.0
        %1333 = vmatprep.subr.mxu0 0.0
        %1334 = vmatpush1.msra.mxu0 0.0
        %1335 = vmatprep.subr.mxu0 0.0
        %1336 = vmatpush1.msra.mxu0 0.0
        %1337 = vmatprep.subr.mxu0 0.0
        %1338 = vmatpush1.msra.mxu0 0.0
        %1339 = vmatprep.subr.mxu0 0.0
        %1340 = vmatpush1.msra.mxu0 0.0
        %1341 = vmatprep.subr.mxu0 0.0
        %1342 = vmatpush1.msra.mxu0 0.0
        %1343 = vmatprep.subr.mxu0 0.0
        %1344 = vmatpush1.msra.mxu0 0.0
        %1345 = vmatprep.subr.mxu0 0.0
        %1346 = vmatpush1.msra.mxu0 0.0
        %1347 = vmatprep.subr.mxu0 0.0
        %1348 = vmatpush1.msra.mxu0 0.0
        %1349 = vmatprep.subr.mxu0 0.0
        %1350 = vmatpush1.msra.mxu0 0.0
        %1351 = vmatprep.subr.mxu0 0.0
        %1352 = vmatpush1.msra.mxu0 0.0
        %1353 = vmatprep.subr.mxu0 0.0
        %1354 = vmatpush1.msra.mxu0 0.0
        %1355 = vmatprep.subr.mxu0 0.0
        %1356 = vmatpush1.msra.mxu0 0.0
        %1357 = vmatprep.subr.mxu0 0.0
        %1358 = vmatpush1.msra.mxu0 0.0
        %1359 = vmatprep.subr.mxu0 0.0
        %1360 = vmatpush1.msra.mxu0 0.0
        %1361 = vmatprep.subr.mxu0 0.0
        %1362 = vmatpush1.msra.mxu0 0.0
        %1363 = vmatprep.mubr.f32.mxu0 0.0
        %v1364 = vand.u32 %v920, 4294901760
        %v1365 = vsub.f32 %v920, %v1364
        %v1366 = vand.u32 %v1365, 4294901760
        %1367 = vmatmul.mubr.f32.gmra.mrb[0].mxu0 %v1366
        %v1368 = vpop.f32.mrb[0].mxu0
        %v1369 = vadd.f32 %v1280, %v1368
        %v1370 = vpop.f32.mrb[0].mxu0
        %1371 = vdwg.mxu0
        %1372 = vmatprep.subr.mxu0 0.0
        %v1373 = vand.u32 %v921, 4294901760
        %v1374 = vsub.f32 %v921, %v1373
        %v1375 = vand.u32 %v1374, 4294901760
        %1376 = vmatpush1.msra.mxu0 %v1375
        %1377 = vmatprep.subr.mxu0 0.0
        %v1378 = vand.u32 %v922, 4294901760
        %v1379 = vsub.f32 %v922, %v1378
        %v1380 = vand.u32 %v1379, 4294901760
        %1381 = vmatpush1.msra.mxu0 %v1380
        %1382 = vmatprep.subr.mxu0 0.0
        %v1383 = vand.u32 %v923, 4294901760
        %v1384 = vsub.f32 %v923, %v1383
        %v1385 = vand.u32 %v1384, 4294901760
        %1386 = vmatpush1.msra.mxu0 %v1385
        %1387 = vmatprep.subr.mxu0 0.0
        %v1388 = vand.u32 %v924, 4294901760
        %v1389 = vsub.f32 %v924, %v1388
        %v1390 = vand.u32 %v1389, 4294901760
        %1391 = vmatpush1.msra.mxu0 %v1390
        %1392 = vmatprep.subr.mxu0 0.0
        %v1393 = vand.u32 %v925, 4294901760
        %v1394 = vsub.f32 %v925, %v1393
        %v1395 = vand.u32 %v1394, 4294901760
        %1396 = vmatpush1.msra.mxu0 %v1395
        %1397 = vmatprep.subr.mxu0 0.0
        %v1398 = vand.u32 %v926, 4294901760
        %v1399 = vsub.f32 %v926, %v1398
        %v1400 = vand.u32 %v1399, 4294901760
        %1401 = vmatpush1.msra.mxu0 %v1400
        %1402 = vmatprep.subr.mxu0 0.0
        %v1403 = vand.u32 %v927, 4294901760
        %v1404 = vsub.f32 %v927, %v1403
        %v1405 = vand.u32 %v1404, 4294901760
        %1406 = vmatpush1.msra.mxu0 %v1405
        %1407 = vmatprep.subr.mxu0 0.0
        %v1408 = vand.u32 %v928, 4294901760
        %v1409 = vsub.f32 %v928, %v1408
        %v1410 = vand.u32 %v1409, 4294901760
        %1411 = vmatpush1.msra.mxu0 %v1410
        %1412 = vmatprep.subr.mxu0 0.0
        %v1413 = vand.u32 %v929, 4294901760
        %v1414 = vsub.f32 %v929, %v1413
        %v1415 = vand.u32 %v1414, 4294901760
        %1416 = vmatpush1.msra.mxu0 %v1415
        %1417 = vmatprep.subr.mxu0 0.0
        %v1418 = vand.u32 %v930, 4294901760
        %v1419 = vsub.f32 %v930, %v1418
        %v1420 = vand.u32 %v1419, 4294901760
        %1421 = vmatpush1.msra.mxu0 %v1420
        %1422 = vmatprep.subr.mxu0 0.0
        %v1423 = vand.u32 %v931, 4294901760
        %v1424 = vsub.f32 %v931, %v1423
        %v1425 = vand.u32 %v1424, 4294901760
        %1426 = vmatpush1.msra.mxu0 %v1425
        %1427 = vmatprep.subr.mxu0 0.0
        %v1428 = vand.u32 %v932, 4294901760
        %v1429 = vsub.f32 %v932, %v1428
        %v1430 = vand.u32 %v1429, 4294901760
        %1431 = vmatpush1.msra.mxu0 %v1430
        %1432 = vmatprep.subr.mxu0 0.0
        %v1433 = vand.u32 %v933, 4294901760
        %v1434 = vsub.f32 %v933, %v1433
        %v1435 = vand.u32 %v1434, 4294901760
        %1436 = vmatpush1.msra.mxu0 %v1435
        %1437 = vmatprep.subr.mxu0 0.0
        %v1438 = vand.u32 %v934, 4294901760
        %v1439 = vsub.f32 %v934, %v1438
        %v1440 = vand.u32 %v1439, 4294901760
        %1441 = vmatpush1.msra.mxu0 %v1440
        %1442 = vmatprep.subr.mxu0 0.0
        %v1443 = vand.u32 %v935, 4294901760
        %v1444 = vsub.f32 %v935, %v1443
        %v1445 = vand.u32 %v1444, 4294901760
        %1446 = vmatpush1.msra.mxu0 %v1445
        %1447 = vmatprep.subr.mxu0 0.0
        %v1448 = vand.u32 %v936, 4294901760
        %v1449 = vsub.f32 %v936, %v1448
        %v1450 = vand.u32 %v1449, 4294901760
        %1451 = vmatpush1.msra.mxu0 %v1450
        %1452 = vmatprep.subr.mxu0 0.0
        %1453 = vmatpush1.msra.mxu0 0.0
        %1454 = vmatprep.subr.mxu0 0.0
        %1455 = vmatpush1.msra.mxu0 0.0
        %1456 = vmatprep.subr.mxu0 0.0
        %1457 = vmatpush1.msra.mxu0 0.0
        %1458 = vmatprep.subr.mxu0 0.0
        %1459 = vmatpush1.msra.mxu0 0.0
        %1460 = vmatprep.subr.mxu0 0.0
        %1461 = vmatpush1.msra.mxu0 0.0
        %1462 = vmatprep.subr.mxu0 0.0
        %1463 = vmatpush1.msra.mxu0 0.0
        %1464 = vmatprep.subr.mxu0 0.0
        %1465 = vmatpush1.msra.mxu0 0.0
        %1466 = vmatprep.subr.mxu0 0.0
        %1467 = vmatpush1.msra.mxu0 0.0
        %1468 = vmatprep.subr.mxu0 0.0
        %1469 = vmatpush1.msra.mxu0 0.0
        %1470 = vmatprep.subr.mxu0 0.0
        %1471 = vmatpush1.msra.mxu0 0.0
        %1472 = vmatprep.subr.mxu0 0.0
        %1473 = vmatpush1.msra.mxu0 0.0
        %1474 = vmatprep.subr.mxu0 0.0
        %1475 = vmatpush1.msra.mxu0 0.0
        %1476 = vmatprep.subr.mxu0 0.0
        %1477 = vmatpush1.msra.mxu0 0.0
        %1478 = vmatprep.subr.mxu0 0.0
        %1479 = vmatpush1.msra.mxu0 0.0
        %1480 = vmatprep.subr.mxu0 0.0
        %1481 = vmatpush1.msra.mxu0 0.0
        %1482 = vmatprep.subr.mxu0 0.0
        %1483 = vmatpush1.msra.mxu0 0.0
        %1484 = vmatprep.mubr.f32.mxu0 0.0
        %v1485 = vand.u32 %v920, 4294901760
        %1486 = vmatmul.mubr.f32.gmra.mrb[0].mxu0 %v1485
        %v1487 = vpop.f32.mrb[0].mxu0
        %v1488 = vadd.f32 %v1369, %v1487
        %v1489 = vpop.f32.mrb[0].mxu0
        %1490 = vdwg.mxu0
        %1491 = vmatprep.subr.mxu0 0.0
        %v1492 = vand.u32 %v921, 4294901760
        %1493 = vmatpush1.msra.mxu0 %v1492
        %1494 = vmatprep.subr.mxu0 0.0
        %v1495 = vand.u32 %v922, 4294901760
        %1496 = vmatpush1.msra.mxu0 %v1495
        %1497 = vmatprep.subr.mxu0 0.0
        %v1498 = vand.u32 %v923, 4294901760
        %1499 = vmatpush1.msra.mxu0 %v1498
        %1500 = vmatprep.subr.mxu0 0.0
        %v1501 = vand.u32 %v924, 4294901760
        %1502 = vmatpush1.msra.mxu0 %v1501
        %1503 = vmatprep.subr.mxu0 0.0
        %v1504 = vand.u32 %v925, 4294901760
        %1505 = vmatpush1.msra.mxu0 %v1504
        %1506 = vmatprep.subr.mxu0 0.0
        %v1507 = vand.u32 %v926, 4294901760
        %1508 = vmatpush1.msra.mxu0 %v1507
        %1509 = vmatprep.subr.mxu0 0.0
        %v1510 = vand.u32 %v927, 4294901760
        %1511 = vmatpush1.msra.mxu0 %v1510
        %1512 = vmatprep.subr.mxu0 0.0
        %v1513 = vand.u32 %v928, 4294901760
        %1514 = vmatpush1.msra.mxu0 %v1513
        %1515 = vmatprep.subr.mxu0 0.0
        %v1516 = vand.u32 %v929, 4294901760
        %1517 = vmatpush1.msra.mxu0 %v1516
        %1518 = vmatprep.subr.mxu0 0.0
        %v1519 = vand.u32 %v930, 4294901760
        %1520 = vmatpush1.msra.mxu0 %v1519
        %1521 = vmatprep.subr.mxu0 0.0
        %v1522 = vand.u32 %v931, 4294901760
        %1523 = vmatpush1.msra.mxu0 %v1522
        %1524 = vmatprep.subr.mxu0 0.0
        %v1525 = vand.u32 %v932, 4294901760
        %1526 = vmatpush1.msra.mxu0 %v1525
        %1527 = vmatprep.subr.mxu0 0.0
        %v1528 = vand.u32 %v933, 4294901760
        %1529 = vmatpush1.msra.mxu0 %v1528
        %1530 = vmatprep.subr.mxu0 0.0
        %v1531 = vand.u32 %v934, 4294901760
        %1532 = vmatpush1.msra.mxu0 %v1531
        %1533 = vmatprep.subr.mxu0 0.0
        %v1534 = vand.u32 %v935, 4294901760
        %1535 = vmatpush1.msra.mxu0 %v1534
        %1536 = vmatprep.subr.mxu0 0.0
        %v1537 = vand.u32 %v936, 4294901760
        %1538 = vmatpush1.msra.mxu0 %v1537
        %1539 = vmatprep.subr.mxu0 0.0
        %1540 = vmatpush1.msra.mxu0 0.0
        %1541 = vmatprep.subr.mxu0 0.0
        %1542 = vmatpush1.msra.mxu0 0.0
        %1543 = vmatprep.subr.mxu0 0.0
        %1544 = vmatpush1.msra.mxu0 0.0
        %1545 = vmatprep.subr.mxu0 0.0
        %1546 = vmatpush1.msra.mxu0 0.0
        %1547 = vmatprep.subr.mxu0 0.0
        %1548 = vmatpush1.msra.mxu0 0.0
        %1549 = vmatprep.subr.mxu0 0.0
        %1550 = vmatpush1.msra.mxu0 0.0
        %1551 = vmatprep.subr.mxu0 0.0
        %1552 = vmatpush1.msra.mxu0 0.0
        %1553 = vmatprep.subr.mxu0 0.0
        %1554 = vmatpush1.msra.mxu0 0.0
        %1555 = vmatprep.subr.mxu0 0.0
        %1556 = vmatpush1.msra.mxu0 0.0
        %1557 = vmatprep.subr.mxu0 0.0
        %1558 = vmatpush1.msra.mxu0 0.0
        %1559 = vmatprep.subr.mxu0 0.0
        %1560 = vmatpush1.msra.mxu0 0.0
        %1561 = vmatprep.subr.mxu0 0.0
        %1562 = vmatpush1.msra.mxu0 0.0
        %1563 = vmatprep.subr.mxu0 0.0
        %1564 = vmatpush1.msra.mxu0 0.0
        %1565 = vmatprep.subr.mxu0 0.0
        %1566 = vmatpush1.msra.mxu0 0.0
        %1567 = vmatprep.subr.mxu0 0.0
        %1568 = vmatpush1.msra.mxu0 0.0
        %1569 = vmatprep.subr.mxu0 0.0
        %1570 = vmatpush1.msra.mxu0 0.0
        %1571 = vmatprep.mubr.f32.mxu0 0.0
        %v1572 = vand.u32 %v920, 4294901760
        %1573 = vmatmul.mubr.f32.gmra.mrb[0].mxu0 %v1572
        %v1574 = vpop.f32.mrb[0].mxu0
        %v1575 = vadd.f32 %v1488, %v1574
        %v1576 = vpop.f32.mrb[0].mxu0
        %1577 = vdwg.mxu0
        %v1578 = vadd.f32 %v299, %v1575
        %1579 = vst.msk [vmem:[%s291] sm:$0xff] %vm302, %v1578
        %s1580 = sand.u32 %s197, 1
        %s1581 = scalar_lea.sflag [#allocation3], %s1580
        %s1582 = sand.u32 %s197, 1
        %s1583 = smul.addr %s1582, 8
        %s1584 = scalar_lea.vmem [#allocation2], %s1583
        // Predicated region
        $region49: #{_lambda_.13} parent=47 // pred_check
          %p1585 = pneg %p207
        $region50: #{_lambda_.13} parent=47 // pred_check_branch
          %1587 = sbr.rel (%p1585) target = $region52
        $region51: #{_lambda_.13} parent=47 // pred_region
          %s1589 = ssub.s32 128, 128
          %1590 = vsyncadd %s1581, %s1589
          %s1591 = sadd.s32 %s26, %s25
          %s1592 = smul.addr %s1591, 128
          %s1593 = scalar_lea.hbm %s7, %s1592
          %s1595 = sshll.u32 %s1584, 4
          %s1596 = int_to_ptr.vmem [resolvable:$true] %s1595
          %1598 = dma.vmem_to_hbm [thread:$0]  %s1596, 128, %s1593, %s1581
        $region52: #{_lambda_.13} parent=47 // pred_fallthru
          _
      $region48: #{_lambda_.13} parent=5 // pred_fallthru
        _
      %p1599 = scmp.le.s32.totalorder 2, %s16
      // Predicated region
      $region53: #{_lambda_.13} parent=5 // pred_check
        %p1600 = pneg %p1599
      $region54: #{_lambda_.13} parent=5 // pred_check_branch
        %1602 = sbr.rel (%p1600) target = $region56
      $region55: #{_lambda_.13} parent=5 // pred_region
        %s1603 = ssub.s32 %s16, 2
        // Predicated region
        $region57: #{_lambda_.13} parent=55 // pred_check
          %p1604 = pneg %p213
        $region58: #{_lambda_.13} parent=55 // pred_check_branch
          %1606 = sbr.rel (%p1604) target = $region60
        $region59: #{_lambda_.13} parent=55 // pred_region
          %s1607 = sand.u32 %s198, 1
          %s1608 = scalar_lea.sflag [#allocation3], %s1607
          %s1609 = sand.u32 %s198, 1
          %s1610 = smul.addr %s1609, 8
          %s1611 = scalar_lea.vmem [#allocation2], %s1610
          %1612 = dma.done %s1608, 128
        $region60: #{_lambda_.13} parent=55 // pred_fallthru
          _
      $region56: #{_lambda_.13} parent=5 // pred_fallthru
        _
    $region6: #{_lambda_.13} parent=1 // loop_footer
      %s20 = sadd.s32 1, %s16
    $region7: #{_lambda_.13} parent=1 // loop_footer_branch
      %15 = sbr.rel target = $region3
    $region8: #{_lambda_.13} parent=1 // loop_exit
      _
    %1613 = vsyncpa [#allocation3], 1
    %s1614 = scalar_lea.sflag [#allocation3], 1
    %1615 = vsyncpa %s1614, 1

// kernel: _lambda_.9
$region0: #{_lambda_.9}
  #allocation0 [shape = 'u32[]', space=smem, size = 0x4, offset = 0x4, fixed_abs, tag = 'smem constant byte address 0x4 - core index']
  #allocation1 [shape = 'u32[144,128]{1,0:T(1,128)}', space=vmem, size = 0x12000, scoped, tag = 'internal scratch']
  #allocation2 [shape = 'f32[4,8,8]{2,1,0:T(8,128)}', space=vmem, size = 0x4000, scoped, tag = 'scratch operand']
  #allocation3 [shape = 'f32[4,8,1]{2,1,0:T(8,128)}', space=vmem, size = 0x4000, scoped, tag = 'scratch operand']
  #allocation4 [shape = 'f32[4,8,1]{2,1,0:T(8,128)}', space=vmem, size = 0x4000, scoped, tag = 'scratch operand']
  #allocation5 [shape = 's32[1]{0}', space=sflag, size = 0x4, scoped, tag = 'scoped memory for _lambda_.9']
  #allocation6 [shape = 's32[1]{0:T(128)S(6)}', space=smem, size = 0x200, scoped, tag = 'prefetched SMEM operand 0']
  #allocation7 [shape = 's32[1]{0:T(128)S(6)}', space=smem, size = 0x200, scoped, tag = 'prefetched SMEM operand 1']
  %s0 = inlined_call_operand.<no memory space> [shape: s32[1], index: 0, kind: input, shape index: {}, may-alias: {0,1}]
  %s1 = inlined_call_operand.<no memory space> [shape: s32[1], index: 1, kind: input, shape index: {}, may-alias: {0,1}]
  %s2 = inlined_call_operand.vmem [shape: f32[2,8,32], index: 2, kind: input, shape index: {}]
  %s3 = inlined_call_operand.vmem [shape: f32[2,4,8,8], index: 3, kind: input, shape index: {}]
  %s4 = inlined_call_operand.vmem [shape: f32[2,4,8,8], index: 4, kind: input, shape index: {}]
  %s5 = inlined_call_operand.vmem [shape: f32[2,4,8,8], index: 5, kind: input, shape index: {}]
  %s6 = inlined_call_operand.vmem [shape: f32[4,8,32], index: 6, kind: input, shape index: {}]
  %s7 = inlined_call_operand.vmem [shape: f32[1,32], index: 7, kind: input, shape index: {}]
  %s8 = inlined_call_operand.vmem [shape: f32[1,32], index: 8, kind: input, shape index: {}]
  %s9 = inlined_call_operand.vmem [shape: f32[2,8,32], index: 9, kind: output, shape index: {}]
  %s10 = sld [smem:[#allocation0]]
  $region69: #{_lambda_.9} parent=0
    _
  %s12 = ssub.s32 1, %s10
  %s13 = scalar_select 0, %s12, %s10
  %14 = sst [smem:[#allocation6]] %s0
  %15 = sst [smem:[#allocation7]] %s1
  loop: start=0, step=1, limit=4
  $region2: #{_lambda_.9} parent=0 // loop_pre_header
    _
  $region3: #{_lambda_.9} parent=0 // loop_header
    %s17 = sphi 0, %s21
    %p18 = scmp.ge.s32.totalorder %s17, 4
    %s24 = sphi 0, %s36
    %s25 = sphi 0, %s32
    %s26 = sphi 0, %s24
    %s27 = sphi 0, %s25
    %s28 = sphi 0, %s26
    %s29 = sphi 0, %s27
    %s43 = sphi 0, %s45
    %s46 = sphi 0, %s43
    %s47 = sphi 0, %s46
    %s63 = sphi 0, %s47
    %s73 = sphi 0, %s75
    %s76 = sphi 0, %s73
    %s77 = sphi 0, %s76
    %s93 = sphi 0, %s77
    %s103 = sphi 0, %s105
    %s106 = sphi 0, %s103
    %s107 = sphi 0, %s106
    %s123 = sphi 0, %s107
    %s133 = sphi 0, %s135
    %s136 = sphi 0, %s133
    %s137 = sphi 0, %s136
    %s153 = sphi 0, %s137
    %s157 = sphi 0, %s157
    %s159 = sphi 0, %s157
    %s160 = sphi 0, %s159
    %s174 = sphi 0, %s160
    %s178 = sphi 0, %s178
    %s180 = sphi 0, %s178
    %s181 = sphi 0, %s180
    %s195 = sphi 0, %s181
    %s199 = sphi 0, %s199
    %s201 = sphi 0, %s199
    %s202 = sphi 0, %s201
    %s216 = sphi 0, %s202
    %s226 = sphi 0, %s228
    %s229 = sphi 0, %s226
    %s230 = sphi 0, %s229
    %s246 = sphi 0, %s230
  $region4: #{_lambda_.9} parent=0 // loop_header_branch
    %20 = sbr.rel (%p18) target = $region8
  $region5: #{_lambda_.9} parent=0 // loop_body
    %s22 = ssub.s32 %s17, 1
    %s23 = ssub.s32 %s17, 2
    %s30 = sadd.s32 1, %s25
    %p31 = scmp.ge.s32.totalorder %s30, 1
    %s32 = scalar_select %p31, 0, %s30
    %s33 = sadd.s32 1, %s24
    %s34 = scalar_select %p31, %s33, %s24
    %p35 = scmp.ge.s32.totalorder %s34, 2
    %s36 = scalar_select %p35, 0, %s34
    %s37 = sld [smem:[#allocation6 + %s25]]
    %s38 = sld [smem:[#allocation6 + %s32]]
    %s39 = ssub.s32 %s24, %s36
    %s40 = ssub.s32 %s37, %s38
    %s41 = sor.u32 %s39, %s40
    %p42 = scmp.eq.s32.totalorder %s41, 0
    %s44 = sadd.s32 %s43, 1
    %s45 = scalar_select %p42, %s43, %s44
    %p48 = pneg %p42
    %p49 = scmp.eq.s32.totalorder %s17, 1
    %p50 = por %p48, %p49
    %p51 = scmp.ne.s32.totalorder %s43, %s46
    %p52 = scmp.eq.s32.totalorder %s17, 0
    %p53 = por %p51, %p52
    %p54 = scmp.ne.s32.totalorder %s43, %s46
    %p55 = scmp.eq.s32.totalorder %s22, 1
    %p56 = por %p54, %p55
    %p57 = scmp.ne.s32.totalorder %s46, %s47
    %p58 = scmp.eq.s32.totalorder %s22, 0
    %p59 = por %p57, %p58
    %p60 = scmp.ne.s32.totalorder %s46, %s47
    %p61 = scmp.eq.s32.totalorder %s23, 1
    %p62 = por %p60, %p61
    %p64 = scmp.ne.s32.totalorder %s47, %s63
    %p65 = scmp.eq.s32.totalorder %s23, 0
    %p66 = por %p64, %p65
    %s67 = sld [smem:[#allocation6 + %s25]]
    %s68 = sld [smem:[#allocation6 + %s32]]
    %s69 = ssub.s32 %s24, %s36
    %s70 = ssub.s32 %s67, %s68
    %s71 = sor.u32 %s69, %s70
    %p72 = scmp.eq.s32.totalorder %s71, 0
    %s74 = sadd.s32 %s73, 1
    %s75 = scalar_select %p72, %s73, %s74
    %p78 = pneg %p72
    %p79 = scmp.eq.s32.totalorder %s17, 1
    %p80 = por %p78, %p79
    %p81 = scmp.ne.s32.totalorder %s73, %s76
    %p82 = scmp.eq.s32.totalorder %s17, 0
    %p83 = por %p81, %p82
    %p84 = scmp.ne.s32.totalorder %s73, %s76
    %p85 = scmp.eq.s32.totalorder %s22, 1
    %p86 = por %p84, %p85
    %p87 = scmp.ne.s32.totalorder %s76, %s77
    %p88 = scmp.eq.s32.totalorder %s22, 0
    %p89 = por %p87, %p88
    %p90 = scmp.ne.s32.totalorder %s76, %s77
    %p91 = scmp.eq.s32.totalorder %s23, 1
    %p92 = por %p90, %p91
    %p94 = scmp.ne.s32.totalorder %s77, %s93
    %p95 = scmp.eq.s32.totalorder %s23, 0
    %p96 = por %p94, %p95
    %s97 = sld [smem:[#allocation7 + %s25]]
    %s98 = sld [smem:[#allocation7 + %s32]]
    %s99 = ssub.s32 %s24, %s36
    %s100 = ssub.s32 %s97, %s98
    %s101 = sor.u32 %s99, %s100
    %p102 = scmp.eq.s32.totalorder %s101, 0
    %s104 = sadd.s32 %s103, 1
    %s105 = scalar_select %p102, %s103, %s104
    %p108 = pneg %p102
    %p109 = scmp.eq.s32.totalorder %s17, 1
    %p110 = por %p108, %p109
    %p111 = scmp.ne.s32.totalorder %s103, %s106
    %p112 = scmp.eq.s32.totalorder %s17, 0
    %p113 = por %p111, %p112
    %p114 = scmp.ne.s32.totalorder %s103, %s106
    %p115 = scmp.eq.s32.totalorder %s22, 1
    %p116 = por %p114, %p115
    %p117 = scmp.ne.s32.totalorder %s106, %s107
    %p118 = scmp.eq.s32.totalorder %s22, 0
    %p119 = por %p117, %p118
    %p120 = scmp.ne.s32.totalorder %s106, %s107
    %p121 = scmp.eq.s32.totalorder %s23, 1
    %p122 = por %p120, %p121
    %p124 = scmp.ne.s32.totalorder %s107, %s123
    %p125 = scmp.eq.s32.totalorder %s23, 0
    %p126 = por %p124, %p125
    %s127 = sld [smem:[#allocation7 + %s25]]
    %s128 = sld [smem:[#allocation7 + %s32]]
    %s129 = ssub.s32 %s24, %s36
    %s130 = ssub.s32 %s127, %s128
    %s131 = sor.u32 %s129, %s130
    %p132 = scmp.eq.s32.totalorder %s131, 0
    %s134 = sadd.s32 %s133, 1
    %s135 = scalar_select %p132, %s133, %s134
    %p138 = pneg %p132
    %p139 = scmp.eq.s32.totalorder %s17, 1
    %p140 = por %p138, %p139
    %p141 = scmp.ne.s32.totalorder %s133, %s136
    %p142 = scmp.eq.s32.totalorder %s17, 0
    %p143 = por %p141, %p142
    %p144 = scmp.ne.s32.totalorder %s133, %s136
    %p145 = scmp.eq.s32.totalorder %s22, 1
    %p146 = por %p144, %p145
    %p147 = scmp.ne.s32.totalorder %s136, %s137
    %p148 = scmp.eq.s32.totalorder %s22, 0
    %p149 = por %p147, %p148
    %p150 = scmp.ne.s32.totalorder %s136, %s137
    %p151 = scmp.eq.s32.totalorder %s23, 1
    %p152 = por %p150, %p151
    %p154 = scmp.ne.s32.totalorder %s137, %s153
    %p155 = scmp.eq.s32.totalorder %s23, 0
    %p156 = por %p154, %p155
    %s158 = sadd.s32 %s157, 1
    %p161 = scmp.eq.s32.totalorder %s17, 1
    %p162 = scmp.ne.s32.totalorder %s157, %s159
    %p163 = scmp.eq.s32.totalorder %s17, 0
    %p164 = por %p162, %p163
    %p165 = scmp.ne.s32.totalorder %s157, %s159
    %p166 = scmp.eq.s32.totalorder %s22, 1
    %p167 = por %p165, %p166
    %p168 = scmp.ne.s32.totalorder %s159, %s160
    %p169 = scmp.eq.s32.totalorder %s22, 0
    %p170 = por %p168, %p169
    %p171 = scmp.ne.s32.totalorder %s159, %s160
    %p172 = scmp.eq.s32.totalorder %s23, 1
    %p173 = por %p171, %p172
    %p175 = scmp.ne.s32.totalorder %s160, %s174
    %p176 = scmp.eq.s32.totalorder %s23, 0
    %p177 = por %p175, %p176
    %s179 = sadd.s32 %s178, 1
    %p182 = scmp.eq.s32.totalorder %s17, 1
    %p183 = scmp.ne.s32.totalorder %s178, %s180
    %p184 = scmp.eq.s32.totalorder %s17, 0
    %p185 = por %p183, %p184
    %p186 = scmp.ne.s32.totalorder %s178, %s180
    %p187 = scmp.eq.s32.totalorder %s22, 1
    %p188 = por %p186, %p187
    %p189 = scmp.ne.s32.totalorder %s180, %s181
    %p190 = scmp.eq.s32.totalorder %s22, 0
    %p191 = por %p189, %p190
    %p192 = scmp.ne.s32.totalorder %s180, %s181
    %p193 = scmp.eq.s32.totalorder %s23, 1
    %p194 = por %p192, %p193
    %p196 = scmp.ne.s32.totalorder %s181, %s195
    %p197 = scmp.eq.s32.totalorder %s23, 0
    %p198 = por %p196, %p197
    %s200 = sadd.s32 %s199, 1
    %p203 = scmp.eq.s32.totalorder %s17, 1
    %p204 = scmp.ne.s32.totalorder %s199, %s201
    %p205 = scmp.eq.s32.totalorder %s17, 0
    %p206 = por %p204, %p205
    %p207 = scmp.ne.s32.totalorder %s199, %s201
    %p208 = scmp.eq.s32.totalorder %s22, 1
    %p209 = por %p207, %p208
    %p210 = scmp.ne.s32.totalorder %s201, %s202
    %p211 = scmp.eq.s32.totalorder %s22, 0
    %p212 = por %p210, %p211
    %p213 = scmp.ne.s32.totalorder %s201, %s202
    %p214 = scmp.eq.s32.totalorder %s23, 1
    %p215 = por %p213, %p214
    %p217 = scmp.ne.s32.totalorder %s202, %s216
    %p218 = scmp.eq.s32.totalorder %s23, 0
    %p219 = por %p217, %p218
    %s220 = sld [smem:[#allocation6 + %s25]]
    %s221 = sld [smem:[#allocation6 + %s32]]
    %s222 = ssub.s32 %s24, %s36
    %s223 = ssub.s32 %s220, %s221
    %s224 = sor.u32 %s222, %s223
    %p225 = scmp.eq.s32.totalorder %s224, 0
    %s227 = sadd.s32 %s226, 1
    %s228 = scalar_select %p225, %s226, %s227
    %p231 = pneg %p225
    %p232 = scmp.eq.s32.totalorder %s17, 1
    %p233 = por %p231, %p232
    %p234 = scmp.ne.s32.totalorder %s226, %s229
    %p235 = scmp.eq.s32.totalorder %s17, 0
    %p236 = por %p234, %p235
    %p237 = scmp.ne.s32.totalorder %s226, %s229
    %p238 = scmp.eq.s32.totalorder %s22, 1
    %p239 = por %p237, %p238
    %p240 = scmp.ne.s32.totalorder %s229, %s230
    %p241 = scmp.eq.s32.totalorder %s22, 0
    %p242 = por %p240, %p241
    %p243 = scmp.ne.s32.totalorder %s229, %s230
    %p244 = scmp.eq.s32.totalorder %s23, 1
    %p245 = por %p243, %p244
    %p247 = scmp.ne.s32.totalorder %s230, %s246
    %p248 = scmp.eq.s32.totalorder %s23, 0
    %p249 = por %p247, %p248
    %p250 = scmp.le.s32.totalorder 1, %s17
    %p251 = scmp.lt.s32.totalorder %s17, 3
    %p252 = pnand %p250, %p251
    %p253 = pneg %p252
    // Predicated region
    $region9: #{_lambda_.9} parent=5 // pred_check
      _
    $region10: #{_lambda_.9} parent=5 // pred_check_branch
      %255 = sbr.rel (%p252) target = $region12
    $region11: #{_lambda_.9} parent=5 // pred_region
      %s256 = ssub.s32 %s17, 1
      // Predicated region
      $region13: #{_lambda_.9} parent=11 // pred_check
        %p257 = pneg %p170
      $region14: #{_lambda_.9} parent=11 // pred_check_branch
        %259 = sbr.rel (%p257) target = $region16
      $region15: #{_lambda_.9} parent=11 // pred_region
        _
      $region16: #{_lambda_.9} parent=11 // pred_fallthru
        _
      // Predicated region
      $region17: #{_lambda_.9} parent=11 // pred_check
        %p260 = pneg %p191
      $region18: #{_lambda_.9} parent=11 // pred_check_branch
        %262 = sbr.rel (%p260) target = $region20
      $region19: #{_lambda_.9} parent=11 // pred_region
        _
      $region20: #{_lambda_.9} parent=11 // pred_fallthru
        _
      // Predicated region
      $region21: #{_lambda_.9} parent=11 // pred_check
        %p263 = pneg %p212
      $region22: #{_lambda_.9} parent=11 // pred_check_branch
        %265 = sbr.rel (%p263) target = $region24
      $region23: #{_lambda_.9} parent=11 // pred_region
        _
      $region24: #{_lambda_.9} parent=11 // pred_fallthru
        _
    $region12: #{_lambda_.9} parent=5 // pred_fallthru
      _
    %p266 = scmp.lt.s32.totalorder %s17, 2
    // Predicated region
    $region25: #{_lambda_.9} parent=5 // pred_check
      %p267 = pneg %p266
    $region26: #{_lambda_.9} parent=5 // pred_check_branch
      %269 = sbr.rel (%p267) target = $region28
    $region27: #{_lambda_.9} parent=5 // pred_region
      // Predicated region
      $region29: #{_lambda_.9} parent=27 // pred_check
        %p270 = pneg %p53
      $region30: #{_lambda_.9} parent=27 // pred_check_branch
        %272 = sbr.rel (%p270) target = $region32
      $region31: #{_lambda_.9} parent=27 // pred_region
        %s273 = sld [smem:[#allocation6 + %s25]]
        %p274 = scmp.lt.s32.totalorder %s24, 1
        %s275 = scalar_select %p274, %s24, 1
        %p276 = scmp.lt.s32.totalorder %s273, 0
        %s277 = scalar_select %p276, %s273, 0
        %s278 = sadd.s32 %s277, %s275
        %s279 = smul.addr %s278, 8
        %s280 = scalar_lea.vmem %s2, %s279
        %s281 = sld [smem:[#allocation6 + %s25]]
      $region32: #{_lambda_.9} parent=27 // pred_fallthru
        _
      // Predicated region
      $region33: #{_lambda_.9} parent=27 // pred_check
        %p282 = pneg %p83
      $region34: #{_lambda_.9} parent=27 // pred_check_branch
        %284 = sbr.rel (%p282) target = $region36
      $region35: #{_lambda_.9} parent=27 // pred_region
        %s285 = sld [smem:[#allocation6 + %s25]]
        %p286 = scmp.lt.s32.totalorder %s24, 1
        %s287 = scalar_select %p286, %s24, 1
        %p288 = scmp.lt.s32.totalorder %s285, 0
        %s289 = scalar_select %p288, %s285, 0
        %s290 = smul.addr %s287, 4
        %s291 = sadd.s32 %s289, %s290
        %s292 = smul.addr %s291, 8
        %s293 = scalar_lea.vmem %s3, %s292
        %s294 = sld [smem:[#allocation6 + %s25]]
      $region36: #{_lambda_.9} parent=27 // pred_fallthru
        _
      // Predicated region
      $region37: #{_lambda_.9} parent=27 // pred_check
        %p295 = pneg %p113
      $region38: #{_lambda_.9} parent=27 // pred_check_branch
        %297 = sbr.rel (%p295) target = $region40
      $region39: #{_lambda_.9} parent=27 // pred_region
        %s298 = sld [smem:[#allocation7 + %s25]]
        %p299 = scmp.lt.s32.totalorder %s24, 1
        %s300 = scalar_select %p299, %s24, 1
        %p301 = scmp.lt.s32.totalorder %s298, 0
        %s302 = scalar_select %p301, %s298, 0
        %s303 = smul.addr %s300, 4
        %s304 = sadd.s32 %s302, %s303
        %s305 = smul.addr %s304, 8
        %s306 = scalar_lea.vmem %s4, %s305
        %s307 = sld [smem:[#allocation7 + %s25]]
      $region40: #{_lambda_.9} parent=27 // pred_fallthru
        _
      // Predicated region
      $region41: #{_lambda_.9} parent=27 // pred_check
        %p308 = pneg %p143
      $region42: #{_lambda_.9} parent=27 // pred_check_branch
        %310 = sbr.rel (%p308) target = $region44
      $region43: #{_lambda_.9} parent=27 // pred_region
        %s311 = sld [smem:[#allocation7 + %s25]]
        %p312 = scmp.lt.s32.totalorder %s24, 1
        %s313 = scalar_select %p312, %s24, 1
        %p314 = scmp.lt.s32.totalorder %s311, 0
        %s315 = scalar_select %p314, %s311, 0
        %s316 = smul.addr %s313, 4
        %s317 = sadd.s32 %s315, %s316
        %s318 = smul.addr %s317, 8
        %s319 = scalar_lea.vmem %s5, %s318
        %s320 = sld [smem:[#allocation7 + %s25]]
      $region44: #{_lambda_.9} parent=27 // pred_fallthru
        _
    $region28: #{_lambda_.9} parent=5 // pred_fallthru
      _
    %p321 = scmp.le.s32.totalorder 1, %s17
    %p322 = scmp.lt.s32.totalorder %s17, 3
    %p323 = pnand %p321, %p322
    %p324 = pneg %p323
    // Predicated region
    $region45: #{_lambda_.9} parent=5 // pred_check
      _
    $region46: #{_lambda_.9} parent=5 // pred_check_branch
      %326 = sbr.rel (%p323) target = $region48
    $region47: #{_lambda_.9} parent=5 // pred_region
      %s327 = ssub.s32 %s17, 1
      %s328 = sld [smem:[#allocation6 + %s27]]
      %p329 = scmp.lt.s32.totalorder %s26, 1
      %s330 = scalar_select %p329, %s26, 1
      %p331 = scmp.lt.s32.totalorder %s328, 0
      %s332 = scalar_select %p331, %s328, 0
      %s333 = sadd.s32 %s332, %s330
      %s334 = smul.addr %s333, 8
      %s335 = scalar_lea.vmem %s2, %s334
      %p336 = pneg %p59
      %p337 = pneg %p56
      %s338 = sld [smem:[#allocation6 + %s27]]
      %p339 = scmp.lt.s32.totalorder %s26, 1
      %s340 = scalar_select %p339, %s26, 1
      %p341 = scmp.lt.s32.totalorder %s338, 0
      %s342 = scalar_select %p341, %s338, 0
      %s343 = smul.addr %s340, 4
      %s344 = sadd.s32 %s342, %s343
      %s345 = smul.addr %s344, 8
      %s346 = scalar_lea.vmem %s3, %s345
      %p347 = pneg %p89
      %p348 = pneg %p86
      %s349 = sld [smem:[#allocation7 + %s27]]
      %p350 = scmp.lt.s32.totalorder %s26, 1
      %s351 = scalar_select %p350, %s26, 1
      %p352 = scmp.lt.s32.totalorder %s349, 0
      %s353 = scalar_select %p352, %s349, 0
      %s354 = smul.addr %s351, 4
      %s355 = sadd.s32 %s353, %s354
      %s356 = smul.addr %s355, 8
      %s357 = scalar_lea.vmem %s4, %s356
      %p358 = pneg %p119
      %p359 = pneg %p116
      %s360 = sld [smem:[#allocation7 + %s27]]
      %p361 = scmp.lt.s32.totalorder %s26, 1
      %s362 = scalar_select %p361, %s26, 1
      %p363 = scmp.lt.s32.totalorder %s360, 0
      %s364 = scalar_select %p363, %s360, 0
      %s365 = smul.addr %s362, 4
      %s366 = sadd.s32 %s364, %s365
      %s367 = smul.addr %s366, 8
      %s368 = scalar_lea.vmem %s5, %s367
      %p369 = pneg %p149
      %p370 = pneg %p146
      %p371 = pneg %p170
      %p372 = pneg %p167
      %p373 = pneg %p191
      %p374 = pneg %p188
      %p375 = pneg %p212
      %p376 = pneg %p209
      %p377 = pneg %p242
      %p378 = pneg %p239
      %s379 = sld [smem:[#allocation6 + %s27]]
      %p380 = scmp.lt.s32.totalorder %s26, 1
      %s381 = scalar_select %p380, %s26, 1
      %p382 = scmp.lt.s32.totalorder %s379, 0
      %s383 = scalar_select %p382, %s379, 0
      %s384 = sadd.s32 %s383, %s381
      %s385 = smul.addr %s384, 8
      %s386 = scalar_lea.vmem %s9, %s385
      %s387 = sld [smem:[#allocation6 + %s27]]
      %p388 = scmp.lt.s32.totalorder %s26, 1
      %s389 = scalar_select %p388, %s26, 1
      %p390 = scmp.lt.s32.totalorder %s387, 0
      %s391 = scalar_select %p390, %s387, 0
      %s392 = sadd.s32 %s391, %s389
      %s393 = smul.addr %s392, 8
      %s394 = scalar_lea.vmem %s2, %s393
      %s395 = sld [smem:[#allocation6 + %s27]]
      %s396 = sld [smem:[#allocation6 + %s27]]
      %p397 = scmp.lt.s32.totalorder %s26, 1
      %s398 = scalar_select %p397, %s26, 1
      %p399 = scmp.lt.s32.totalorder %s396, 0
      %s400 = scalar_select %p399, %s396, 0
      %s401 = smul.addr %s398, 4
      %s402 = sadd.s32 %s400, %s401
      %s403 = smul.addr %s402, 8
      %s404 = scalar_lea.vmem %s3, %s403
      %s405 = sld [smem:[#allocation6 + %s27]]
      %s406 = sld [smem:[#allocation7 + %s27]]
      %p407 = scmp.lt.s32.totalorder %s26, 1
      %s408 = scalar_select %p407, %s26, 1
      %p409 = scmp.lt.s32.totalorder %s406, 0
      %s410 = scalar_select %p409, %s406, 0
      %s411 = smul.addr %s408, 4
      %s412 = sadd.s32 %s410, %s411
      %s413 = smul.addr %s412, 8
      %s414 = scalar_lea.vmem %s4, %s413
      %s415 = sld [smem:[#allocation7 + %s27]]
      %s416 = sld [smem:[#allocation7 + %s27]]
      %p417 = scmp.lt.s32.totalorder %s26, 1
      %s418 = scalar_select %p417, %s26, 1
      %p419 = scmp.lt.s32.totalorder %s416, 0
      %s420 = scalar_select %p419, %s416, 0
      %s421 = smul.addr %s418, 4
      %s422 = sadd.s32 %s420, %s421
      %s423 = smul.addr %s422, 8
      %s424 = scalar_lea.vmem %s5, %s423
      %s425 = sld [smem:[#allocation7 + %s27]]
      %s426 = sld [smem:[#allocation6 + %s27]]
      %p427 = scmp.lt.s32.totalorder %s26, 1
      %s428 = scalar_select %p427, %s26, 1
      %p429 = scmp.lt.s32.totalorder %s426, 0
      %s430 = scalar_select %p429, %s426, 0
      %s431 = sadd.s32 %s430, %s428
      %s432 = smul.addr %s431, 8
      %s433 = scalar_lea.vmem %s9, %s432
      %s434 = sld [smem:[#allocation6 + %s27]]
      %s435 = sld [smem:[#allocation6 + %s27]]
      %s436 = sld [smem:[#allocation7 + %s27]]
      %p437 = scmp.eq.s32.totalorder %s436, 0
      // Predicated region
      $region49: #{_lambda_.9} parent=47 // pred_check
        %p438 = pneg %p437
      $region50: #{_lambda_.9} parent=47 // pred_check_branch
        %440 = sbr.rel (%p438) target = $region52
      $region51: #{_lambda_.9} parent=47 // pred_region
        %vm441 = vcmask 64512
        %442 = vst.msk [vmem:[#allocation2] sm:$0xff] %vm441, 0.0
        %443 = vst.msk [vmem:[#allocation2 + $0x8] sm:$0xff] %vm441, 0.0
        %444 = vst.msk [vmem:[#allocation2 + $0x10] sm:$0xff] %vm441, 0.0
        %445 = vst.msk [vmem:[#allocation2 + $0x18] sm:$0xff] %vm441, 0.0
        %vm446 = vcmask 7168
        %447 = vst.msk [vmem:[#allocation3] sm:$0xff] %vm446, -inf
        %448 = vst.msk [vmem:[#allocation3 + $0x8] sm:$0xff] %vm446, -inf
        %449 = vst.msk [vmem:[#allocation3 + $0x10] sm:$0xff] %vm446, -inf
        %450 = vst.msk [vmem:[#allocation3 + $0x18] sm:$0xff] %vm446, -inf
        %451 = vst.msk [vmem:[#allocation4] sm:$0xff] %vm446, 0.0
        %452 = vst.msk [vmem:[#allocation4 + $0x8] sm:$0xff] %vm446, 0.0
        %453 = vst.msk [vmem:[#allocation4 + $0x10] sm:$0xff] %vm446, 0.0
        %454 = vst.msk [vmem:[#allocation4 + $0x18] sm:$0xff] %vm446, 0.0
      $region52: #{_lambda_.9} parent=47 // pred_fallthru
        _
      %v455 = vld [vmem:[%s404] sm:$0xff]
      %v456 = vld [vmem:[%s404 + $0x8] sm:$0xff]
      %v457 = vld [vmem:[%s404 + $0x10] sm:$0xff]
      %v458 = vld [vmem:[%s404 + $0x18] sm:$0xff]
      %v459 = vld [vmem:[%s414] sm:$0xff]
      %v460 = vld [vmem:[%s414 + $0x8] sm:$0xff]
      %v461 = vld [vmem:[%s414 + $0x10] sm:$0xff]
      %v462 = vld [vmem:[%s414 + $0x18] sm:$0xff]
      %v463 = vld [vmem:[%s424] sm:$0xff]
      %v464 = vld [vmem:[%s424 + $0x8] sm:$0xff]
      %v465 = vld [vmem:[%s424 + $0x10] sm:$0xff]
      %v466 = vld [vmem:[%s424 + $0x18] sm:$0xff]
      %s467 = smul.u32 %s435, 8
      %v468 = vlaneseq
      %v469 = vshrl.u32 %v468, 7
      %v470 = vstv %s467
      %v471 = vadd.s32 %v470, %v469
      %s472 = smul.u32 %s436, 8
      %v473 = vlaneseq
      %v474 = vand.u32 %v473, 127
      %v475 = vstv %s472
      %v476 = vadd.s32 %v475, %v474
      %vm477 = vcmp.le.s32.totalorder %v476, %v471
      %v478 = vsel %vm477, 0.0, -1e+09
      %vm479 = vcmask 64512
      %v481 = vsel %vm479, %v455, 0
      %v484 = vsel %vm479, %v459, 0
      %486 = vmatprep.subr.mxu0 0.0
      %v487 = vand.u32 %v484, 4294901760
      %488 = vmatpush1.xpose.msra.mxu0 %v487
      %489 = vmatprep.subr.mxu0 0.0
      %490 = vmatpush1.xpose.msra.mxu0 0.0
      %491 = vmatprep.subr.mxu0 0.0
      %492 = vmatpush1.xpose.msra.mxu0 0.0
      %493 = vmatprep.subr.mxu0 0.0
      %494 = vmatpush1.xpose.msra.mxu0 0.0
      %495 = vmatprep.subr.mxu0 0.0
      %496 = vmatpush1.xpose.msra.mxu0 0.0
      %497 = vmatprep.subr.mxu0 0.0
      %498 = vmatpush1.xpose.msra.mxu0 0.0
      %499 = vmatprep.subr.mxu0 0.0
      %500 = vmatpush1.xpose.msra.mxu0 0.0
      %501 = vmatprep.subr.mxu0 0.0
      %502 = vmatpush1.xpose.msra.mxu0 0.0
      %503 = vmatprep.subr.mxu0 0.0
      %504 = vmatpush1.xpose.msra.mxu0 0.0
      %505 = vmatprep.subr.mxu0 0.0
      %506 = vmatpush1.xpose.msra.mxu0 0.0
      %507 = vmatprep.subr.mxu0 0.0
      %508 = vmatpush1.xpose.msra.mxu0 0.0
      %509 = vmatprep.subr.mxu0 0.0
      %510 = vmatpush1.xpose.msra.mxu0 0.0
      %511 = vmatprep.subr.mxu0 0.0
      %512 = vmatpush1.xpose.msra.mxu0 0.0
      %513 = vmatprep.subr.mxu0 0.0
      %514 = vmatpush1.xpose.msra.mxu0 0.0
      %515 = vmatprep.subr.mxu0 0.0
      %516 = vmatpush1.xpose.msra.mxu0 0.0
      %517 = vmatprep.subr.mxu0 0.0
      %518 = vmatpush1.xpose.msra.mxu0 0.0
      %519 = vmatprep.subr.mxu0 0.0
      %520 = vmatpush1.xpose.msra.mxu0 0.0
      %521 = vmatprep.subr.mxu0 0.0
      %522 = vmatpush1.xpose.msra.mxu0 0.0
      %523 = vmatprep.subr.mxu0 0.0
      %524 = vmatpush1.xpose.msra.mxu0 0.0
      %525 = vmatprep.subr.mxu0 0.0
      %526 = vmatpush1.xpose.msra.mxu0 0.0
      %527 = vmatprep.subr.mxu0 0.0
      %528 = vmatpush1.xpose.msra.mxu0 0.0
      %529 = vmatprep.subr.mxu0 0.0
      %530 = vmatpush1.xpose.msra.mxu0 0.0
      %531 = vmatprep.subr.mxu0 0.0
      %532 = vmatpush1.xpose.msra.mxu0 0.0
      %533 = vmatprep.subr.mxu0 0.0
      %534 = vmatpush1.xpose.msra.mxu0 0.0
      %535 = vmatprep.subr.mxu0 0.0
      %536 = vmatpush1.xpose.msra.mxu0 0.0
      %537 = vmatprep.subr.mxu0 0.0
      %538 = vmatpush1.xpose.msra.mxu0 0.0
      %539 = vmatprep.subr.mxu0 0.0
      %540 = vmatpush1.xpose.msra.mxu0 0.0
      %541 = vmatprep.subr.mxu0 0.0
      %542 = vmatpush1.xpose.msra.mxu0 0.0
      %543 = vmatprep.subr.mxu0 0.0
      %544 = vmatpush1.xpose.msra.mxu0 0.0
      %545 = vmatprep.subr.mxu0 0.0
      %546 = vmatpush1.xpose.msra.mxu0 0.0
      %547 = vmatprep.subr.mxu0 0.0
      %548 = vmatpush1.xpose.msra.mxu0 0.0
      %549 = vmatprep.subr.mxu0 0.0
      %550 = vmatpush1.xpose.msra.mxu0 0.0
      %551 = vmatprep.mubr.f32.mxu0 0.0
      %v552 = vand.u32 %v481, 4294901760
      %v553 = vsub.f32 %v481, %v552
      %v554 = vand.u32 %v553, 4294901760
      %v555 = vsub.f32 %v553, %v554
      %v556 = vand.u32 %v555, 4294901760
      %557 = vmatmul.mubr.f32.gmra.mrb[0].mxu0 %v556
      %v558 = vpop.f32.mrb[0].mxu0
      %v559 = vadd.f32 %v478, %v558
      %v560 = vpop.f32.mrb[0].mxu0
      %561 = vdwg.mxu0
      %562 = vmatprep.subr.mxu0 0.0
      %v563 = vand.u32 %v484, 4294901760
      %v564 = vsub.f32 %v484, %v563
      %v565 = vand.u32 %v564, 4294901760
      %v566 = vsub.f32 %v564, %v565
      %v567 = vand.u32 %v566, 4294901760
      %568 = vmatpush1.xpose.msra.mxu0 %v567
      %569 = vmatprep.subr.mxu0 0.0
      %570 = vmatpush1.xpose.msra.mxu0 0.0
      %571 = vmatprep.subr.mxu0 0.0
      %572 = vmatpush1.xpose.msra.mxu0 0.0
      %573 = vmatprep.subr.mxu0 0.0
      %574 = vmatpush1.xpose.msra.mxu0 0.0
      %575 = vmatprep.subr.mxu0 0.0
      %576 = vmatpush1.xpose.msra.mxu0 0.0
      %577 = vmatprep.subr.mxu0 0.0
      %578 = vmatpush1.xpose.msra.mxu0 0.0
      %579 = vmatprep.subr.mxu0 0.0
      %580 = vmatpush1.xpose.msra.mxu0 0.0
      %581 = vmatprep.subr.mxu0 0.0
      %582 = vmatpush1.xpose.msra.mxu0 0.0
      %583 = vmatprep.subr.mxu0 0.0
      %584 = vmatpush1.xpose.msra.mxu0 0.0
      %585 = vmatprep.subr.mxu0 0.0
      %586 = vmatpush1.xpose.msra.mxu0 0.0
      %587 = vmatprep.subr.mxu0 0.0
      %588 = vmatpush1.xpose.msra.mxu0 0.0
      %589 = vmatprep.subr.mxu0 0.0
      %590 = vmatpush1.xpose.msra.mxu0 0.0
      %591 = vmatprep.subr.mxu0 0.0
      %592 = vmatpush1.xpose.msra.mxu0 0.0
      %593 = vmatprep.subr.mxu0 0.0
      %594 = vmatpush1.xpose.msra.mxu0 0.0
      %595 = vmatprep.subr.mxu0 0.0
      %596 = vmatpush1.xpose.msra.mxu0 0.0
      %597 = vmatprep.subr.mxu0 0.0
      %598 = vmatpush1.xpose.msra.mxu0 0.0
      %599 = vmatprep.subr.mxu0 0.0
      %600 = vmatpush1.xpose.msra.mxu0 0.0
      %601 = vmatprep.subr.mxu0 0.0
      %602 = vmatpush1.xpose.msra.mxu0 0.0
      %603 = vmatprep.subr.mxu0 0.0
      %604 = vmatpush1.xpose.msra.mxu0 0.0
      %605 = vmatprep.subr.mxu0 0.0
      %606 = vmatpush1.xpose.msra.mxu0 0.0
      %607 = vmatprep.subr.mxu0 0.0
      %608 = vmatpush1.xpose.msra.mxu0 0.0
      %609 = vmatprep.subr.mxu0 0.0
      %610 = vmatpush1.xpose.msra.mxu0 0.0
      %611 = vmatprep.subr.mxu0 0.0
      %612 = vmatpush1.xpose.msra.mxu0 0.0
      %613 = vmatprep.subr.mxu0 0.0
      %614 = vmatpush1.xpose.msra.mxu0 0.0
      %615 = vmatprep.subr.mxu0 0.0
      %616 = vmatpush1.xpose.msra.mxu0 0.0
      %617 = vmatprep.subr.mxu0 0.0
      %618 = vmatpush1.xpose.msra.mxu0 0.0
      %619 = vmatprep.subr.mxu0 0.0
      %620 = vmatpush1.xpose.msra.mxu0 0.0
      %621 = vmatprep.subr.mxu0 0.0
      %622 = vmatpush1.xpose.msra.mxu0 0.0
      %623 = vmatprep.subr.mxu0 0.0
      %624 = vmatpush1.xpose.msra.mxu0 0.0
      %625 = vmatprep.subr.mxu0 0.0
      %626 = vmatpush1.xpose.msra.mxu0 0.0
      %627 = vmatprep.subr.mxu0 0.0
      %628 = vmatpush1.xpose.msra.mxu0 0.0
      %629 = vmatprep.subr.mxu0 0.0
      %630 = vmatpush1.xpose.msra.mxu0 0.0
      %631 = vmatprep.mubr.f32.mxu0 0.0
      %v632 = vand.u32 %v481, 4294901760
      %633 = vmatmul.mubr.f32.gmra.mrb[0].mxu0 %v632
      %v634 = vpop.f32.mrb[0].mxu0
      %v635 = vadd.f32 %v559, %v634
      %v636 = vpop.f32.mrb[0].mxu0
      %637 = vdwg.mxu0
      %638 = vmatprep.subr.mxu0 0.0
      %v639 = vand.u32 %v484, 4294901760
      %v640 = vsub.f32 %v484, %v639
      %641 = vmatpush1.xpose.msra.mxu0 %v640
      %642 = vmatprep.subr.mxu0 0.0
      %643 = vmatpush1.xpose.msra.mxu0 0.0
      %644 = vmatprep.subr.mxu0 0.0
      %645 = vmatpush1.xpose.msra.mxu0 0.0
      %646 = vmatprep.subr.mxu0 0.0
      %647 = vmatpush1.xpose.msra.mxu0 0.0
      %648 = vmatprep.subr.mxu0 0.0
      %649 = vmatpush1.xpose.msra.mxu0 0.0
      %650 = vmatprep.subr.mxu0 0.0
      %651 = vmatpush1.xpose.msra.mxu0 0.0
      %652 = vmatprep.subr.mxu0 0.0
      %653 = vmatpush1.xpose.msra.mxu0 0.0
      %654 = vmatprep.subr.mxu0 0.0
      %655 = vmatpush1.xpose.msra.mxu0 0.0
      %656 = vmatprep.subr.mxu0 0.0
      %657 = vmatpush1.xpose.msra.mxu0 0.0
      %658 = vmatprep.subr.mxu0 0.0
      %659 = vmatpush1.xpose.msra.mxu0 0.0
      %660 = vmatprep.subr.mxu0 0.0
      %661 = vmatpush1.xpose.msra.mxu0 0.0
      %662 = vmatprep.subr.mxu0 0.0
      %663 = vmatpush1.xpose.msra.mxu0 0.0
      %664 = vmatprep.subr.mxu0 0.0
      %665 = vmatpush1.xpose.msra.mxu0 0.0
      %666 = vmatprep.subr.mxu0 0.0
      %667 = vmatpush1.xpose.msra.mxu0 0.0
      %668 = vmatprep.subr.mxu0 0.0
      %669 = vmatpush1.xpose.msra.mxu0 0.0
      %670 = vmatprep.subr.mxu0 0.0
      %671 = vmatpush1.xpose.msra.mxu0 0.0
      %672 = vmatprep.subr.mxu0 0.0
      %673 = vmatpush1.xpose.msra.mxu0 0.0
      %674 = vmatprep.subr.mxu0 0.0
      %675 = vmatpush1.xpose.msra.mxu0 0.0
      %676 = vmatprep.subr.mxu0 0.0
      %677 = vmatpush1.xpose.msra.mxu0 0.0
      %678 = vmatprep.subr.mxu0 0.0
      %679 = vmatpush1.xpose.msra.mxu0 0.0
      %680 = vmatprep.subr.mxu0 0.0
      %681 = vmatpush1.xpose.msra.mxu0 0.0
      %682 = vmatprep.subr.mxu0 0.0
      %683 = vmatpush1.xpose.msra.mxu0 0.0
      %684 = vmatprep.subr.mxu0 0.0
      %685 = vmatpush1.xpose.msra.mxu0 0.0
      %686 = vmatprep.subr.mxu0 0.0
      %687 = vmatpush1.xpose.msra.mxu0 0.0
      %688 = vmatprep.subr.mxu0 0.0
      %689 = vmatpush1.xpose.msra.mxu0 0.0
      %690 = vmatprep.subr.mxu0 0.0
      %691 = vmatpush1.xpose.msra.mxu0 0.0
      %692 = vmatprep.subr.mxu0 0.0
      %693 = vmatpush1.xpose.msra.mxu0 0.0
      %694 = vmatprep.subr.mxu0 0.0
      %695 = vmatpush1.xpose.msra.mxu0 0.0
      %696 = vmatprep.subr.mxu0 0.0
      %697 = vmatpush1.xpose.msra.mxu0 0.0
      %698 = vmatprep.subr.mxu0 0.0
      %699 = vmatpush1.xpose.msra.mxu0 0.0
      %700 = vmatprep.subr.mxu0 0.0
      %701 = vmatpush1.xpose.msra.mxu0 0.0
      %702 = vmatprep.subr.mxu0 0.0
      %703 = vmatpush1.xpose.msra.mxu0 0.0
      %704 = vmatprep.mubr.f32.mxu0 0.0
      %v705 = vand.u32 %v481, 4294901760
      %v706 = vsub.f32 %v481, %v705
      %707 = vmatmul.mubr.f32.gmra.mrb[0].mxu0 %v706
      %v708 = vpop.f32.mrb[0].mxu0
      %v709 = vadd.f32 %v635, %v708
      %v710 = vpop.f32.mrb[0].mxu0
      %711 = vdwg.mxu0
      %712 = vmatprep.subr.mxu0 0.0
      %v713 = vand.u32 %v484, 4294901760
      %714 = vmatpush1.xpose.msra.mxu0 %v713
      %715 = vmatprep.subr.mxu0 0.0
      %716 = vmatpush1.xpose.msra.mxu0 0.0
      %717 = vmatprep.subr.mxu0 0.0
      %718 = vmatpush1.xpose.msra.mxu0 0.0
      %719 = vmatprep.subr.mxu0 0.0
      %720 = vmatpush1.xpose.msra.mxu0 0.0
      %721 = vmatprep.subr.mxu0 0.0
      %722 = vmatpush1.xpose.msra.mxu0 0.0
      %723 = vmatprep.subr.mxu0 0.0
      %724 = vmatpush1.xpose.msra.mxu0 0.0
      %725 = vmatprep.subr.mxu0 0.0
      %726 = vmatpush1.xpose.msra.mxu0 0.0
      %727 = vmatprep.subr.mxu0 0.0
      %728 = vmatpush1.xpose.msra.mxu0 0.0
      %729 = vmatprep.subr.mxu0 0.0
      %730 = vmatpush1.xpose.msra.mxu0 0.0
      %731 = vmatprep.subr.mxu0 0.0
      %732 = vmatpush1.xpose.msra.mxu0 0.0
      %733 = vmatprep.subr.mxu0 0.0
      %734 = vmatpush1.xpose.msra.mxu0 0.0
      %735 = vmatprep.subr.mxu0 0.0
      %736 = vmatpush1.xpose.msra.mxu0 0.0
      %737 = vmatprep.subr.mxu0 0.0
      %738 = vmatpush1.xpose.msra.mxu0 0.0
      %739 = vmatprep.subr.mxu0 0.0
      %740 = vmatpush1.xpose.msra.mxu0 0.0
      %741 = vmatprep.subr.mxu0 0.0
      %742 = vmatpush1.xpose.msra.mxu0 0.0
      %743 = vmatprep.subr.mxu0 0.0
      %744 = vmatpush1.xpose.msra.mxu0 0.0
      %745 = vmatprep.subr.mxu0 0.0
      %746 = vmatpush1.xpose.msra.mxu0 0.0
      %747 = vmatprep.subr.mxu0 0.0
      %748 = vmatpush1.xpose.msra.mxu0 0.0
      %749 = vmatprep.subr.mxu0 0.0
      %750 = vmatpush1.xpose.msra.mxu0 0.0
      %751 = vmatprep.subr.mxu0 0.0
      %752 = vmatpush1.xpose.msra.mxu0 0.0
      %753 = vmatprep.subr.mxu0 0.0
      %754 = vmatpush1.xpose.msra.mxu0 0.0
      %755 = vmatprep.subr.mxu0 0.0
      %756 = vmatpush1.xpose.msra.mxu0 0.0
      %757 = vmatprep.subr.mxu0 0.0
      %758 = vmatpush1.xpose.msra.mxu0 0.0
      %759 = vmatprep.subr.mxu0 0.0
      %760 = vmatpush1.xpose.msra.mxu0 0.0
      %761 = vmatprep.subr.mxu0 0.0
      %762 = vmatpush1.xpose.msra.mxu0 0.0
      %763 = vmatprep.subr.mxu0 0.0
      %764 = vmatpush1.xpose.msra.mxu0 0.0
      %765 = vmatprep.subr.mxu0 0.0
      %766 = vmatpush1.xpose.msra.mxu0 0.0
      %767 = vmatprep.subr.mxu0 0.0
      %768 = vmatpush1.xpose.msra.mxu0 0.0
      %769 = vmatprep.subr.mxu0 0.0
      %770 = vmatpush1.xpose.msra.mxu0 0.0
      %771 = vmatprep.subr.mxu0 0.0
      %772 = vmatpush1.xpose.msra.mxu0 0.0
      %773 = vmatprep.subr.mxu0 0.0
      %774 = vmatpush1.xpose.msra.mxu0 0.0
      %775 = vmatprep.subr.mxu0 0.0
      %776 = vmatpush1.xpose.msra.mxu0 0.0
      %777 = vmatprep.mubr.f32.mxu0 0.0
      %v778 = vand.u32 %v481, 4294901760
      %v779 = vsub.f32 %v481, %v778
      %v780 = vand.u32 %v779, 4294901760
      %781 = vmatmul.mubr.f32.gmra.mrb[0].mxu0 %v780
      %v782 = vpop.f32.mrb[0].mxu0
      %v783 = vadd.f32 %v709, %v782
      %v784 = vpop.f32.mrb[0].mxu0
      %785 = vdwg.mxu0
      %786 = vmatprep.subr.mxu0 0.0
      %v787 = vand.u32 %v484, 4294901760
      %v788 = vsub.f32 %v484, %v787
      %v789 = vand.u32 %v788, 4294901760
      %790 = vmatpush1.xpose.msra.mxu0 %v789
      %791 = vmatprep.subr.mxu0 0.0
      %792 = vmatpush1.xpose.msra.mxu0 0.0
      %793 = vmatprep.subr.mxu0 0.0
      %794 = vmatpush1.xpose.msra.mxu0 0.0
      %795 = vmatprep.subr.mxu0 0.0
      %796 = vmatpush1.xpose.msra.mxu0 0.0
      %797 = vmatprep.subr.mxu0 0.0
      %798 = vmatpush1.xpose.msra.mxu0 0.0
      %799 = vmatprep.subr.mxu0 0.0
      %800 = vmatpush1.xpose.msra.mxu0 0.0
      %801 = vmatprep.subr.mxu0 0.0
      %802 = vmatpush1.xpose.msra.mxu0 0.0
      %803 = vmatprep.subr.mxu0 0.0
      %804 = vmatpush1.xpose.msra.mxu0 0.0
      %805 = vmatprep.subr.mxu0 0.0
      %806 = vmatpush1.xpose.msra.mxu0 0.0
      %807 = vmatprep.subr.mxu0 0.0
      %808 = vmatpush1.xpose.msra.mxu0 0.0
      %809 = vmatprep.subr.mxu0 0.0
      %810 = vmatpush1.xpose.msra.mxu0 0.0
      %811 = vmatprep.subr.mxu0 0.0
      %812 = vmatpush1.xpose.msra.mxu0 0.0
      %813 = vmatprep.subr.mxu0 0.0
      %814 = vmatpush1.xpose.msra.mxu0 0.0
      %815 = vmatprep.subr.mxu0 0.0
      %816 = vmatpush1.xpose.msra.mxu0 0.0
      %817 = vmatprep.subr.mxu0 0.0
      %818 = vmatpush1.xpose.msra.mxu0 0.0
      %819 = vmatprep.subr.mxu0 0.0
      %820 = vmatpush1.xpose.msra.mxu0 0.0
      %821 = vmatprep.subr.mxu0 0.0
      %822 = vmatpush1.xpose.msra.mxu0 0.0
      %823 = vmatprep.subr.mxu0 0.0
      %824 = vmatpush1.xpose.msra.mxu0 0.0
      %825 = vmatprep.subr.mxu0 0.0
      %826 = vmatpush1.xpose.msra.mxu0 0.0
      %827 = vmatprep.subr.mxu0 0.0
      %828 = vmatpush1.xpose.msra.mxu0 0.0
      %829 = vmatprep.subr.mxu0 0.0
      %830 = vmatpush1.xpose.msra.mxu0 0.0
      %831 = vmatprep.subr.mxu0 0.0
      %832 = vmatpush1.xpose.msra.mxu0 0.0
      %833 = vmatprep.subr.mxu0 0.0
      %834 = vmatpush1.xpose.msra.mxu0 0.0
      %835 = vmatprep.subr.mxu0 0.0
      %836 = vmatpush1.xpose.msra.mxu0 0.0
      %837 = vmatprep.subr.mxu0 0.0
      %838 = vmatpush1.xpose.msra.mxu0 0.0
      %839 = vmatprep.subr.mxu0 0.0
      %840 = vmatpush1.xpose.msra.mxu0 0.0
      %841 = vmatprep.subr.mxu0 0.0
      %842 = vmatpush1.xpose.msra.mxu0 0.0
      %843 = vmatprep.subr.mxu0 0.0
      %844 = vmatpush1.xpose.msra.mxu0 0.0
      %845 = vmatprep.subr.mxu0 0.0
      %846 = vmatpush1.xpose.msra.mxu0 0.0
      %847 = vmatprep.subr.mxu0 0.0
      %848 = vmatpush1.xpose.msra.mxu0 0.0
      %849 = vmatprep.subr.mxu0 0.0
      %850 = vmatpush1.xpose.msra.mxu0 0.0
      %851 = vmatprep.subr.mxu0 0.0
      %852 = vmatpush1.xpose.msra.mxu0 0.0
      %853 = vmatprep.mubr.f32.mxu0 0.0
      %v854 = vand.u32 %v481, 4294901760
      %855 = vmatmul.mubr.f32.gmra.mrb[0].mxu0 %v854
      %v856 = vpop.f32.mrb[0].mxu0
      %v857 = vadd.f32 %v783, %v856
      %v858 = vpop.f32.mrb[0].mxu0
      %859 = vdwg.mxu0
      %860 = vmatprep.subr.mxu0 0.0
      %v861 = vand.u32 %v484, 4294901760
      %862 = vmatpush1.xpose.msra.mxu0 %v861
      %863 = vmatprep.subr.mxu0 0.0
      %864 = vmatpush1.xpose.msra.mxu0 0.0
      %865 = vmatprep.subr.mxu0 0.0
      %866 = vmatpush1.xpose.msra.mxu0 0.0
      %867 = vmatprep.subr.mxu0 0.0
      %868 = vmatpush1.xpose.msra.mxu0 0.0
      %869 = vmatprep.subr.mxu0 0.0
      %870 = vmatpush1.xpose.msra.mxu0 0.0
      %871 = vmatprep.subr.mxu0 0.0
      %872 = vmatpush1.xpose.msra.mxu0 0.0
      %873 = vmatprep.subr.mxu0 0.0
      %874 = vmatpush1.xpose.msra.mxu0 0.0
      %875 = vmatprep.subr.mxu0 0.0
      %876 = vmatpush1.xpose.msra.mxu0 0.0
      %877 = vmatprep.subr.mxu0 0.0
      %878 = vmatpush1.xpose.msra.mxu0 0.0
      %879 = vmatprep.subr.mxu0 0.0
      %880 = vmatpush1.xpose.msra.mxu0 0.0
      %881 = vmatprep.subr.mxu0 0.0
      %882 = vmatpush1.xpose.msra.mxu0 0.0
      %883 = vmatprep.subr.mxu0 0.0
      %884 = vmatpush1.xpose.msra.mxu0 0.0
      %885 = vmatprep.subr.mxu0 0.0
      %886 = vmatpush1.xpose.msra.mxu0 0.0
      %887 = vmatprep.subr.mxu0 0.0
      %888 = vmatpush1.xpose.msra.mxu0 0.0
      %889 = vmatprep.subr.mxu0 0.0
      %890 = vmatpush1.xpose.msra.mxu0 0.0
      %891 = vmatprep.subr.mxu0 0.0
      %892 = vmatpush1.xpose.msra.mxu0 0.0
      %893 = vmatprep.subr.mxu0 0.0
      %894 = vmatpush1.xpose.msra.mxu0 0.0
      %895 = vmatprep.subr.mxu0 0.0
      %896 = vmatpush1.xpose.msra.mxu0 0.0
      %897 = vmatprep.subr.mxu0 0.0
      %898 = vmatpush1.xpose.msra.mxu0 0.0
      %899 = vmatprep.subr.mxu0 0.0
      %900 = vmatpush1.xpose.msra.mxu0 0.0
      %901 = vmatprep.subr.mxu0 0.0
      %902 = vmatpush1.xpose.msra.mxu0 0.0
      %903 = vmatprep.subr.mxu0 0.0
      %904 = vmatpush1.xpose.msra.mxu0 0.0
      %905 = vmatprep.subr.mxu0 0.0
      %906 = vmatpush1.xpose.msra.mxu0 0.0
      %907 = vmatprep.subr.mxu0 0.0
      %908 = vmatpush1.xpose.msra.mxu0 0.0
      %909 = vmatprep.subr.mxu0 0.0
      %910 = vmatpush1.xpose.msra.mxu0 0.0
      %911 = vmatprep.subr.mxu0 0.0
      %912 = vmatpush1.xpose.msra.mxu0 0.0
      %913 = vmatprep.subr.mxu0 0.0
      %914 = vmatpush1.xpose.msra.mxu0 0.0
      %915 = vmatprep.subr.mxu0 0.0
      %916 = vmatpush1.xpose.msra.mxu0 0.0
      %917 = vmatprep.subr.mxu0 0.0
      %918 = vmatpush1.xpose.msra.mxu0 0.0
      %919 = vmatprep.subr.mxu0 0.0
      %920 = vmatpush1.xpose.msra.mxu0 0.0
      %921 = vmatprep.subr.mxu0 0.0
      %922 = vmatpush1.xpose.msra.mxu0 0.0
      %923 = vmatprep.subr.mxu0 0.0
      %924 = vmatpush1.xpose.msra.mxu0 0.0
      %925 = vmatprep.mubr.f32.mxu0 0.0
      %v926 = vand.u32 %v481, 4294901760
      %927 = vmatmul.mubr.f32.gmra.mrb[0].mxu0 %v926
      %v928 = vpop.f32.mrb[0].mxu0
      %v929 = vadd.f32 %v857, %v928
      %v930 = vpop.f32.mrb[0].mxu0
      %931 = vdwg.mxu0
      %v933 = vsel %vm479, %v456, 0
      %v936 = vsel %vm479, %v460, 0
      %938 = vmatprep.subr.mxu0 0.0
      %v939 = vand.u32 %v936, 4294901760
      %940 = vmatpush1.xpose.msra.mxu0 %v939
      %941 = vmatprep.subr.mxu0 0.0
      %942 = vmatpush1.xpose.msra.mxu0 0.0
      %943 = vmatprep.subr.mxu0 0.0
      %944 = vmatpush1.xpose.msra.mxu0 0.0
      %945 = vmatprep.subr.mxu0 0.0
      %946 = vmatpush1.xpose.msra.mxu0 0.0
      %947 = vmatprep.subr.mxu0 0.0
      %948 = vmatpush1.xpose.msra.mxu0 0.0
      %949 = vmatprep.subr.mxu0 0.0
      %950 = vmatpush1.xpose.msra.mxu0 0.0
      %951 = vmatprep.subr.mxu0 0.0
      %952 = vmatpush1.xpose.msra.mxu0 0.0
      %953 = vmatprep.subr.mxu0 0.0
      %954 = vmatpush1.xpose.msra.mxu0 0.0
      %955 = vmatprep.subr.mxu0 0.0
      %956 = vmatpush1.xpose.msra.mxu0 0.0
      %957 = vmatprep.subr.mxu0 0.0
      %958 = vmatpush1.xpose.msra.mxu0 0.0
      %959 = vmatprep.subr.mxu0 0.0
      %960 = vmatpush1.xpose.msra.mxu0 0.0
      %961 = vmatprep.subr.mxu0 0.0
      %962 = vmatpush1.xpose.msra.mxu0 0.0
      %963 = vmatprep.subr.mxu0 0.0
      %964 = vmatpush1.xpose.msra.mxu0 0.0
      %965 = vmatprep.subr.mxu0 0.0
      %966 = vmatpush1.xpose.msra.mxu0 0.0
      %967 = vmatprep.subr.mxu0 0.0
      %968 = vmatpush1.xpose.msra.mxu0 0.0
      %969 = vmatprep.subr.mxu0 0.0
      %970 = vmatpush1.xpose.msra.mxu0 0.0
      %971 = vmatprep.subr.mxu0 0.0
      %972 = vmatpush1.xpose.msra.mxu0 0.0
      %973 = vmatprep.subr.mxu0 0.0
      %974 = vmatpush1.xpose.msra.mxu0 0.0
      %975 = vmatprep.subr.mxu0 0.0
      %976 = vmatpush1.xpose.msra.mxu0 0.0
      %977 = vmatprep.subr.mxu0 0.0
      %978 = vmatpush1.xpose.msra.mxu0 0.0
      %979 = vmatprep.subr.mxu0 0.0
      %980 = vmatpush1.xpose.msra.mxu0 0.0
      %981 = vmatprep.subr.mxu0 0.0
      %982 = vmatpush1.xpose.msra.mxu0 0.0
      %983 = vmatprep.subr.mxu0 0.0
      %984 = vmatpush1.xpose.msra.mxu0 0.0
      %985 = vmatprep.subr.mxu0 0.0
      %986 = vmatpush1.xpose.msra.mxu0 0.0
      %987 = vmatprep.subr.mxu0 0.0
      %988 = vmatpush1.xpose.msra.mxu0 0.0
      %989 = vmatprep.subr.mxu0 0.0
      %990 = vmatpush1.xpose.msra.mxu0 0.0
      %991 = vmatprep.subr.mxu0 0.0
      %992 = vmatpush1.xpose.msra.mxu0 0.0
      %993 = vmatprep.subr.mxu0 0.0
      %994 = vmatpush1.xpose.msra.mxu0 0.0
      %995 = vmatprep.subr.mxu0 0.0
      %996 = vmatpush1.xpose.msra.mxu0 0.0
      %997 = vmatprep.subr.mxu0 0.0
      %998 = vmatpush1.xpose.msra.mxu0 0.0
      %999 = vmatprep.subr.mxu0 0.0
      %1000 = vmatpush1.xpose.msra.mxu0 0.0
      %1001 = vmatprep.subr.mxu0 0.0
      %1002 = vmatpush1.xpose.msra.mxu0 0.0
      %1003 = vmatprep.mubr.f32.mxu0 0.0
      %v1004 = vand.u32 %v933, 4294901760
      %v1005 = vsub.f32 %v933, %v1004
      %v1006 = vand.u32 %v1005, 4294901760
      %v1007 = vsub.f32 %v1005, %v1006
      %v1008 = vand.u32 %v1007, 4294901760
      %1009 = vmatmul.mubr.f32.gmra.mrb[0].mxu0 %v1008
      %v1010 = vpop.f32.mrb[0].mxu0
      %v1011 = vadd.f32 %v478, %v1010
      %v1012 = vpop.f32.mrb[0].mxu0
      %1013 = vdwg.mxu0
      %1014 = vmatprep.subr.mxu0 0.0
      %v1015 = vand.u32 %v936, 4294901760
      %v1016 = vsub.f32 %v936, %v1015
      %v1017 = vand.u32 %v1016, 4294901760
      %v1018 = vsub.f32 %v1016, %v1017
      %v1019 = vand.u32 %v1018, 4294901760
      %1020 = vmatpush1.xpose.msra.mxu0 %v1019
      %1021 = vmatprep.subr.mxu0 0.0
      %1022 = vmatpush1.xpose.msra.mxu0 0.0
      %1023 = vmatprep.subr.mxu0 0.0
      %1024 = vmatpush1.xpose.msra.mxu0 0.0
      %1025 = vmatprep.subr.mxu0 0.0
      %1026 = vmatpush1.xpose.msra.mxu0 0.0
      %1027 = vmatprep.subr.mxu0 0.0
      %1028 = vmatpush1.xpose.msra.mxu0 0.0
      %1029 = vmatprep.subr.mxu0 0.0
      %1030 = vmatpush1.xpose.msra.mxu0 0.0
      %1031 = vmatprep.subr.mxu0 0.0
      %1032 = vmatpush1.xpose.msra.mxu0 0.0
      %1033 = vmatprep.subr.mxu0 0.0
      %1034 = vmatpush1.xpose.msra.mxu0 0.0
      %1035 = vmatprep.subr.mxu0 0.0
      %1036 = vmatpush1.xpose.msra.mxu0 0.0
      %1037 = vmatprep.subr.mxu0 0.0
      %1038 = vmatpush1.xpose.msra.mxu0 0.0
      %1039 = vmatprep.subr.mxu0 0.0
      %1040 = vmatpush1.xpose.msra.mxu0 0.0
      %1041 = vmatprep.subr.mxu0 0.0
      %1042 = vmatpush1.xpose.msra.mxu0 0.0
      %1043 = vmatprep.subr.mxu0 0.0
      %1044 = vmatpush1.xpose.msra.mxu0 0.0
      %1045 = vmatprep.subr.mxu0 0.0
      %1046 = vmatpush1.xpose.msra.mxu0 0.0
      %1047 = vmatprep.subr.mxu0 0.0
      %1048 = vmatpush1.xpose.msra.mxu0 0.0
      %1049 = vmatprep.subr.mxu0 0.0
      %1050 = vmatpush1.xpose.msra.mxu0 0.0
      %1051 = vmatprep.subr.mxu0 0.0
      %1052 = vmatpush1.xpose.msra.mxu0 0.0
      %1053 = vmatprep.subr.mxu0 0.0
      %1054 = vmatpush1.xpose.msra.mxu0 0.0
      %1055 = vmatprep.subr.mxu0 0.0
      %1056 = vmatpush1.xpose.msra.mxu0 0.0
      %1057 = vmatprep.subr.mxu0 0.0
      %1058 = vmatpush1.xpose.msra.mxu0 0.0
      %1059 = vmatprep.subr.mxu0 0.0
      %1060 = vmatpush1.xpose.msra.mxu0 0.0
      %1061 = vmatprep.subr.mxu0 0.0
      %1062 = vmatpush1.xpose.msra.mxu0 0.0
      %1063 = vmatprep.subr.mxu0 0.0
      %1064 = vmatpush1.xpose.msra.mxu0 0.0
      %1065 = vmatprep.subr.mxu0 0.0
      %1066 = vmatpush1.xpose.msra.mxu0 0.0
      %1067 = vmatprep.subr.mxu0 0.0
      %1068 = vmatpush1.xpose.msra.mxu0 0.0
      %1069 = vmatprep.subr.mxu0 0.0
      %1070 = vmatpush1.xpose.msra.mxu0 0.0
      %1071 = vmatprep.subr.mxu0 0.0
      %1072 = vmatpush1.xpose.msra.mxu0 0.0
      %1073 = vmatprep.subr.mxu0 0.0
      %1074 = vmatpush1.xpose.msra.mxu0 0.0
      %1075 = vmatprep.subr.mxu0 0.0
      %1076 = vmatpush1.xpose.msra.mxu0 0.0
      %1077 = vmatprep.subr.mxu0 0.0
      %1078 = vmatpush1.xpose.msra.mxu0 0.0
      %1079 = vmatprep.subr.mxu0 0.0
      %1080 = vmatpush1.xpose.msra.mxu0 0.0
      %1081 = vmatprep.subr.mxu0 0.0
      %1082 = vmatpush1.xpose.msra.mxu0 0.0
      %1083 = vmatprep.mubr.f32.mxu0 0.0
      %v1084 = vand.u32 %v933, 4294901760
      %1085 = vmatmul.mubr.f32.gmra.mrb[0].mxu0 %v1084
      %v1086 = vpop.f32.mrb[0].mxu0
      %v1087 = vadd.f32 %v1011, %v1086
      %v1088 = vpop.f32.mrb[0].mxu0
      %1089 = vdwg.mxu0
      %1090 = vmatprep.subr.mxu0 0.0
      %v1091 = vand.u32 %v936, 4294901760
      %v1092 = vsub.f32 %v936, %v1091
      %1093 = vmatpush1.xpose.msra.mxu0 %v1092
      %1094 = vmatprep.subr.mxu0 0.0
      %1095 = vmatpush1.xpose.msra.mxu0 0.0
      %1096 = vmatprep.subr.mxu0 0.0
      %1097 = vmatpush1.xpose.msra.mxu0 0.0
      %1098 = vmatprep.subr.mxu0 0.0
      %1099 = vmatpush1.xpose.msra.mxu0 0.0
      %1100 = vmatprep.subr.mxu0 0.0
      %1101 = vmatpush1.xpose.msra.mxu0 0.0
      %1102 = vmatprep.subr.mxu0 0.0
      %1103 = vmatpush1.xpose.msra.mxu0 0.0
      %1104 = vmatprep.subr.mxu0 0.0
      %1105 = vmatpush1.xpose.msra.mxu0 0.0
      %1106 = vmatprep.subr.mxu0 0.0
      %1107 = vmatpush1.xpose.msra.mxu0 0.0
      %1108 = vmatprep.subr.mxu0 0.0
      %1109 = vmatpush1.xpose.msra.mxu0 0.0
      %1110 = vmatprep.subr.mxu0 0.0
      %1111 = vmatpush1.xpose.msra.mxu0 0.0
      %1112 = vmatprep.subr.mxu0 0.0
      %1113 = vmatpush1.xpose.msra.mxu0 0.0
      %1114 = vmatprep.subr.mxu0 0.0
      %1115 = vmatpush1.xpose.msra.mxu0 0.0
      %1116 = vmatprep.subr.mxu0 0.0
      %1117 = vmatpush1.xpose.msra.mxu0 0.0
      %1118 = vmatprep.subr.mxu0 0.0
      %1119 = vmatpush1.xpose.msra.mxu0 0.0
      %1120 = vmatprep.subr.mxu0 0.0
      %1121 = vmatpush1.xpose.msra.mxu0 0.0
      %1122 = vmatprep.subr.mxu0 0.0
      %1123 = vmatpush1.xpose.msra.mxu0 0.0
      %1124 = vmatprep.subr.mxu0 0.0
      %1125 = vmatpush1.xpose.msra.mxu0 0.0
      %1126 = vmatprep.subr.mxu0 0.0
      %1127 = vmatpush1.xpose.msra.mxu0 0.0
      %1128 = vmatprep.subr.mxu0 0.0
      %1129 = vmatpush1.xpose.msra.mxu0 0.0
      %1130 = vmatprep.subr.mxu0 0.0
      %1131 = vmatpush1.xpose.msra.mxu0 0.0
      %1132 = vmatprep.subr.mxu0 0.0
      %1133 = vmatpush1.xpose.msra.mxu0 0.0
      %1134 = vmatprep.subr.mxu0 0.0
      %1135 = vmatpush1.xpose.msra.mxu0 0.0
      %1136 = vmatprep.subr.mxu0 0.0
      %1137 = vmatpush1.xpose.msra.mxu0 0.0
      %1138 = vmatprep.subr.mxu0 0.0
      %1139 = vmatpush1.xpose.msra.mxu0 0.0
      %1140 = vmatprep.subr.mxu0 0.0
      %1141 = vmatpush1.xpose.msra.mxu0 0.0
      %1142 = vmatprep.subr.mxu0 0.0
      %1143 = vmatpush1.xpose.msra.mxu0 0.0
      %1144 = vmatprep.subr.mxu0 0.0
      %1145 = vmatpush1.xpose.msra.mxu0 0.0
      %1146 = vmatprep.subr.mxu0 0.0
      %1147 = vmatpush1.xpose.msra.mxu0 0.0
      %1148 = vmatprep.subr.mxu0 0.0
      %1149 = vmatpush1.xpose.msra.mxu0 0.0
      %1150 = vmatprep.subr.mxu0 0.0
      %1151 = vmatpush1.xpose.msra.mxu0 0.0
      %1152 = vmatprep.subr.mxu0 0.0
      %1153 = vmatpush1.xpose.msra.mxu0 0.0
      %1154 = vmatprep.subr.mxu0 0.0
      %1155 = vmatpush1.xpose.msra.mxu0 0.0
      %1156 = vmatprep.mubr.f32.mxu0 0.0
      %v1157 = vand.u32 %v933, 4294901760
      %v1158 = vsub.f32 %v933, %v1157
      %1159 = vmatmul.mubr.f32.gmra.mrb[0].mxu0 %v1158
      %v1160 = vpop.f32.mrb[0].mxu0
      %v1161 = vadd.f32 %v1087, %v1160
      %v1162 = vpop.f32.mrb[0].mxu0
      %1163 = vdwg.mxu0
      %1164 = vmatprep.subr.mxu0 0.0
      %v1165 = vand.u32 %v936, 4294901760
      %1166 = vmatpush1.xpose.msra.mxu0 %v1165
      %1167 = vmatprep.subr.mxu0 0.0
      %1168 = vmatpush1.xpose.msra.mxu0 0.0
      %1169 = vmatprep.subr.mxu0 0.0
      %1170 = vmatpush1.xpose.msra.mxu0 0.0
      %1171 = vmatprep.subr.mxu0 0.0
      %1172 = vmatpush1.xpose.msra.mxu0 0.0
      %1173 = vmatprep.subr.mxu0 0.0
      %1174 = vmatpush1.xpose.msra.mxu0 0.0
      %1175 = vmatprep.subr.mxu0 0.0
      %1176 = vmatpush1.xpose.msra.mxu0 0.0
      %1177 = vmatprep.subr.mxu0 0.0
      %1178 = vmatpush1.xpose.msra.mxu0 0.0
      %1179 = vmatprep.subr.mxu0 0.0
      %1180 = vmatpush1.xpose.msra.mxu0 0.0
      %1181 = vmatprep.subr.mxu0 0.0
      %1182 = vmatpush1.xpose.msra.mxu0 0.0
      %1183 = vmatprep.subr.mxu0 0.0
      %1184 = vmatpush1.xpose.msra.mxu0 0.0
      %1185 = vmatprep.subr.mxu0 0.0
      %1186 = vmatpush1.xpose.msra.mxu0 0.0
      %1187 = vmatprep.subr.mxu0 0.0
      %1188 = vmatpush1.xpose.msra.mxu0 0.0
      %1189 = vmatprep.subr.mxu0 0.0
      %1190 = vmatpush1.xpose.msra.mxu0 0.0
      %1191 = vmatprep.subr.mxu0 0.0
      %1192 = vmatpush1.xpose.msra.mxu0 0.0
      %1193 = vmatprep.subr.mxu0 0.0
      %1194 = vmatpush1.xpose.msra.mxu0 0.0
      %1195 = vmatprep.subr.mxu0 0.0
      %1196 = vmatpush1.xpose.msra.mxu0 0.0
      %1197 = vmatprep.subr.mxu0 0.0
      %1198 = vmatpush1.xpose.msra.mxu0 0.0
      %1199 = vmatprep.subr.mxu0 0.0
      %1200 = vmatpush1.xpose.msra.mxu0 0.0
      %1201 = vmatprep.subr.mxu0 0.0
      %1202 = vmatpush1.xpose.msra.mxu0 0.0
      %1203 = vmatprep.subr.mxu0 0.0
      %1204 = vmatpush1.xpose.msra.mxu0 0.0
      %1205 = vmatprep.subr.mxu0 0.0
      %1206 = vmatpush1.xpose.msra.mxu0 0.0
      %1207 = vmatprep.subr.mxu0 0.0
      %1208 = vmatpush1.xpose.msra.mxu0 0.0
      %1209 = vmatprep.subr.mxu0 0.0
      %1210 = vmatpush1.xpose.msra.mxu0 0.0
      %1211 = vmatprep.subr.mxu0 0.0
      %1212 = vmatpush1.xpose.msra.mxu0 0.0
      %1213 = vmatprep.subr.mxu0 0.0
      %1214 = vmatpush1.xpose.msra.mxu0 0.0
      %1215 = vmatprep.subr.mxu0 0.0
      %1216 = vmatpush1.xpose.msra.mxu0 0.0
      %1217 = vmatprep.subr.mxu0 0.0
      %1218 = vmatpush1.xpose.msra.mxu0 0.0
      %1219 = vmatprep.subr.mxu0 0.0
      %1220 = vmatpush1.xpose.msra.mxu0 0.0
      %1221 = vmatprep.subr.mxu0 0.0
      %1222 = vmatpush1.xpose.msra.mxu0 0.0
      %1223 = vmatprep.subr.mxu0 0.0
      %1224 = vmatpush1.xpose.msra.mxu0 0.0
      %1225 = vmatprep.subr.mxu0 0.0
      %1226 = vmatpush1.xpose.msra.mxu0 0.0
      %1227 = vmatprep.subr.mxu0 0.0
      %1228 = vmatpush1.xpose.msra.mxu0 0.0
      %1229 = vmatprep.mubr.f32.mxu0 0.0
      %v1230 = vand.u32 %v933, 4294901760
      %v1231 = vsub.f32 %v933, %v1230
      %v1232 = vand.u32 %v1231, 4294901760
      %1233 = vmatmul.mubr.f32.gmra.mrb[0].mxu0 %v1232
      %v1234 = vpop.f32.mrb[0].mxu0
      %v1235 = vadd.f32 %v1161, %v1234
      %v1236 = vpop.f32.mrb[0].mxu0
      %1237 = vdwg.mxu0
      %1238 = vmatprep.subr.mxu0 0.0
      %v1239 = vand.u32 %v936, 4294901760
      %v1240 = vsub.f32 %v936, %v1239
      %v1241 = vand.u32 %v1240, 4294901760
      %1242 = vmatpush1.xpose.msra.mxu0 %v1241
      %1243 = vmatprep.subr.mxu0 0.0
      %1244 = vmatpush1.xpose.msra.mxu0 0.0
      %1245 = vmatprep.subr.mxu0 0.0
      %1246 = vmatpush1.xpose.msra.mxu0 0.0
      %1247 = vmatprep.subr.mxu0 0.0
      %1248 = vmatpush1.xpose.msra.mxu0 0.0
      %1249 = vmatprep.subr.mxu0 0.0
      %1250 = vmatpush1.xpose.msra.mxu0 0.0
      %1251 = vmatprep.subr.mxu0 0.0
      %1252 = vmatpush1.xpose.msra.mxu0 0.0
      %1253 = vmatprep.subr.mxu0 0.0
      %1254 = vmatpush1.xpose.msra.mxu0 0.0
      %1255 = vmatprep.subr.mxu0 0.0
      %1256 = vmatpush1.xpose.msra.mxu0 0.0
      %1257 = vmatprep.subr.mxu0 0.0
      %1258 = vmatpush1.xpose.msra.mxu0 0.0
      %1259 = vmatprep.subr.mxu0 0.0
      %1260 = vmatpush1.xpose.msra.mxu0 0.0
      %1261 = vmatprep.subr.mxu0 0.0
      %1262 = vmatpush1.xpose.msra.mxu0 0.0
      %1263 = vmatprep.subr.mxu0 0.0
      %1264 = vmatpush1.xpose.msra.mxu0 0.0
      %1265 = vmatprep.subr.mxu0 0.0
      %1266 = vmatpush1.xpose.msra.mxu0 0.0
      %1267 = vmatprep.subr.mxu0 0.0
      %1268 = vmatpush1.xpose.msra.mxu0 0.0
      %1269 = vmatprep.subr.mxu0 0.0
      %1270 = vmatpush1.xpose.msra.mxu0 0.0
      %1271 = vmatprep.subr.mxu0 0.0
      %1272 = vmatpush1.xpose.msra.mxu0 0.0
      %1273 = vmatprep.subr.mxu0 0.0
      %1274 = vmatpush1.xpose.msra.mxu0 0.0
      %1275 = vmatprep.subr.mxu0 0.0
      %1276 = vmatpush1.xpose.msra.mxu0 0.0
      %1277 = vmatprep.subr.mxu0 0.0
      %1278 = vmatpush1.xpose.msra.mxu0 0.0
      %1279 = vmatprep.subr.mxu0 0.0
      %1280 = vmatpush1.xpose.msra.mxu0 0.0
      %1281 = vmatprep.subr.mxu0 0.0
      %1282 = vmatpush1.xpose.msra.mxu0 0.0
      %1283 = vmatprep.subr.mxu0 0.0
      %1284 = vmatpush1.xpose.msra.mxu0 0.0
      %1285 = vmatprep.subr.mxu0 0.0
      %1286 = vmatpush1.xpose.msra.mxu0 0.0
      %1287 = vmatprep.subr.mxu0 0.0
      %1288 = vmatpush1.xpose.msra.mxu0 0.0
      %1289 = vmatprep.subr.mxu0 0.0
      %1290 = vmatpush1.xpose.msra.mxu0 0.0
      %1291 = vmatprep.subr.mxu0 0.0
      %1292 = vmatpush1.xpose.msra.mxu0 0.0
      %1293 = vmatprep.subr.mxu0 0.0
      %1294 = vmatpush1.xpose.msra.mxu0 0.0
      %1295 = vmatprep.subr.mxu0 0.0
      %1296 = vmatpush1.xpose.msra.mxu0 0.0
      %1297 = vmatprep.subr.mxu0 0.0
      %1298 = vmatpush1.xpose.msra.mxu0 0.0
      %1299 = vmatprep.subr.mxu0 0.0
      %1300 = vmatpush1.xpose.msra.mxu0 0.0
      %1301 = vmatprep.subr.mxu0 0.0
      %1302 = vmatpush1.xpose.msra.mxu0 0.0
      %1303 = vmatprep.subr.mxu0 0.0
      %1304 = vmatpush1.xpose.msra.mxu0 0.0
      %1305 = vmatprep.mubr.f32.mxu0 0.0
      %v1306 = vand.u32 %v933, 4294901760
      %1307 = vmatmul.mubr.f32.gmra.mrb[0].mxu0 %v1306
      %v1308 = vpop.f32.mrb[0].mxu0
      %v1309 = vadd.f32 %v1235, %v1308
      %v1310 = vpop.f32.mrb[0].mxu0
      %1311 = vdwg.mxu0
      %1312 = vmatprep.subr.mxu0 0.0
      %v1313 = vand.u32 %v936, 4294901760
      %1314 = vmatpush1.xpose.msra.mxu0 %v1313
      %1315 = vmatprep.subr.mxu0 0.0
      %1316 = vmatpush1.xpose.msra.mxu0 0.0
      %1317 = vmatprep.subr.mxu0 0.0
      %1318 = vmatpush1.xpose.msra.mxu0 0.0
      %1319 = vmatprep.subr.mxu0 0.0
      %1320 = vmatpush1.xpose.msra.mxu0 0.0
      %1321 = vmatprep.subr.mxu0 0.0
      %1322 = vmatpush1.xpose.msra.mxu0 0.0
      %1323 = vmatprep.subr.mxu0 0.0
      %1324 = vmatpush1.xpose.msra.mxu0 0.0
      %1325 = vmatprep.subr.mxu0 0.0
      %1326 = vmatpush1.xpose.msra.mxu0 0.0
      %1327 = vmatprep.subr.mxu0 0.0
      %1328 = vmatpush1.xpose.msra.mxu0 0.0
      %1329 = vmatprep.subr.mxu0 0.0
      %1330 = vmatpush1.xpose.msra.mxu0 0.0
      %1331 = vmatprep.subr.mxu0 0.0
      %1332 = vmatpush1.xpose.msra.mxu0 0.0
      %1333 = vmatprep.subr.mxu0 0.0
      %1334 = vmatpush1.xpose.msra.mxu0 0.0
      %1335 = vmatprep.subr.mxu0 0.0
      %1336 = vmatpush1.xpose.msra.mxu0 0.0
      %1337 = vmatprep.subr.mxu0 0.0
      %1338 = vmatpush1.xpose.msra.mxu0 0.0
      %1339 = vmatprep.subr.mxu0 0.0
      %1340 = vmatpush1.xpose.msra.mxu0 0.0
      %1341 = vmatprep.subr.mxu0 0.0
      %1342 = vmatpush1.xpose.msra.mxu0 0.0
      %1343 = vmatprep.subr.mxu0 0.0
      %1344 = vmatpush1.xpose.msra.mxu0 0.0
      %1345 = vmatprep.subr.mxu0 0.0
      %1346 = vmatpush1.xpose.msra.mxu0 0.0
      %1347 = vmatprep.subr.mxu0 0.0
      %1348 = vmatpush1.xpose.msra.mxu0 0.0
      %1349 = vmatprep.subr.mxu0 0.0
      %1350 = vmatpush1.xpose.msra.mxu0 0.0
      %1351 = vmatprep.subr.mxu0 0.0
      %1352 = vmatpush1.xpose.msra.mxu0 0.0
      %1353 = vmatprep.subr.mxu0 0.0
      %1354 = vmatpush1.xpose.msra.mxu0 0.0
      %1355 = vmatprep.subr.mxu0 0.0
      %1356 = vmatpush1.xpose.msra.mxu0 0.0
      %1357 = vmatprep.subr.mxu0 0.0
      %1358 = vmatpush1.xpose.msra.mxu0 0.0
      %1359 = vmatprep.subr.mxu0 0.0
      %1360 = vmatpush1.xpose.msra.mxu0 0.0
      %1361 = vmatprep.subr.mxu0 0.0
      %1362 = vmatpush1.xpose.msra.mxu0 0.0
      %1363 = vmatprep.subr.mxu0 0.0
      %1364 = vmatpush1.xpose.msra.mxu0 0.0
      %1365 = vmatprep.subr.mxu0 0.0
      %1366 = vmatpush1.xpose.msra.mxu0 0.0
      %1367 = vmatprep.subr.mxu0 0.0
      %1368 = vmatpush1.xpose.msra.mxu0 0.0
      %1369 = vmatprep.subr.mxu0 0.0
      %1370 = vmatpush1.xpose.msra.mxu0 0.0
      %1371 = vmatprep.subr.mxu0 0.0
      %1372 = vmatpush1.xpose.msra.mxu0 0.0
      %1373 = vmatprep.subr.mxu0 0.0
      %1374 = vmatpush1.xpose.msra.mxu0 0.0
      %1375 = vmatprep.subr.mxu0 0.0
      %1376 = vmatpush1.xpose.msra.mxu0 0.0
      %1377 = vmatprep.mubr.f32.mxu0 0.0
      %v1378 = vand.u32 %v933, 4294901760
      %1379 = vmatmul.mubr.f32.gmra.mrb[0].mxu0 %v1378
      %v1380 = vpop.f32.mrb[0].mxu0
      %v1381 = vadd.f32 %v1309, %v1380
      %v1382 = vpop.f32.mrb[0].mxu0
      %1383 = vdwg.mxu0
      %v1385 = vsel %vm479, %v457, 0
      %v1388 = vsel %vm479, %v461, 0
      %1390 = vmatprep.subr.mxu0 0.0
      %v1391 = vand.u32 %v1388, 4294901760
      %1392 = vmatpush1.xpose.msra.mxu0 %v1391
      %1393 = vmatprep.subr.mxu0 0.0
      %1394 = vmatpush1.xpose.msra.mxu0 0.0
      %1395 = vmatprep.subr.mxu0 0.0
      %1396 = vmatpush1.xpose.msra.mxu0 0.0
      %1397 = vmatprep.subr.mxu0 0.0
      %1398 = vmatpush1.xpose.msra.mxu0 0.0
      %1399 = vmatprep.subr.mxu0 0.0
      %1400 = vmatpush1.xpose.msra.mxu0 0.0
      %1401 = vmatprep.subr.mxu0 0.0
      %1402 = vmatpush1.xpose.msra.mxu0 0.0
      %1403 = vmatprep.subr.mxu0 0.0
      %1404 = vmatpush1.xpose.msra.mxu0 0.0
      %1405 = vmatprep.subr.mxu0 0.0
      %1406 = vmatpush1.xpose.msra.mxu0 0.0
      %1407 = vmatprep.subr.mxu0 0.0
      %1408 = vmatpush1.xpose.msra.mxu0 0.0
      %1409 = vmatprep.subr.mxu0 0.0
      %1410 = vmatpush1.xpose.msra.mxu0 0.0
      %1411 = vmatprep.subr.mxu0 0.0
      %1412 = vmatpush1.xpose.msra.mxu0 0.0
      %1413 = vmatprep.subr.mxu0 0.0
      %1414 = vmatpush1.xpose.msra.mxu0 0.0
      %1415 = vmatprep.subr.mxu0 0.0
      %1416 = vmatpush1.xpose.msra.mxu0 0.0
      %1417 = vmatprep.subr.mxu0 0.0
      %1418 = vmatpush1.xpose.msra.mxu0 0.0
      %1419 = vmatprep.subr.mxu0 0.0
      %1420 = vmatpush1.xpose.msra.mxu0 0.0
      %1421 = vmatprep.subr.mxu0 0.0
      %1422 = vmatpush1.xpose.msra.mxu0 0.0
      %1423 = vmatprep.subr.mxu0 0.0
      %1424 = vmatpush1.xpose.msra.mxu0 0.0
      %1425 = vmatprep.subr.mxu0 0.0
      %1426 = vmatpush1.xpose.msra.mxu0 0.0
      %1427 = vmatprep.subr.mxu0 0.0
      %1428 = vmatpush1.xpose.msra.mxu0 0.0
      %1429 = vmatprep.subr.mxu0 0.0
      %1430 = vmatpush1.xpose.msra.mxu0 0.0
      %1431 = vmatprep.subr.mxu0 0.0
      %1432 = vmatpush1.xpose.msra.mxu0 0.0
      %1433 = vmatprep.subr.mxu0 0.0
      %1434 = vmatpush1.xpose.msra.mxu0 0.0
      %1435 = vmatprep.subr.mxu0 0.0
      %1436 = vmatpush1.xpose.msra.mxu0 0.0
      %1437 = vmatprep.subr.mxu0 0.0
      %1438 = vmatpush1.xpose.msra.mxu0 0.0
      %1439 = vmatprep.subr.mxu0 0.0
      %1440 = vmatpush1.xpose.msra.mxu0 0.0
      %1441 = vmatprep.subr.mxu0 0.0
      %1442 = vmatpush1.xpose.msra.mxu0 0.0
      %1443 = vmatprep.subr.mxu0 0.0
      %1444 = vmatpush1.xpose.msra.mxu0 0.0
      %1445 = vmatprep.subr.mxu0 0.0
      %1446 = vmatpush1.xpose.msra.mxu0 0.0
      %1447 = vmatprep.subr.mxu0 0.0
      %1448 = vmatpush1.xpose.msra.mxu0 0.0
      %1449 = vmatprep.subr.mxu0 0.0
      %1450 = vmatpush1.xpose.msra.mxu0 0.0
      %1451 = vmatprep.subr.mxu0 0.0
      %1452 = vmatpush1.xpose.msra.mxu0 0.0
      %1453 = vmatprep.subr.mxu0 0.0
      %1454 = vmatpush1.xpose.msra.mxu0 0.0
      %1455 = vmatprep.mubr.f32.mxu0 0.0
      %v1456 = vand.u32 %v1385, 4294901760
      %v1457 = vsub.f32 %v1385, %v1456
      %v1458 = vand.u32 %v1457, 4294901760
      %v1459 = vsub.f32 %v1457, %v1458
      %v1460 = vand.u32 %v1459, 4294901760
      %1461 = vmatmul.mubr.f32.gmra.mrb[0].mxu0 %v1460
      %v1462 = vpop.f32.mrb[0].mxu0
      %v1463 = vadd.f32 %v478, %v1462
      %v1464 = vpop.f32.mrb[0].mxu0
      %1465 = vdwg.mxu0
      %1466 = vmatprep.subr.mxu0 0.0
      %v1467 = vand.u32 %v1388, 4294901760
      %v1468 = vsub.f32 %v1388, %v1467
      %v1469 = vand.u32 %v1468, 4294901760
      %v1470 = vsub.f32 %v1468, %v1469
      %v1471 = vand.u32 %v1470, 4294901760
      %1472 = vmatpush1.xpose.msra.mxu0 %v1471
      %1473 = vmatprep.subr.mxu0 0.0
      %1474 = vmatpush1.xpose.msra.mxu0 0.0
      %1475 = vmatprep.subr.mxu0 0.0
      %1476 = vmatpush1.xpose.msra.mxu0 0.0
      %1477 = vmatprep.subr.mxu0 0.0
      %1478 = vmatpush1.xpose.msra.mxu0 0.0
      %1479 = vmatprep.subr.mxu0 0.0
      %1480 = vmatpush1.xpose.msra.mxu0 0.0
      %1481 = vmatprep.subr.mxu0 0.0
      %1482 = vmatpush1.xpose.msra.mxu0 0.0
      %1483 = vmatprep.subr.mxu0 0.0
      %1484 = vmatpush1.xpose.msra.mxu0 0.0
      %1485 = vmatprep.subr.mxu0 0.0
      %1486 = vmatpush1.xpose.msra.mxu0 0.0
      %1487 = vmatprep.subr.mxu0 0.0
      %1488 = vmatpush1.xpose.msra.mxu0 0.0
      %1489 = vmatprep.subr.mxu0 0.0
      %1490 = vmatpush1.xpose.msra.mxu0 0.0
      %1491 = vmatprep.subr.mxu0 0.0
      %1492 = vmatpush1.xpose.msra.mxu0 0.0
      %1493 = vmatprep.subr.mxu0 0.0
      %1494 = vmatpush1.xpose.msra.mxu0 0.0
      %1495 = vmatprep.subr.mxu0 0.0
      %1496 = vmatpush1.xpose.msra.mxu0 0.0
      %1497 = vmatprep.subr.mxu0 0.0
      %1498 = vmatpush1.xpose.msra.mxu0 0.0
      %1499 = vmatprep.subr.mxu0 0.0
      %1500 = vmatpush1.xpose.msra.mxu0 0.0
      %1501 = vmatprep.subr.mxu0 0.0
      %1502 = vmatpush1.xpose.msra.mxu0 0.0
      %1503 = vmatprep.subr.mxu0 0.0
      %1504 = vmatpush1.xpose.msra.mxu0 0.0
      %1505 = vmatprep.subr.mxu0 0.0
      %1506 = vmatpush1.xpose.msra.mxu0 0.0
      %1507 = vmatprep.subr.mxu0 0.0
      %1508 = vmatpush1.xpose.msra.mxu0 0.0
      %1509 = vmatprep.subr.mxu0 0.0
      %1510 = vmatpush1.xpose.msra.mxu0 0.0
      %1511 = vmatprep.subr.mxu0 0.0
      %1512 = vmatpush1.xpose.msra.mxu0 0.0
      %1513 = vmatprep.subr.mxu0 0.0
      %1514 = vmatpush1.xpose.msra.mxu0 0.0
      %1515 = vmatprep.subr.mxu0 0.0
      %1516 = vmatpush1.xpose.msra.mxu0 0.0
      %1517 = vmatprep.subr.mxu0 0.0
      %1518 = vmatpush1.xpose.msra.mxu0 0.0
      %1519 = vmatprep.subr.mxu0 0.0
      %1520 = vmatpush1.xpose.msra.mxu0 0.0
      %1521 = vmatprep.subr.mxu0 0.0
      %1522 = vmatpush1.xpose.msra.mxu0 0.0
      %1523 = vmatprep.subr.mxu0 0.0
      %1524 = vmatpush1.xpose.msra.mxu0 0.0
      %1525 = vmatprep.subr.mxu0 0.0
      %1526 = vmatpush1.xpose.msra.mxu0 0.0
      %1527 = vmatprep.subr.mxu0 0.0
      %1528 = vmatpush1.xpose.msra.mxu0 0.0
      %1529 = vmatprep.subr.mxu0 0.0
      %1530 = vmatpush1.xpose.msra.mxu0 0.0
      %1531 = vmatprep.subr.mxu0 0.0
      %1532 = vmatpush1.xpose.msra.mxu0 0.0
      %1533 = vmatprep.subr.mxu0 0.0
      %1534 = vmatpush1.xpose.msra.mxu0 0.0
      %1535 = vmatprep.mubr.f32.mxu0 0.0
      %v1536 = vand.u32 %v1385, 4294901760
      %1537 = vmatmul.mubr.f32.gmra.mrb[0].mxu0 %v1536
      %v1538 = vpop.f32.mrb[0].mxu0
      %v1539 = vadd.f32 %v1463, %v1538
      %v1540 = vpop.f32.mrb[0].mxu0
      %1541 = vdwg.mxu0
      %1542 = vmatprep.subr.mxu0 0.0
      %v1543 = vand.u32 %v1388, 4294901760
      %v1544 = vsub.f32 %v1388, %v1543
      %1545 = vmatpush1.xpose.msra.mxu0 %v1544
      %1546 = vmatprep.subr.mxu0 0.0
      %1547 = vmatpush1.xpose.msra.mxu0 0.0
      %1548 = vmatprep.subr.mxu0 0.0
      %1549 = vmatpush1.xpose.msra.mxu0 0.0
      %1550 = vmatprep.subr.mxu0 0.0
      %1551 = vmatpush1.xpose.msra.mxu0 0.0
      %1552 = vmatprep.subr.mxu0 0.0
      %1553 = vmatpush1.xpose.msra.mxu0 0.0
      %1554 = vmatprep.subr.mxu0 0.0
      %1555 = vmatpush1.xpose.msra.mxu0 0.0
      %1556 = vmatprep.subr.mxu0 0.0
      %1557 = vmatpush1.xpose.msra.mxu0 0.0
      %1558 = vmatprep.subr.mxu0 0.0
      %1559 = vmatpush1.xpose.msra.mxu0 0.0
      %1560 = vmatprep.subr.mxu0 0.0
      %1561 = vmatpush1.xpose.msra.mxu0 0.0
      %1562 = vmatprep.subr.mxu0 0.0
      %1563 = vmatpush1.xpose.msra.mxu0 0.0
      %1564 = vmatprep.subr.mxu0 0.0
      %1565 = vmatpush1.xpose.msra.mxu0 0.0
      %1566 = vmatprep.subr.mxu0 0.0
      %1567 = vmatpush1.xpose.msra.mxu0 0.0
      %1568 = vmatprep.subr.mxu0 0.0
      %1569 = vmatpush1.xpose.msra.mxu0 0.0
      %1570 = vmatprep.subr.mxu0 0.0
      %1571 = vmatpush1.xpose.msra.mxu0 0.0
      %1572 = vmatprep.subr.mxu0 0.0
      %1573 = vmatpush1.xpose.msra.mxu0 0.0
      %1574 = vmatprep.subr.mxu0 0.0
      %1575 = vmatpush1.xpose.msra.mxu0 0.0
      %1576 = vmatprep.subr.mxu0 0.0
      %1577 = vmatpush1.xpose.msra.mxu0 0.0
      %1578 = vmatprep.subr.mxu0 0.0
      %1579 = vmatpush1.xpose.msra.mxu0 0.0
      %1580 = vmatprep.subr.mxu0 0.0
      %1581 = vmatpush1.xpose.msra.mxu0 0.0
      %1582 = vmatprep.subr.mxu0 0.0
      %1583 = vmatpush1.xpose.msra.mxu0 0.0
      %1584 = vmatprep.subr.mxu0 0.0
      %1585 = vmatpush1.xpose.msra.mxu0 0.0
      %1586 = vmatprep.subr.mxu0 0.0
      %1587 = vmatpush1.xpose.msra.mxu0 0.0
      %1588 = vmatprep.subr.mxu0 0.0
      %1589 = vmatpush1.xpose.msra.mxu0 0.0
      %1590 = vmatprep.subr.mxu0 0.0
      %1591 = vmatpush1.xpose.msra.mxu0 0.0
      %1592 = vmatprep.subr.mxu0 0.0
      %1593 = vmatpush1.xpose.msra.mxu0 0.0
      %1594 = vmatprep.subr.mxu0 0.0
      %1595 = vmatpush1.xpose.msra.mxu0 0.0
      %1596 = vmatprep.subr.mxu0 0.0
      %1597 = vmatpush1.xpose.msra.mxu0 0.0
      %1598 = vmatprep.subr.mxu0 0.0
      %1599 = vmatpush1.xpose.msra.mxu0 0.0
      %1600 = vmatprep.subr.mxu0 0.0
      %1601 = vmatpush1.xpose.msra.mxu0 0.0
      %1602 = vmatprep.subr.mxu0 0.0
      %1603 = vmatpush1.xpose.msra.mxu0 0.0
      %1604 = vmatprep.subr.mxu0 0.0
      %1605 = vmatpush1.xpose.msra.mxu0 0.0
      %1606 = vmatprep.subr.mxu0 0.0
      %1607 = vmatpush1.xpose.msra.mxu0 0.0
      %1608 = vmatprep.mubr.f32.mxu0 0.0
      %v1609 = vand.u32 %v1385, 4294901760
      %v1610 = vsub.f32 %v1385, %v1609
      %1611 = vmatmul.mubr.f32.gmra.mrb[0].mxu0 %v1610
      %v1612 = vpop.f32.mrb[0].mxu0
      %v1613 = vadd.f32 %v1539, %v1612
      %v1614 = vpop.f32.mrb[0].mxu0
      %1615 = vdwg.mxu0
      %1616 = vmatprep.subr.mxu0 0.0
      %v1617 = vand.u32 %v1388, 4294901760
      %1618 = vmatpush1.xpose.msra.mxu0 %v1617
      %1619 = vmatprep.subr.mxu0 0.0
      %1620 = vmatpush1.xpose.msra.mxu0 0.0
      %1621 = vmatprep.subr.mxu0 0.0
      %1622 = vmatpush1.xpose.msra.mxu0 0.0
      %1623 = vmatprep.subr.mxu0 0.0
      %1624 = vmatpush1.xpose.msra.mxu0 0.0
      %1625 = vmatprep.subr.mxu0 0.0
      %1626 = vmatpush1.xpose.msra.mxu0 0.0
      %1627 = vmatprep.subr.mxu0 0.0
      %1628 = vmatpush1.xpose.msra.mxu0 0.0
      %1629 = vmatprep.subr.mxu0 0.0
      %1630 = vmatpush1.xpose.msra.mxu0 0.0
      %1631 = vmatprep.subr.mxu0 0.0
      %1632 = vmatpush1.xpose.msra.mxu0 0.0
      %1633 = vmatprep.subr.mxu0 0.0
      %1634 = vmatpush1.xpose.msra.mxu0 0.0
      %1635 = vmatprep.subr.mxu0 0.0
      %1636 = vmatpush1.xpose.msra.mxu0 0.0
      %1637 = vmatprep.subr.mxu0 0.0
      %1638 = vmatpush1.xpose.msra.mxu0 0.0
      %1639 = vmatprep.subr.mxu0 0.0
      %1640 = vmatpush1.xpose.msra.mxu0 0.0
      %1641 = vmatprep.subr.mxu0 0.0
      %1642 = vmatpush1.xpose.msra.mxu0 0.0
      %1643 = vmatprep.subr.mxu0 0.0
      %1644 = vmatpush1.xpose.msra.mxu0 0.0
      %1645 = vmatprep.subr.mxu0 0.0
      %1646 = vmatpush1.xpose.msra.mxu0 0.0
      %1647 = vmatprep.subr.mxu0 0.0
      %1648 = vmatpush1.xpose.msra.mxu0 0.0
      %1649 = vmatprep.subr.mxu0 0.0
      %1650 = vmatpush1.xpose.msra.mxu0 0.0
      %1651 = vmatprep.subr.mxu0 0.0
      %1652 = vmatpush1.xpose.msra.mxu0 0.0
      %1653 = vmatprep.subr.mxu0 0.0
      %1654 = vmatpush1.xpose.msra.mxu0 0.0
      %1655 = vmatprep.subr.mxu0 0.0
      %1656 = vmatpush1.xpose.msra.mxu0 0.0
      %1657 = vmatprep.subr.mxu0 0.0
      %1658 = vmatpush1.xpose.msra.mxu0 0.0
      %1659 = vmatprep.subr.mxu0 0.0
      %1660 = vmatpush1.xpose.msra.mxu0 0.0
      %1661 = vmatprep.subr.mxu0 0.0
      %1662 = vmatpush1.xpose.msra.mxu0 0.0
      %1663 = vmatprep.subr.mxu0 0.0
      %1664 = vmatpush1.xpose.msra.mxu0 0.0
      %1665 = vmatprep.subr.mxu0 0.0
      %1666 = vmatpush1.xpose.msra.mxu0 0.0
      %1667 = vmatprep.subr.mxu0 0.0
      %1668 = vmatpush1.xpose.msra.mxu0 0.0
      %1669 = vmatprep.subr.mxu0 0.0
      %1670 = vmatpush1.xpose.msra.mxu0 0.0
      %1671 = vmatprep.subr.mxu0 0.0
      %1672 = vmatpush1.xpose.msra.mxu0 0.0
      %1673 = vmatprep.subr.mxu0 0.0
      %1674 = vmatpush1.xpose.msra.mxu0 0.0
      %1675 = vmatprep.subr.mxu0 0.0
      %1676 = vmatpush1.xpose.msra.mxu0 0.0
      %1677 = vmatprep.subr.mxu0 0.0
      %1678 = vmatpush1.xpose.msra.mxu0 0.0
      %1679 = vmatprep.subr.mxu0 0.0
      %1680 = vmatpush1.xpose.msra.mxu0 0.0
      %1681 = vmatprep.mubr.f32.mxu0 0.0
      %v1682 = vand.u32 %v1385, 4294901760
      %v1683 = vsub.f32 %v1385, %v1682
      %v1684 = vand.u32 %v1683, 4294901760
      %1685 = vmatmul.mubr.f32.gmra.mrb[0].mxu0 %v1684
      %v1686 = vpop.f32.mrb[0].mxu0
      %v1687 = vadd.f32 %v1613, %v1686
      %v1688 = vpop.f32.mrb[0].mxu0
      %1689 = vdwg.mxu0
      %1690 = vmatprep.subr.mxu0 0.0
      %v1691 = vand.u32 %v1388, 4294901760
      %v1692 = vsub.f32 %v1388, %v1691
      %v1693 = vand.u32 %v1692, 4294901760
      %1694 = vmatpush1.xpose.msra.mxu0 %v1693
      %1695 = vmatprep.subr.mxu0 0.0
      %1696 = vmatpush1.xpose.msra.mxu0 0.0
      %1697 = vmatprep.subr.mxu0 0.0
      %1698 = vmatpush1.xpose.msra.mxu0 0.0
      %1699 = vmatprep.subr.mxu0 0.0
      %1700 = vmatpush1.xpose.msra.mxu0 0.0
      %1701 = vmatprep.subr.mxu0 0.0
      %1702 = vmatpush1.xpose.msra.mxu0 0.0
      %1703 = vmatprep.subr.mxu0 0.0
      %1704 = vmatpush1.xpose.msra.mxu0 0.0
      %1705 = vmatprep.subr.mxu0 0.0
      %1706 = vmatpush1.xpose.msra.mxu0 0.0
      %1707 = vmatprep.subr.mxu0 0.0
      %1708 = vmatpush1.xpose.msra.mxu0 0.0
      %1709 = vmatprep.subr.mxu0 0.0
      %1710 = vmatpush1.xpose.msra.mxu0 0.0
      %1711 = vmatprep.subr.mxu0 0.0
      %1712 = vmatpush1.xpose.msra.mxu0 0.0
      %1713 = vmatprep.subr.mxu0 0.0
      %1714 = vmatpush1.xpose.msra.mxu0 0.0
      %1715 = vmatprep.subr.mxu0 0.0
      %1716 = vmatpush1.xpose.msra.mxu0 0.0
      %1717 = vmatprep.subr.mxu0 0.0
      %1718 = vmatpush1.xpose.msra.mxu0 0.0
      %1719 = vmatprep.subr.mxu0 0.0
      %1720 = vmatpush1.xpose.msra.mxu0 0.0
      %1721 = vmatprep.subr.mxu0 0.0
      %1722 = vmatpush1.xpose.msra.mxu0 0.0
      %1723 = vmatprep.subr.mxu0 0.0
      %1724 = vmatpush1.xpose.msra.mxu0 0.0
      %1725 = vmatprep.subr.mxu0 0.0
      %1726 = vmatpush1.xpose.msra.mxu0 0.0
      %1727 = vmatprep.subr.mxu0 0.0
      %1728 = vmatpush1.xpose.msra.mxu0 0.0
      %1729 = vmatprep.subr.mxu0 0.0
      %1730 = vmatpush1.xpose.msra.mxu0 0.0
      %1731 = vmatprep.subr.mxu0 0.0
      %1732 = vmatpush1.xpose.msra.mxu0 0.0
      %1733 = vmatprep.subr.mxu0 0.0
      %1734 = vmatpush1.xpose.msra.mxu0 0.0
      %1735 = vmatprep.subr.mxu0 0.0
      %1736 = vmatpush1.xpose.msra.mxu0 0.0
      %1737 = vmatprep.subr.mxu0 0.0
      %1738 = vmatpush1.xpose.msra.mxu0 0.0
      %1739 = vmatprep.subr.mxu0 0.0
      %1740 = vmatpush1.xpose.msra.mxu0 0.0
      %1741 = vmatprep.subr.mxu0 0.0
      %1742 = vmatpush1.xpose.msra.mxu0 0.0
      %1743 = vmatprep.subr.mxu0 0.0
      %1744 = vmatpush1.xpose.msra.mxu0 0.0
      %1745 = vmatprep.subr.mxu0 0.0
      %1746 = vmatpush1.xpose.msra.mxu0 0.0
      %1747 = vmatprep.subr.mxu0 0.0
      %1748 = vmatpush1.xpose.msra.mxu0 0.0
      %1749 = vmatprep.subr.mxu0 0.0
      %1750 = vmatpush1.xpose.msra.mxu0 0.0
      %1751 = vmatprep.subr.mxu0 0.0
      %1752 = vmatpush1.xpose.msra.mxu0 0.0
      %1753 = vmatprep.subr.mxu0 0.0
      %1754 = vmatpush1.xpose.msra.mxu0 0.0
      %1755 = vmatprep.subr.mxu0 0.0
      %1756 = vmatpush1.xpose.msra.mxu0 0.0
      %1757 = vmatprep.mubr.f32.mxu0 0.0
      %v1758 = vand.u32 %v1385, 4294901760
      %1759 = vmatmul.mubr.f32.gmra.mrb[0].mxu0 %v1758
      %v1760 = vpop.f32.mrb[0].mxu0
      %v1761 = vadd.f32 %v1687, %v1760
      %v1762 = vpop.f32.mrb[0].mxu0
      %1763 = vdwg.mxu0
      %1764 = vmatprep.subr.mxu0 0.0
      %v1765 = vand.u32 %v1388, 4294901760
      %1766 = vmatpush1.xpose.msra.mxu0 %v1765
      %1767 = vmatprep.subr.mxu0 0.0
      %1768 = vmatpush1.xpose.msra.mxu0 0.0
      %1769 = vmatprep.subr.mxu0 0.0
      %1770 = vmatpush1.xpose.msra.mxu0 0.0
      %1771 = vmatprep.subr.mxu0 0.0
      %1772 = vmatpush1.xpose.msra.mxu0 0.0
      %1773 = vmatprep.subr.mxu0 0.0
      %1774 = vmatpush1.xpose.msra.mxu0 0.0
      %1775 = vmatprep.subr.mxu0 0.0
      %1776 = vmatpush1.xpose.msra.mxu0 0.0
      %1777 = vmatprep.subr.mxu0 0.0
      %1778 = vmatpush1.xpose.msra.mxu0 0.0
      %1779 = vmatprep.subr.mxu0 0.0
      %1780 = vmatpush1.xpose.msra.mxu0 0.0
      %1781 = vmatprep.subr.mxu0 0.0
      %1782 = vmatpush1.xpose.msra.mxu0 0.0
      %1783 = vmatprep.subr.mxu0 0.0
      %1784 = vmatpush1.xpose.msra.mxu0 0.0
      %1785 = vmatprep.subr.mxu0 0.0
      %1786 = vmatpush1.xpose.msra.mxu0 0.0
      %1787 = vmatprep.subr.mxu0 0.0
      %1788 = vmatpush1.xpose.msra.mxu0 0.0
      %1789 = vmatprep.subr.mxu0 0.0
      %1790 = vmatpush1.xpose.msra.mxu0 0.0
      %1791 = vmatprep.subr.mxu0 0.0
      %1792 = vmatpush1.xpose.msra.mxu0 0.0
      %1793 = vmatprep.subr.mxu0 0.0
      %1794 = vmatpush1.xpose.msra.mxu0 0.0
      %1795 = vmatprep.subr.mxu0 0.0
      %1796 = vmatpush1.xpose.msra.mxu0 0.0
      %1797 = vmatprep.subr.mxu0 0.0
      %1798 = vmatpush1.xpose.msra.mxu0 0.0
      %1799 = vmatprep.subr.mxu0 0.0
      %1800 = vmatpush1.xpose.msra.mxu0 0.0
      %1801 = vmatprep.subr.mxu0 0.0
      %1802 = vmatpush1.xpose.msra.mxu0 0.0
      %1803 = vmatprep.subr.mxu0 0.0
      %1804 = vmatpush1.xpose.msra.mxu0 0.0
      %1805 = vmatprep.subr.mxu0 0.0
      %1806 = vmatpush1.xpose.msra.mxu0 0.0
      %1807 = vmatprep.subr.mxu0 0.0
      %1808 = vmatpush1.xpose.msra.mxu0 0.0
      %1809 = vmatprep.subr.mxu0 0.0
      %1810 = vmatpush1.xpose.msra.mxu0 0.0
      %1811 = vmatprep.subr.mxu0 0.0
      %1812 = vmatpush1.xpose.msra.mxu0 0.0
      %1813 = vmatprep.subr.mxu0 0.0
      %1814 = vmatpush1.xpose.msra.mxu0 0.0
      %1815 = vmatprep.subr.mxu0 0.0
      %1816 = vmatpush1.xpose.msra.mxu0 0.0
      %1817 = vmatprep.subr.mxu0 0.0
      %1818 = vmatpush1.xpose.msra.mxu0 0.0
      %1819 = vmatprep.subr.mxu0 0.0
      %1820 = vmatpush1.xpose.msra.mxu0 0.0
      %1821 = vmatprep.subr.mxu0 0.0
      %1822 = vmatpush1.xpose.msra.mxu0 0.0
      %1823 = vmatprep.subr.mxu0 0.0
      %1824 = vmatpush1.xpose.msra.mxu0 0.0
      %1825 = vmatprep.subr.mxu0 0.0
      %1826 = vmatpush1.xpose.msra.mxu0 0.0
      %1827 = vmatprep.subr.mxu0 0.0
      %1828 = vmatpush1.xpose.msra.mxu0 0.0
      %1829 = vmatprep.mubr.f32.mxu0 0.0
      %v1830 = vand.u32 %v1385, 4294901760
      %1831 = vmatmul.mubr.f32.gmra.mrb[0].mxu0 %v1830
      %v1832 = vpop.f32.mrb[0].mxu0
      %v1833 = vadd.f32 %v1761, %v1832
      %v1834 = vpop.f32.mrb[0].mxu0
      %1835 = vdwg.mxu0
      %v1837 = vsel %vm479, %v458, 0
      %v1840 = vsel %vm479, %v462, 0
      %1842 = vmatprep.subr.mxu0 0.0
      %v1843 = vand.u32 %v1840, 4294901760
      %1844 = vmatpush1.xpose.msra.mxu0 %v1843
      %1845 = vmatprep.subr.mxu0 0.0
      %1846 = vmatpush1.xpose.msra.mxu0 0.0
      %1847 = vmatprep.subr.mxu0 0.0
      %1848 = vmatpush1.xpose.msra.mxu0 0.0
      %1849 = vmatprep.subr.mxu0 0.0
      %1850 = vmatpush1.xpose.msra.mxu0 0.0
      %1851 = vmatprep.subr.mxu0 0.0
      %1852 = vmatpush1.xpose.msra.mxu0 0.0
      %1853 = vmatprep.subr.mxu0 0.0
      %1854 = vmatpush1.xpose.msra.mxu0 0.0
      %1855 = vmatprep.subr.mxu0 0.0
      %1856 = vmatpush1.xpose.msra.mxu0 0.0
      %1857 = vmatprep.subr.mxu0 0.0
      %1858 = vmatpush1.xpose.msra.mxu0 0.0
      %1859 = vmatprep.subr.mxu0 0.0
      %1860 = vmatpush1.xpose.msra.mxu0 0.0
      %1861 = vmatprep.subr.mxu0 0.0
      %1862 = vmatpush1.xpose.msra.mxu0 0.0
      %1863 = vmatprep.subr.mxu0 0.0
      %1864 = vmatpush1.xpose.msra.mxu0 0.0
      %1865 = vmatprep.subr.mxu0 0.0
      %1866 = vmatpush1.xpose.msra.mxu0 0.0
      %1867 = vmatprep.subr.mxu0 0.0
      %1868 = vmatpush1.xpose.msra.mxu0 0.0
      %1869 = vmatprep.subr.mxu0 0.0
      %1870 = vmatpush1.xpose.msra.mxu0 0.0
      %1871 = vmatprep.subr.mxu0 0.0
      %1872 = vmatpush1.xpose.msra.mxu0 0.0
      %1873 = vmatprep.subr.mxu0 0.0
      %1874 = vmatpush1.xpose.msra.mxu0 0.0
      %1875 = vmatprep.subr.mxu0 0.0
      %1876 = vmatpush1.xpose.msra.mxu0 0.0
      %1877 = vmatprep.subr.mxu0 0.0
      %1878 = vmatpush1.xpose.msra.mxu0 0.0
      %1879 = vmatprep.subr.mxu0 0.0
      %1880 = vmatpush1.xpose.msra.mxu0 0.0
      %1881 = vmatprep.subr.mxu0 0.0
      %1882 = vmatpush1.xpose.msra.mxu0 0.0
      %1883 = vmatprep.subr.mxu0 0.0
      %1884 = vmatpush1.xpose.msra.mxu0 0.0
      %1885 = vmatprep.subr.mxu0 0.0
      %1886 = vmatpush1.xpose.msra.mxu0 0.0
      %1887 = vmatprep.subr.mxu0 0.0
      %1888 = vmatpush1.xpose.msra.mxu0 0.0
      %1889 = vmatprep.subr.mxu0 0.0
      %1890 = vmatpush1.xpose.msra.mxu0 0.0
      %1891 = vmatprep.subr.mxu0 0.0
      %1892 = vmatpush1.xpose.msra.mxu0 0.0
      %1893 = vmatprep.subr.mxu0 0.0
      %1894 = vmatpush1.xpose.msra.mxu0 0.0
      %1895 = vmatprep.subr.mxu0 0.0
      %1896 = vmatpush1.xpose.msra.mxu0 0.0
      %1897 = vmatprep.subr.mxu0 0.0
      %1898 = vmatpush1.xpose.msra.mxu0 0.0
      %1899 = vmatprep.subr.mxu0 0.0
      %1900 = vmatpush1.xpose.msra.mxu0 0.0
      %1901 = vmatprep.subr.mxu0 0.0
      %1902 = vmatpush1.xpose.msra.mxu0 0.0
      %1903 = vmatprep.subr.mxu0 0.0
      %1904 = vmatpush1.xpose.msra.mxu0 0.0
      %1905 = vmatprep.subr.mxu0 0.0
      %1906 = vmatpush1.xpose.msra.mxu0 0.0
      %1907 = vmatprep.mubr.f32.mxu0 0.0
      %v1908 = vand.u32 %v1837, 4294901760
      %v1909 = vsub.f32 %v1837, %v1908
      %v1910 = vand.u32 %v1909, 4294901760
      %v1911 = vsub.f32 %v1909, %v1910
      %v1912 = vand.u32 %v1911, 4294901760
      %1913 = vmatmul.mubr.f32.gmra.mrb[0].mxu0 %v1912
      %v1914 = vpop.f32.mrb[0].mxu0
      %v1915 = vadd.f32 %v478, %v1914
      %v1916 = vpop.f32.mrb[0].mxu0
      %1917 = vdwg.mxu0
      %1918 = vmatprep.subr.mxu0 0.0
      %v1919 = vand.u32 %v1840, 4294901760
      %v1920 = vsub.f32 %v1840, %v1919
      %v1921 = vand.u32 %v1920, 4294901760
      %v1922 = vsub.f32 %v1920, %v1921
      %v1923 = vand.u32 %v1922, 4294901760
      %1924 = vmatpush1.xpose.msra.mxu0 %v1923
      %1925 = vmatprep.subr.mxu0 0.0
      %1926 = vmatpush1.xpose.msra.mxu0 0.0
      %1927 = vmatprep.subr.mxu0 0.0
      %1928 = vmatpush1.xpose.msra.mxu0 0.0
      %1929 = vmatprep.subr.mxu0 0.0
      %1930 = vmatpush1.xpose.msra.mxu0 0.0
      %1931 = vmatprep.subr.mxu0 0.0
      %1932 = vmatpush1.xpose.msra.mxu0 0.0
      %1933 = vmatprep.subr.mxu0 0.0
      %1934 = vmatpush1.xpose.msra.mxu0 0.0
      %1935 = vmatprep.subr.mxu0 0.0
      %1936 = vmatpush1.xpose.msra.mxu0 0.0
      %1937 = vmatprep.subr.mxu0 0.0
      %1938 = vmatpush1.xpose.msra.mxu0 0.0
      %1939 = vmatprep.subr.mxu0 0.0
      %1940 = vmatpush1.xpose.msra.mxu0 0.0
      %1941 = vmatprep.subr.mxu0 0.0
      %1942 = vmatpush1.xpose.msra.mxu0 0.0
      %1943 = vmatprep.subr.mxu0 0.0
      %1944 = vmatpush1.xpose.msra.mxu0 0.0
      %1945 = vmatprep.subr.mxu0 0.0
      %1946 = vmatpush1.xpose.msra.mxu0 0.0
      %1947 = vmatprep.subr.mxu0 0.0
      %1948 = vmatpush1.xpose.msra.mxu0 0.0
      %1949 = vmatprep.subr.mxu0 0.0
      %1950 = vmatpush1.xpose.msra.mxu0 0.0
      %1951 = vmatprep.subr.mxu0 0.0
      %1952 = vmatpush1.xpose.msra.mxu0 0.0
      %1953 = vmatprep.subr.mxu0 0.0
      %1954 = vmatpush1.xpose.msra.mxu0 0.0
      %1955 = vmatprep.subr.mxu0 0.0
      %1956 = vmatpush1.xpose.msra.mxu0 0.0
      %1957 = vmatprep.subr.mxu0 0.0
      %1958 = vmatpush1.xpose.msra.mxu0 0.0
      %1959 = vmatprep.subr.mxu0 0.0
      %1960 = vmatpush1.xpose.msra.mxu0 0.0
      %1961 = vmatprep.subr.mxu0 0.0
      %1962 = vmatpush1.xpose.msra.mxu0 0.0
      %1963 = vmatprep.subr.mxu0 0.0
      %1964 = vmatpush1.xpose.msra.mxu0 0.0
      %1965 = vmatprep.subr.mxu0 0.0
      %1966 = vmatpush1.xpose.msra.mxu0 0.0
      %1967 = vmatprep.subr.mxu0 0.0
      %1968 = vmatpush1.xpose.msra.mxu0 0.0
      %1969 = vmatprep.subr.mxu0 0.0
      %1970 = vmatpush1.xpose.msra.mxu0 0.0
      %1971 = vmatprep.subr.mxu0 0.0
      %1972 = vmatpush1.xpose.msra.mxu0 0.0
      %1973 = vmatprep.subr.mxu0 0.0
      %1974 = vmatpush1.xpose.msra.mxu0 0.0
      %1975 = vmatprep.subr.mxu0 0.0
      %1976 = vmatpush1.xpose.msra.mxu0 0.0
      %1977 = vmatprep.subr.mxu0 0.0
      %1978 = vmatpush1.xpose.msra.mxu0 0.0
      %1979 = vmatprep.subr.mxu0 0.0
      %1980 = vmatpush1.xpose.msra.mxu0 0.0
      %1981 = vmatprep.subr.mxu0 0.0
      %1982 = vmatpush1.xpose.msra.mxu0 0.0
      %1983 = vmatprep.subr.mxu0 0.0
      %1984 = vmatpush1.xpose.msra.mxu0 0.0
      %1985 = vmatprep.subr.mxu0 0.0
      %1986 = vmatpush1.xpose.msra.mxu0 0.0
      %1987 = vmatprep.mubr.f32.mxu0 0.0
      %v1988 = vand.u32 %v1837, 4294901760
      %1989 = vmatmul.mubr.f32.gmra.mrb[0].mxu0 %v1988
      %v1990 = vpop.f32.mrb[0].mxu0
      %v1991 = vadd.f32 %v1915, %v1990
      %v1992 = vpop.f32.mrb[0].mxu0
      %1993 = vdwg.mxu0
      %1994 = vmatprep.subr.mxu0 0.0
      %v1995 = vand.u32 %v1840, 4294901760
      %v1996 = vsub.f32 %v1840, %v1995
      %1997 = vmatpush1.xpose.msra.mxu0 %v1996
      %1998 = vmatprep.subr.mxu0 0.0
      %1999 = vmatpush1.xpose.msra.mxu0 0.0
      %2000 = vmatprep.subr.mxu0 0.0
      %2001 = vmatpush1.xpose.msra.mxu0 0.0
      %2002 = vmatprep.subr.mxu0 0.0
      %2003 = vmatpush1.xpose.msra.mxu0 0.0
      %2004 = vmatprep.subr.mxu0 0.0
      %2005 = vmatpush1.xpose.msra.mxu0 0.0
      %2006 = vmatprep.subr.mxu0 0.0
      %2007 = vmatpush1.xpose.msra.mxu0 0.0
      %2008 = vmatprep.subr.mxu0 0.0
      %2009 = vmatpush1.xpose.msra.mxu0 0.0
      %2010 = vmatprep.subr.mxu0 0.0
      %2011 = vmatpush1.xpose.msra.mxu0 0.0
      %2012 = vmatprep.subr.mxu0 0.0
      %2013 = vmatpush1.xpose.msra.mxu0 0.0
      %2014 = vmatprep.subr.mxu0 0.0
      %2015 = vmatpush1.xpose.msra.mxu0 0.0
      %2016 = vmatprep.subr.mxu0 0.0
      %2017 = vmatpush1.xpose.msra.mxu0 0.0
      %2018 = vmatprep.subr.mxu0 0.0
      %2019 = vmatpush1.xpose.msra.mxu0 0.0
      %2020 = vmatprep.subr.mxu0 0.0
      %2021 = vmatpush1.xpose.msra.mxu0 0.0
      %2022 = vmatprep.subr.mxu0 0.0
      %2023 = vmatpush1.xpose.msra.mxu0 0.0
      %2024 = vmatprep.subr.mxu0 0.0
      %2025 = vmatpush1.xpose.msra.mxu0 0.0
      %2026 = vmatprep.subr.mxu0 0.0
      %2027 = vmatpush1.xpose.msra.mxu0 0.0
      %2028 = vmatprep.subr.mxu0 0.0
      %2029 = vmatpush1.xpose.msra.mxu0 0.0
      %2030 = vmatprep.subr.mxu0 0.0
      %2031 = vmatpush1.xpose.msra.mxu0 0.0
      %2032 = vmatprep.subr.mxu0 0.0
      %2033 = vmatpush1.xpose.msra.mxu0 0.0
      %2034 = vmatprep.subr.mxu0 0.0
      %2035 = vmatpush1.xpose.msra.mxu0 0.0
      %2036 = vmatprep.subr.mxu0 0.0
      %2037 = vmatpush1.xpose.msra.mxu0 0.0
      %2038 = vmatprep.subr.mxu0 0.0
      %2039 = vmatpush1.xpose.msra.mxu0 0.0
      %2040 = vmatprep.subr.mxu0 0.0
      %2041 = vmatpush1.xpose.msra.mxu0 0.0
      %2042 = vmatprep.subr.mxu0 0.0
      %2043 = vmatpush1.xpose.msra.mxu0 0.0
      %2044 = vmatprep.subr.mxu0 0.0
      %2045 = vmatpush1.xpose.msra.mxu0 0.0
      %2046 = vmatprep.subr.mxu0 0.0
      %2047 = vmatpush1.xpose.msra.mxu0 0.0
      %2048 = vmatprep.subr.mxu0 0.0
      %2049 = vmatpush1.xpose.msra.mxu0 0.0
      %2050 = vmatprep.subr.mxu0 0.0
      %2051 = vmatpush1.xpose.msra.mxu0 0.0
      %2052 = vmatprep.subr.mxu0 0.0
      %2053 = vmatpush1.xpose.msra.mxu0 0.0
      %2054 = vmatprep.subr.mxu0 0.0
      %2055 = vmatpush1.xpose.msra.mxu0 0.0
      %2056 = vmatprep.subr.mxu0 0.0
      %2057 = vmatpush1.xpose.msra.mxu0 0.0
      %2058 = vmatprep.subr.mxu0 0.0
      %2059 = vmatpush1.xpose.msra.mxu0 0.0
      %2060 = vmatprep.mubr.f32.mxu0 0.0
      %v2061 = vand.u32 %v1837, 4294901760
      %v2062 = vsub.f32 %v1837, %v2061
      %2063 = vmatmul.mubr.f32.gmra.mrb[0].mxu0 %v2062
      %v2064 = vpop.f32.mrb[0].mxu0
      %v2065 = vadd.f32 %v1991, %v2064
      %v2066 = vpop.f32.mrb[0].mxu0
      %2067 = vdwg.mxu0
      %2068 = vmatprep.subr.mxu0 0.0
      %v2069 = vand.u32 %v1840, 4294901760
      %2070 = vmatpush1.xpose.msra.mxu0 %v2069
      %2071 = vmatprep.subr.mxu0 0.0
      %2072 = vmatpush1.xpose.msra.mxu0 0.0
      %2073 = vmatprep.subr.mxu0 0.0
      %2074 = vmatpush1.xpose.msra.mxu0 0.0
      %2075 = vmatprep.subr.mxu0 0.0
      %2076 = vmatpush1.xpose.msra.mxu0 0.0
      %2077 = vmatprep.subr.mxu0 0.0
      %2078 = vmatpush1.xpose.msra.mxu0 0.0
      %2079 = vmatprep.subr.mxu0 0.0
      %2080 = vmatpush1.xpose.msra.mxu0 0.0
      %2081 = vmatprep.subr.mxu0 0.0
      %2082 = vmatpush1.xpose.msra.mxu0 0.0
      %2083 = vmatprep.subr.mxu0 0.0
      %2084 = vmatpush1.xpose.msra.mxu0 0.0
      %2085 = vmatprep.subr.mxu0 0.0
      %2086 = vmatpush1.xpose.msra.mxu0 0.0
      %2087 = vmatprep.subr.mxu0 0.0
      %2088 = vmatpush1.xpose.msra.mxu0 0.0
      %2089 = vmatprep.subr.mxu0 0.0
      %2090 = vmatpush1.xpose.msra.mxu0 0.0
      %2091 = vmatprep.subr.mxu0 0.0
      %2092 = vmatpush1.xpose.msra.mxu0 0.0
      %2093 = vmatprep.subr.mxu0 0.0
      %2094 = vmatpush1.xpose.msra.mxu0 0.0
      %2095 = vmatprep.subr.mxu0 0.0
      %2096 = vmatpush1.xpose.msra.mxu0 0.0
      %2097 = vmatprep.subr.mxu0 0.0
      %2098 = vmatpush1.xpose.msra.mxu0 0.0
      %2099 = vmatprep.subr.mxu0 0.0
      %2100 = vmatpush1.xpose.msra.mxu0 0.0
      %2101 = vmatprep.subr.mxu0 0.0
      %2102 = vmatpush1.xpose.msra.mxu0 0.0
      %2103 = vmatprep.subr.mxu0 0.0
      %2104 = vmatpush1.xpose.msra.mxu0 0.0
      %2105 = vmatprep.subr.mxu0 0.0
      %2106 = vmatpush1.xpose.msra.mxu0 0.0
      %2107 = vmatprep.subr.mxu0 0.0
      %2108 = vmatpush1.xpose.msra.mxu0 0.0
      %2109 = vmatprep.subr.mxu0 0.0
      %2110 = vmatpush1.xpose.msra.mxu0 0.0
      %2111 = vmatprep.subr.mxu0 0.0
      %2112 = vmatpush1.xpose.msra.mxu0 0.0
      %2113 = vmatprep.subr.mxu0 0.0
      %2114 = vmatpush1.xpose.msra.mxu0 0.0
      %2115 = vmatprep.subr.mxu0 0.0
      %2116 = vmatpush1.xpose.msra.mxu0 0.0
      %2117 = vmatprep.subr.mxu0 0.0
      %2118 = vmatpush1.xpose.msra.mxu0 0.0
      %2119 = vmatprep.subr.mxu0 0.0
      %2120 = vmatpush1.xpose.msra.mxu0 0.0
      %2121 = vmatprep.subr.mxu0 0.0
      %2122 = vmatpush1.xpose.msra.mxu0 0.0
      %2123 = vmatprep.subr.mxu0 0.0
      %2124 = vmatpush1.xpose.msra.mxu0 0.0
      %2125 = vmatprep.subr.mxu0 0.0
      %2126 = vmatpush1.xpose.msra.mxu0 0.0
      %2127 = vmatprep.subr.mxu0 0.0
      %2128 = vmatpush1.xpose.msra.mxu0 0.0
      %2129 = vmatprep.subr.mxu0 0.0
      %2130 = vmatpush1.xpose.msra.mxu0 0.0
      %2131 = vmatprep.subr.mxu0 0.0
      %2132 = vmatpush1.xpose.msra.mxu0 0.0
      %2133 = vmatprep.mubr.f32.mxu0 0.0
      %v2134 = vand.u32 %v1837, 4294901760
      %v2135 = vsub.f32 %v1837, %v2134
      %v2136 = vand.u32 %v2135, 4294901760
      %2137 = vmatmul.mubr.f32.gmra.mrb[0].mxu0 %v2136
      %v2138 = vpop.f32.mrb[0].mxu0
      %v2139 = vadd.f32 %v2065, %v2138
      %v2140 = vpop.f32.mrb[0].mxu0
      %2141 = vdwg.mxu0
      %2142 = vmatprep.subr.mxu0 0.0
      %v2143 = vand.u32 %v1840, 4294901760
      %v2144 = vsub.f32 %v1840, %v2143
      %v2145 = vand.u32 %v2144, 4294901760
      %2146 = vmatpush1.xpose.msra.mxu0 %v2145
      %2147 = vmatprep.subr.mxu0 0.0
      %2148 = vmatpush1.xpose.msra.mxu0 0.0
      %2149 = vmatprep.subr.mxu0 0.0
      %2150 = vmatpush1.xpose.msra.mxu0 0.0
      %2151 = vmatprep.subr.mxu0 0.0
      %2152 = vmatpush1.xpose.msra.mxu0 0.0
      %2153 = vmatprep.subr.mxu0 0.0
      %2154 = vmatpush1.xpose.msra.mxu0 0.0
      %2155 = vmatprep.subr.mxu0 0.0
      %2156 = vmatpush1.xpose.msra.mxu0 0.0
      %2157 = vmatprep.subr.mxu0 0.0
      %2158 = vmatpush1.xpose.msra.mxu0 0.0
      %2159 = vmatprep.subr.mxu0 0.0
      %2160 = vmatpush1.xpose.msra.mxu0 0.0
      %2161 = vmatprep.subr.mxu0 0.0
      %2162 = vmatpush1.xpose.msra.mxu0 0.0
      %2163 = vmatprep.subr.mxu0 0.0
      %2164 = vmatpush1.xpose.msra.mxu0 0.0
      %2165 = vmatprep.subr.mxu0 0.0
      %2166 = vmatpush1.xpose.msra.mxu0 0.0
      %2167 = vmatprep.subr.mxu0 0.0
      %2168 = vmatpush1.xpose.msra.mxu0 0.0
      %2169 = vmatprep.subr.mxu0 0.0
      %2170 = vmatpush1.xpose.msra.mxu0 0.0
      %2171 = vmatprep.subr.mxu0 0.0
      %2172 = vmatpush1.xpose.msra.mxu0 0.0
      %2173 = vmatprep.subr.mxu0 0.0
      %2174 = vmatpush1.xpose.msra.mxu0 0.0
      %2175 = vmatprep.subr.mxu0 0.0
      %2176 = vmatpush1.xpose.msra.mxu0 0.0
      %2177 = vmatprep.subr.mxu0 0.0
      %2178 = vmatpush1.xpose.msra.mxu0 0.0
      %2179 = vmatprep.subr.mxu0 0.0
      %2180 = vmatpush1.xpose.msra.mxu0 0.0
      %2181 = vmatprep.subr.mxu0 0.0
      %2182 = vmatpush1.xpose.msra.mxu0 0.0
      %2183 = vmatprep.subr.mxu0 0.0
      %2184 = vmatpush1.xpose.msra.mxu0 0.0
      %2185 = vmatprep.subr.mxu0 0.0
      %2186 = vmatpush1.xpose.msra.mxu0 0.0
      %2187 = vmatprep.subr.mxu0 0.0
      %2188 = vmatpush1.xpose.msra.mxu0 0.0
      %2189 = vmatprep.subr.mxu0 0.0
      %2190 = vmatpush1.xpose.msra.mxu0 0.0
      %2191 = vmatprep.subr.mxu0 0.0
      %2192 = vmatpush1.xpose.msra.mxu0 0.0
      %2193 = vmatprep.subr.mxu0 0.0
      %2194 = vmatpush1.xpose.msra.mxu0 0.0
      %2195 = vmatprep.subr.mxu0 0.0
      %2196 = vmatpush1.xpose.msra.mxu0 0.0
      %2197 = vmatprep.subr.mxu0 0.0
      %2198 = vmatpush1.xpose.msra.mxu0 0.0
      %2199 = vmatprep.subr.mxu0 0.0
      %2200 = vmatpush1.xpose.msra.mxu0 0.0
      %2201 = vmatprep.subr.mxu0 0.0
      %2202 = vmatpush1.xpose.msra.mxu0 0.0
      %2203 = vmatprep.subr.mxu0 0.0
      %2204 = vmatpush1.xpose.msra.mxu0 0.0
      %2205 = vmatprep.subr.mxu0 0.0
      %2206 = vmatpush1.xpose.msra.mxu0 0.0
      %2207 = vmatprep.subr.mxu0 0.0
      %2208 = vmatpush1.xpose.msra.mxu0 0.0
      %2209 = vmatprep.mubr.f32.mxu0 0.0
      %v2210 = vand.u32 %v1837, 4294901760
      %2211 = vmatmul.mubr.f32.gmra.mrb[0].mxu0 %v2210
      %v2212 = vpop.f32.mrb[0].mxu0
      %v2213 = vadd.f32 %v2139, %v2212
      %v2214 = vpop.f32.mrb[0].mxu0
      %2215 = vdwg.mxu0
      %2216 = vmatprep.subr.mxu0 0.0
      %v2217 = vand.u32 %v1840, 4294901760
      %2218 = vmatpush1.xpose.msra.mxu0 %v2217
      %2219 = vmatprep.subr.mxu0 0.0
      %2220 = vmatpush1.xpose.msra.mxu0 0.0
      %2221 = vmatprep.subr.mxu0 0.0
      %2222 = vmatpush1.xpose.msra.mxu0 0.0
      %2223 = vmatprep.subr.mxu0 0.0
      %2224 = vmatpush1.xpose.msra.mxu0 0.0
      %2225 = vmatprep.subr.mxu0 0.0
      %2226 = vmatpush1.xpose.msra.mxu0 0.0
      %2227 = vmatprep.subr.mxu0 0.0
      %2228 = vmatpush1.xpose.msra.mxu0 0.0
      %2229 = vmatprep.subr.mxu0 0.0
      %2230 = vmatpush1.xpose.msra.mxu0 0.0
      %2231 = vmatprep.subr.mxu0 0.0
      %2232 = vmatpush1.xpose.msra.mxu0 0.0
      %2233 = vmatprep.subr.mxu0 0.0
      %2234 = vmatpush1.xpose.msra.mxu0 0.0
      %2235 = vmatprep.subr.mxu0 0.0
      %2236 = vmatpush1.xpose.msra.mxu0 0.0
      %2237 = vmatprep.subr.mxu0 0.0
      %2238 = vmatpush1.xpose.msra.mxu0 0.0
      %2239 = vmatprep.subr.mxu0 0.0
      %2240 = vmatpush1.xpose.msra.mxu0 0.0
      %2241 = vmatprep.subr.mxu0 0.0
      %2242 = vmatpush1.xpose.msra.mxu0 0.0
      %2243 = vmatprep.subr.mxu0 0.0
      %2244 = vmatpush1.xpose.msra.mxu0 0.0
      %2245 = vmatprep.subr.mxu0 0.0
      %2246 = vmatpush1.xpose.msra.mxu0 0.0
      %2247 = vmatprep.subr.mxu0 0.0
      %2248 = vmatpush1.xpose.msra.mxu0 0.0
      %2249 = vmatprep.subr.mxu0 0.0
      %2250 = vmatpush1.xpose.msra.mxu0 0.0
      %2251 = vmatprep.subr.mxu0 0.0
      %2252 = vmatpush1.xpose.msra.mxu0 0.0
      %2253 = vmatprep.subr.mxu0 0.0
      %2254 = vmatpush1.xpose.msra.mxu0 0.0
      %2255 = vmatprep.subr.mxu0 0.0
      %2256 = vmatpush1.xpose.msra.mxu0 0.0
      %2257 = vmatprep.subr.mxu0 0.0
      %2258 = vmatpush1.xpose.msra.mxu0 0.0
      %2259 = vmatprep.subr.mxu0 0.0
      %2260 = vmatpush1.xpose.msra.mxu0 0.0
      %2261 = vmatprep.subr.mxu0 0.0
      %2262 = vmatpush1.xpose.msra.mxu0 0.0
      %2263 = vmatprep.subr.mxu0 0.0
      %2264 = vmatpush1.xpose.msra.mxu0 0.0
      %2265 = vmatprep.subr.mxu0 0.0
      %2266 = vmatpush1.xpose.msra.mxu0 0.0
      %2267 = vmatprep.subr.mxu0 0.0
      %2268 = vmatpush1.xpose.msra.mxu0 0.0
      %2269 = vmatprep.subr.mxu0 0.0
      %2270 = vmatpush1.xpose.msra.mxu0 0.0
      %2271 = vmatprep.subr.mxu0 0.0
      %2272 = vmatpush1.xpose.msra.mxu0 0.0
      %2273 = vmatprep.subr.mxu0 0.0
      %2274 = vmatpush1.xpose.msra.mxu0 0.0
      %2275 = vmatprep.subr.mxu0 0.0
      %2276 = vmatpush1.xpose.msra.mxu0 0.0
      %2277 = vmatprep.subr.mxu0 0.0
      %2278 = vmatpush1.xpose.msra.mxu0 0.0
      %2279 = vmatprep.subr.mxu0 0.0
      %2280 = vmatpush1.xpose.msra.mxu0 0.0
      %2281 = vmatprep.mubr.f32.mxu0 0.0
      %v2282 = vand.u32 %v1837, 4294901760
      %2283 = vmatmul.mubr.f32.gmra.mrb[0].mxu0 %v2282
      %v2284 = vpop.f32.mrb[0].mxu0
      %v2285 = vadd.f32 %v2213, %v2284
      %v2286 = vpop.f32.mrb[0].mxu0
      %2287 = vdwg.mxu0
      %v2288 = vld [vmem:[#allocation3] sm:$0xff]
      %v2289 = vld [vmem:[#allocation3 + $0x8] sm:$0xff]
      %v2290 = vld [vmem:[#allocation3 + $0x10] sm:$0xff]
      %v2291 = vld [vmem:[#allocation3 + $0x18] sm:$0xff]
      %v2292 = vsel %vm479, %v929, -inf
      %2293 = vmax.xlane.f32.xlu0 %v2292
      %v2294 = vpop.xlane.xlu0 %2293
      %v2295 = vsel %vm479, %v1381, -inf
      %2296 = vmax.xlane.f32.xlu0 %v2295
      %v2297 = vpop.xlane.xlu0 %2296
      %v2298 = vsel %vm479, %v1833, -inf
      %2299 = vmax.xlane.f32.xlu0 %v2298
      %v2300 = vpop.xlane.xlu0 %2299
      %v2301 = vsel %vm479, %v2285, -inf
      %2302 = vmax.xlane.f32.xlu0 %v2301
      %v2303 = vpop.xlane.xlu0 %2302
      %v2304 = vmax.f32 %v2288, %v2294
      %v2305 = vmax.f32 %v2289, %v2297
      %v2306 = vmax.f32 %v2290, %v2300
      %v2307 = vmax.f32 %v2291, %v2303
      %v2308 = vsub.f32 %v2288, %v2304
      %v2309 = vsub.f32 %v2289, %v2305
      %v2310 = vsub.f32 %v2290, %v2306
      %v2311 = vsub.f32 %v2291, %v2307
      %v2312 = vmul.f32 %v2308, 1.442695
      %v2313 = vpow.pop %v2312
      %v2314 = vmul.f32 %v2309, 1.442695
      %v2315 = vpow.pop %v2314
      %v2316 = vmul.f32 %v2310, 1.442695
      %v2317 = vpow.pop %v2316
      %v2318 = vmul.f32 %v2311, 1.442695
      %v2319 = vpow.pop %v2318
      %2321 = vset.pattern.permute.xlu0 0
      %2322 = vperm.xlu0 %2321, %v2304
      %v2323 = vpop.permute.xlu0 %2322
      %2326 = vset.pattern.permute.xlu0 0
      %2327 = vperm.xlu0 %2326, %v2305
      %v2328 = vpop.permute.xlu0 %2327
      %2331 = vset.pattern.permute.xlu0 0
      %2332 = vperm.xlu0 %2331, %v2306
      %v2333 = vpop.permute.xlu0 %2332
      %2336 = vset.pattern.permute.xlu0 0
      %2337 = vperm.xlu0 %2336, %v2307
      %v2338 = vpop.permute.xlu0 %2337
      %v2340 = vsub.f32 %v929, %v2323
      %v2341 = vsub.f32 %v1381, %v2328
      %v2342 = vsub.f32 %v1833, %v2333
      %v2343 = vsub.f32 %v2285, %v2338
      %v2344 = vmul.f32 %v2340, 1.442695
      %v2345 = vpow.pop %v2344
      %v2346 = vmul.f32 %v2341, 1.442695
      %v2347 = vpow.pop %v2346
      %v2348 = vmul.f32 %v2342, 1.442695
      %v2349 = vpow.pop %v2348
      %v2350 = vmul.f32 %v2343, 1.442695
      %v2351 = vpow.pop %v2350
      %v2352 = vld [vmem:[#allocation4] sm:$0xff]
      %v2353 = vld [vmem:[#allocation4 + $0x8] sm:$0xff]
      %v2354 = vld [vmem:[#allocation4 + $0x10] sm:$0xff]
      %v2355 = vld [vmem:[#allocation4 + $0x18] sm:$0xff]
      %v2356 = vmul.f32 %v2313, %v2352
      %v2357 = vmul.f32 %v2315, %v2353
      %v2358 = vmul.f32 %v2317, %v2354
      %v2359 = vmul.f32 %v2319, %v2355
      %v2360 = vsel %vm479, %v2345, 0.0
      %2361 = vadd.xlane.f32.xlu0 %v2360
      %v2362 = vpop.xlane.xlu0 %2361
      %v2363 = vsel %vm479, %v2347, 0.0
      %2364 = vadd.xlane.f32.xlu0 %v2363
      %v2365 = vpop.xlane.xlu0 %2364
      %v2366 = vsel %vm479, %v2349, 0.0
      %2367 = vadd.xlane.f32.xlu0 %v2366
      %v2368 = vpop.xlane.xlu0 %2367
      %v2369 = vsel %vm479, %v2351, 0.0
      %2370 = vadd.xlane.f32.xlu0 %v2369
      %v2371 = vpop.xlane.xlu0 %2370
      %v2372 = vadd.f32 %v2356, %v2362
      %v2373 = vadd.f32 %v2357, %v2365
      %v2374 = vadd.f32 %v2358, %v2368
      %v2375 = vadd.f32 %v2359, %v2371
      %vm2376 = vcmask 7168
      %2377 = vst.msk [vmem:[#allocation4] sm:$0xff] %vm2376, %v2372
      %2378 = vst.msk [vmem:[#allocation4 + $0x8] sm:$0xff] %vm2376, %v2373
      %2379 = vst.msk [vmem:[#allocation4 + $0x10] sm:$0xff] %vm2376, %v2374
      %2380 = vst.msk [vmem:[#allocation4 + $0x18] sm:$0xff] %vm2376, %v2375
      %v2381 = vld [vmem:[#allocation2] sm:$0xff]
      %v2382 = vld [vmem:[#allocation2 + $0x8] sm:$0xff]
      %v2383 = vld [vmem:[#allocation2 + $0x10] sm:$0xff]
      %v2384 = vld [vmem:[#allocation2 + $0x18] sm:$0xff]
      %2386 = vset.pattern.permute.xlu0 0
      %2387 = vperm.xlu0 %2386, %v2313
      %v2388 = vpop.permute.xlu0 %2387
      %2391 = vset.pattern.permute.xlu0 0
      %2392 = vperm.xlu0 %2391, %v2315
      %v2393 = vpop.permute.xlu0 %2392
      %2396 = vset.pattern.permute.xlu0 0
      %2397 = vperm.xlu0 %2396, %v2317
      %v2398 = vpop.permute.xlu0 %2397
      %2401 = vset.pattern.permute.xlu0 0
      %2402 = vperm.xlu0 %2401, %v2319
      %v2403 = vpop.permute.xlu0 %2402
      %v2405 = vmul.f32 %v2388, %v2381
      %v2406 = vmul.f32 %v2393, %v2382
      %v2407 = vmul.f32 %v2398, %v2383
      %v2408 = vmul.f32 %v2403, %v2384
      %v2410 = vsel %vm479, %v2345, 0
      %2412 = vmatprep.subr.mxu0 0.0
      %v2413 = vand.u32 %v463, 4294901760
      %2414 = vmatpush1.msra.mxu0 %v2413
      %2415 = vmatprep.subr.mxu0 0.0
      %2416 = vmatpush1.msra.mxu0 0.0
      %2417 = vmatprep.subr.mxu0 0.0
      %2418 = vmatpush1.msra.mxu0 0.0
      %2419 = vmatprep.subr.mxu0 0.0
      %2420 = vmatpush1.msra.mxu0 0.0
      %2421 = vmatprep.subr.mxu0 0.0
      %2422 = vmatpush1.msra.mxu0 0.0
      %2423 = vmatprep.subr.mxu0 0.0
      %2424 = vmatpush1.msra.mxu0 0.0
      %2425 = vmatprep.subr.mxu0 0.0
      %2426 = vmatpush1.msra.mxu0 0.0
      %2427 = vmatprep.subr.mxu0 0.0
      %2428 = vmatpush1.msra.mxu0 0.0
      %2429 = vmatprep.subr.mxu0 0.0
      %2430 = vmatpush1.msra.mxu0 0.0
      %2431 = vmatprep.subr.mxu0 0.0
      %2432 = vmatpush1.msra.mxu0 0.0
      %2433 = vmatprep.subr.mxu0 0.0
      %2434 = vmatpush1.msra.mxu0 0.0
      %2435 = vmatprep.subr.mxu0 0.0
      %2436 = vmatpush1.msra.mxu0 0.0
      %2437 = vmatprep.subr.mxu0 0.0
      %2438 = vmatpush1.msra.mxu0 0.0
      %2439 = vmatprep.subr.mxu0 0.0
      %2440 = vmatpush1.msra.mxu0 0.0
      %2441 = vmatprep.subr.mxu0 0.0
      %2442 = vmatpush1.msra.mxu0 0.0
      %2443 = vmatprep.subr.mxu0 0.0
      %2444 = vmatpush1.msra.mxu0 0.0
      %2445 = vmatprep.subr.mxu0 0.0
      %2446 = vmatpush1.msra.mxu0 0.0
      %2447 = vmatprep.subr.mxu0 0.0
      %2448 = vmatpush1.msra.mxu0 0.0
      %2449 = vmatprep.subr.mxu0 0.0
      %2450 = vmatpush1.msra.mxu0 0.0
      %2451 = vmatprep.subr.mxu0 0.0
      %2452 = vmatpush1.msra.mxu0 0.0
      %2453 = vmatprep.subr.mxu0 0.0
      %2454 = vmatpush1.msra.mxu0 0.0
      %2455 = vmatprep.subr.mxu0 0.0
      %2456 = vmatpush1.msra.mxu0 0.0
      %2457 = vmatprep.subr.mxu0 0.0
      %2458 = vmatpush1.msra.mxu0 0.0
      %2459 = vmatprep.subr.mxu0 0.0
      %2460 = vmatpush1.msra.mxu0 0.0
      %2461 = vmatprep.subr.mxu0 0.0
      %2462 = vmatpush1.msra.mxu0 0.0
      %2463 = vmatprep.subr.mxu0 0.0
      %2464 = vmatpush1.msra.mxu0 0.0
      %2465 = vmatprep.subr.mxu0 0.0
      %2466 = vmatpush1.msra.mxu0 0.0
      %2467 = vmatprep.subr.mxu0 0.0
      %2468 = vmatpush1.msra.mxu0 0.0
      %2469 = vmatprep.subr.mxu0 0.0
      %2470 = vmatpush1.msra.mxu0 0.0
      %2471 = vmatprep.subr.mxu0 0.0
      %2472 = vmatpush1.msra.mxu0 0.0
      %2473 = vmatprep.subr.mxu0 0.0
      %2474 = vmatpush1.msra.mxu0 0.0
      %2475 = vmatprep.subr.mxu0 0.0
      %2476 = vmatpush1.msra.mxu0 0.0
      %2477 = vmatprep.mubr.f32.mxu0 0.0
      %v2478 = vand.u32 %v2410, 4294901760
      %v2479 = vsub.f32 %v2410, %v2478
      %v2480 = vand.u32 %v2479, 4294901760
      %v2481 = vsub.f32 %v2479, %v2480
      %v2482 = vand.u32 %v2481, 4294901760
      %2483 = vmatmul.mubr.f32.gmra.mrb[0].mxu0 %v2482
      %v2484 = vpop.f32.mrb[0].mxu0
      %v2485 = vadd.f32 0.0, %v2484
      %v2486 = vpop.f32.mrb[0].mxu0
      %2487 = vdwg.mxu0
      %2488 = vmatprep.subr.mxu0 0.0
      %v2489 = vand.u32 %v463, 4294901760
      %v2490 = vsub.f32 %v463, %v2489
      %v2491 = vand.u32 %v2490, 4294901760
      %v2492 = vsub.f32 %v2490, %v2491
      %v2493 = vand.u32 %v2492, 4294901760
      %2494 = vmatpush1.msra.mxu0 %v2493
      %2495 = vmatprep.subr.mxu0 0.0
      %2496 = vmatpush1.msra.mxu0 0.0
      %2497 = vmatprep.subr.mxu0 0.0
      %2498 = vmatpush1.msra.mxu0 0.0
      %2499 = vmatprep.subr.mxu0 0.0
      %2500 = vmatpush1.msra.mxu0 0.0
      %2501 = vmatprep.subr.mxu0 0.0
      %2502 = vmatpush1.msra.mxu0 0.0
      %2503 = vmatprep.subr.mxu0 0.0
      %2504 = vmatpush1.msra.mxu0 0.0
      %2505 = vmatprep.subr.mxu0 0.0
      %2506 = vmatpush1.msra.mxu0 0.0
      %2507 = vmatprep.subr.mxu0 0.0
      %2508 = vmatpush1.msra.mxu0 0.0
      %2509 = vmatprep.subr.mxu0 0.0
      %2510 = vmatpush1.msra.mxu0 0.0
      %2511 = vmatprep.subr.mxu0 0.0
      %2512 = vmatpush1.msra.mxu0 0.0
      %2513 = vmatprep.subr.mxu0 0.0
      %2514 = vmatpush1.msra.mxu0 0.0
      %2515 = vmatprep.subr.mxu0 0.0
      %2516 = vmatpush1.msra.mxu0 0.0
      %2517 = vmatprep.subr.mxu0 0.0
      %2518 = vmatpush1.msra.mxu0 0.0
      %2519 = vmatprep.subr.mxu0 0.0
      %2520 = vmatpush1.msra.mxu0 0.0
      %2521 = vmatprep.subr.mxu0 0.0
      %2522 = vmatpush1.msra.mxu0 0.0
      %2523 = vmatprep.subr.mxu0 0.0
      %2524 = vmatpush1.msra.mxu0 0.0
      %2525 = vmatprep.subr.mxu0 0.0
      %2526 = vmatpush1.msra.mxu0 0.0
      %2527 = vmatprep.subr.mxu0 0.0
      %2528 = vmatpush1.msra.mxu0 0.0
      %2529 = vmatprep.subr.mxu0 0.0
      %2530 = vmatpush1.msra.mxu0 0.0
      %2531 = vmatprep.subr.mxu0 0.0
      %2532 = vmatpush1.msra.mxu0 0.0
      %2533 = vmatprep.subr.mxu0 0.0
      %2534 = vmatpush1.msra.mxu0 0.0
      %2535 = vmatprep.subr.mxu0 0.0
      %2536 = vmatpush1.msra.mxu0 0.0
      %2537 = vmatprep.subr.mxu0 0.0
      %2538 = vmatpush1.msra.mxu0 0.0
      %2539 = vmatprep.subr.mxu0 0.0
      %2540 = vmatpush1.msra.mxu0 0.0
      %2541 = vmatprep.subr.mxu0 0.0
      %2542 = vmatpush1.msra.mxu0 0.0
      %2543 = vmatprep.subr.mxu0 0.0
      %2544 = vmatpush1.msra.mxu0 0.0
      %2545 = vmatprep.subr.mxu0 0.0
      %2546 = vmatpush1.msra.mxu0 0.0
      %2547 = vmatprep.subr.mxu0 0.0
      %2548 = vmatpush1.msra.mxu0 0.0
      %2549 = vmatprep.subr.mxu0 0.0
      %2550 = vmatpush1.msra.mxu0 0.0
      %2551 = vmatprep.subr.mxu0 0.0
      %2552 = vmatpush1.msra.mxu0 0.0
      %2553 = vmatprep.subr.mxu0 0.0
      %2554 = vmatpush1.msra.mxu0 0.0
      %2555 = vmatprep.subr.mxu0 0.0
      %2556 = vmatpush1.msra.mxu0 0.0
      %2557 = vmatprep.mubr.f32.mxu0 0.0
      %v2558 = vand.u32 %v2410, 4294901760
      %2559 = vmatmul.mubr.f32.gmra.mrb[0].mxu0 %v2558
      %v2560 = vpop.f32.mrb[0].mxu0
      %v2561 = vadd.f32 %v2485, %v2560
      %v2562 = vpop.f32.mrb[0].mxu0
      %2563 = vdwg.mxu0
      %2564 = vmatprep.subr.mxu0 0.0
      %v2565 = vand.u32 %v463, 4294901760
      %v2566 = vsub.f32 %v463, %v2565
      %2567 = vmatpush1.msra.mxu0 %v2566
      %2568 = vmatprep.subr.mxu0 0.0
      %2569 = vmatpush1.msra.mxu0 0.0
      %2570 = vmatprep.subr.mxu0 0.0
      %2571 = vmatpush1.msra.mxu0 0.0
      %2572 = vmatprep.subr.mxu0 0.0
      %2573 = vmatpush1.msra.mxu0 0.0
      %2574 = vmatprep.subr.mxu0 0.0
      %2575 = vmatpush1.msra.mxu0 0.0
      %2576 = vmatprep.subr.mxu0 0.0
      %2577 = vmatpush1.msra.mxu0 0.0
      %2578 = vmatprep.subr.mxu0 0.0
      %2579 = vmatpush1.msra.mxu0 0.0
      %2580 = vmatprep.subr.mxu0 0.0
      %2581 = vmatpush1.msra.mxu0 0.0
      %2582 = vmatprep.subr.mxu0 0.0
      %2583 = vmatpush1.msra.mxu0 0.0
      %2584 = vmatprep.subr.mxu0 0.0
      %2585 = vmatpush1.msra.mxu0 0.0
      %2586 = vmatprep.subr.mxu0 0.0
      %2587 = vmatpush1.msra.mxu0 0.0
      %2588 = vmatprep.subr.mxu0 0.0
      %2589 = vmatpush1.msra.mxu0 0.0
      %2590 = vmatprep.subr.mxu0 0.0
      %2591 = vmatpush1.msra.mxu0 0.0
      %2592 = vmatprep.subr.mxu0 0.0
      %2593 = vmatpush1.msra.mxu0 0.0
      %2594 = vmatprep.subr.mxu0 0.0
      %2595 = vmatpush1.msra.mxu0 0.0
      %2596 = vmatprep.subr.mxu0 0.0
      %2597 = vmatpush1.msra.mxu0 0.0
      %2598 = vmatprep.subr.mxu0 0.0
      %2599 = vmatpush1.msra.mxu0 0.0
      %2600 = vmatprep.subr.mxu0 0.0
      %2601 = vmatpush1.msra.mxu0 0.0
      %2602 = vmatprep.subr.mxu0 0.0
      %2603 = vmatpush1.msra.mxu0 0.0
      %2604 = vmatprep.subr.mxu0 0.0
      %2605 = vmatpush1.msra.mxu0 0.0
      %2606 = vmatprep.subr.mxu0 0.0
      %2607 = vmatpush1.msra.mxu0 0.0
      %2608 = vmatprep.subr.mxu0 0.0
      %2609 = vmatpush1.msra.mxu0 0.0
      %2610 = vmatprep.subr.mxu0 0.0
      %2611 = vmatpush1.msra.mxu0 0.0
      %2612 = vmatprep.subr.mxu0 0.0
      %2613 = vmatpush1.msra.mxu0 0.0
      %2614 = vmatprep.subr.mxu0 0.0
      %2615 = vmatpush1.msra.mxu0 0.0
      %2616 = vmatprep.subr.mxu0 0.0
      %2617 = vmatpush1.msra.mxu0 0.0
      %2618 = vmatprep.subr.mxu0 0.0
      %2619 = vmatpush1.msra.mxu0 0.0
      %2620 = vmatprep.subr.mxu0 0.0
      %2621 = vmatpush1.msra.mxu0 0.0
      %2622 = vmatprep.subr.mxu0 0.0
      %2623 = vmatpush1.msra.mxu0 0.0
      %2624 = vmatprep.subr.mxu0 0.0
      %2625 = vmatpush1.msra.mxu0 0.0
      %2626 = vmatprep.subr.mxu0 0.0
      %2627 = vmatpush1.msra.mxu0 0.0
      %2628 = vmatprep.subr.mxu0 0.0
      %2629 = vmatpush1.msra.mxu0 0.0
      %2630 = vmatprep.mubr.f32.mxu0 0.0
      %v2631 = vand.u32 %v2410, 4294901760
      %v2632 = vsub.f32 %v2410, %v2631
      %2633 = vmatmul.mubr.f32.gmra.mrb[0].mxu0 %v2632
      %v2634 = vpop.f32.mrb[0].mxu0
      %v2635 = vadd.f32 %v2561, %v2634
      %v2636 = vpop.f32.mrb[0].mxu0
      %2637 = vdwg.mxu0
      %2638 = vmatprep.subr.mxu0 0.0
      %v2639 = vand.u32 %v463, 4294901760
      %2640 = vmatpush1.msra.mxu0 %v2639
      %2641 = vmatprep.subr.mxu0 0.0
      %2642 = vmatpush1.msra.mxu0 0.0
      %2643 = vmatprep.subr.mxu0 0.0
      %2644 = vmatpush1.msra.mxu0 0.0
      %2645 = vmatprep.subr.mxu0 0.0
      %2646 = vmatpush1.msra.mxu0 0.0
      %2647 = vmatprep.subr.mxu0 0.0
      %2648 = vmatpush1.msra.mxu0 0.0
      %2649 = vmatprep.subr.mxu0 0.0
      %2650 = vmatpush1.msra.mxu0 0.0
      %2651 = vmatprep.subr.mxu0 0.0
      %2652 = vmatpush1.msra.mxu0 0.0
      %2653 = vmatprep.subr.mxu0 0.0
      %2654 = vmatpush1.msra.mxu0 0.0
      %2655 = vmatprep.subr.mxu0 0.0
      %2656 = vmatpush1.msra.mxu0 0.0
      %2657 = vmatprep.subr.mxu0 0.0
      %2658 = vmatpush1.msra.mxu0 0.0
      %2659 = vmatprep.subr.mxu0 0.0
      %2660 = vmatpush1.msra.mxu0 0.0
      %2661 = vmatprep.subr.mxu0 0.0
      %2662 = vmatpush1.msra.mxu0 0.0
      %2663 = vmatprep.subr.mxu0 0.0
      %2664 = vmatpush1.msra.mxu0 0.0
      %2665 = vmatprep.subr.mxu0 0.0
      %2666 = vmatpush1.msra.mxu0 0.0
      %2667 = vmatprep.subr.mxu0 0.0
      %2668 = vmatpush1.msra.mxu0 0.0
      %2669 = vmatprep.subr.mxu0 0.0
      %2670 = vmatpush1.msra.mxu0 0.0
      %2671 = vmatprep.subr.mxu0 0.0
      %2672 = vmatpush1.msra.mxu0 0.0
      %2673 = vmatprep.subr.mxu0 0.0
      %2674 = vmatpush1.msra.mxu0 0.0
      %2675 = vmatprep.subr.mxu0 0.0
      %2676 = vmatpush1.msra.mxu0 0.0
      %2677 = vmatprep.subr.mxu0 0.0
      %2678 = vmatpush1.msra.mxu0 0.0
      %2679 = vmatprep.subr.mxu0 0.0
      %2680 = vmatpush1.msra.mxu0 0.0
      %2681 = vmatprep.subr.mxu0 0.0
      %2682 = vmatpush1.msra.mxu0 0.0
      %2683 = vmatprep.subr.mxu0 0.0
      %2684 = vmatpush1.msra.mxu0 0.0
      %2685 = vmatprep.subr.mxu0 0.0
      %2686 = vmatpush1.msra.mxu0 0.0
      %2687 = vmatprep.subr.mxu0 0.0
      %2688 = vmatpush1.msra.mxu0 0.0
      %2689 = vmatprep.subr.mxu0 0.0
      %2690 = vmatpush1.msra.mxu0 0.0
      %2691 = vmatprep.subr.mxu0 0.0
      %2692 = vmatpush1.msra.mxu0 0.0
      %2693 = vmatprep.subr.mxu0 0.0
      %2694 = vmatpush1.msra.mxu0 0.0
      %2695 = vmatprep.subr.mxu0 0.0
      %2696 = vmatpush1.msra.mxu0 0.0
      %2697 = vmatprep.subr.mxu0 0.0
      %2698 = vmatpush1.msra.mxu0 0.0
      %2699 = vmatprep.subr.mxu0 0.0
      %2700 = vmatpush1.msra.mxu0 0.0
      %2701 = vmatprep.subr.mxu0 0.0
      %2702 = vmatpush1.msra.mxu0 0.0
      %2703 = vmatprep.mubr.f32.mxu0 0.0
      %v2704 = vand.u32 %v2410, 4294901760
      %v2705 = vsub.f32 %v2410, %v2704
      %v2706 = vand.u32 %v2705, 4294901760
      %2707 = vmatmul.mubr.f32.gmra.mrb[0].mxu0 %v2706
      %v2708 = vpop.f32.mrb[0].mxu0
      %v2709 = vadd.f32 %v2635, %v2708
      %v2710 = vpop.f32.mrb[0].mxu0
      %2711 = vdwg.mxu0
      %2712 = vmatprep.subr.mxu0 0.0
      %v2713 = vand.u32 %v463, 4294901760
      %v2714 = vsub.f32 %v463, %v2713
      %v2715 = vand.u32 %v2714, 4294901760
      %2716 = vmatpush1.msra.mxu0 %v2715
      %2717 = vmatprep.subr.mxu0 0.0
      %2718 = vmatpush1.msra.mxu0 0.0
      %2719 = vmatprep.subr.mxu0 0.0
      %2720 = vmatpush1.msra.mxu0 0.0
      %2721 = vmatprep.subr.mxu0 0.0
      %2722 = vmatpush1.msra.mxu0 0.0
      %2723 = vmatprep.subr.mxu0 0.0
      %2724 = vmatpush1.msra.mxu0 0.0
      %2725 = vmatprep.subr.mxu0 0.0
      %2726 = vmatpush1.msra.mxu0 0.0
      %2727 = vmatprep.subr.mxu0 0.0
      %2728 = vmatpush1.msra.mxu0 0.0
      %2729 = vmatprep.subr.mxu0 0.0
      %2730 = vmatpush1.msra.mxu0 0.0
      %2731 = vmatprep.subr.mxu0 0.0
      %2732 = vmatpush1.msra.mxu0 0.0
      %2733 = vmatprep.subr.mxu0 0.0
      %2734 = vmatpush1.msra.mxu0 0.0
      %2735 = vmatprep.subr.mxu0 0.0
      %2736 = vmatpush1.msra.mxu0 0.0
      %2737 = vmatprep.subr.mxu0 0.0
      %2738 = vmatpush1.msra.mxu0 0.0
      %2739 = vmatprep.subr.mxu0 0.0
      %2740 = vmatpush1.msra.mxu0 0.0
      %2741 = vmatprep.subr.mxu0 0.0
      %2742 = vmatpush1.msra.mxu0 0.0
      %2743 = vmatprep.subr.mxu0 0.0
      %2744 = vmatpush1.msra.mxu0 0.0
      %2745 = vmatprep.subr.mxu0 0.0
      %2746 = vmatpush1.msra.mxu0 0.0
      %2747 = vmatprep.subr.mxu0 0.0
      %2748 = vmatpush1.msra.mxu0 0.0
      %2749 = vmatprep.subr.mxu0 0.0
      %2750 = vmatpush1.msra.mxu0 0.0
      %2751 = vmatprep.subr.mxu0 0.0
      %2752 = vmatpush1.msra.mxu0 0.0
      %2753 = vmatprep.subr.mxu0 0.0
      %2754 = vmatpush1.msra.mxu0 0.0
      %2755 = vmatprep.subr.mxu0 0.0
      %2756 = vmatpush1.msra.mxu0 0.0
      %2757 = vmatprep.subr.mxu0 0.0
      %2758 = vmatpush1.msra.mxu0 0.0
      %2759 = vmatprep.subr.mxu0 0.0
      %2760 = vmatpush1.msra.mxu0 0.0
      %2761 = vmatprep.subr.mxu0 0.0
      %2762 = vmatpush1.msra.mxu0 0.0
      %2763 = vmatprep.subr.mxu0 0.0
      %2764 = vmatpush1.msra.mxu0 0.0
      %2765 = vmatprep.subr.mxu0 0.0
      %2766 = vmatpush1.msra.mxu0 0.0
      %2767 = vmatprep.subr.mxu0 0.0
      %2768 = vmatpush1.msra.mxu0 0.0
      %2769 = vmatprep.subr.mxu0 0.0
      %2770 = vmatpush1.msra.mxu0 0.0
      %2771 = vmatprep.subr.mxu0 0.0
      %2772 = vmatpush1.msra.mxu0 0.0
      %2773 = vmatprep.subr.mxu0 0.0
      %2774 = vmatpush1.msra.mxu0 0.0
      %2775 = vmatprep.subr.mxu0 0.0
      %2776 = vmatpush1.msra.mxu0 0.0
      %2777 = vmatprep.subr.mxu0 0.0
      %2778 = vmatpush1.msra.mxu0 0.0
      %2779 = vmatprep.mubr.f32.mxu0 0.0
      %v2780 = vand.u32 %v2410, 4294901760
      %2781 = vmatmul.mubr.f32.gmra.mrb[0].mxu0 %v2780
      %v2782 = vpop.f32.mrb[0].mxu0
      %v2783 = vadd.f32 %v2709, %v2782
      %v2784 = vpop.f32.mrb[0].mxu0
      %2785 = vdwg.mxu0
      %2786 = vmatprep.subr.mxu0 0.0
      %v2787 = vand.u32 %v463, 4294901760
      %2788 = vmatpush1.msra.mxu0 %v2787
      %2789 = vmatprep.subr.mxu0 0.0
      %2790 = vmatpush1.msra.mxu0 0.0
      %2791 = vmatprep.subr.mxu0 0.0
      %2792 = vmatpush1.msra.mxu0 0.0
      %2793 = vmatprep.subr.mxu0 0.0
      %2794 = vmatpush1.msra.mxu0 0.0
      %2795 = vmatprep.subr.mxu0 0.0
      %2796 = vmatpush1.msra.mxu0 0.0
      %2797 = vmatprep.subr.mxu0 0.0
      %2798 = vmatpush1.msra.mxu0 0.0
      %2799 = vmatprep.subr.mxu0 0.0
      %2800 = vmatpush1.msra.mxu0 0.0
      %2801 = vmatprep.subr.mxu0 0.0
      %2802 = vmatpush1.msra.mxu0 0.0
      %2803 = vmatprep.subr.mxu0 0.0
      %2804 = vmatpush1.msra.mxu0 0.0
      %2805 = vmatprep.subr.mxu0 0.0
      %2806 = vmatpush1.msra.mxu0 0.0
      %2807 = vmatprep.subr.mxu0 0.0
      %2808 = vmatpush1.msra.mxu0 0.0
      %2809 = vmatprep.subr.mxu0 0.0
      %2810 = vmatpush1.msra.mxu0 0.0
      %2811 = vmatprep.subr.mxu0 0.0
      %2812 = vmatpush1.msra.mxu0 0.0
      %2813 = vmatprep.subr.mxu0 0.0
      %2814 = vmatpush1.msra.mxu0 0.0
      %2815 = vmatprep.subr.mxu0 0.0
      %2816 = vmatpush1.msra.mxu0 0.0
      %2817 = vmatprep.subr.mxu0 0.0
      %2818 = vmatpush1.msra.mxu0 0.0
      %2819 = vmatprep.subr.mxu0 0.0
      %2820 = vmatpush1.msra.mxu0 0.0
      %2821 = vmatprep.subr.mxu0 0.0
      %2822 = vmatpush1.msra.mxu0 0.0
      %2823 = vmatprep.subr.mxu0 0.0
      %2824 = vmatpush1.msra.mxu0 0.0
      %2825 = vmatprep.subr.mxu0 0.0
      %2826 = vmatpush1.msra.mxu0 0.0
      %2827 = vmatprep.subr.mxu0 0.0
      %2828 = vmatpush1.msra.mxu0 0.0
      %2829 = vmatprep.subr.mxu0 0.0
      %2830 = vmatpush1.msra.mxu0 0.0
      %2831 = vmatprep.subr.mxu0 0.0
      %2832 = vmatpush1.msra.mxu0 0.0
      %2833 = vmatprep.subr.mxu0 0.0
      %2834 = vmatpush1.msra.mxu0 0.0
      %2835 = vmatprep.subr.mxu0 0.0
      %2836 = vmatpush1.msra.mxu0 0.0
      %2837 = vmatprep.subr.mxu0 0.0
      %2838 = vmatpush1.msra.mxu0 0.0
      %2839 = vmatprep.subr.mxu0 0.0
      %2840 = vmatpush1.msra.mxu0 0.0
      %2841 = vmatprep.subr.mxu0 0.0
      %2842 = vmatpush1.msra.mxu0 0.0
      %2843 = vmatprep.subr.mxu0 0.0
      %2844 = vmatpush1.msra.mxu0 0.0
      %2845 = vmatprep.subr.mxu0 0.0
      %2846 = vmatpush1.msra.mxu0 0.0
      %2847 = vmatprep.subr.mxu0 0.0
      %2848 = vmatpush1.msra.mxu0 0.0
      %2849 = vmatprep.subr.mxu0 0.0
      %2850 = vmatpush1.msra.mxu0 0.0
      %2851 = vmatprep.mubr.f32.mxu0 0.0
      %v2852 = vand.u32 %v2410, 4294901760
      %2853 = vmatmul.mubr.f32.gmra.mrb[0].mxu0 %v2852
      %v2854 = vpop.f32.mrb[0].mxu0
      %v2855 = vadd.f32 %v2783, %v2854
      %v2856 = vpop.f32.mrb[0].mxu0
      %2857 = vdwg.mxu0
      %v2859 = vsel %vm479, %v2347, 0
      %2861 = vmatprep.subr.mxu0 0.0
      %v2862 = vand.u32 %v464, 4294901760
      %2863 = vmatpush1.msra.mxu0 %v2862
      %2864 = vmatprep.subr.mxu0 0.0
      %2865 = vmatpush1.msra.mxu0 0.0
      %2866 = vmatprep.subr.mxu0 0.0
      %2867 = vmatpush1.msra.mxu0 0.0
      %2868 = vmatprep.subr.mxu0 0.0
      %2869 = vmatpush1.msra.mxu0 0.0
      %2870 = vmatprep.subr.mxu0 0.0
      %2871 = vmatpush1.msra.mxu0 0.0
      %2872 = vmatprep.subr.mxu0 0.0
      %2873 = vmatpush1.msra.mxu0 0.0
      %2874 = vmatprep.subr.mxu0 0.0
      %2875 = vmatpush1.msra.mxu0 0.0
      %2876 = vmatprep.subr.mxu0 0.0
      %2877 = vmatpush1.msra.mxu0 0.0
      %2878 = vmatprep.subr.mxu0 0.0
      %2879 = vmatpush1.msra.mxu0 0.0
      %2880 = vmatprep.subr.mxu0 0.0
      %2881 = vmatpush1.msra.mxu0 0.0
      %2882 = vmatprep.subr.mxu0 0.0
      %2883 = vmatpush1.msra.mxu0 0.0
      %2884 = vmatprep.subr.mxu0 0.0
      %2885 = vmatpush1.msra.mxu0 0.0
      %2886 = vmatprep.subr.mxu0 0.0
      %2887 = vmatpush1.msra.mxu0 0.0
      %2888 = vmatprep.subr.mxu0 0.0
      %2889 = vmatpush1.msra.mxu0 0.0
      %2890 = vmatprep.subr.mxu0 0.0
      %2891 = vmatpush1.msra.mxu0 0.0
      %2892 = vmatprep.subr.mxu0 0.0
      %2893 = vmatpush1.msra.mxu0 0.0
      %2894 = vmatprep.subr.mxu0 0.0
      %2895 = vmatpush1.msra.mxu0 0.0
      %2896 = vmatprep.subr.mxu0 0.0
      %2897 = vmatpush1.msra.mxu0 0.0
      %2898 = vmatprep.subr.mxu0 0.0
      %2899 = vmatpush1.msra.mxu0 0.0
      %2900 = vmatprep.subr.mxu0 0.0
      %2901 = vmatpush1.msra.mxu0 0.0
      %2902 = vmatprep.subr.mxu0 0.0
      %2903 = vmatpush1.msra.mxu0 0.0
      %2904 = vmatprep.subr.mxu0 0.0
      %2905 = vmatpush1.msra.mxu0 0.0
      %2906 = vmatprep.subr.mxu0 0.0
      %2907 = vmatpush1.msra.mxu0 0.0
      %2908 = vmatprep.subr.mxu0 0.0
      %2909 = vmatpush1.msra.mxu0 0.0
      %2910 = vmatprep.subr.mxu0 0.0
      %2911 = vmatpush1.msra.mxu0 0.0
      %2912 = vmatprep.subr.mxu0 0.0
      %2913 = vmatpush1.msra.mxu0 0.0
      %2914 = vmatprep.subr.mxu0 0.0
      %2915 = vmatpush1.msra.mxu0 0.0
      %2916 = vmatprep.subr.mxu0 0.0
      %2917 = vmatpush1.msra.mxu0 0.0
      %2918 = vmatprep.subr.mxu0 0.0
      %2919 = vmatpush1.msra.mxu0 0.0
      %2920 = vmatprep.subr.mxu0 0.0
      %2921 = vmatpush1.msra.mxu0 0.0
      %2922 = vmatprep.subr.mxu0 0.0
      %2923 = vmatpush1.msra.mxu0 0.0
      %2924 = vmatprep.subr.mxu0 0.0
      %2925 = vmatpush1.msra.mxu0 0.0
      %2926 = vmatprep.mubr.f32.mxu0 0.0
      %v2927 = vand.u32 %v2859, 4294901760
      %v2928 = vsub.f32 %v2859, %v2927
      %v2929 = vand.u32 %v2928, 4294901760
      %v2930 = vsub.f32 %v2928, %v2929
      %v2931 = vand.u32 %v2930, 4294901760
      %2932 = vmatmul.mubr.f32.gmra.mrb[0].mxu0 %v2931
      %v2933 = vpop.f32.mrb[0].mxu0
      %v2934 = vadd.f32 0.0, %v2933
      %v2935 = vpop.f32.mrb[0].mxu0
      %2936 = vdwg.mxu0
      %2937 = vmatprep.subr.mxu0 0.0
      %v2938 = vand.u32 %v464, 4294901760
      %v2939 = vsub.f32 %v464, %v2938
      %v2940 = vand.u32 %v2939, 4294901760
      %v2941 = vsub.f32 %v2939, %v2940
      %v2942 = vand.u32 %v2941, 4294901760
      %2943 = vmatpush1.msra.mxu0 %v2942
      %2944 = vmatprep.subr.mxu0 0.0
      %2945 = vmatpush1.msra.mxu0 0.0
      %2946 = vmatprep.subr.mxu0 0.0
      %2947 = vmatpush1.msra.mxu0 0.0
      %2948 = vmatprep.subr.mxu0 0.0
      %2949 = vmatpush1.msra.mxu0 0.0
      %2950 = vmatprep.subr.mxu0 0.0
      %2951 = vmatpush1.msra.mxu0 0.0
      %2952 = vmatprep.subr.mxu0 0.0
      %2953 = vmatpush1.msra.mxu0 0.0
      %2954 = vmatprep.subr.mxu0 0.0
      %2955 = vmatpush1.msra.mxu0 0.0
      %2956 = vmatprep.subr.mxu0 0.0
      %2957 = vmatpush1.msra.mxu0 0.0
      %2958 = vmatprep.subr.mxu0 0.0
      %2959 = vmatpush1.msra.mxu0 0.0
      %2960 = vmatprep.subr.mxu0 0.0
      %2961 = vmatpush1.msra.mxu0 0.0
      %2962 = vmatprep.subr.mxu0 0.0
      %2963 = vmatpush1.msra.mxu0 0.0
      %2964 = vmatprep.subr.mxu0 0.0
      %2965 = vmatpush1.msra.mxu0 0.0
      %2966 = vmatprep.subr.mxu0 0.0
      %2967 = vmatpush1.msra.mxu0 0.0
      %2968 = vmatprep.subr.mxu0 0.0
      %2969 = vmatpush1.msra.mxu0 0.0
      %2970 = vmatprep.subr.mxu0 0.0
      %2971 = vmatpush1.msra.mxu0 0.0
      %2972 = vmatprep.subr.mxu0 0.0
      %2973 = vmatpush1.msra.mxu0 0.0
      %2974 = vmatprep.subr.mxu0 0.0
      %2975 = vmatpush1.msra.mxu0 0.0
      %2976 = vmatprep.subr.mxu0 0.0
      %2977 = vmatpush1.msra.mxu0 0.0
      %2978 = vmatprep.subr.mxu0 0.0
      %2979 = vmatpush1.msra.mxu0 0.0
      %2980 = vmatprep.subr.mxu0 0.0
      %2981 = vmatpush1.msra.mxu0 0.0
      %2982 = vmatprep.subr.mxu0 0.0
      %2983 = vmatpush1.msra.mxu0 0.0
      %2984 = vmatprep.subr.mxu0 0.0
      %2985 = vmatpush1.msra.mxu0 0.0
      %2986 = vmatprep.subr.mxu0 0.0
      %2987 = vmatpush1.msra.mxu0 0.0
      %2988 = vmatprep.subr.mxu0 0.0
      %2989 = vmatpush1.msra.mxu0 0.0
      %2990 = vmatprep.subr.mxu0 0.0
      %2991 = vmatpush1.msra.mxu0 0.0
      %2992 = vmatprep.subr.mxu0 0.0
      %2993 = vmatpush1.msra.mxu0 0.0
      %2994 = vmatprep.subr.mxu0 0.0
      %2995 = vmatpush1.msra.mxu0 0.0
      %2996 = vmatprep.subr.mxu0 0.0
      %2997 = vmatpush1.msra.mxu0 0.0
      %2998 = vmatprep.subr.mxu0 0.0
      %2999 = vmatpush1.msra.mxu0 0.0
      %3000 = vmatprep.subr.mxu0 0.0
      %3001 = vmatpush1.msra.mxu0 0.0
      %3002 = vmatprep.subr.mxu0 0.0
      %3003 = vmatpush1.msra.mxu0 0.0
      %3004 = vmatprep.subr.mxu0 0.0
      %3005 = vmatpush1.msra.mxu0 0.0
      %3006 = vmatprep.mubr.f32.mxu0 0.0
      %v3007 = vand.u32 %v2859, 4294901760
      %3008 = vmatmul.mubr.f32.gmra.mrb[0].mxu0 %v3007
      %v3009 = vpop.f32.mrb[0].mxu0
      %v3010 = vadd.f32 %v2934, %v3009
      %v3011 = vpop.f32.mrb[0].mxu0
      %3012 = vdwg.mxu0
      %3013 = vmatprep.subr.mxu0 0.0
      %v3014 = vand.u32 %v464, 4294901760
      %v3015 = vsub.f32 %v464, %v3014
      %3016 = vmatpush1.msra.mxu0 %v3015
      %3017 = vmatprep.subr.mxu0 0.0
      %3018 = vmatpush1.msra.mxu0 0.0
      %3019 = vmatprep.subr.mxu0 0.0
      %3020 = vmatpush1.msra.mxu0 0.0
      %3021 = vmatprep.subr.mxu0 0.0
      %3022 = vmatpush1.msra.mxu0 0.0
      %3023 = vmatprep.subr.mxu0 0.0
      %3024 = vmatpush1.msra.mxu0 0.0
      %3025 = vmatprep.subr.mxu0 0.0
      %3026 = vmatpush1.msra.mxu0 0.0
      %3027 = vmatprep.subr.mxu0 0.0
      %3028 = vmatpush1.msra.mxu0 0.0
      %3029 = vmatprep.subr.mxu0 0.0
      %3030 = vmatpush1.msra.mxu0 0.0
      %3031 = vmatprep.subr.mxu0 0.0
      %3032 = vmatpush1.msra.mxu0 0.0
      %3033 = vmatprep.subr.mxu0 0.0
      %3034 = vmatpush1.msra.mxu0 0.0
      %3035 = vmatprep.subr.mxu0 0.0
      %3036 = vmatpush1.msra.mxu0 0.0
      %3037 = vmatprep.subr.mxu0 0.0
      %3038 = vmatpush1.msra.mxu0 0.0
      %3039 = vmatprep.subr.mxu0 0.0
      %3040 = vmatpush1.msra.mxu0 0.0
      %3041 = vmatprep.subr.mxu0 0.0
      %3042 = vmatpush1.msra.mxu0 0.0
      %3043 = vmatprep.subr.mxu0 0.0
      %3044 = vmatpush1.msra.mxu0 0.0
      %3045 = vmatprep.subr.mxu0 0.0
      %3046 = vmatpush1.msra.mxu0 0.0
      %3047 = vmatprep.subr.mxu0 0.0
      %3048 = vmatpush1.msra.mxu0 0.0
      %3049 = vmatprep.subr.mxu0 0.0
      %3050 = vmatpush1.msra.mxu0 0.0
      %3051 = vmatprep.subr.mxu0 0.0
      %3052 = vmatpush1.msra.mxu0 0.0
      %3053 = vmatprep.subr.mxu0 0.0
      %3054 = vmatpush1.msra.mxu0 0.0
      %3055 = vmatprep.subr.mxu0 0.0
      %3056 = vmatpush1.msra.mxu0 0.0
      %3057 = vmatprep.subr.mxu0 0.0
      %3058 = vmatpush1.msra.mxu0 0.0
      %3059 = vmatprep.subr.mxu0 0.0
      %3060 = vmatpush1.msra.mxu0 0.0
      %3061 = vmatprep.subr.mxu0 0.0
      %3062 = vmatpush1.msra.mxu0 0.0
      %3063 = vmatprep.subr.mxu0 0.0
      %3064 = vmatpush1.msra.mxu0 0.0
      %3065 = vmatprep.subr.mxu0 0.0
      %3066 = vmatpush1.msra.mxu0 0.0
      %3067 = vmatprep.subr.mxu0 0.0
      %3068 = vmatpush1.msra.mxu0 0.0
      %3069 = vmatprep.subr.mxu0 0.0
      %3070 = vmatpush1.msra.mxu0 0.0
      %3071 = vmatprep.subr.mxu0 0.0
      %3072 = vmatpush1.msra.mxu0 0.0
      %3073 = vmatprep.subr.mxu0 0.0
      %3074 = vmatpush1.msra.mxu0 0.0
      %3075 = vmatprep.subr.mxu0 0.0
      %3076 = vmatpush1.msra.mxu0 0.0
      %3077 = vmatprep.subr.mxu0 0.0
      %3078 = vmatpush1.msra.mxu0 0.0
      %3079 = vmatprep.mubr.f32.mxu0 0.0
      %v3080 = vand.u32 %v2859, 4294901760
      %v3081 = vsub.f32 %v2859, %v3080
      %3082 = vmatmul.mubr.f32.gmra.mrb[0].mxu0 %v3081
      %v3083 = vpop.f32.mrb[0].mxu0
      %v3084 = vadd.f32 %v3010, %v3083
      %v3085 = vpop.f32.mrb[0].mxu0
      %3086 = vdwg.mxu0
      %3087 = vmatprep.subr.mxu0 0.0
      %v3088 = vand.u32 %v464, 4294901760
      %3089 = vmatpush1.msra.mxu0 %v3088
      %3090 = vmatprep.subr.mxu0 0.0
      %3091 = vmatpush1.msra.mxu0 0.0
      %3092 = vmatprep.subr.mxu0 0.0
      %3093 = vmatpush1.msra.mxu0 0.0
      %3094 = vmatprep.subr.mxu0 0.0
      %3095 = vmatpush1.msra.mxu0 0.0
      %3096 = vmatprep.subr.mxu0 0.0
      %3097 = vmatpush1.msra.mxu0 0.0
      %3098 = vmatprep.subr.mxu0 0.0
      %3099 = vmatpush1.msra.mxu0 0.0
      %3100 = vmatprep.subr.mxu0 0.0
      %3101 = vmatpush1.msra.mxu0 0.0
      %3102 = vmatprep.subr.mxu0 0.0
      %3103 = vmatpush1.msra.mxu0 0.0
      %3104 = vmatprep.subr.mxu0 0.0
      %3105 = vmatpush1.msra.mxu0 0.0
      %3106 = vmatprep.subr.mxu0 0.0
      %3107 = vmatpush1.msra.mxu0 0.0
      %3108 = vmatprep.subr.mxu0 0.0
      %3109 = vmatpush1.msra.mxu0 0.0
      %3110 = vmatprep.subr.mxu0 0.0
      %3111 = vmatpush1.msra.mxu0 0.0
      %3112 = vmatprep.subr.mxu0 0.0
      %3113 = vmatpush1.msra.mxu0 0.0
      %3114 = vmatprep.subr.mxu0 0.0
      %3115 = vmatpush1.msra.mxu0 0.0
      %3116 = vmatprep.subr.mxu0 0.0
      %3117 = vmatpush1.msra.mxu0 0.0
      %3118 = vmatprep.subr.mxu0 0.0
      %3119 = vmatpush1.msra.mxu0 0.0
      %3120 = vmatprep.subr.mxu0 0.0
      %3121 = vmatpush1.msra.mxu0 0.0
      %3122 = vmatprep.subr.mxu0 0.0
      %3123 = vmatpush1.msra.mxu0 0.0
      %3124 = vmatprep.subr.mxu0 0.0
      %3125 = vmatpush1.msra.mxu0 0.0
      %3126 = vmatprep.subr.mxu0 0.0
      %3127 = vmatpush1.msra.mxu0 0.0
      %3128 = vmatprep.subr.mxu0 0.0
      %3129 = vmatpush1.msra.mxu0 0.0
      %3130 = vmatprep.subr.mxu0 0.0
      %3131 = vmatpush1.msra.mxu0 0.0
      %3132 = vmatprep.subr.mxu0 0.0
      %3133 = vmatpush1.msra.mxu0 0.0
      %3134 = vmatprep.subr.mxu0 0.0
      %3135 = vmatpush1.msra.mxu0 0.0
      %3136 = vmatprep.subr.mxu0 0.0
      %3137 = vmatpush1.msra.mxu0 0.0
      %3138 = vmatprep.subr.mxu0 0.0
      %3139 = vmatpush1.msra.mxu0 0.0
      %3140 = vmatprep.subr.mxu0 0.0
      %3141 = vmatpush1.msra.mxu0 0.0
      %3142 = vmatprep.subr.mxu0 0.0
      %3143 = vmatpush1.msra.mxu0 0.0
      %3144 = vmatprep.subr.mxu0 0.0
      %3145 = vmatpush1.msra.mxu0 0.0
      %3146 = vmatprep.subr.mxu0 0.0
      %3147 = vmatpush1.msra.mxu0 0.0
      %3148 = vmatprep.subr.mxu0 0.0
      %3149 = vmatpush1.msra.mxu0 0.0
      %3150 = vmatprep.subr.mxu0 0.0
      %3151 = vmatpush1.msra.mxu0 0.0
      %3152 = vmatprep.mubr.f32.mxu0 0.0
      %v3153 = vand.u32 %v2859, 4294901760
      %v3154 = vsub.f32 %v2859, %v3153
      %v3155 = vand.u32 %v3154, 4294901760
      %3156 = vmatmul.mubr.f32.gmra.mrb[0].mxu0 %v3155
      %v3157 = vpop.f32.mrb[0].mxu0
      %v3158 = vadd.f32 %v3084, %v3157
      %v3159 = vpop.f32.mrb[0].mxu0
      %3160 = vdwg.mxu0
      %3161 = vmatprep.subr.mxu0 0.0
      %v3162 = vand.u32 %v464, 4294901760
      %v3163 = vsub.f32 %v464, %v3162
      %v3164 = vand.u32 %v3163, 4294901760
      %3165 = vmatpush1.msra.mxu0 %v3164
      %3166 = vmatprep.subr.mxu0 0.0
      %3167 = vmatpush1.msra.mxu0 0.0
      %3168 = vmatprep.subr.mxu0 0.0
      %3169 = vmatpush1.msra.mxu0 0.0
      %3170 = vmatprep.subr.mxu0 0.0
      %3171 = vmatpush1.msra.mxu0 0.0
      %3172 = vmatprep.subr.mxu0 0.0
      %3173 = vmatpush1.msra.mxu0 0.0
      %3174 = vmatprep.subr.mxu0 0.0
      %3175 = vmatpush1.msra.mxu0 0.0
      %3176 = vmatprep.subr.mxu0 0.0
      %3177 = vmatpush1.msra.mxu0 0.0
      %3178 = vmatprep.subr.mxu0 0.0
      %3179 = vmatpush1.msra.mxu0 0.0
      %3180 = vmatprep.subr.mxu0 0.0
      %3181 = vmatpush1.msra.mxu0 0.0
      %3182 = vmatprep.subr.mxu0 0.0
      %3183 = vmatpush1.msra.mxu0 0.0
      %3184 = vmatprep.subr.mxu0 0.0
      %3185 = vmatpush1.msra.mxu0 0.0
      %3186 = vmatprep.subr.mxu0 0.0
      %3187 = vmatpush1.msra.mxu0 0.0
      %3188 = vmatprep.subr.mxu0 0.0
      %3189 = vmatpush1.msra.mxu0 0.0
      %3190 = vmatprep.subr.mxu0 0.0
      %3191 = vmatpush1.msra.mxu0 0.0
      %3192 = vmatprep.subr.mxu0 0.0
      %3193 = vmatpush1.msra.mxu0 0.0
      %3194 = vmatprep.subr.mxu0 0.0
      %3195 = vmatpush1.msra.mxu0 0.0
      %3196 = vmatprep.subr.mxu0 0.0
      %3197 = vmatpush1.msra.mxu0 0.0
      %3198 = vmatprep.subr.mxu0 0.0
      %3199 = vmatpush1.msra.mxu0 0.0
      %3200 = vmatprep.subr.mxu0 0.0
      %3201 = vmatpush1.msra.mxu0 0.0
      %3202 = vmatprep.subr.mxu0 0.0
      %3203 = vmatpush1.msra.mxu0 0.0
      %3204 = vmatprep.subr.mxu0 0.0
      %3205 = vmatpush1.msra.mxu0 0.0
      %3206 = vmatprep.subr.mxu0 0.0
      %3207 = vmatpush1.msra.mxu0 0.0
      %3208 = vmatprep.subr.mxu0 0.0
      %3209 = vmatpush1.msra.mxu0 0.0
      %3210 = vmatprep.subr.mxu0 0.0
      %3211 = vmatpush1.msra.mxu0 0.0
      %3212 = vmatprep.subr.mxu0 0.0
      %3213 = vmatpush1.msra.mxu0 0.0
      %3214 = vmatprep.subr.mxu0 0.0
      %3215 = vmatpush1.msra.mxu0 0.0
      %3216 = vmatprep.subr.mxu0 0.0
      %3217 = vmatpush1.msra.mxu0 0.0
      %3218 = vmatprep.subr.mxu0 0.0
      %3219 = vmatpush1.msra.mxu0 0.0
      %3220 = vmatprep.subr.mxu0 0.0
      %3221 = vmatpush1.msra.mxu0 0.0
      %3222 = vmatprep.subr.mxu0 0.0
      %3223 = vmatpush1.msra.mxu0 0.0
      %3224 = vmatprep.subr.mxu0 0.0
      %3225 = vmatpush1.msra.mxu0 0.0
      %3226 = vmatprep.subr.mxu0 0.0
      %3227 = vmatpush1.msra.mxu0 0.0
      %3228 = vmatprep.mubr.f32.mxu0 0.0
      %v3229 = vand.u32 %v2859, 4294901760
      %3230 = vmatmul.mubr.f32.gmra.mrb[0].mxu0 %v3229
      %v3231 = vpop.f32.mrb[0].mxu0
      %v3232 = vadd.f32 %v3158, %v3231
      %v3233 = vpop.f32.mrb[0].mxu0
      %3234 = vdwg.mxu0
      %3235 = vmatprep.subr.mxu0 0.0
      %v3236 = vand.u32 %v464, 4294901760
      %3237 = vmatpush1.msra.mxu0 %v3236
      %3238 = vmatprep.subr.mxu0 0.0
      %3239 = vmatpush1.msra.mxu0 0.0
      %3240 = vmatprep.subr.mxu0 0.0
      %3241 = vmatpush1.msra.mxu0 0.0
      %3242 = vmatprep.subr.mxu0 0.0
      %3243 = vmatpush1.msra.mxu0 0.0
      %3244 = vmatprep.subr.mxu0 0.0
      %3245 = vmatpush1.msra.mxu0 0.0
      %3246 = vmatprep.subr.mxu0 0.0
      %3247 = vmatpush1.msra.mxu0 0.0
      %3248 = vmatprep.subr.mxu0 0.0
      %3249 = vmatpush1.msra.mxu0 0.0
      %3250 = vmatprep.subr.mxu0 0.0
      %3251 = vmatpush1.msra.mxu0 0.0
      %3252 = vmatprep.subr.mxu0 0.0
      %3253 = vmatpush1.msra.mxu0 0.0
      %3254 = vmatprep.subr.mxu0 0.0
      %3255 = vmatpush1.msra.mxu0 0.0
      %3256 = vmatprep.subr.mxu0 0.0
      %3257 = vmatpush1.msra.mxu0 0.0
      %3258 = vmatprep.subr.mxu0 0.0
      %3259 = vmatpush1.msra.mxu0 0.0
      %3260 = vmatprep.subr.mxu0 0.0
      %3261 = vmatpush1.msra.mxu0 0.0
      %3262 = vmatprep.subr.mxu0 0.0
      %3263 = vmatpush1.msra.mxu0 0.0
      %3264 = vmatprep.subr.mxu0 0.0
      %3265 = vmatpush1.msra.mxu0 0.0
      %3266 = vmatprep.subr.mxu0 0.0
      %3267 = vmatpush1.msra.mxu0 0.0
      %3268 = vmatprep.subr.mxu0 0.0
      %3269 = vmatpush1.msra.mxu0 0.0
      %3270 = vmatprep.subr.mxu0 0.0
      %3271 = vmatpush1.msra.mxu0 0.0
      %3272 = vmatprep.subr.mxu0 0.0
      %3273 = vmatpush1.msra.mxu0 0.0
      %3274 = vmatprep.subr.mxu0 0.0
      %3275 = vmatpush1.msra.mxu0 0.0
      %3276 = vmatprep.subr.mxu0 0.0
      %3277 = vmatpush1.msra.mxu0 0.0
      %3278 = vmatprep.subr.mxu0 0.0
      %3279 = vmatpush1.msra.mxu0 0.0
      %3280 = vmatprep.subr.mxu0 0.0
      %3281 = vmatpush1.msra.mxu0 0.0
      %3282 = vmatprep.subr.mxu0 0.0
      %3283 = vmatpush1.msra.mxu0 0.0
      %3284 = vmatprep.subr.mxu0 0.0
      %3285 = vmatpush1.msra.mxu0 0.0
      %3286 = vmatprep.subr.mxu0 0.0
      %3287 = vmatpush1.msra.mxu0 0.0
      %3288 = vmatprep.subr.mxu0 0.0
      %3289 = vmatpush1.msra.mxu0 0.0
      %3290 = vmatprep.subr.mxu0 0.0
      %3291 = vmatpush1.msra.mxu0 0.0
      %3292 = vmatprep.subr.mxu0 0.0
      %3293 = vmatpush1.msra.mxu0 0.0
      %3294 = vmatprep.subr.mxu0 0.0
      %3295 = vmatpush1.msra.mxu0 0.0
      %3296 = vmatprep.subr.mxu0 0.0
      %3297 = vmatpush1.msra.mxu0 0.0
      %3298 = vmatprep.subr.mxu0 0.0
      %3299 = vmatpush1.msra.mxu0 0.0
      %3300 = vmatprep.mubr.f32.mxu0 0.0
      %v3301 = vand.u32 %v2859, 4294901760
      %3302 = vmatmul.mubr.f32.gmra.mrb[0].mxu0 %v3301
      %v3303 = vpop.f32.mrb[0].mxu0
      %v3304 = vadd.f32 %v3232, %v3303
      %v3305 = vpop.f32.mrb[0].mxu0
      %3306 = vdwg.mxu0
      %v3308 = vsel %vm479, %v2349, 0
      %3310 = vmatprep.subr.mxu0 0.0
      %v3311 = vand.u32 %v465, 4294901760
      %3312 = vmatpush1.msra.mxu0 %v3311
      %3313 = vmatprep.subr.mxu0 0.0
      %3314 = vmatpush1.msra.mxu0 0.0
      %3315 = vmatprep.subr.mxu0 0.0
      %3316 = vmatpush1.msra.mxu0 0.0
      %3317 = vmatprep.subr.mxu0 0.0
      %3318 = vmatpush1.msra.mxu0 0.0
      %3319 = vmatprep.subr.mxu0 0.0
      %3320 = vmatpush1.msra.mxu0 0.0
      %3321 = vmatprep.subr.mxu0 0.0
      %3322 = vmatpush1.msra.mxu0 0.0
      %3323 = vmatprep.subr.mxu0 0.0
      %3324 = vmatpush1.msra.mxu0 0.0
      %3325 = vmatprep.subr.mxu0 0.0
      %3326 = vmatpush1.msra.mxu0 0.0
      %3327 = vmatprep.subr.mxu0 0.0
      %3328 = vmatpush1.msra.mxu0 0.0
      %3329 = vmatprep.subr.mxu0 0.0
      %3330 = vmatpush1.msra.mxu0 0.0
      %3331 = vmatprep.subr.mxu0 0.0
      %3332 = vmatpush1.msra.mxu0 0.0
      %3333 = vmatprep.subr.mxu0 0.0
      %3334 = vmatpush1.msra.mxu0 0.0
      %3335 = vmatprep.subr.mxu0 0.0
      %3336 = vmatpush1.msra.mxu0 0.0
      %3337 = vmatprep.subr.mxu0 0.0
      %3338 = vmatpush1.msra.mxu0 0.0
      %3339 = vmatprep.subr.mxu0 0.0
      %3340 = vmatpush1.msra.mxu0 0.0
      %3341 = vmatprep.subr.mxu0 0.0
      %3342 = vmatpush1.msra.mxu0 0.0
      %3343 = vmatprep.subr.mxu0 0.0
      %3344 = vmatpush1.msra.mxu0 0.0
      %3345 = vmatprep.subr.mxu0 0.0
      %3346 = vmatpush1.msra.mxu0 0.0
      %3347 = vmatprep.subr.mxu0 0.0
      %3348 = vmatpush1.msra.mxu0 0.0
      %3349 = vmatprep.subr.mxu0 0.0
      %3350 = vmatpush1.msra.mxu0 0.0
      %3351 = vmatprep.subr.mxu0 0.0
      %3352 = vmatpush1.msra.mxu0 0.0
      %3353 = vmatprep.subr.mxu0 0.0
      %3354 = vmatpush1.msra.mxu0 0.0
      %3355 = vmatprep.subr.mxu0 0.0
      %3356 = vmatpush1.msra.mxu0 0.0
      %3357 = vmatprep.subr.mxu0 0.0
      %3358 = vmatpush1.msra.mxu0 0.0
      %3359 = vmatprep.subr.mxu0 0.0
      %3360 = vmatpush1.msra.mxu0 0.0
      %3361 = vmatprep.subr.mxu0 0.0
      %3362 = vmatpush1.msra.mxu0 0.0
      %3363 = vmatprep.subr.mxu0 0.0
      %3364 = vmatpush1.msra.mxu0 0.0
      %3365 = vmatprep.subr.mxu0 0.0
      %3366 = vmatpush1.msra.mxu0 0.0
      %3367 = vmatprep.subr.mxu0 0.0
      %3368 = vmatpush1.msra.mxu0 0.0
      %3369 = vmatprep.subr.mxu0 0.0
      %3370 = vmatpush1.msra.mxu0 0.0
      %3371 = vmatprep.subr.mxu0 0.0
      %3372 = vmatpush1.msra.mxu0 0.0
      %3373 = vmatprep.subr.mxu0 0.0
      %3374 = vmatpush1.msra.mxu0 0.0
      %3375 = vmatprep.mubr.f32.mxu0 0.0
      %v3376 = vand.u32 %v3308, 4294901760
      %v3377 = vsub.f32 %v3308, %v3376
      %v3378 = vand.u32 %v3377, 4294901760
      %v3379 = vsub.f32 %v3377, %v3378
      %v3380 = vand.u32 %v3379, 4294901760
      %3381 = vmatmul.mubr.f32.gmra.mrb[0].mxu0 %v3380
      %v3382 = vpop.f32.mrb[0].mxu0
      %v3383 = vadd.f32 0.0, %v3382
      %v3384 = vpop.f32.mrb[0].mxu0
      %3385 = vdwg.mxu0
      %3386 = vmatprep.subr.mxu0 0.0
      %v3387 = vand.u32 %v465, 4294901760
      %v3388 = vsub.f32 %v465, %v3387
      %v3389 = vand.u32 %v3388, 4294901760
      %v3390 = vsub.f32 %v3388, %v3389
      %v3391 = vand.u32 %v3390, 4294901760
      %3392 = vmatpush1.msra.mxu0 %v3391
      %3393 = vmatprep.subr.mxu0 0.0
      %3394 = vmatpush1.msra.mxu0 0.0
      %3395 = vmatprep.subr.mxu0 0.0
      %3396 = vmatpush1.msra.mxu0 0.0
      %3397 = vmatprep.subr.mxu0 0.0
      %3398 = vmatpush1.msra.mxu0 0.0
      %3399 = vmatprep.subr.mxu0 0.0
      %3400 = vmatpush1.msra.mxu0 0.0
      %3401 = vmatprep.subr.mxu0 0.0
      %3402 = vmatpush1.msra.mxu0 0.0
      %3403 = vmatprep.subr.mxu0 0.0
      %3404 = vmatpush1.msra.mxu0 0.0
      %3405 = vmatprep.subr.mxu0 0.0
      %3406 = vmatpush1.msra.mxu0 0.0
      %3407 = vmatprep.subr.mxu0 0.0
      %3408 = vmatpush1.msra.mxu0 0.0
      %3409 = vmatprep.subr.mxu0 0.0
      %3410 = vmatpush1.msra.mxu0 0.0
      %3411 = vmatprep.subr.mxu0 0.0
      %3412 = vmatpush1.msra.mxu0 0.0
      %3413 = vmatprep.subr.mxu0 0.0
      %3414 = vmatpush1.msra.mxu0 0.0
      %3415 = vmatprep.subr.mxu0 0.0
      %3416 = vmatpush1.msra.mxu0 0.0
      %3417 = vmatprep.subr.mxu0 0.0
      %3418 = vmatpush1.msra.mxu0 0.0
      %3419 = vmatprep.subr.mxu0 0.0
      %3420 = vmatpush1.msra.mxu0 0.0
      %3421 = vmatprep.subr.mxu0 0.0
      %3422 = vmatpush1.msra.mxu0 0.0
      %3423 = vmatprep.subr.mxu0 0.0
      %3424 = vmatpush1.msra.mxu0 0.0
      %3425 = vmatprep.subr.mxu0 0.0
      %3426 = vmatpush1.msra.mxu0 0.0
      %3427 = vmatprep.subr.mxu0 0.0
      %3428 = vmatpush1.msra.mxu0 0.0
      %3429 = vmatprep.subr.mxu0 0.0
      %3430 = vmatpush1.msra.mxu0 0.0
      %3431 = vmatprep.subr.mxu0 0.0
      %3432 = vmatpush1.msra.mxu0 0.0
      %3433 = vmatprep.subr.mxu0 0.0
      %3434 = vmatpush1.msra.mxu0 0.0
      %3435 = vmatprep.subr.mxu0 0.0
      %3436 = vmatpush1.msra.mxu0 0.0
      %3437 = vmatprep.subr.mxu0 0.0
      %3438 = vmatpush1.msra.mxu0 0.0
      %3439 = vmatprep.subr.mxu0 0.0
      %3440 = vmatpush1.msra.mxu0 0.0
      %3441 = vmatprep.subr.mxu0 0.0
      %3442 = vmatpush1.msra.mxu0 0.0
      %3443 = vmatprep.subr.mxu0 0.0
      %3444 = vmatpush1.msra.mxu0 0.0
      %3445 = vmatprep.subr.mxu0 0.0
      %3446 = vmatpush1.msra.mxu0 0.0
      %3447 = vmatprep.subr.mxu0 0.0
      %3448 = vmatpush1.msra.mxu0 0.0
      %3449 = vmatprep.subr.mxu0 0.0
      %3450 = vmatpush1.msra.mxu0 0.0
      %3451 = vmatprep.subr.mxu0 0.0
      %3452 = vmatpush1.msra.mxu0 0.0
      %3453 = vmatprep.subr.mxu0 0.0
      %3454 = vmatpush1.msra.mxu0 0.0
      %3455 = vmatprep.mubr.f32.mxu0 0.0
      %v3456 = vand.u32 %v3308, 4294901760
      %3457 = vmatmul.mubr.f32.gmra.mrb[0].mxu0 %v3456
      %v3458 = vpop.f32.mrb[0].mxu0
      %v3459 = vadd.f32 %v3383, %v3458
      %v3460 = vpop.f32.mrb[0].mxu0
      %3461 = vdwg.mxu0
      %3462 = vmatprep.subr.mxu0 0.0
      %v3463 = vand.u32 %v465, 4294901760
      %v3464 = vsub.f32 %v465, %v3463
      %3465 = vmatpush1.msra.mxu0 %v3464
      %3466 = vmatprep.subr.mxu0 0.0
      %3467 = vmatpush1.msra.mxu0 0.0
      %3468 = vmatprep.subr.mxu0 0.0
      %3469 = vmatpush1.msra.mxu0 0.0
      %3470 = vmatprep.subr.mxu0 0.0
      %3471 = vmatpush1.msra.mxu0 0.0
      %3472 = vmatprep.subr.mxu0 0.0
      %3473 = vmatpush1.msra.mxu0 0.0
      %3474 = vmatprep.subr.mxu0 0.0
      %3475 = vmatpush1.msra.mxu0 0.0
      %3476 = vmatprep.subr.mxu0 0.0
      %3477 = vmatpush1.msra.mxu0 0.0
      %3478 = vmatprep.subr.mxu0 0.0
      %3479 = vmatpush1.msra.mxu0 0.0
      %3480 = vmatprep.subr.mxu0 0.0
      %3481 = vmatpush1.msra.mxu0 0.0
      %3482 = vmatprep.subr.mxu0 0.0
      %3483 = vmatpush1.msra.mxu0 0.0
      %3484 = vmatprep.subr.mxu0 0.0
      %3485 = vmatpush1.msra.mxu0 0.0
      %3486 = vmatprep.subr.mxu0 0.0
      %3487 = vmatpush1.msra.mxu0 0.0
      %3488 = vmatprep.subr.mxu0 0.0
      %3489 = vmatpush1.msra.mxu0 0.0
      %3490 = vmatprep.subr.mxu0 0.0
      %3491 = vmatpush1.msra.mxu0 0.0
      %3492 = vmatprep.subr.mxu0 0.0
      %3493 = vmatpush1.msra.mxu0 0.0
      %3494 = vmatprep.subr.mxu0 0.0
      %3495 = vmatpush1.msra.mxu0 0.0
      %3496 = vmatprep.subr.mxu0 0.0
      %3497 = vmatpush1.msra.mxu0 0.0
      %3498 = vmatprep.subr.mxu0 0.0
      %3499 = vmatpush1.msra.mxu0 0.0
      %3500 = vmatprep.subr.mxu0 0.0
      %3501 = vmatpush1.msra.mxu0 0.0
      %3502 = vmatprep.subr.mxu0 0.0
      %3503 = vmatpush1.msra.mxu0 0.0
      %3504 = vmatprep.subr.mxu0 0.0
      %3505 = vmatpush1.msra.mxu0 0.0
      %3506 = vmatprep.subr.mxu0 0.0
      %3507 = vmatpush1.msra.mxu0 0.0
      %3508 = vmatprep.subr.mxu0 0.0
      %3509 = vmatpush1.msra.mxu0 0.0
      %3510 = vmatprep.subr.mxu0 0.0
      %3511 = vmatpush1.msra.mxu0 0.0
      %3512 = vmatprep.subr.mxu0 0.0
      %3513 = vmatpush1.msra.mxu0 0.0
      %3514 = vmatprep.subr.mxu0 0.0
      %3515 = vmatpush1.msra.mxu0 0.0
      %3516 = vmatprep.subr.mxu0 0.0
      %3517 = vmatpush1.msra.mxu0 0.0
      %3518 = vmatprep.subr.mxu0 0.0
      %3519 = vmatpush1.msra.mxu0 0.0
      %3520 = vmatprep.subr.mxu0 0.0
      %3521 = vmatpush1.msra.mxu0 0.0
      %3522 = vmatprep.subr.mxu0 0.0
      %3523 = vmatpush1.msra.mxu0 0.0
      %3524 = vmatprep.subr.mxu0 0.0
      %3525 = vmatpush1.msra.mxu0 0.0
      %3526 = vmatprep.subr.mxu0 0.0
      %3527 = vmatpush1.msra.mxu0 0.0
      %3528 = vmatprep.mubr.f32.mxu0 0.0
      %v3529 = vand.u32 %v3308, 4294901760
      %v3530 = vsub.f32 %v3308, %v3529
      %3531 = vmatmul.mubr.f32.gmra.mrb[0].mxu0 %v3530
      %v3532 = vpop.f32.mrb[0].mxu0
      %v3533 = vadd.f32 %v3459, %v3532
      %v3534 = vpop.f32.mrb[0].mxu0
      %3535 = vdwg.mxu0
      %3536 = vmatprep.subr.mxu0 0.0
      %v3537 = vand.u32 %v465, 4294901760
      %3538 = vmatpush1.msra.mxu0 %v3537
      %3539 = vmatprep.subr.mxu0 0.0
      %3540 = vmatpush1.msra.mxu0 0.0
      %3541 = vmatprep.subr.mxu0 0.0
      %3542 = vmatpush1.msra.mxu0 0.0
      %3543 = vmatprep.subr.mxu0 0.0
      %3544 = vmatpush1.msra.mxu0 0.0
      %3545 = vmatprep.subr.mxu0 0.0
      %3546 = vmatpush1.msra.mxu0 0.0
      %3547 = vmatprep.subr.mxu0 0.0
      %3548 = vmatpush1.msra.mxu0 0.0
      %3549 = vmatprep.subr.mxu0 0.0
      %3550 = vmatpush1.msra.mxu0 0.0
      %3551 = vmatprep.subr.mxu0 0.0
      %3552 = vmatpush1.msra.mxu0 0.0
      %3553 = vmatprep.subr.mxu0 0.0
      %3554 = vmatpush1.msra.mxu0 0.0
      %3555 = vmatprep.subr.mxu0 0.0
      %3556 = vmatpush1.msra.mxu0 0.0
      %3557 = vmatprep.subr.mxu0 0.0
      %3558 = vmatpush1.msra.mxu0 0.0
      %3559 = vmatprep.subr.mxu0 0.0
      %3560 = vmatpush1.msra.mxu0 0.0
      %3561 = vmatprep.subr.mxu0 0.0
      %3562 = vmatpush1.msra.mxu0 0.0
      %3563 = vmatprep.subr.mxu0 0.0
      %3564 = vmatpush1.msra.mxu0 0.0
      %3565 = vmatprep.subr.mxu0 0.0
      %3566 = vmatpush1.msra.mxu0 0.0
      %3567 = vmatprep.subr.mxu0 0.0
      %3568 = vmatpush1.msra.mxu0 0.0
      %3569 = vmatprep.subr.mxu0 0.0
      %3570 = vmatpush1.msra.mxu0 0.0
      %3571 = vmatprep.subr.mxu0 0.0
      %3572 = vmatpush1.msra.mxu0 0.0
      %3573 = vmatprep.subr.mxu0 0.0
      %3574 = vmatpush1.msra.mxu0 0.0
      %3575 = vmatprep.subr.mxu0 0.0
      %3576 = vmatpush1.msra.mxu0 0.0
      %3577 = vmatprep.subr.mxu0 0.0
      %3578 = vmatpush1.msra.mxu0 0.0
      %3579 = vmatprep.subr.mxu0 0.0
      %3580 = vmatpush1.msra.mxu0 0.0
      %3581 = vmatprep.subr.mxu0 0.0
      %3582 = vmatpush1.msra.mxu0 0.0
      %3583 = vmatprep.subr.mxu0 0.0
      %3584 = vmatpush1.msra.mxu0 0.0
      %3585 = vmatprep.subr.mxu0 0.0
      %3586 = vmatpush1.msra.mxu0 0.0
      %3587 = vmatprep.subr.mxu0 0.0
      %3588 = vmatpush1.msra.mxu0 0.0
      %3589 = vmatprep.subr.mxu0 0.0
      %3590 = vmatpush1.msra.mxu0 0.0
      %3591 = vmatprep.subr.mxu0 0.0
      %3592 = vmatpush1.msra.mxu0 0.0
      %3593 = vmatprep.subr.mxu0 0.0
      %3594 = vmatpush1.msra.mxu0 0.0
      %3595 = vmatprep.subr.mxu0 0.0
      %3596 = vmatpush1.msra.mxu0 0.0
      %3597 = vmatprep.subr.mxu0 0.0
      %3598 = vmatpush1.msra.mxu0 0.0
      %3599 = vmatprep.subr.mxu0 0.0
      %3600 = vmatpush1.msra.mxu0 0.0
      %3601 = vmatprep.mubr.f32.mxu0 0.0
      %v3602 = vand.u32 %v3308, 4294901760
      %v3603 = vsub.f32 %v3308, %v3602
      %v3604 = vand.u32 %v3603, 4294901760
      %3605 = vmatmul.mubr.f32.gmra.mrb[0].mxu0 %v3604
      %v3606 = vpop.f32.mrb[0].mxu0
      %v3607 = vadd.f32 %v3533, %v3606
      %v3608 = vpop.f32.mrb[0].mxu0
      %3609 = vdwg.mxu0
      %3610 = vmatprep.subr.mxu0 0.0
      %v3611 = vand.u32 %v465, 4294901760
      %v3612 = vsub.f32 %v465, %v3611
      %v3613 = vand.u32 %v3612, 4294901760
      %3614 = vmatpush1.msra.mxu0 %v3613
      %3615 = vmatprep.subr.mxu0 0.0
      %3616 = vmatpush1.msra.mxu0 0.0
      %3617 = vmatprep.subr.mxu0 0.0
      %3618 = vmatpush1.msra.mxu0 0.0
      %3619 = vmatprep.subr.mxu0 0.0
      %3620 = vmatpush1.msra.mxu0 0.0
      %3621 = vmatprep.subr.mxu0 0.0
      %3622 = vmatpush1.msra.mxu0 0.0
      %3623 = vmatprep.subr.mxu0 0.0
      %3624 = vmatpush1.msra.mxu0 0.0
      %3625 = vmatprep.subr.mxu0 0.0
      %3626 = vmatpush1.msra.mxu0 0.0
      %3627 = vmatprep.subr.mxu0 0.0
      %3628 = vmatpush1.msra.mxu0 0.0
      %3629 = vmatprep.subr.mxu0 0.0
      %3630 = vmatpush1.msra.mxu0 0.0
      %3631 = vmatprep.subr.mxu0 0.0
      %3632 = vmatpush1.msra.mxu0 0.0
      %3633 = vmatprep.subr.mxu0 0.0
      %3634 = vmatpush1.msra.mxu0 0.0
      %3635 = vmatprep.subr.mxu0 0.0
      %3636 = vmatpush1.msra.mxu0 0.0
      %3637 = vmatprep.subr.mxu0 0.0
      %3638 = vmatpush1.msra.mxu0 0.0
      %3639 = vmatprep.subr.mxu0 0.0
      %3640 = vmatpush1.msra.mxu0 0.0
      %3641 = vmatprep.subr.mxu0 0.0
      %3642 = vmatpush1.msra.mxu0 0.0
      %3643 = vmatprep.subr.mxu0 0.0
      %3644 = vmatpush1.msra.mxu0 0.0
      %3645 = vmatprep.subr.mxu0 0.0
      %3646 = vmatpush1.msra.mxu0 0.0
      %3647 = vmatprep.subr.mxu0 0.0
      %3648 = vmatpush1.msra.mxu0 0.0
      %3649 = vmatprep.subr.mxu0 0.0
      %3650 = vmatpush1.msra.mxu0 0.0
      %3651 = vmatprep.subr.mxu0 0.0
      %3652 = vmatpush1.msra.mxu0 0.0
      %3653 = vmatprep.subr.mxu0 0.0
      %3654 = vmatpush1.msra.mxu0 0.0
      %3655 = vmatprep.subr.mxu0 0.0
      %3656 = vmatpush1.msra.mxu0 0.0
      %3657 = vmatprep.subr.mxu0 0.0
      %3658 = vmatpush1.msra.mxu0 0.0
      %3659 = vmatprep.subr.mxu0 0.0
      %3660 = vmatpush1.msra.mxu0 0.0
      %3661 = vmatprep.subr.mxu0 0.0
      %3662 = vmatpush1.msra.mxu0 0.0
      %3663 = vmatprep.subr.mxu0 0.0
      %3664 = vmatpush1.msra.mxu0 0.0
      %3665 = vmatprep.subr.mxu0 0.0
      %3666 = vmatpush1.msra.mxu0 0.0
      %3667 = vmatprep.subr.mxu0 0.0
      %3668 = vmatpush1.msra.mxu0 0.0
      %3669 = vmatprep.subr.mxu0 0.0
      %3670 = vmatpush1.msra.mxu0 0.0
      %3671 = vmatprep.subr.mxu0 0.0
      %3672 = vmatpush1.msra.mxu0 0.0
      %3673 = vmatprep.subr.mxu0 0.0
      %3674 = vmatpush1.msra.mxu0 0.0
      %3675 = vmatprep.subr.mxu0 0.0
      %3676 = vmatpush1.msra.mxu0 0.0
      %3677 = vmatprep.mubr.f32.mxu0 0.0
      %v3678 = vand.u32 %v3308, 4294901760
      %3679 = vmatmul.mubr.f32.gmra.mrb[0].mxu0 %v3678
      %v3680 = vpop.f32.mrb[0].mxu0
      %v3681 = vadd.f32 %v3607, %v3680
      %v3682 = vpop.f32.mrb[0].mxu0
      %3683 = vdwg.mxu0
      %3684 = vmatprep.subr.mxu0 0.0
      %v3685 = vand.u32 %v465, 4294901760
      %3686 = vmatpush1.msra.mxu0 %v3685
      %3687 = vmatprep.subr.mxu0 0.0
      %3688 = vmatpush1.msra.mxu0 0.0
      %3689 = vmatprep.subr.mxu0 0.0
      %3690 = vmatpush1.msra.mxu0 0.0
      %3691 = vmatprep.subr.mxu0 0.0
      %3692 = vmatpush1.msra.mxu0 0.0
      %3693 = vmatprep.subr.mxu0 0.0
      %3694 = vmatpush1.msra.mxu0 0.0
      %3695 = vmatprep.subr.mxu0 0.0
      %3696 = vmatpush1.msra.mxu0 0.0
      %3697 = vmatprep.subr.mxu0 0.0
      %3698 = vmatpush1.msra.mxu0 0.0
      %3699 = vmatprep.subr.mxu0 0.0
      %3700 = vmatpush1.msra.mxu0 0.0
      %3701 = vmatprep.subr.mxu0 0.0
      %3702 = vmatpush1.msra.mxu0 0.0
      %3703 = vmatprep.subr.mxu0 0.0
      %3704 = vmatpush1.msra.mxu0 0.0
      %3705 = vmatprep.subr.mxu0 0.0
      %3706 = vmatpush1.msra.mxu0 0.0
      %3707 = vmatprep.subr.mxu0 0.0
      %3708 = vmatpush1.msra.mxu0 0.0
      %3709 = vmatprep.subr.mxu0 0.0
      %3710 = vmatpush1.msra.mxu0 0.0
      %3711 = vmatprep.subr.mxu0 0.0
      %3712 = vmatpush1.msra.mxu0 0.0
      %3713 = vmatprep.subr.mxu0 0.0
      %3714 = vmatpush1.msra.mxu0 0.0
      %3715 = vmatprep.subr.mxu0 0.0
      %3716 = vmatpush1.msra.mxu0 0.0
      %3717 = vmatprep.subr.mxu0 0.0
      %3718 = vmatpush1.msra.mxu0 0.0
      %3719 = vmatprep.subr.mxu0 0.0
      %3720 = vmatpush1.msra.mxu0 0.0
      %3721 = vmatprep.subr.mxu0 0.0
      %3722 = vmatpush1.msra.mxu0 0.0
      %3723 = vmatprep.subr.mxu0 0.0
      %3724 = vmatpush1.msra.mxu0 0.0
      %3725 = vmatprep.subr.mxu0 0.0
      %3726 = vmatpush1.msra.mxu0 0.0
      %3727 = vmatprep.subr.mxu0 0.0
      %3728 = vmatpush1.msra.mxu0 0.0
      %3729 = vmatprep.subr.mxu0 0.0
      %3730 = vmatpush1.msra.mxu0 0.0
      %3731 = vmatprep.subr.mxu0 0.0
      %3732 = vmatpush1.msra.mxu0 0.0
      %3733 = vmatprep.subr.mxu0 0.0
      %3734 = vmatpush1.msra.mxu0 0.0
      %3735 = vmatprep.subr.mxu0 0.0
      %3736 = vmatpush1.msra.mxu0 0.0
      %3737 = vmatprep.subr.mxu0 0.0
      %3738 = vmatpush1.msra.mxu0 0.0
      %3739 = vmatprep.subr.mxu0 0.0
      %3740 = vmatpush1.msra.mxu0 0.0
      %3741 = vmatprep.subr.mxu0 0.0
      %3742 = vmatpush1.msra.mxu0 0.0
      %3743 = vmatprep.subr.mxu0 0.0
      %3744 = vmatpush1.msra.mxu0 0.0
      %3745 = vmatprep.subr.mxu0 0.0
      %3746 = vmatpush1.msra.mxu0 0.0
      %3747 = vmatprep.subr.mxu0 0.0
      %3748 = vmatpush1.msra.mxu0 0.0
      %3749 = vmatprep.mubr.f32.mxu0 0.0
      %v3750 = vand.u32 %v3308, 4294901760
      %3751 = vmatmul.mubr.f32.gmra.mrb[0].mxu0 %v3750
      %v3752 = vpop.f32.mrb[0].mxu0
      %v3753 = vadd.f32 %v3681, %v3752
      %v3754 = vpop.f32.mrb[0].mxu0
      %3755 = vdwg.mxu0
      %v3757 = vsel %vm479, %v2351, 0
      %3759 = vmatprep.subr.mxu0 0.0
      %v3760 = vand.u32 %v466, 4294901760
      %3761 = vmatpush1.msra.mxu0 %v3760
      %3762 = vmatprep.subr.mxu0 0.0
      %3763 = vmatpush1.msra.mxu0 0.0
      %3764 = vmatprep.subr.mxu0 0.0
      %3765 = vmatpush1.msra.mxu0 0.0
      %3766 = vmatprep.subr.mxu0 0.0
      %3767 = vmatpush1.msra.mxu0 0.0
      %3768 = vmatprep.subr.mxu0 0.0
      %3769 = vmatpush1.msra.mxu0 0.0
      %3770 = vmatprep.subr.mxu0 0.0
      %3771 = vmatpush1.msra.mxu0 0.0
      %3772 = vmatprep.subr.mxu0 0.0
      %3773 = vmatpush1.msra.mxu0 0.0
      %3774 = vmatprep.subr.mxu0 0.0
      %3775 = vmatpush1.msra.mxu0 0.0
      %3776 = vmatprep.subr.mxu0 0.0
      %3777 = vmatpush1.msra.mxu0 0.0
      %3778 = vmatprep.subr.mxu0 0.0
      %3779 = vmatpush1.msra.mxu0 0.0
      %3780 = vmatprep.subr.mxu0 0.0
      %3781 = vmatpush1.msra.mxu0 0.0
      %3782 = vmatprep.subr.mxu0 0.0
      %3783 = vmatpush1.msra.mxu0 0.0
      %3784 = vmatprep.subr.mxu0 0.0
      %3785 = vmatpush1.msra.mxu0 0.0
      %3786 = vmatprep.subr.mxu0 0.0
      %3787 = vmatpush1.msra.mxu0 0.0
      %3788 = vmatprep.subr.mxu0 0.0
      %3789 = vmatpush1.msra.mxu0 0.0
      %3790 = vmatprep.subr.mxu0 0.0
      %3791 = vmatpush1.msra.mxu0 0.0
      %3792 = vmatprep.subr.mxu0 0.0
      %3793 = vmatpush1.msra.mxu0 0.0
      %3794 = vmatprep.subr.mxu0 0.0
      %3795 = vmatpush1.msra.mxu0 0.0
      %3796 = vmatprep.subr.mxu0 0.0
      %3797 = vmatpush1.msra.mxu0 0.0
      %3798 = vmatprep.subr.mxu0 0.0
      %3799 = vmatpush1.msra.mxu0 0.0
      %3800 = vmatprep.subr.mxu0 0.0
      %3801 = vmatpush1.msra.mxu0 0.0
      %3802 = vmatprep.subr.mxu0 0.0
      %3803 = vmatpush1.msra.mxu0 0.0
      %3804 = vmatprep.subr.mxu0 0.0
      %3805 = vmatpush1.msra.mxu0 0.0
      %3806 = vmatprep.subr.mxu0 0.0
      %3807 = vmatpush1.msra.mxu0 0.0
      %3808 = vmatprep.subr.mxu0 0.0
      %3809 = vmatpush1.msra.mxu0 0.0
      %3810 = vmatprep.subr.mxu0 0.0
      %3811 = vmatpush1.msra.mxu0 0.0
      %3812 = vmatprep.subr.mxu0 0.0
      %3813 = vmatpush1.msra.mxu0 0.0
      %3814 = vmatprep.subr.mxu0 0.0
      %3815 = vmatpush1.msra.mxu0 0.0
      %3816 = vmatprep.subr.mxu0 0.0
      %3817 = vmatpush1.msra.mxu0 0.0
      %3818 = vmatprep.subr.mxu0 0.0
      %3819 = vmatpush1.msra.mxu0 0.0
      %3820 = vmatprep.subr.mxu0 0.0
      %3821 = vmatpush1.msra.mxu0 0.0
      %3822 = vmatprep.subr.mxu0 0.0
      %3823 = vmatpush1.msra.mxu0 0.0
      %3824 = vmatprep.mubr.f32.mxu0 0.0
      %v3825 = vand.u32 %v3757, 4294901760
      %v3826 = vsub.f32 %v3757, %v3825
      %v3827 = vand.u32 %v3826, 4294901760
      %v3828 = vsub.f32 %v3826, %v3827
      %v3829 = vand.u32 %v3828, 4294901760
      %3830 = vmatmul.mubr.f32.gmra.mrb[0].mxu0 %v3829
      %v3831 = vpop.f32.mrb[0].mxu0
      %v3832 = vadd.f32 0.0, %v3831
      %v3833 = vpop.f32.mrb[0].mxu0
      %3834 = vdwg.mxu0
      %3835 = vmatprep.subr.mxu0 0.0
      %v3836 = vand.u32 %v466, 4294901760
      %v3837 = vsub.f32 %v466, %v3836
      %v3838 = vand.u32 %v3837, 4294901760
      %v3839 = vsub.f32 %v3837, %v3838
      %v3840 = vand.u32 %v3839, 4294901760
      %3841 = vmatpush1.msra.mxu0 %v3840
      %3842 = vmatprep.subr.mxu0 0.0
      %3843 = vmatpush1.msra.mxu0 0.0
      %3844 = vmatprep.subr.mxu0 0.0
      %3845 = vmatpush1.msra.mxu0 0.0
      %3846 = vmatprep.subr.mxu0 0.0
      %3847 = vmatpush1.msra.mxu0 0.0
      %3848 = vmatprep.subr.mxu0 0.0
      %3849 = vmatpush1.msra.mxu0 0.0
      %3850 = vmatprep.subr.mxu0 0.0
      %3851 = vmatpush1.msra.mxu0 0.0
      %3852 = vmatprep.subr.mxu0 0.0
      %3853 = vmatpush1.msra.mxu0 0.0
      %3854 = vmatprep.subr.mxu0 0.0
      %3855 = vmatpush1.msra.mxu0 0.0
      %3856 = vmatprep.subr.mxu0 0.0
      %3857 = vmatpush1.msra.mxu0 0.0
      %3858 = vmatprep.subr.mxu0 0.0
      %3859 = vmatpush1.msra.mxu0 0.0
      %3860 = vmatprep.subr.mxu0 0.0
      %3861 = vmatpush1.msra.mxu0 0.0
      %3862 = vmatprep.subr.mxu0 0.0
      %3863 = vmatpush1.msra.mxu0 0.0
      %3864 = vmatprep.subr.mxu0 0.0
      %3865 = vmatpush1.msra.mxu0 0.0
      %3866 = vmatprep.subr.mxu0 0.0
      %3867 = vmatpush1.msra.mxu0 0.0
      %3868 = vmatprep.subr.mxu0 0.0
      %3869 = vmatpush1.msra.mxu0 0.0
      %3870 = vmatprep.subr.mxu0 0.0
      %3871 = vmatpush1.msra.mxu0 0.0
      %3872 = vmatprep.subr.mxu0 0.0
      %3873 = vmatpush1.msra.mxu0 0.0
      %3874 = vmatprep.subr.mxu0 0.0
      %3875 = vmatpush1.msra.mxu0 0.0
      %3876 = vmatprep.subr.mxu0 0.0
      %3877 = vmatpush1.msra.mxu0 0.0
      %3878 = vmatprep.subr.mxu0 0.0
      %3879 = vmatpush1.msra.mxu0 0.0
      %3880 = vmatprep.subr.mxu0 0.0
      %3881 = vmatpush1.msra.mxu0 0.0
      %3882 = vmatprep.subr.mxu0 0.0
      %3883 = vmatpush1.msra.mxu0 0.0
      %3884 = vmatprep.subr.mxu0 0.0
      %3885 = vmatpush1.msra.mxu0 0.0
      %3886 = vmatprep.subr.mxu0 0.0
      %3887 = vmatpush1.msra.mxu0 0.0
      %3888 = vmatprep.subr.mxu0 0.0
      %3889 = vmatpush1.msra.mxu0 0.0
      %3890 = vmatprep.subr.mxu0 0.0
      %3891 = vmatpush1.msra.mxu0 0.0
      %3892 = vmatprep.subr.mxu0 0.0
      %3893 = vmatpush1.msra.mxu0 0.0
      %3894 = vmatprep.subr.mxu0 0.0
      %3895 = vmatpush1.msra.mxu0 0.0
      %3896 = vmatprep.subr.mxu0 0.0
      %3897 = vmatpush1.msra.mxu0 0.0
      %3898 = vmatprep.subr.mxu0 0.0
      %3899 = vmatpush1.msra.mxu0 0.0
      %3900 = vmatprep.subr.mxu0 0.0
      %3901 = vmatpush1.msra.mxu0 0.0
      %3902 = vmatprep.subr.mxu0 0.0
      %3903 = vmatpush1.msra.mxu0 0.0
      %3904 = vmatprep.mubr.f32.mxu0 0.0
      %v3905 = vand.u32 %v3757, 4294901760
      %3906 = vmatmul.mubr.f32.gmra.mrb[0].mxu0 %v3905
      %v3907 = vpop.f32.mrb[0].mxu0
      %v3908 = vadd.f32 %v3832, %v3907
      %v3909 = vpop.f32.mrb[0].mxu0
      %3910 = vdwg.mxu0
      %3911 = vmatprep.subr.mxu0 0.0
      %v3912 = vand.u32 %v466, 4294901760
      %v3913 = vsub.f32 %v466, %v3912
      %3914 = vmatpush1.msra.mxu0 %v3913
      %3915 = vmatprep.subr.mxu0 0.0
      %3916 = vmatpush1.msra.mxu0 0.0
      %3917 = vmatprep.subr.mxu0 0.0
      %3918 = vmatpush1.msra.mxu0 0.0
      %3919 = vmatprep.subr.mxu0 0.0
      %3920 = vmatpush1.msra.mxu0 0.0
      %3921 = vmatprep.subr.mxu0 0.0
      %3922 = vmatpush1.msra.mxu0 0.0
      %3923 = vmatprep.subr.mxu0 0.0
      %3924 = vmatpush1.msra.mxu0 0.0
      %3925 = vmatprep.subr.mxu0 0.0
      %3926 = vmatpush1.msra.mxu0 0.0
      %3927 = vmatprep.subr.mxu0 0.0
      %3928 = vmatpush1.msra.mxu0 0.0
      %3929 = vmatprep.subr.mxu0 0.0
      %3930 = vmatpush1.msra.mxu0 0.0
      %3931 = vmatprep.subr.mxu0 0.0
      %3932 = vmatpush1.msra.mxu0 0.0
      %3933 = vmatprep.subr.mxu0 0.0
      %3934 = vmatpush1.msra.mxu0 0.0
      %3935 = vmatprep.subr.mxu0 0.0
      %3936 = vmatpush1.msra.mxu0 0.0
      %3937 = vmatprep.subr.mxu0 0.0
      %3938 = vmatpush1.msra.mxu0 0.0
      %3939 = vmatprep.subr.mxu0 0.0
      %3940 = vmatpush1.msra.mxu0 0.0
      %3941 = vmatprep.subr.mxu0 0.0
      %3942 = vmatpush1.msra.mxu0 0.0
      %3943 = vmatprep.subr.mxu0 0.0
      %3944 = vmatpush1.msra.mxu0 0.0
      %3945 = vmatprep.subr.mxu0 0.0
      %3946 = vmatpush1.msra.mxu0 0.0
      %3947 = vmatprep.subr.mxu0 0.0
      %3948 = vmatpush1.msra.mxu0 0.0
      %3949 = vmatprep.subr.mxu0 0.0
      %3950 = vmatpush1.msra.mxu0 0.0
      %3951 = vmatprep.subr.mxu0 0.0
      %3952 = vmatpush1.msra.mxu0 0.0
      %3953 = vmatprep.subr.mxu0 0.0
      %3954 = vmatpush1.msra.mxu0 0.0
      %3955 = vmatprep.subr.mxu0 0.0
      %3956 = vmatpush1.msra.mxu0 0.0
      %3957 = vmatprep.subr.mxu0 0.0
      %3958 = vmatpush1.msra.mxu0 0.0
      %3959 = vmatprep.subr.mxu0 0.0
      %3960 = vmatpush1.msra.mxu0 0.0
      %3961 = vmatprep.subr.mxu0 0.0
      %3962 = vmatpush1.msra.mxu0 0.0
      %3963 = vmatprep.subr.mxu0 0.0
      %3964 = vmatpush1.msra.mxu0 0.0
      %3965 = vmatprep.subr.mxu0 0.0
      %3966 = vmatpush1.msra.mxu0 0.0
      %3967 = vmatprep.subr.mxu0 0.0
      %3968 = vmatpush1.msra.mxu0 0.0
      %3969 = vmatprep.subr.mxu0 0.0
      %3970 = vmatpush1.msra.mxu0 0.0
      %3971 = vmatprep.subr.mxu0 0.0
      %3972 = vmatpush1.msra.mxu0 0.0
      %3973 = vmatprep.subr.mxu0 0.0
      %3974 = vmatpush1.msra.mxu0 0.0
      %3975 = vmatprep.subr.mxu0 0.0
      %3976 = vmatpush1.msra.mxu0 0.0
      %3977 = vmatprep.mubr.f32.mxu0 0.0
      %v3978 = vand.u32 %v3757, 4294901760
      %v3979 = vsub.f32 %v3757, %v3978
      %3980 = vmatmul.mubr.f32.gmra.mrb[0].mxu0 %v3979
      %v3981 = vpop.f32.mrb[0].mxu0
      %v3982 = vadd.f32 %v3908, %v3981
      %v3983 = vpop.f32.mrb[0].mxu0
      %3984 = vdwg.mxu0
      %3985 = vmatprep.subr.mxu0 0.0
      %v3986 = vand.u32 %v466, 4294901760
      %3987 = vmatpush1.msra.mxu0 %v3986
      %3988 = vmatprep.subr.mxu0 0.0
      %3989 = vmatpush1.msra.mxu0 0.0
      %3990 = vmatprep.subr.mxu0 0.0
      %3991 = vmatpush1.msra.mxu0 0.0
      %3992 = vmatprep.subr.mxu0 0.0
      %3993 = vmatpush1.msra.mxu0 0.0
      %3994 = vmatprep.subr.mxu0 0.0
      %3995 = vmatpush1.msra.mxu0 0.0
      %3996 = vmatprep.subr.mxu0 0.0
      %3997 = vmatpush1.msra.mxu0 0.0
      %3998 = vmatprep.subr.mxu0 0.0
      %3999 = vmatpush1.msra.mxu0 0.0
      %4000 = vmatprep.subr.mxu0 0.0
      %4001 = vmatpush1.msra.mxu0 0.0
      %4002 = vmatprep.subr.mxu0 0.0
      %4003 = vmatpush1.msra.mxu0 0.0
      %4004 = vmatprep.subr.mxu0 0.0
      %4005 = vmatpush1.msra.mxu0 0.0
      %4006 = vmatprep.subr.mxu0 0.0
      %4007 = vmatpush1.msra.mxu0 0.0
      %4008 = vmatprep.subr.mxu0 0.0
      %4009 = vmatpush1.msra.mxu0 0.0
      %4010 = vmatprep.subr.mxu0 0.0
      %4011 = vmatpush1.msra.mxu0 0.0
      %4012 = vmatprep.subr.mxu0 0.0
      %4013 = vmatpush1.msra.mxu0 0.0
      %4014 = vmatprep.subr.mxu0 0.0
      %4015 = vmatpush1.msra.mxu0 0.0
      %4016 = vmatprep.subr.mxu0 0.0
      %4017 = vmatpush1.msra.mxu0 0.0
      %4018 = vmatprep.subr.mxu0 0.0
      %4019 = vmatpush1.msra.mxu0 0.0
      %4020 = vmatprep.subr.mxu0 0.0
      %4021 = vmatpush1.msra.mxu0 0.0
      %4022 = vmatprep.subr.mxu0 0.0
      %4023 = vmatpush1.msra.mxu0 0.0
      %4024 = vmatprep.subr.mxu0 0.0
      %4025 = vmatpush1.msra.mxu0 0.0
      %4026 = vmatprep.subr.mxu0 0.0
      %4027 = vmatpush1.msra.mxu0 0.0
      %4028 = vmatprep.subr.mxu0 0.0
      %4029 = vmatpush1.msra.mxu0 0.0
      %4030 = vmatprep.subr.mxu0 0.0
      %4031 = vmatpush1.msra.mxu0 0.0
      %4032 = vmatprep.subr.mxu0 0.0
      %4033 = vmatpush1.msra.mxu0 0.0
      %4034 = vmatprep.subr.mxu0 0.0
      %4035 = vmatpush1.msra.mxu0 0.0
      %4036 = vmatprep.subr.mxu0 0.0
      %4037 = vmatpush1.msra.mxu0 0.0
      %4038 = vmatprep.subr.mxu0 0.0
      %4039 = vmatpush1.msra.mxu0 0.0
      %4040 = vmatprep.subr.mxu0 0.0
      %4041 = vmatpush1.msra.mxu0 0.0
      %4042 = vmatprep.subr.mxu0 0.0
      %4043 = vmatpush1.msra.mxu0 0.0
      %4044 = vmatprep.subr.mxu0 0.0
      %4045 = vmatpush1.msra.mxu0 0.0
      %4046 = vmatprep.subr.mxu0 0.0
      %4047 = vmatpush1.msra.mxu0 0.0
      %4048 = vmatprep.subr.mxu0 0.0
      %4049 = vmatpush1.msra.mxu0 0.0
      %4050 = vmatprep.mubr.f32.mxu0 0.0
      %v4051 = vand.u32 %v3757, 4294901760
      %v4052 = vsub.f32 %v3757, %v4051
      %v4053 = vand.u32 %v4052, 4294901760
      %4054 = vmatmul.mubr.f32.gmra.mrb[0].mxu0 %v4053
      %v4055 = vpop.f32.mrb[0].mxu0
      %v4056 = vadd.f32 %v3982, %v4055
      %v4057 = vpop.f32.mrb[0].mxu0
      %4058 = vdwg.mxu0
      %4059 = vmatprep.subr.mxu0 0.0
      %v4060 = vand.u32 %v466, 4294901760
      %v4061 = vsub.f32 %v466, %v4060
      %v4062 = vand.u32 %v4061, 4294901760
      %4063 = vmatpush1.msra.mxu0 %v4062
      %4064 = vmatprep.subr.mxu0 0.0
      %4065 = vmatpush1.msra.mxu0 0.0
      %4066 = vmatprep.subr.mxu0 0.0
      %4067 = vmatpush1.msra.mxu0 0.0
      %4068 = vmatprep.subr.mxu0 0.0
      %4069 = vmatpush1.msra.mxu0 0.0
      %4070 = vmatprep.subr.mxu0 0.0
      %4071 = vmatpush1.msra.mxu0 0.0
      %4072 = vmatprep.subr.mxu0 0.0
      %4073 = vmatpush1.msra.mxu0 0.0
      %4074 = vmatprep.subr.mxu0 0.0
      %4075 = vmatpush1.msra.mxu0 0.0
      %4076 = vmatprep.subr.mxu0 0.0
      %4077 = vmatpush1.msra.mxu0 0.0
      %4078 = vmatprep.subr.mxu0 0.0
      %4079 = vmatpush1.msra.mxu0 0.0
      %4080 = vmatprep.subr.mxu0 0.0
      %4081 = vmatpush1.msra.mxu0 0.0
      %4082 = vmatprep.subr.mxu0 0.0
      %4083 = vmatpush1.msra.mxu0 0.0
      %4084 = vmatprep.subr.mxu0 0.0
      %4085 = vmatpush1.msra.mxu0 0.0
      %4086 = vmatprep.subr.mxu0 0.0
      %4087 = vmatpush1.msra.mxu0 0.0
      %4088 = vmatprep.subr.mxu0 0.0
      %4089 = vmatpush1.msra.mxu0 0.0
      %4090 = vmatprep.subr.mxu0 0.0
      %4091 = vmatpush1.msra.mxu0 0.0
      %4092 = vmatprep.subr.mxu0 0.0
      %4093 = vmatpush1.msra.mxu0 0.0
      %4094 = vmatprep.subr.mxu0 0.0
      %4095 = vmatpush1.msra.mxu0 0.0
      %4096 = vmatprep.subr.mxu0 0.0
      %4097 = vmatpush1.msra.mxu0 0.0
      %4098 = vmatprep.subr.mxu0 0.0
      %4099 = vmatpush1.msra.mxu0 0.0
      %4100 = vmatprep.subr.mxu0 0.0
      %4101 = vmatpush1.msra.mxu0 0.0
      %4102 = vmatprep.subr.mxu0 0.0
      %4103 = vmatpush1.msra.mxu0 0.0
      %4104 = vmatprep.subr.mxu0 0.0
      %4105 = vmatpush1.msra.mxu0 0.0
      %4106 = vmatprep.subr.mxu0 0.0
      %4107 = vmatpush1.msra.mxu0 0.0
      %4108 = vmatprep.subr.mxu0 0.0
      %4109 = vmatpush1.msra.mxu0 0.0
      %4110 = vmatprep.subr.mxu0 0.0
      %4111 = vmatpush1.msra.mxu0 0.0
      %4112 = vmatprep.subr.mxu0 0.0
      %4113 = vmatpush1.msra.mxu0 0.0
      %4114 = vmatprep.subr.mxu0 0.0
      %4115 = vmatpush1.msra.mxu0 0.0
      %4116 = vmatprep.subr.mxu0 0.0
      %4117 = vmatpush1.msra.mxu0 0.0
      %4118 = vmatprep.subr.mxu0 0.0
      %4119 = vmatpush1.msra.mxu0 0.0
      %4120 = vmatprep.subr.mxu0 0.0
      %4121 = vmatpush1.msra.mxu0 0.0
      %4122 = vmatprep.subr.mxu0 0.0
      %4123 = vmatpush1.msra.mxu0 0.0
      %4124 = vmatprep.subr.mxu0 0.0
      %4125 = vmatpush1.msra.mxu0 0.0
      %4126 = vmatprep.mubr.f32.mxu0 0.0
      %v4127 = vand.u32 %v3757, 4294901760
      %4128 = vmatmul.mubr.f32.gmra.mrb[0].mxu0 %v4127
      %v4129 = vpop.f32.mrb[0].mxu0
      %v4130 = vadd.f32 %v4056, %v4129
      %v4131 = vpop.f32.mrb[0].mxu0
      %4132 = vdwg.mxu0
      %4133 = vmatprep.subr.mxu0 0.0
      %v4134 = vand.u32 %v466, 4294901760
      %4135 = vmatpush1.msra.mxu0 %v4134
      %4136 = vmatprep.subr.mxu0 0.0
      %4137 = vmatpush1.msra.mxu0 0.0
      %4138 = vmatprep.subr.mxu0 0.0
      %4139 = vmatpush1.msra.mxu0 0.0
      %4140 = vmatprep.subr.mxu0 0.0
      %4141 = vmatpush1.msra.mxu0 0.0
      %4142 = vmatprep.subr.mxu0 0.0
      %4143 = vmatpush1.msra.mxu0 0.0
      %4144 = vmatprep.subr.mxu0 0.0
      %4145 = vmatpush1.msra.mxu0 0.0
      %4146 = vmatprep.subr.mxu0 0.0
      %4147 = vmatpush1.msra.mxu0 0.0
      %4148 = vmatprep.subr.mxu0 0.0
      %4149 = vmatpush1.msra.mxu0 0.0
      %4150 = vmatprep.subr.mxu0 0.0
      %4151 = vmatpush1.msra.mxu0 0.0
      %4152 = vmatprep.subr.mxu0 0.0
      %4153 = vmatpush1.msra.mxu0 0.0
      %4154 = vmatprep.subr.mxu0 0.0
      %4155 = vmatpush1.msra.mxu0 0.0
      %4156 = vmatprep.subr.mxu0 0.0
      %4157 = vmatpush1.msra.mxu0 0.0
      %4158 = vmatprep.subr.mxu0 0.0
      %4159 = vmatpush1.msra.mxu0 0.0
      %4160 = vmatprep.subr.mxu0 0.0
      %4161 = vmatpush1.msra.mxu0 0.0
      %4162 = vmatprep.subr.mxu0 0.0
      %4163 = vmatpush1.msra.mxu0 0.0
      %4164 = vmatprep.subr.mxu0 0.0
      %4165 = vmatpush1.msra.mxu0 0.0
      %4166 = vmatprep.subr.mxu0 0.0
      %4167 = vmatpush1.msra.mxu0 0.0
      %4168 = vmatprep.subr.mxu0 0.0
      %4169 = vmatpush1.msra.mxu0 0.0
      %4170 = vmatprep.subr.mxu0 0.0
      %4171 = vmatpush1.msra.mxu0 0.0
      %4172 = vmatprep.subr.mxu0 0.0
      %4173 = vmatpush1.msra.mxu0 0.0
      %4174 = vmatprep.subr.mxu0 0.0
      %4175 = vmatpush1.msra.mxu0 0.0
      %4176 = vmatprep.subr.mxu0 0.0
      %4177 = vmatpush1.msra.mxu0 0.0
      %4178 = vmatprep.subr.mxu0 0.0
      %4179 = vmatpush1.msra.mxu0 0.0
      %4180 = vmatprep.subr.mxu0 0.0
      %4181 = vmatpush1.msra.mxu0 0.0
      %4182 = vmatprep.subr.mxu0 0.0
      %4183 = vmatpush1.msra.mxu0 0.0
      %4184 = vmatprep.subr.mxu0 0.0
      %4185 = vmatpush1.msra.mxu0 0.0
      %4186 = vmatprep.subr.mxu0 0.0
      %4187 = vmatpush1.msra.mxu0 0.0
      %4188 = vmatprep.subr.mxu0 0.0
      %4189 = vmatpush1.msra.mxu0 0.0
      %4190 = vmatprep.subr.mxu0 0.0
      %4191 = vmatpush1.msra.mxu0 0.0
      %4192 = vmatprep.subr.mxu0 0.0
      %4193 = vmatpush1.msra.mxu0 0.0
      %4194 = vmatprep.subr.mxu0 0.0
      %4195 = vmatpush1.msra.mxu0 0.0
      %4196 = vmatprep.subr.mxu0 0.0
      %4197 = vmatpush1.msra.mxu0 0.0
      %4198 = vmatprep.mubr.f32.mxu0 0.0
      %v4199 = vand.u32 %v3757, 4294901760
      %4200 = vmatmul.mubr.f32.gmra.mrb[0].mxu0 %v4199
      %v4201 = vpop.f32.mrb[0].mxu0
      %v4202 = vadd.f32 %v4130, %v4201
      %v4203 = vpop.f32.mrb[0].mxu0
      %4204 = vdwg.mxu0
      %v4205 = vadd.f32 %v2405, %v2855
      %v4206 = vadd.f32 %v2406, %v3304
      %v4207 = vadd.f32 %v2407, %v3753
      %v4208 = vadd.f32 %v2408, %v4202
      %4209 = vst.msk [vmem:[#allocation2] sm:$0xff] %vm479, %v4205
      %4210 = vst.msk [vmem:[#allocation2 + $0x8] sm:$0xff] %vm479, %v4206
      %4211 = vst.msk [vmem:[#allocation2 + $0x10] sm:$0xff] %vm479, %v4207
      %4212 = vst.msk [vmem:[#allocation2 + $0x18] sm:$0xff] %vm479, %v4208
      %4213 = vst.msk [vmem:[#allocation3] sm:$0xff] %vm2376, %v2304
      %4214 = vst.msk [vmem:[#allocation3 + $0x8] sm:$0xff] %vm2376, %v2305
      %4215 = vst.msk [vmem:[#allocation3 + $0x10] sm:$0xff] %vm2376, %v2306
      %4216 = vst.msk [vmem:[#allocation3 + $0x18] sm:$0xff] %vm2376, %v2307
      %p4217 = scmp.eq.s32.totalorder %s436, %s435
      // Predicated region
      $region53: #{_lambda_.9} parent=47 // pred_check
        %p4218 = pneg %p4217
      $region54: #{_lambda_.9} parent=47 // pred_check_branch
        %4220 = sbr.rel (%p4218) target = $region56
      $region55: #{_lambda_.9} parent=47 // pred_region
        %v4221 = vld [vmem:[#allocation2] sm:$0xff]
        %v4222 = vld [vmem:[#allocation2 + $0x8] sm:$0xff]
        %v4223 = vld [vmem:[#allocation2 + $0x10] sm:$0xff]
        %v4224 = vld [vmem:[#allocation2 + $0x18] sm:$0xff]
        %v4225 = vld [vmem:[#allocation4] sm:$0xff]
        %v4226 = vld [vmem:[#allocation4 + $0x8] sm:$0xff]
        %v4227 = vld [vmem:[#allocation4 + $0x10] sm:$0xff]
        %v4228 = vld [vmem:[#allocation4 + $0x18] sm:$0xff]
        %v4229 = vrcp.pop %v4225
        %v4230 = vmul.f32 1.0, %v4229
        %v4231 = vrcp.pop %v4226
        %v4232 = vmul.f32 1.0, %v4231
        %v4233 = vrcp.pop %v4227
        %v4234 = vmul.f32 1.0, %v4233
        %v4235 = vrcp.pop %v4228
        %v4236 = vmul.f32 1.0, %v4235
        %4238 = vset.pattern.permute.xlu0 0
        %4239 = vperm.xlu0 %4238, %v4230
        %v4240 = vpop.permute.xlu0 %4239
        %4243 = vset.pattern.permute.xlu0 0
        %4244 = vperm.xlu0 %4243, %v4232
        %v4245 = vpop.permute.xlu0 %4244
        %4248 = vset.pattern.permute.xlu0 0
        %4249 = vperm.xlu0 %4248, %v4234
        %v4250 = vpop.permute.xlu0 %4249
        %4253 = vset.pattern.permute.xlu0 0
        %4254 = vperm.xlu0 %4253, %v4236
        %v4255 = vpop.permute.xlu0 %4254
        %v4257 = vmul.f32 %v4221, %v4240
        %v4258 = vmul.f32 %v4222, %v4245
        %v4259 = vmul.f32 %v4223, %v4250
        %v4260 = vmul.f32 %v4224, %v4255
        %v4261 = vld [vmem:[%s6] sm:$0xff]
        %s4262 = scalar_lea.vmem %s6, 8
        %v4263 = vld [vmem:[%s4262] sm:$0xff]
        %v4265 = vsel %vm479, %v4258, 0
        %4267 = vmatprep.subr.mxu0 0.0
        %v4268 = vand.u32 %v4263, 4294901760
        %4269 = vmatpush1.msra.mxu0 %v4268
        %4270 = vmatprep.subr.mxu0 0.0
        %4271 = vmatpush1.msra.mxu0 0.0
        %4272 = vmatprep.subr.mxu0 0.0
        %4273 = vmatpush1.msra.mxu0 0.0
        %4274 = vmatprep.subr.mxu0 0.0
        %4275 = vmatpush1.msra.mxu0 0.0
        %4276 = vmatprep.subr.mxu0 0.0
        %4277 = vmatpush1.msra.mxu0 0.0
        %4278 = vmatprep.subr.mxu0 0.0
        %4279 = vmatpush1.msra.mxu0 0.0
        %4280 = vmatprep.subr.mxu0 0.0
        %4281 = vmatpush1.msra.mxu0 0.0
        %4282 = vmatprep.subr.mxu0 0.0
        %4283 = vmatpush1.msra.mxu0 0.0
        %4284 = vmatprep.subr.mxu0 0.0
        %4285 = vmatpush1.msra.mxu0 0.0
        %4286 = vmatprep.subr.mxu0 0.0
        %4287 = vmatpush1.msra.mxu0 0.0
        %4288 = vmatprep.subr.mxu0 0.0
        %4289 = vmatpush1.msra.mxu0 0.0
        %4290 = vmatprep.subr.mxu0 0.0
        %4291 = vmatpush1.msra.mxu0 0.0
        %4292 = vmatprep.subr.mxu0 0.0
        %4293 = vmatpush1.msra.mxu0 0.0
        %4294 = vmatprep.subr.mxu0 0.0
        %4295 = vmatpush1.msra.mxu0 0.0
        %4296 = vmatprep.subr.mxu0 0.0
        %4297 = vmatpush1.msra.mxu0 0.0
        %4298 = vmatprep.subr.mxu0 0.0
        %4299 = vmatpush1.msra.mxu0 0.0
        %4300 = vmatprep.subr.mxu0 0.0
        %4301 = vmatpush1.msra.mxu0 0.0
        %4302 = vmatprep.subr.mxu0 0.0
        %4303 = vmatpush1.msra.mxu0 0.0
        %4304 = vmatprep.subr.mxu0 0.0
        %4305 = vmatpush1.msra.mxu0 0.0
        %4306 = vmatprep.subr.mxu0 0.0
        %4307 = vmatpush1.msra.mxu0 0.0
        %4308 = vmatprep.subr.mxu0 0.0
        %4309 = vmatpush1.msra.mxu0 0.0
        %4310 = vmatprep.subr.mxu0 0.0
        %4311 = vmatpush1.msra.mxu0 0.0
        %4312 = vmatprep.subr.mxu0 0.0
        %4313 = vmatpush1.msra.mxu0 0.0
        %4314 = vmatprep.subr.mxu0 0.0
        %4315 = vmatpush1.msra.mxu0 0.0
        %4316 = vmatprep.subr.mxu0 0.0
        %4317 = vmatpush1.msra.mxu0 0.0
        %4318 = vmatprep.subr.mxu0 0.0
        %4319 = vmatpush1.msra.mxu0 0.0
        %4320 = vmatprep.subr.mxu0 0.0
        %4321 = vmatpush1.msra.mxu0 0.0
        %4322 = vmatprep.subr.mxu0 0.0
        %4323 = vmatpush1.msra.mxu0 0.0
        %4324 = vmatprep.subr.mxu0 0.0
        %4325 = vmatpush1.msra.mxu0 0.0
        %4326 = vmatprep.subr.mxu0 0.0
        %4327 = vmatpush1.msra.mxu0 0.0
        %4328 = vmatprep.subr.mxu0 0.0
        %4329 = vmatpush1.msra.mxu0 0.0
        %4330 = vmatprep.subr.mxu0 0.0
        %4331 = vmatpush1.msra.mxu0 0.0
        %4332 = vmatprep.mubr.f32.mxu0 0.0
        %v4333 = vand.u32 %v4265, 4294901760
        %v4334 = vsub.f32 %v4265, %v4333
        %v4335 = vand.u32 %v4334, 4294901760
        %v4336 = vsub.f32 %v4334, %v4335
        %v4337 = vand.u32 %v4336, 4294901760
        %4338 = vmatmul.mubr.f32.gmra.mrb[0].mxu0 %v4337
        %v4339 = vpop.f32.mrb[0].mxu0
        %v4340 = vadd.f32 0.0, %v4339
        %v4341 = vpop.f32.mrb[0].mxu0
        %4342 = vdwg.mxu0
        %4343 = vmatprep.subr.mxu0 0.0
        %v4344 = vand.u32 %v4263, 4294901760
        %v4345 = vsub.f32 %v4263, %v4344
        %v4346 = vand.u32 %v4345, 4294901760
        %v4347 = vsub.f32 %v4345, %v4346
        %v4348 = vand.u32 %v4347, 4294901760
        %4349 = vmatpush1.msra.mxu0 %v4348
        %4350 = vmatprep.subr.mxu0 0.0
        %4351 = vmatpush1.msra.mxu0 0.0
        %4352 = vmatprep.subr.mxu0 0.0
        %4353 = vmatpush1.msra.mxu0 0.0
        %4354 = vmatprep.subr.mxu0 0.0
        %4355 = vmatpush1.msra.mxu0 0.0
        %4356 = vmatprep.subr.mxu0 0.0
        %4357 = vmatpush1.msra.mxu0 0.0
        %4358 = vmatprep.subr.mxu0 0.0
        %4359 = vmatpush1.msra.mxu0 0.0
        %4360 = vmatprep.subr.mxu0 0.0
        %4361 = vmatpush1.msra.mxu0 0.0
        %4362 = vmatprep.subr.mxu0 0.0
        %4363 = vmatpush1.msra.mxu0 0.0
        %4364 = vmatprep.subr.mxu0 0.0
        %4365 = vmatpush1.msra.mxu0 0.0
        %4366 = vmatprep.subr.mxu0 0.0
        %4367 = vmatpush1.msra.mxu0 0.0
        %4368 = vmatprep.subr.mxu0 0.0
        %4369 = vmatpush1.msra.mxu0 0.0
        %4370 = vmatprep.subr.mxu0 0.0
        %4371 = vmatpush1.msra.mxu0 0.0
        %4372 = vmatprep.subr.mxu0 0.0
        %4373 = vmatpush1.msra.mxu0 0.0
        %4374 = vmatprep.subr.mxu0 0.0
        %4375 = vmatpush1.msra.mxu0 0.0
        %4376 = vmatprep.subr.mxu0 0.0
        %4377 = vmatpush1.msra.mxu0 0.0
        %4378 = vmatprep.subr.mxu0 0.0
        %4379 = vmatpush1.msra.mxu0 0.0
        %4380 = vmatprep.subr.mxu0 0.0
        %4381 = vmatpush1.msra.mxu0 0.0
        %4382 = vmatprep.subr.mxu0 0.0
        %4383 = vmatpush1.msra.mxu0 0.0
        %4384 = vmatprep.subr.mxu0 0.0
        %4385 = vmatpush1.msra.mxu0 0.0
        %4386 = vmatprep.subr.mxu0 0.0
        %4387 = vmatpush1.msra.mxu0 0.0
        %4388 = vmatprep.subr.mxu0 0.0
        %4389 = vmatpush1.msra.mxu0 0.0
        %4390 = vmatprep.subr.mxu0 0.0
        %4391 = vmatpush1.msra.mxu0 0.0
        %4392 = vmatprep.subr.mxu0 0.0
        %4393 = vmatpush1.msra.mxu0 0.0
        %4394 = vmatprep.subr.mxu0 0.0
        %4395 = vmatpush1.msra.mxu0 0.0
        %4396 = vmatprep.subr.mxu0 0.0
        %4397 = vmatpush1.msra.mxu0 0.0
        %4398 = vmatprep.subr.mxu0 0.0
        %4399 = vmatpush1.msra.mxu0 0.0
        %4400 = vmatprep.subr.mxu0 0.0
        %4401 = vmatpush1.msra.mxu0 0.0
        %4402 = vmatprep.subr.mxu0 0.0
        %4403 = vmatpush1.msra.mxu0 0.0
        %4404 = vmatprep.subr.mxu0 0.0
        %4405 = vmatpush1.msra.mxu0 0.0
        %4406 = vmatprep.subr.mxu0 0.0
        %4407 = vmatpush1.msra.mxu0 0.0
        %4408 = vmatprep.subr.mxu0 0.0
        %4409 = vmatpush1.msra.mxu0 0.0
        %4410 = vmatprep.subr.mxu0 0.0
        %4411 = vmatpush1.msra.mxu0 0.0
        %4412 = vmatprep.mubr.f32.mxu0 0.0
        %v4413 = vand.u32 %v4265, 4294901760
        %4414 = vmatmul.mubr.f32.gmra.mrb[0].mxu0 %v4413
        %v4415 = vpop.f32.mrb[0].mxu0
        %v4416 = vadd.f32 %v4340, %v4415
        %v4417 = vpop.f32.mrb[0].mxu0
        %4418 = vdwg.mxu0
        %4419 = vmatprep.subr.mxu0 0.0
        %v4420 = vand.u32 %v4263, 4294901760
        %v4421 = vsub.f32 %v4263, %v4420
        %4422 = vmatpush1.msra.mxu0 %v4421
        %4423 = vmatprep.subr.mxu0 0.0
        %4424 = vmatpush1.msra.mxu0 0.0
        %4425 = vmatprep.subr.mxu0 0.0
        %4426 = vmatpush1.msra.mxu0 0.0
        %4427 = vmatprep.subr.mxu0 0.0
        %4428 = vmatpush1.msra.mxu0 0.0
        %4429 = vmatprep.subr.mxu0 0.0
        %4430 = vmatpush1.msra.mxu0 0.0
        %4431 = vmatprep.subr.mxu0 0.0
        %4432 = vmatpush1.msra.mxu0 0.0
        %4433 = vmatprep.subr.mxu0 0.0
        %4434 = vmatpush1.msra.mxu0 0.0
        %4435 = vmatprep.subr.mxu0 0.0
        %4436 = vmatpush1.msra.mxu0 0.0
        %4437 = vmatprep.subr.mxu0 0.0
        %4438 = vmatpush1.msra.mxu0 0.0
        %4439 = vmatprep.subr.mxu0 0.0
        %4440 = vmatpush1.msra.mxu0 0.0
        %4441 = vmatprep.subr.mxu0 0.0
        %4442 = vmatpush1.msra.mxu0 0.0
        %4443 = vmatprep.subr.mxu0 0.0
        %4444 = vmatpush1.msra.mxu0 0.0
        %4445 = vmatprep.subr.mxu0 0.0
        %4446 = vmatpush1.msra.mxu0 0.0
        %4447 = vmatprep.subr.mxu0 0.0
        %4448 = vmatpush1.msra.mxu0 0.0
        %4449 = vmatprep.subr.mxu0 0.0
        %4450 = vmatpush1.msra.mxu0 0.0
        %4451 = vmatprep.subr.mxu0 0.0
        %4452 = vmatpush1.msra.mxu0 0.0
        %4453 = vmatprep.subr.mxu0 0.0
        %4454 = vmatpush1.msra.mxu0 0.0
        %4455 = vmatprep.subr.mxu0 0.0
        %4456 = vmatpush1.msra.mxu0 0.0
        %4457 = vmatprep.subr.mxu0 0.0
        %4458 = vmatpush1.msra.mxu0 0.0
        %4459 = vmatprep.subr.mxu0 0.0
        %4460 = vmatpush1.msra.mxu0 0.0
        %4461 = vmatprep.subr.mxu0 0.0
        %4462 = vmatpush1.msra.mxu0 0.0
        %4463 = vmatprep.subr.mxu0 0.0
        %4464 = vmatpush1.msra.mxu0 0.0
        %4465 = vmatprep.subr.mxu0 0.0
        %4466 = vmatpush1.msra.mxu0 0.0
        %4467 = vmatprep.subr.mxu0 0.0
        %4468 = vmatpush1.msra.mxu0 0.0
        %4469 = vmatprep.subr.mxu0 0.0
        %4470 = vmatpush1.msra.mxu0 0.0
        %4471 = vmatprep.subr.mxu0 0.0
        %4472 = vmatpush1.msra.mxu0 0.0
        %4473 = vmatprep.subr.mxu0 0.0
        %4474 = vmatpush1.msra.mxu0 0.0
        %4475 = vmatprep.subr.mxu0 0.0
        %4476 = vmatpush1.msra.mxu0 0.0
        %4477 = vmatprep.subr.mxu0 0.0
        %4478 = vmatpush1.msra.mxu0 0.0
        %4479 = vmatprep.subr.mxu0 0.0
        %4480 = vmatpush1.msra.mxu0 0.0
        %4481 = vmatprep.subr.mxu0 0.0
        %4482 = vmatpush1.msra.mxu0 0.0
        %4483 = vmatprep.subr.mxu0 0.0
        %4484 = vmatpush1.msra.mxu0 0.0
        %4485 = vmatprep.mubr.f32.mxu0 0.0
        %v4486 = vand.u32 %v4265, 4294901760
        %v4487 = vsub.f32 %v4265, %v4486
        %4488 = vmatmul.mubr.f32.gmra.mrb[0].mxu0 %v4487
        %v4489 = vpop.f32.mrb[0].mxu0
        %v4490 = vadd.f32 %v4416, %v4489
        %v4491 = vpop.f32.mrb[0].mxu0
        %4492 = vdwg.mxu0
        %4493 = vmatprep.subr.mxu0 0.0
        %v4494 = vand.u32 %v4263, 4294901760
        %4495 = vmatpush1.msra.mxu0 %v4494
        %4496 = vmatprep.subr.mxu0 0.0
        %4497 = vmatpush1.msra.mxu0 0.0
        %4498 = vmatprep.subr.mxu0 0.0
        %4499 = vmatpush1.msra.mxu0 0.0
        %4500 = vmatprep.subr.mxu0 0.0
        %4501 = vmatpush1.msra.mxu0 0.0
        %4502 = vmatprep.subr.mxu0 0.0
        %4503 = vmatpush1.msra.mxu0 0.0
        %4504 = vmatprep.subr.mxu0 0.0
        %4505 = vmatpush1.msra.mxu0 0.0
        %4506 = vmatprep.subr.mxu0 0.0
        %4507 = vmatpush1.msra.mxu0 0.0
        %4508 = vmatprep.subr.mxu0 0.0
        %4509 = vmatpush1.msra.mxu0 0.0
        %4510 = vmatprep.subr.mxu0 0.0
        %4511 = vmatpush1.msra.mxu0 0.0
        %4512 = vmatprep.subr.mxu0 0.0
        %4513 = vmatpush1.msra.mxu0 0.0
        %4514 = vmatprep.subr.mxu0 0.0
        %4515 = vmatpush1.msra.mxu0 0.0
        %4516 = vmatprep.subr.mxu0 0.0
        %4517 = vmatpush1.msra.mxu0 0.0
        %4518 = vmatprep.subr.mxu0 0.0
        %4519 = vmatpush1.msra.mxu0 0.0
        %4520 = vmatprep.subr.mxu0 0.0
        %4521 = vmatpush1.msra.mxu0 0.0
        %4522 = vmatprep.subr.mxu0 0.0
        %4523 = vmatpush1.msra.mxu0 0.0
        %4524 = vmatprep.subr.mxu0 0.0
        %4525 = vmatpush1.msra.mxu0 0.0
        %4526 = vmatprep.subr.mxu0 0.0
        %4527 = vmatpush1.msra.mxu0 0.0
        %4528 = vmatprep.subr.mxu0 0.0
        %4529 = vmatpush1.msra.mxu0 0.0
        %4530 = vmatprep.subr.mxu0 0.0
        %4531 = vmatpush1.msra.mxu0 0.0
        %4532 = vmatprep.subr.mxu0 0.0
        %4533 = vmatpush1.msra.mxu0 0.0
        %4534 = vmatprep.subr.mxu0 0.0
        %4535 = vmatpush1.msra.mxu0 0.0
        %4536 = vmatprep.subr.mxu0 0.0
        %4537 = vmatpush1.msra.mxu0 0.0
        %4538 = vmatprep.subr.mxu0 0.0
        %4539 = vmatpush1.msra.mxu0 0.0
        %4540 = vmatprep.subr.mxu0 0.0
        %4541 = vmatpush1.msra.mxu0 0.0
        %4542 = vmatprep.subr.mxu0 0.0
        %4543 = vmatpush1.msra.mxu0 0.0
        %4544 = vmatprep.subr.mxu0 0.0
        %4545 = vmatpush1.msra.mxu0 0.0
        %4546 = vmatprep.subr.mxu0 0.0
        %4547 = vmatpush1.msra.mxu0 0.0
        %4548 = vmatprep.subr.mxu0 0.0
        %4549 = vmatpush1.msra.mxu0 0.0
        %4550 = vmatprep.subr.mxu0 0.0
        %4551 = vmatpush1.msra.mxu0 0.0
        %4552 = vmatprep.subr.mxu0 0.0
        %4553 = vmatpush1.msra.mxu0 0.0
        %4554 = vmatprep.subr.mxu0 0.0
        %4555 = vmatpush1.msra.mxu0 0.0
        %4556 = vmatprep.subr.mxu0 0.0
        %4557 = vmatpush1.msra.mxu0 0.0
        %4558 = vmatprep.mubr.f32.mxu0 0.0
        %v4559 = vand.u32 %v4265, 4294901760
        %v4560 = vsub.f32 %v4265, %v4559
        %v4561 = vand.u32 %v4560, 4294901760
        %4562 = vmatmul.mubr.f32.gmra.mrb[0].mxu0 %v4561
        %v4563 = vpop.f32.mrb[0].mxu0
        %v4564 = vadd.f32 %v4490, %v4563
        %v4565 = vpop.f32.mrb[0].mxu0
        %4566 = vdwg.mxu0
        %4567 = vmatprep.subr.mxu0 0.0
        %v4568 = vand.u32 %v4263, 4294901760
        %v4569 = vsub.f32 %v4263, %v4568
        %v4570 = vand.u32 %v4569, 4294901760
        %4571 = vmatpush1.msra.mxu0 %v4570
        %4572 = vmatprep.subr.mxu0 0.0
        %4573 = vmatpush1.msra.mxu0 0.0
        %4574 = vmatprep.subr.mxu0 0.0
        %4575 = vmatpush1.msra.mxu0 0.0
        %4576 = vmatprep.subr.mxu0 0.0
        %4577 = vmatpush1.msra.mxu0 0.0
        %4578 = vmatprep.subr.mxu0 0.0
        %4579 = vmatpush1.msra.mxu0 0.0
        %4580 = vmatprep.subr.mxu0 0.0
        %4581 = vmatpush1.msra.mxu0 0.0
        %4582 = vmatprep.subr.mxu0 0.0
        %4583 = vmatpush1.msra.mxu0 0.0
        %4584 = vmatprep.subr.mxu0 0.0
        %4585 = vmatpush1.msra.mxu0 0.0
        %4586 = vmatprep.subr.mxu0 0.0
        %4587 = vmatpush1.msra.mxu0 0.0
        %4588 = vmatprep.subr.mxu0 0.0
        %4589 = vmatpush1.msra.mxu0 0.0
        %4590 = vmatprep.subr.mxu0 0.0
        %4591 = vmatpush1.msra.mxu0 0.0
        %4592 = vmatprep.subr.mxu0 0.0
        %4593 = vmatpush1.msra.mxu0 0.0
        %4594 = vmatprep.subr.mxu0 0.0
        %4595 = vmatpush1.msra.mxu0 0.0
        %4596 = vmatprep.subr.mxu0 0.0
        %4597 = vmatpush1.msra.mxu0 0.0
        %4598 = vmatprep.subr.mxu0 0.0
        %4599 = vmatpush1.msra.mxu0 0.0
        %4600 = vmatprep.subr.mxu0 0.0
        %4601 = vmatpush1.msra.mxu0 0.0
        %4602 = vmatprep.subr.mxu0 0.0
        %4603 = vmatpush1.msra.mxu0 0.0
        %4604 = vmatprep.subr.mxu0 0.0
        %4605 = vmatpush1.msra.mxu0 0.0
        %4606 = vmatprep.subr.mxu0 0.0
        %4607 = vmatpush1.msra.mxu0 0.0
        %4608 = vmatprep.subr.mxu0 0.0
        %4609 = vmatpush1.msra.mxu0 0.0
        %4610 = vmatprep.subr.mxu0 0.0
        %4611 = vmatpush1.msra.mxu0 0.0
        %4612 = vmatprep.subr.mxu0 0.0
        %4613 = vmatpush1.msra.mxu0 0.0
        %4614 = vmatprep.subr.mxu0 0.0
        %4615 = vmatpush1.msra.mxu0 0.0
        %4616 = vmatprep.subr.mxu0 0.0
        %4617 = vmatpush1.msra.mxu0 0.0
        %4618 = vmatprep.subr.mxu0 0.0
        %4619 = vmatpush1.msra.mxu0 0.0
        %4620 = vmatprep.subr.mxu0 0.0
        %4621 = vmatpush1.msra.mxu0 0.0
        %4622 = vmatprep.subr.mxu0 0.0
        %4623 = vmatpush1.msra.mxu0 0.0
        %4624 = vmatprep.subr.mxu0 0.0
        %4625 = vmatpush1.msra.mxu0 0.0
        %4626 = vmatprep.subr.mxu0 0.0
        %4627 = vmatpush1.msra.mxu0 0.0
        %4628 = vmatprep.subr.mxu0 0.0
        %4629 = vmatpush1.msra.mxu0 0.0
        %4630 = vmatprep.subr.mxu0 0.0
        %4631 = vmatpush1.msra.mxu0 0.0
        %4632 = vmatprep.subr.mxu0 0.0
        %4633 = vmatpush1.msra.mxu0 0.0
        %4634 = vmatprep.mubr.f32.mxu0 0.0
        %v4635 = vand.u32 %v4265, 4294901760
        %4636 = vmatmul.mubr.f32.gmra.mrb[0].mxu0 %v4635
        %v4637 = vpop.f32.mrb[0].mxu0
        %v4638 = vadd.f32 %v4564, %v4637
        %v4639 = vpop.f32.mrb[0].mxu0
        %4640 = vdwg.mxu0
        %4641 = vmatprep.subr.mxu0 0.0
        %v4642 = vand.u32 %v4263, 4294901760
        %4643 = vmatpush1.msra.mxu0 %v4642
        %4644 = vmatprep.subr.mxu0 0.0
        %4645 = vmatpush1.msra.mxu0 0.0
        %4646 = vmatprep.subr.mxu0 0.0
        %4647 = vmatpush1.msra.mxu0 0.0
        %4648 = vmatprep.subr.mxu0 0.0
        %4649 = vmatpush1.msra.mxu0 0.0
        %4650 = vmatprep.subr.mxu0 0.0
        %4651 = vmatpush1.msra.mxu0 0.0
        %4652 = vmatprep.subr.mxu0 0.0
        %4653 = vmatpush1.msra.mxu0 0.0
        %4654 = vmatprep.subr.mxu0 0.0
        %4655 = vmatpush1.msra.mxu0 0.0
        %4656 = vmatprep.subr.mxu0 0.0
        %4657 = vmatpush1.msra.mxu0 0.0
        %4658 = vmatprep.subr.mxu0 0.0
        %4659 = vmatpush1.msra.mxu0 0.0
        %4660 = vmatprep.subr.mxu0 0.0
        %4661 = vmatpush1.msra.mxu0 0.0
        %4662 = vmatprep.subr.mxu0 0.0
        %4663 = vmatpush1.msra.mxu0 0.0
        %4664 = vmatprep.subr.mxu0 0.0
        %4665 = vmatpush1.msra.mxu0 0.0
        %4666 = vmatprep.subr.mxu0 0.0
        %4667 = vmatpush1.msra.mxu0 0.0
        %4668 = vmatprep.subr.mxu0 0.0
        %4669 = vmatpush1.msra.mxu0 0.0
        %4670 = vmatprep.subr.mxu0 0.0
        %4671 = vmatpush1.msra.mxu0 0.0
        %4672 = vmatprep.subr.mxu0 0.0
        %4673 = vmatpush1.msra.mxu0 0.0
        %4674 = vmatprep.subr.mxu0 0.0
        %4675 = vmatpush1.msra.mxu0 0.0
        %4676 = vmatprep.subr.mxu0 0.0
        %4677 = vmatpush1.msra.mxu0 0.0
        %4678 = vmatprep.subr.mxu0 0.0
        %4679 = vmatpush1.msra.mxu0 0.0
        %4680 = vmatprep.subr.mxu0 0.0
        %4681 = vmatpush1.msra.mxu0 0.0
        %4682 = vmatprep.subr.mxu0 0.0
        %4683 = vmatpush1.msra.mxu0 0.0
        %4684 = vmatprep.subr.mxu0 0.0
        %4685 = vmatpush1.msra.mxu0 0.0
        %4686 = vmatprep.subr.mxu0 0.0
        %4687 = vmatpush1.msra.mxu0 0.0
        %4688 = vmatprep.subr.mxu0 0.0
        %4689 = vmatpush1.msra.mxu0 0.0
        %4690 = vmatprep.subr.mxu0 0.0
        %4691 = vmatpush1.msra.mxu0 0.0
        %4692 = vmatprep.subr.mxu0 0.0
        %4693 = vmatpush1.msra.mxu0 0.0
        %4694 = vmatprep.subr.mxu0 0.0
        %4695 = vmatpush1.msra.mxu0 0.0
        %4696 = vmatprep.subr.mxu0 0.0
        %4697 = vmatpush1.msra.mxu0 0.0
        %4698 = vmatprep.subr.mxu0 0.0
        %4699 = vmatpush1.msra.mxu0 0.0
        %4700 = vmatprep.subr.mxu0 0.0
        %4701 = vmatpush1.msra.mxu0 0.0
        %4702 = vmatprep.subr.mxu0 0.0
        %4703 = vmatpush1.msra.mxu0 0.0
        %4704 = vmatprep.subr.mxu0 0.0
        %4705 = vmatpush1.msra.mxu0 0.0
        %4706 = vmatprep.mubr.f32.mxu0 0.0
        %v4707 = vand.u32 %v4265, 4294901760
        %4708 = vmatmul.mubr.f32.gmra.mrb[0].mxu0 %v4707
        %v4709 = vpop.f32.mrb[0].mxu0
        %v4710 = vadd.f32 %v4638, %v4709
        %v4711 = vpop.f32.mrb[0].mxu0
        %4712 = vdwg.mxu0
        %v4714 = vsel %vm479, %v4257, 0
        %4716 = vmatprep.subr.mxu0 0.0
        %v4717 = vand.u32 %v4261, 4294901760
        %4718 = vmatpush1.msra.mxu0 %v4717
        %4719 = vmatprep.subr.mxu0 0.0
        %4720 = vmatpush1.msra.mxu0 0.0
        %4721 = vmatprep.subr.mxu0 0.0
        %4722 = vmatpush1.msra.mxu0 0.0
        %4723 = vmatprep.subr.mxu0 0.0
        %4724 = vmatpush1.msra.mxu0 0.0
        %4725 = vmatprep.subr.mxu0 0.0
        %4726 = vmatpush1.msra.mxu0 0.0
        %4727 = vmatprep.subr.mxu0 0.0
        %4728 = vmatpush1.msra.mxu0 0.0
        %4729 = vmatprep.subr.mxu0 0.0
        %4730 = vmatpush1.msra.mxu0 0.0
        %4731 = vmatprep.subr.mxu0 0.0
        %4732 = vmatpush1.msra.mxu0 0.0
        %4733 = vmatprep.subr.mxu0 0.0
        %4734 = vmatpush1.msra.mxu0 0.0
        %4735 = vmatprep.subr.mxu0 0.0
        %4736 = vmatpush1.msra.mxu0 0.0
        %4737 = vmatprep.subr.mxu0 0.0
        %4738 = vmatpush1.msra.mxu0 0.0
        %4739 = vmatprep.subr.mxu0 0.0
        %4740 = vmatpush1.msra.mxu0 0.0
        %4741 = vmatprep.subr.mxu0 0.0
        %4742 = vmatpush1.msra.mxu0 0.0
        %4743 = vmatprep.subr.mxu0 0.0
        %4744 = vmatpush1.msra.mxu0 0.0
        %4745 = vmatprep.subr.mxu0 0.0
        %4746 = vmatpush1.msra.mxu0 0.0
        %4747 = vmatprep.subr.mxu0 0.0
        %4748 = vmatpush1.msra.mxu0 0.0
        %4749 = vmatprep.subr.mxu0 0.0
        %4750 = vmatpush1.msra.mxu0 0.0
        %4751 = vmatprep.subr.mxu0 0.0
        %4752 = vmatpush1.msra.mxu0 0.0
        %4753 = vmatprep.subr.mxu0 0.0
        %4754 = vmatpush1.msra.mxu0 0.0
        %4755 = vmatprep.subr.mxu0 0.0
        %4756 = vmatpush1.msra.mxu0 0.0
        %4757 = vmatprep.subr.mxu0 0.0
        %4758 = vmatpush1.msra.mxu0 0.0
        %4759 = vmatprep.subr.mxu0 0.0
        %4760 = vmatpush1.msra.mxu0 0.0
        %4761 = vmatprep.subr.mxu0 0.0
        %4762 = vmatpush1.msra.mxu0 0.0
        %4763 = vmatprep.subr.mxu0 0.0
        %4764 = vmatpush1.msra.mxu0 0.0
        %4765 = vmatprep.subr.mxu0 0.0
        %4766 = vmatpush1.msra.mxu0 0.0
        %4767 = vmatprep.subr.mxu0 0.0
        %4768 = vmatpush1.msra.mxu0 0.0
        %4769 = vmatprep.subr.mxu0 0.0
        %4770 = vmatpush1.msra.mxu0 0.0
        %4771 = vmatprep.subr.mxu0 0.0
        %4772 = vmatpush1.msra.mxu0 0.0
        %4773 = vmatprep.subr.mxu0 0.0
        %4774 = vmatpush1.msra.mxu0 0.0
        %4775 = vmatprep.subr.mxu0 0.0
        %4776 = vmatpush1.msra.mxu0 0.0
        %4777 = vmatprep.subr.mxu0 0.0
        %4778 = vmatpush1.msra.mxu0 0.0
        %4779 = vmatprep.subr.mxu0 0.0
        %4780 = vmatpush1.msra.mxu0 0.0
        %4781 = vmatprep.mubr.f32.mxu0 0.0
        %v4782 = vand.u32 %v4714, 4294901760
        %v4783 = vsub.f32 %v4714, %v4782
        %v4784 = vand.u32 %v4783, 4294901760
        %v4785 = vsub.f32 %v4783, %v4784
        %v4786 = vand.u32 %v4785, 4294901760
        %4787 = vmatmul.mubr.f32.gmra.mrb[0].mxu0 %v4786
        %v4788 = vpop.f32.mrb[0].mxu0
        %v4789 = vadd.f32 %v4710, %v4788
        %v4790 = vpop.f32.mrb[0].mxu0
        %4791 = vdwg.mxu0
        %4792 = vmatprep.subr.mxu0 0.0
        %v4793 = vand.u32 %v4261, 4294901760
        %v4794 = vsub.f32 %v4261, %v4793
        %v4795 = vand.u32 %v4794, 4294901760
        %v4796 = vsub.f32 %v4794, %v4795
        %v4797 = vand.u32 %v4796, 4294901760
        %4798 = vmatpush1.msra.mxu0 %v4797
        %4799 = vmatprep.subr.mxu0 0.0
        %4800 = vmatpush1.msra.mxu0 0.0
        %4801 = vmatprep.subr.mxu0 0.0
        %4802 = vmatpush1.msra.mxu0 0.0
        %4803 = vmatprep.subr.mxu0 0.0
        %4804 = vmatpush1.msra.mxu0 0.0
        %4805 = vmatprep.subr.mxu0 0.0
        %4806 = vmatpush1.msra.mxu0 0.0
        %4807 = vmatprep.subr.mxu0 0.0
        %4808 = vmatpush1.msra.mxu0 0.0
        %4809 = vmatprep.subr.mxu0 0.0
        %4810 = vmatpush1.msra.mxu0 0.0
        %4811 = vmatprep.subr.mxu0 0.0
        %4812 = vmatpush1.msra.mxu0 0.0
        %4813 = vmatprep.subr.mxu0 0.0
        %4814 = vmatpush1.msra.mxu0 0.0
        %4815 = vmatprep.subr.mxu0 0.0
        %4816 = vmatpush1.msra.mxu0 0.0
        %4817 = vmatprep.subr.mxu0 0.0
        %4818 = vmatpush1.msra.mxu0 0.0
        %4819 = vmatprep.subr.mxu0 0.0
        %4820 = vmatpush1.msra.mxu0 0.0
        %4821 = vmatprep.subr.mxu0 0.0
        %4822 = vmatpush1.msra.mxu0 0.0
        %4823 = vmatprep.subr.mxu0 0.0
        %4824 = vmatpush1.msra.mxu0 0.0
        %4825 = vmatprep.subr.mxu0 0.0
        %4826 = vmatpush1.msra.mxu0 0.0
        %4827 = vmatprep.subr.mxu0 0.0
        %4828 = vmatpush1.msra.mxu0 0.0
        %4829 = vmatprep.subr.mxu0 0.0
        %4830 = vmatpush1.msra.mxu0 0.0
        %4831 = vmatprep.subr.mxu0 0.0
        %4832 = vmatpush1.msra.mxu0 0.0
        %4833 = vmatprep.subr.mxu0 0.0
        %4834 = vmatpush1.msra.mxu0 0.0
        %4835 = vmatprep.subr.mxu0 0.0
        %4836 = vmatpush1.msra.mxu0 0.0
        %4837 = vmatprep.subr.mxu0 0.0
        %4838 = vmatpush1.msra.mxu0 0.0
        %4839 = vmatprep.subr.mxu0 0.0
        %4840 = vmatpush1.msra.mxu0 0.0
        %4841 = vmatprep.subr.mxu0 0.0
        %4842 = vmatpush1.msra.mxu0 0.0
        %4843 = vmatprep.subr.mxu0 0.0
        %4844 = vmatpush1.msra.mxu0 0.0
        %4845 = vmatprep.subr.mxu0 0.0
        %4846 = vmatpush1.msra.mxu0 0.0
        %4847 = vmatprep.subr.mxu0 0.0
        %4848 = vmatpush1.msra.mxu0 0.0
        %4849 = vmatprep.subr.mxu0 0.0
        %4850 = vmatpush1.msra.mxu0 0.0
        %4851 = vmatprep.subr.mxu0 0.0
        %4852 = vmatpush1.msra.mxu0 0.0
        %4853 = vmatprep.subr.mxu0 0.0
        %4854 = vmatpush1.msra.mxu0 0.0
        %4855 = vmatprep.subr.mxu0 0.0
        %4856 = vmatpush1.msra.mxu0 0.0
        %4857 = vmatprep.subr.mxu0 0.0
        %4858 = vmatpush1.msra.mxu0 0.0
        %4859 = vmatprep.subr.mxu0 0.0
        %4860 = vmatpush1.msra.mxu0 0.0
        %4861 = vmatprep.mubr.f32.mxu0 0.0
        %v4862 = vand.u32 %v4714, 4294901760
        %4863 = vmatmul.mubr.f32.gmra.mrb[0].mxu0 %v4862
        %v4864 = vpop.f32.mrb[0].mxu0
        %v4865 = vadd.f32 %v4789, %v4864
        %v4866 = vpop.f32.mrb[0].mxu0
        %4867 = vdwg.mxu0
        %4868 = vmatprep.subr.mxu0 0.0
        %v4869 = vand.u32 %v4261, 4294901760
        %v4870 = vsub.f32 %v4261, %v4869
        %4871 = vmatpush1.msra.mxu0 %v4870
        %4872 = vmatprep.subr.mxu0 0.0
        %4873 = vmatpush1.msra.mxu0 0.0
        %4874 = vmatprep.subr.mxu0 0.0
        %4875 = vmatpush1.msra.mxu0 0.0
        %4876 = vmatprep.subr.mxu0 0.0
        %4877 = vmatpush1.msra.mxu0 0.0
        %4878 = vmatprep.subr.mxu0 0.0
        %4879 = vmatpush1.msra.mxu0 0.0
        %4880 = vmatprep.subr.mxu0 0.0
        %4881 = vmatpush1.msra.mxu0 0.0
        %4882 = vmatprep.subr.mxu0 0.0
        %4883 = vmatpush1.msra.mxu0 0.0
        %4884 = vmatprep.subr.mxu0 0.0
        %4885 = vmatpush1.msra.mxu0 0.0
        %4886 = vmatprep.subr.mxu0 0.0
        %4887 = vmatpush1.msra.mxu0 0.0
        %4888 = vmatprep.subr.mxu0 0.0
        %4889 = vmatpush1.msra.mxu0 0.0
        %4890 = vmatprep.subr.mxu0 0.0
        %4891 = vmatpush1.msra.mxu0 0.0
        %4892 = vmatprep.subr.mxu0 0.0
        %4893 = vmatpush1.msra.mxu0 0.0
        %4894 = vmatprep.subr.mxu0 0.0
        %4895 = vmatpush1.msra.mxu0 0.0
        %4896 = vmatprep.subr.mxu0 0.0
        %4897 = vmatpush1.msra.mxu0 0.0
        %4898 = vmatprep.subr.mxu0 0.0
        %4899 = vmatpush1.msra.mxu0 0.0
        %4900 = vmatprep.subr.mxu0 0.0
        %4901 = vmatpush1.msra.mxu0 0.0
        %4902 = vmatprep.subr.mxu0 0.0
        %4903 = vmatpush1.msra.mxu0 0.0
        %4904 = vmatprep.subr.mxu0 0.0
        %4905 = vmatpush1.msra.mxu0 0.0
        %4906 = vmatprep.subr.mxu0 0.0
        %4907 = vmatpush1.msra.mxu0 0.0
        %4908 = vmatprep.subr.mxu0 0.0
        %4909 = vmatpush1.msra.mxu0 0.0
        %4910 = vmatprep.subr.mxu0 0.0
        %4911 = vmatpush1.msra.mxu0 0.0
        %4912 = vmatprep.subr.mxu0 0.0
        %4913 = vmatpush1.msra.mxu0 0.0
        %4914 = vmatprep.subr.mxu0 0.0
        %4915 = vmatpush1.msra.mxu0 0.0
        %4916 = vmatprep.subr.mxu0 0.0
        %4917 = vmatpush1.msra.mxu0 0.0
        %4918 = vmatprep.subr.mxu0 0.0
        %4919 = vmatpush1.msra.mxu0 0.0
        %4920 = vmatprep.subr.mxu0 0.0
        %4921 = vmatpush1.msra.mxu0 0.0
        %4922 = vmatprep.subr.mxu0 0.0
        %4923 = vmatpush1.msra.mxu0 0.0
        %4924 = vmatprep.subr.mxu0 0.0
        %4925 = vmatpush1.msra.mxu0 0.0
        %4926 = vmatprep.subr.mxu0 0.0
        %4927 = vmatpush1.msra.mxu0 0.0
        %4928 = vmatprep.subr.mxu0 0.0
        %4929 = vmatpush1.msra.mxu0 0.0
        %4930 = vmatprep.subr.mxu0 0.0
        %4931 = vmatpush1.msra.mxu0 0.0
        %4932 = vmatprep.subr.mxu0 0.0
        %4933 = vmatpush1.msra.mxu0 0.0
        %4934 = vmatprep.mubr.f32.mxu0 0.0
        %v4935 = vand.u32 %v4714, 4294901760
        %v4936 = vsub.f32 %v4714, %v4935
        %4937 = vmatmul.mubr.f32.gmra.mrb[0].mxu0 %v4936
        %v4938 = vpop.f32.mrb[0].mxu0
        %v4939 = vadd.f32 %v4865, %v4938
        %v4940 = vpop.f32.mrb[0].mxu0
        %4941 = vdwg.mxu0
        %4942 = vmatprep.subr.mxu0 0.0
        %v4943 = vand.u32 %v4261, 4294901760
        %4944 = vmatpush1.msra.mxu0 %v4943
        %4945 = vmatprep.subr.mxu0 0.0
        %4946 = vmatpush1.msra.mxu0 0.0
        %4947 = vmatprep.subr.mxu0 0.0
        %4948 = vmatpush1.msra.mxu0 0.0
        %4949 = vmatprep.subr.mxu0 0.0
        %4950 = vmatpush1.msra.mxu0 0.0
        %4951 = vmatprep.subr.mxu0 0.0
        %4952 = vmatpush1.msra.mxu0 0.0
        %4953 = vmatprep.subr.mxu0 0.0
        %4954 = vmatpush1.msra.mxu0 0.0
        %4955 = vmatprep.subr.mxu0 0.0
        %4956 = vmatpush1.msra.mxu0 0.0
        %4957 = vmatprep.subr.mxu0 0.0
        %4958 = vmatpush1.msra.mxu0 0.0
        %4959 = vmatprep.subr.mxu0 0.0
        %4960 = vmatpush1.msra.mxu0 0.0
        %4961 = vmatprep.subr.mxu0 0.0
        %4962 = vmatpush1.msra.mxu0 0.0
        %4963 = vmatprep.subr.mxu0 0.0
        %4964 = vmatpush1.msra.mxu0 0.0
        %4965 = vmatprep.subr.mxu0 0.0
        %4966 = vmatpush1.msra.mxu0 0.0
        %4967 = vmatprep.subr.mxu0 0.0
        %4968 = vmatpush1.msra.mxu0 0.0
        %4969 = vmatprep.subr.mxu0 0.0
        %4970 = vmatpush1.msra.mxu0 0.0
        %4971 = vmatprep.subr.mxu0 0.0
        %4972 = vmatpush1.msra.mxu0 0.0
        %4973 = vmatprep.subr.mxu0 0.0
        %4974 = vmatpush1.msra.mxu0 0.0
        %4975 = vmatprep.subr.mxu0 0.0
        %4976 = vmatpush1.msra.mxu0 0.0
        %4977 = vmatprep.subr.mxu0 0.0
        %4978 = vmatpush1.msra.mxu0 0.0
        %4979 = vmatprep.subr.mxu0 0.0
        %4980 = vmatpush1.msra.mxu0 0.0
        %4981 = vmatprep.subr.mxu0 0.0
        %4982 = vmatpush1.msra.mxu0 0.0
        %4983 = vmatprep.subr.mxu0 0.0
        %4984 = vmatpush1.msra.mxu0 0.0
        %4985 = vmatprep.subr.mxu0 0.0
        %4986 = vmatpush1.msra.mxu0 0.0
        %4987 = vmatprep.subr.mxu0 0.0
        %4988 = vmatpush1.msra.mxu0 0.0
        %4989 = vmatprep.subr.mxu0 0.0
        %4990 = vmatpush1.msra.mxu0 0.0
        %4991 = vmatprep.subr.mxu0 0.0
        %4992 = vmatpush1.msra.mxu0 0.0
        %4993 = vmatprep.subr.mxu0 0.0
        %4994 = vmatpush1.msra.mxu0 0.0
        %4995 = vmatprep.subr.mxu0 0.0
        %4996 = vmatpush1.msra.mxu0 0.0
        %4997 = vmatprep.subr.mxu0 0.0
        %4998 = vmatpush1.msra.mxu0 0.0
        %4999 = vmatprep.subr.mxu0 0.0
        %5000 = vmatpush1.msra.mxu0 0.0
        %5001 = vmatprep.subr.mxu0 0.0
        %5002 = vmatpush1.msra.mxu0 0.0
        %5003 = vmatprep.subr.mxu0 0.0
        %5004 = vmatpush1.msra.mxu0 0.0
        %5005 = vmatprep.subr.mxu0 0.0
        %5006 = vmatpush1.msra.mxu0 0.0
        %5007 = vmatprep.mubr.f32.mxu0 0.0
        %v5008 = vand.u32 %v4714, 4294901760
        %v5009 = vsub.f32 %v4714, %v5008
        %v5010 = vand.u32 %v5009, 4294901760
        %5011 = vmatmul.mubr.f32.gmra.mrb[0].mxu0 %v5010
        %v5012 = vpop.f32.mrb[0].mxu0
        %v5013 = vadd.f32 %v4939, %v5012
        %v5014 = vpop.f32.mrb[0].mxu0
        %5015 = vdwg.mxu0
        %5016 = vmatprep.subr.mxu0 0.0
        %v5017 = vand.u32 %v4261, 4294901760
        %v5018 = vsub.f32 %v4261, %v5017
        %v5019 = vand.u32 %v5018, 4294901760
        %5020 = vmatpush1.msra.mxu0 %v5019
        %5021 = vmatprep.subr.mxu0 0.0
        %5022 = vmatpush1.msra.mxu0 0.0
        %5023 = vmatprep.subr.mxu0 0.0
        %5024 = vmatpush1.msra.mxu0 0.0
        %5025 = vmatprep.subr.mxu0 0.0
        %5026 = vmatpush1.msra.mxu0 0.0
        %5027 = vmatprep.subr.mxu0 0.0
        %5028 = vmatpush1.msra.mxu0 0.0
        %5029 = vmatprep.subr.mxu0 0.0
        %5030 = vmatpush1.msra.mxu0 0.0
        %5031 = vmatprep.subr.mxu0 0.0
        %5032 = vmatpush1.msra.mxu0 0.0
        %5033 = vmatprep.subr.mxu0 0.0
        %5034 = vmatpush1.msra.mxu0 0.0
        %5035 = vmatprep.subr.mxu0 0.0
        %5036 = vmatpush1.msra.mxu0 0.0
        %5037 = vmatprep.subr.mxu0 0.0
        %5038 = vmatpush1.msra.mxu0 0.0
        %5039 = vmatprep.subr.mxu0 0.0
        %5040 = vmatpush1.msra.mxu0 0.0
        %5041 = vmatprep.subr.mxu0 0.0
        %5042 = vmatpush1.msra.mxu0 0.0
        %5043 = vmatprep.subr.mxu0 0.0
        %5044 = vmatpush1.msra.mxu0 0.0
        %5045 = vmatprep.subr.mxu0 0.0
        %5046 = vmatpush1.msra.mxu0 0.0
        %5047 = vmatprep.subr.mxu0 0.0
        %5048 = vmatpush1.msra.mxu0 0.0
        %5049 = vmatprep.subr.mxu0 0.0
        %5050 = vmatpush1.msra.mxu0 0.0
        %5051 = vmatprep.subr.mxu0 0.0
        %5052 = vmatpush1.msra.mxu0 0.0
        %5053 = vmatprep.subr.mxu0 0.0
        %5054 = vmatpush1.msra.mxu0 0.0
        %5055 = vmatprep.subr.mxu0 0.0
        %5056 = vmatpush1.msra.mxu0 0.0
        %5057 = vmatprep.subr.mxu0 0.0
        %5058 = vmatpush1.msra.mxu0 0.0
        %5059 = vmatprep.subr.mxu0 0.0
        %5060 = vmatpush1.msra.mxu0 0.0
        %5061 = vmatprep.subr.mxu0 0.0
        %5062 = vmatpush1.msra.mxu0 0.0
        %5063 = vmatprep.subr.mxu0 0.0
        %5064 = vmatpush1.msra.mxu0 0.0
        %5065 = vmatprep.subr.mxu0 0.0
        %5066 = vmatpush1.msra.mxu0 0.0
        %5067 = vmatprep.subr.mxu0 0.0
        %5068 = vmatpush1.msra.mxu0 0.0
        %5069 = vmatprep.subr.mxu0 0.0
        %5070 = vmatpush1.msra.mxu0 0.0
        %5071 = vmatprep.subr.mxu0 0.0
        %5072 = vmatpush1.msra.mxu0 0.0
        %5073 = vmatprep.subr.mxu0 0.0
        %5074 = vmatpush1.msra.mxu0 0.0
        %5075 = vmatprep.subr.mxu0 0.0
        %5076 = vmatpush1.msra.mxu0 0.0
        %5077 = vmatprep.subr.mxu0 0.0
        %5078 = vmatpush1.msra.mxu0 0.0
        %5079 = vmatprep.subr.mxu0 0.0
        %5080 = vmatpush1.msra.mxu0 0.0
        %5081 = vmatprep.subr.mxu0 0.0
        %5082 = vmatpush1.msra.mxu0 0.0
        %5083 = vmatprep.mubr.f32.mxu0 0.0
        %v5084 = vand.u32 %v4714, 4294901760
        %5085 = vmatmul.mubr.f32.gmra.mrb[0].mxu0 %v5084
        %v5086 = vpop.f32.mrb[0].mxu0
        %v5087 = vadd.f32 %v5013, %v5086
        %v5088 = vpop.f32.mrb[0].mxu0
        %5089 = vdwg.mxu0
        %5090 = vmatprep.subr.mxu0 0.0
        %v5091 = vand.u32 %v4261, 4294901760
        %5092 = vmatpush1.msra.mxu0 %v5091
        %5093 = vmatprep.subr.mxu0 0.0
        %5094 = vmatpush1.msra.mxu0 0.0
        %5095 = vmatprep.subr.mxu0 0.0
        %5096 = vmatpush1.msra.mxu0 0.0
        %5097 = vmatprep.subr.mxu0 0.0
        %5098 = vmatpush1.msra.mxu0 0.0
        %5099 = vmatprep.subr.mxu0 0.0
        %5100 = vmatpush1.msra.mxu0 0.0
        %5101 = vmatprep.subr.mxu0 0.0
        %5102 = vmatpush1.msra.mxu0 0.0
        %5103 = vmatprep.subr.mxu0 0.0
        %5104 = vmatpush1.msra.mxu0 0.0
        %5105 = vmatprep.subr.mxu0 0.0
        %5106 = vmatpush1.msra.mxu0 0.0
        %5107 = vmatprep.subr.mxu0 0.0
        %5108 = vmatpush1.msra.mxu0 0.0
        %5109 = vmatprep.subr.mxu0 0.0
        %5110 = vmatpush1.msra.mxu0 0.0
        %5111 = vmatprep.subr.mxu0 0.0
        %5112 = vmatpush1.msra.mxu0 0.0
        %5113 = vmatprep.subr.mxu0 0.0
        %5114 = vmatpush1.msra.mxu0 0.0
        %5115 = vmatprep.subr.mxu0 0.0
        %5116 = vmatpush1.msra.mxu0 0.0
        %5117 = vmatprep.subr.mxu0 0.0
        %5118 = vmatpush1.msra.mxu0 0.0
        %5119 = vmatprep.subr.mxu0 0.0
        %5120 = vmatpush1.msra.mxu0 0.0
        %5121 = vmatprep.subr.mxu0 0.0
        %5122 = vmatpush1.msra.mxu0 0.0
        %5123 = vmatprep.subr.mxu0 0.0
        %5124 = vmatpush1.msra.mxu0 0.0
        %5125 = vmatprep.subr.mxu0 0.0
        %5126 = vmatpush1.msra.mxu0 0.0
        %5127 = vmatprep.subr.mxu0 0.0
        %5128 = vmatpush1.msra.mxu0 0.0
        %5129 = vmatprep.subr.mxu0 0.0
        %5130 = vmatpush1.msra.mxu0 0.0
        %5131 = vmatprep.subr.mxu0 0.0
        %5132 = vmatpush1.msra.mxu0 0.0
        %5133 = vmatprep.subr.mxu0 0.0
        %5134 = vmatpush1.msra.mxu0 0.0
        %5135 = vmatprep.subr.mxu0 0.0
        %5136 = vmatpush1.msra.mxu0 0.0
        %5137 = vmatprep.subr.mxu0 0.0
        %5138 = vmatpush1.msra.mxu0 0.0
        %5139 = vmatprep.subr.mxu0 0.0
        %5140 = vmatpush1.msra.mxu0 0.0
        %5141 = vmatprep.subr.mxu0 0.0
        %5142 = vmatpush1.msra.mxu0 0.0
        %5143 = vmatprep.subr.mxu0 0.0
        %5144 = vmatpush1.msra.mxu0 0.0
        %5145 = vmatprep.subr.mxu0 0.0
        %5146 = vmatpush1.msra.mxu0 0.0
        %5147 = vmatprep.subr.mxu0 0.0
        %5148 = vmatpush1.msra.mxu0 0.0
        %5149 = vmatprep.subr.mxu0 0.0
        %5150 = vmatpush1.msra.mxu0 0.0
        %5151 = vmatprep.subr.mxu0 0.0
        %5152 = vmatpush1.msra.mxu0 0.0
        %5153 = vmatprep.subr.mxu0 0.0
        %5154 = vmatpush1.msra.mxu0 0.0
        %5155 = vmatprep.mubr.f32.mxu0 0.0
        %v5156 = vand.u32 %v4714, 4294901760
        %5157 = vmatmul.mubr.f32.gmra.mrb[0].mxu0 %v5156
        %v5158 = vpop.f32.mrb[0].mxu0
        %v5159 = vadd.f32 %v5087, %v5158
        %v5160 = vpop.f32.mrb[0].mxu0
        %5161 = vdwg.mxu0
        %s5162 = scalar_lea.vmem %s6, 16
        %v5163 = vld [vmem:[%s5162] sm:$0xff]
        %v5165 = vsel %vm479, %v4259, 0
        %5167 = vmatprep.subr.mxu0 0.0
        %v5168 = vand.u32 %v5163, 4294901760
        %5169 = vmatpush1.msra.mxu0 %v5168
        %5170 = vmatprep.subr.mxu0 0.0
        %5171 = vmatpush1.msra.mxu0 0.0
        %5172 = vmatprep.subr.mxu0 0.0
        %5173 = vmatpush1.msra.mxu0 0.0
        %5174 = vmatprep.subr.mxu0 0.0
        %5175 = vmatpush1.msra.mxu0 0.0
        %5176 = vmatprep.subr.mxu0 0.0
        %5177 = vmatpush1.msra.mxu0 0.0
        %5178 = vmatprep.subr.mxu0 0.0
        %5179 = vmatpush1.msra.mxu0 0.0
        %5180 = vmatprep.subr.mxu0 0.0
        %5181 = vmatpush1.msra.mxu0 0.0
        %5182 = vmatprep.subr.mxu0 0.0
        %5183 = vmatpush1.msra.mxu0 0.0
        %5184 = vmatprep.subr.mxu0 0.0
        %5185 = vmatpush1.msra.mxu0 0.0
        %5186 = vmatprep.subr.mxu0 0.0
        %5187 = vmatpush1.msra.mxu0 0.0
        %5188 = vmatprep.subr.mxu0 0.0
        %5189 = vmatpush1.msra.mxu0 0.0
        %5190 = vmatprep.subr.mxu0 0.0
        %5191 = vmatpush1.msra.mxu0 0.0
        %5192 = vmatprep.subr.mxu0 0.0
        %5193 = vmatpush1.msra.mxu0 0.0
        %5194 = vmatprep.subr.mxu0 0.0
        %5195 = vmatpush1.msra.mxu0 0.0
        %5196 = vmatprep.subr.mxu0 0.0
        %5197 = vmatpush1.msra.mxu0 0.0
        %5198 = vmatprep.subr.mxu0 0.0
        %5199 = vmatpush1.msra.mxu0 0.0
        %5200 = vmatprep.subr.mxu0 0.0
        %5201 = vmatpush1.msra.mxu0 0.0
        %5202 = vmatprep.subr.mxu0 0.0
        %5203 = vmatpush1.msra.mxu0 0.0
        %5204 = vmatprep.subr.mxu0 0.0
        %5205 = vmatpush1.msra.mxu0 0.0
        %5206 = vmatprep.subr.mxu0 0.0
        %5207 = vmatpush1.msra.mxu0 0.0
        %5208 = vmatprep.subr.mxu0 0.0
        %5209 = vmatpush1.msra.mxu0 0.0
        %5210 = vmatprep.subr.mxu0 0.0
        %5211 = vmatpush1.msra.mxu0 0.0
        %5212 = vmatprep.subr.mxu0 0.0
        %5213 = vmatpush1.msra.mxu0 0.0
        %5214 = vmatprep.subr.mxu0 0.0
        %5215 = vmatpush1.msra.mxu0 0.0
        %5216 = vmatprep.subr.mxu0 0.0
        %5217 = vmatpush1.msra.mxu0 0.0
        %5218 = vmatprep.subr.mxu0 0.0
        %5219 = vmatpush1.msra.mxu0 0.0
        %5220 = vmatprep.subr.mxu0 0.0
        %5221 = vmatpush1.msra.mxu0 0.0
        %5222 = vmatprep.subr.mxu0 0.0
        %5223 = vmatpush1.msra.mxu0 0.0
        %5224 = vmatprep.subr.mxu0 0.0
        %5225 = vmatpush1.msra.mxu0 0.0
        %5226 = vmatprep.subr.mxu0 0.0
        %5227 = vmatpush1.msra.mxu0 0.0
        %5228 = vmatprep.subr.mxu0 0.0
        %5229 = vmatpush1.msra.mxu0 0.0
        %5230 = vmatprep.subr.mxu0 0.0
        %5231 = vmatpush1.msra.mxu0 0.0
        %5232 = vmatprep.mubr.f32.mxu0 0.0
        %v5233 = vand.u32 %v5165, 4294901760
        %v5234 = vsub.f32 %v5165, %v5233
        %v5235 = vand.u32 %v5234, 4294901760
        %v5236 = vsub.f32 %v5234, %v5235
        %v5237 = vand.u32 %v5236, 4294901760
        %5238 = vmatmul.mubr.f32.gmra.mrb[0].mxu0 %v5237
        %v5239 = vpop.f32.mrb[0].mxu0
        %v5240 = vadd.f32 0.0, %v5239
        %v5241 = vpop.f32.mrb[0].mxu0
        %5242 = vdwg.mxu0
        %5243 = vmatprep.subr.mxu0 0.0
        %v5244 = vand.u32 %v5163, 4294901760
        %v5245 = vsub.f32 %v5163, %v5244
        %v5246 = vand.u32 %v5245, 4294901760
        %v5247 = vsub.f32 %v5245, %v5246
        %v5248 = vand.u32 %v5247, 4294901760
        %5249 = vmatpush1.msra.mxu0 %v5248
        %5250 = vmatprep.subr.mxu0 0.0
        %5251 = vmatpush1.msra.mxu0 0.0
        %5252 = vmatprep.subr.mxu0 0.0
        %5253 = vmatpush1.msra.mxu0 0.0
        %5254 = vmatprep.subr.mxu0 0.0
        %5255 = vmatpush1.msra.mxu0 0.0
        %5256 = vmatprep.subr.mxu0 0.0
        %5257 = vmatpush1.msra.mxu0 0.0
        %5258 = vmatprep.subr.mxu0 0.0
        %5259 = vmatpush1.msra.mxu0 0.0
        %5260 = vmatprep.subr.mxu0 0.0
        %5261 = vmatpush1.msra.mxu0 0.0
        %5262 = vmatprep.subr.mxu0 0.0
        %5263 = vmatpush1.msra.mxu0 0.0
        %5264 = vmatprep.subr.mxu0 0.0
        %5265 = vmatpush1.msra.mxu0 0.0
        %5266 = vmatprep.subr.mxu0 0.0
        %5267 = vmatpush1.msra.mxu0 0.0
        %5268 = vmatprep.subr.mxu0 0.0
        %5269 = vmatpush1.msra.mxu0 0.0
        %5270 = vmatprep.subr.mxu0 0.0
        %5271 = vmatpush1.msra.mxu0 0.0
        %5272 = vmatprep.subr.mxu0 0.0
        %5273 = vmatpush1.msra.mxu0 0.0
        %5274 = vmatprep.subr.mxu0 0.0
        %5275 = vmatpush1.msra.mxu0 0.0
        %5276 = vmatprep.subr.mxu0 0.0
        %5277 = vmatpush1.msra.mxu0 0.0
        %5278 = vmatprep.subr.mxu0 0.0
        %5279 = vmatpush1.msra.mxu0 0.0
        %5280 = vmatprep.subr.mxu0 0.0
        %5281 = vmatpush1.msra.mxu0 0.0
        %5282 = vmatprep.subr.mxu0 0.0
        %5283 = vmatpush1.msra.mxu0 0.0
        %5284 = vmatprep.subr.mxu0 0.0
        %5285 = vmatpush1.msra.mxu0 0.0
        %5286 = vmatprep.subr.mxu0 0.0
        %5287 = vmatpush1.msra.mxu0 0.0
        %5288 = vmatprep.subr.mxu0 0.0
        %5289 = vmatpush1.msra.mxu0 0.0
        %5290 = vmatprep.subr.mxu0 0.0
        %5291 = vmatpush1.msra.mxu0 0.0
        %5292 = vmatprep.subr.mxu0 0.0
        %5293 = vmatpush1.msra.mxu0 0.0
        %5294 = vmatprep.subr.mxu0 0.0
        %5295 = vmatpush1.msra.mxu0 0.0
        %5296 = vmatprep.subr.mxu0 0.0
        %5297 = vmatpush1.msra.mxu0 0.0
        %5298 = vmatprep.subr.mxu0 0.0
        %5299 = vmatpush1.msra.mxu0 0.0
        %5300 = vmatprep.subr.mxu0 0.0
        %5301 = vmatpush1.msra.mxu0 0.0
        %5302 = vmatprep.subr.mxu0 0.0
        %5303 = vmatpush1.msra.mxu0 0.0
        %5304 = vmatprep.subr.mxu0 0.0
        %5305 = vmatpush1.msra.mxu0 0.0
        %5306 = vmatprep.subr.mxu0 0.0
        %5307 = vmatpush1.msra.mxu0 0.0
        %5308 = vmatprep.subr.mxu0 0.0
        %5309 = vmatpush1.msra.mxu0 0.0
        %5310 = vmatprep.subr.mxu0 0.0
        %5311 = vmatpush1.msra.mxu0 0.0
        %5312 = vmatprep.mubr.f32.mxu0 0.0
        %v5313 = vand.u32 %v5165, 4294901760
        %5314 = vmatmul.mubr.f32.gmra.mrb[0].mxu0 %v5313
        %v5315 = vpop.f32.mrb[0].mxu0
        %v5316 = vadd.f32 %v5240, %v5315
        %v5317 = vpop.f32.mrb[0].mxu0
        %5318 = vdwg.mxu0
        %5319 = vmatprep.subr.mxu0 0.0
        %v5320 = vand.u32 %v5163, 4294901760
        %v5321 = vsub.f32 %v5163, %v5320
        %5322 = vmatpush1.msra.mxu0 %v5321
        %5323 = vmatprep.subr.mxu0 0.0
        %5324 = vmatpush1.msra.mxu0 0.0
        %5325 = vmatprep.subr.mxu0 0.0
        %5326 = vmatpush1.msra.mxu0 0.0
        %5327 = vmatprep.subr.mxu0 0.0
        %5328 = vmatpush1.msra.mxu0 0.0
        %5329 = vmatprep.subr.mxu0 0.0
        %5330 = vmatpush1.msra.mxu0 0.0
        %5331 = vmatprep.subr.mxu0 0.0
        %5332 = vmatpush1.msra.mxu0 0.0
        %5333 = vmatprep.subr.mxu0 0.0
        %5334 = vmatpush1.msra.mxu0 0.0
        %5335 = vmatprep.subr.mxu0 0.0
        %5336 = vmatpush1.msra.mxu0 0.0
        %5337 = vmatprep.subr.mxu0 0.0
        %5338 = vmatpush1.msra.mxu0 0.0
        %5339 = vmatprep.subr.mxu0 0.0
        %5340 = vmatpush1.msra.mxu0 0.0
        %5341 = vmatprep.subr.mxu0 0.0
        %5342 = vmatpush1.msra.mxu0 0.0
        %5343 = vmatprep.subr.mxu0 0.0
        %5344 = vmatpush1.msra.mxu0 0.0
        %5345 = vmatprep.subr.mxu0 0.0
        %5346 = vmatpush1.msra.mxu0 0.0
        %5347 = vmatprep.subr.mxu0 0.0
        %5348 = vmatpush1.msra.mxu0 0.0
        %5349 = vmatprep.subr.mxu0 0.0
        %5350 = vmatpush1.msra.mxu0 0.0
        %5351 = vmatprep.subr.mxu0 0.0
        %5352 = vmatpush1.msra.mxu0 0.0
        %5353 = vmatprep.subr.mxu0 0.0
        %5354 = vmatpush1.msra.mxu0 0.0
        %5355 = vmatprep.subr.mxu0 0.0
        %5356 = vmatpush1.msra.mxu0 0.0
        %5357 = vmatprep.subr.mxu0 0.0
        %5358 = vmatpush1.msra.mxu0 0.0
        %5359 = vmatprep.subr.mxu0 0.0
        %5360 = vmatpush1.msra.mxu0 0.0
        %5361 = vmatprep.subr.mxu0 0.0
        %5362 = vmatpush1.msra.mxu0 0.0
        %5363 = vmatprep.subr.mxu0 0.0
        %5364 = vmatpush1.msra.mxu0 0.0
        %5365 = vmatprep.subr.mxu0 0.0
        %5366 = vmatpush1.msra.mxu0 0.0
        %5367 = vmatprep.subr.mxu0 0.0
        %5368 = vmatpush1.msra.mxu0 0.0
        %5369 = vmatprep.subr.mxu0 0.0
        %5370 = vmatpush1.msra.mxu0 0.0
        %5371 = vmatprep.subr.mxu0 0.0
        %5372 = vmatpush1.msra.mxu0 0.0
        %5373 = vmatprep.subr.mxu0 0.0
        %5374 = vmatpush1.msra.mxu0 0.0
        %5375 = vmatprep.subr.mxu0 0.0
        %5376 = vmatpush1.msra.mxu0 0.0
        %5377 = vmatprep.subr.mxu0 0.0
        %5378 = vmatpush1.msra.mxu0 0.0
        %5379 = vmatprep.subr.mxu0 0.0
        %5380 = vmatpush1.msra.mxu0 0.0
        %5381 = vmatprep.subr.mxu0 0.0
        %5382 = vmatpush1.msra.mxu0 0.0
        %5383 = vmatprep.subr.mxu0 0.0
        %5384 = vmatpush1.msra.mxu0 0.0
        %5385 = vmatprep.mubr.f32.mxu0 0.0
        %v5386 = vand.u32 %v5165, 4294901760
        %v5387 = vsub.f32 %v5165, %v5386
        %5388 = vmatmul.mubr.f32.gmra.mrb[0].mxu0 %v5387
        %v5389 = vpop.f32.mrb[0].mxu0
        %v5390 = vadd.f32 %v5316, %v5389
        %v5391 = vpop.f32.mrb[0].mxu0
        %5392 = vdwg.mxu0
        %5393 = vmatprep.subr.mxu0 0.0
        %v5394 = vand.u32 %v5163, 4294901760
        %5395 = vmatpush1.msra.mxu0 %v5394
        %5396 = vmatprep.subr.mxu0 0.0
        %5397 = vmatpush1.msra.mxu0 0.0
        %5398 = vmatprep.subr.mxu0 0.0
        %5399 = vmatpush1.msra.mxu0 0.0
        %5400 = vmatprep.subr.mxu0 0.0
        %5401 = vmatpush1.msra.mxu0 0.0
        %5402 = vmatprep.subr.mxu0 0.0
        %5403 = vmatpush1.msra.mxu0 0.0
        %5404 = vmatprep.subr.mxu0 0.0
        %5405 = vmatpush1.msra.mxu0 0.0
        %5406 = vmatprep.subr.mxu0 0.0
        %5407 = vmatpush1.msra.mxu0 0.0
        %5408 = vmatprep.subr.mxu0 0.0
        %5409 = vmatpush1.msra.mxu0 0.0
        %5410 = vmatprep.subr.mxu0 0.0
        %5411 = vmatpush1.msra.mxu0 0.0
        %5412 = vmatprep.subr.mxu0 0.0
        %5413 = vmatpush1.msra.mxu0 0.0
        %5414 = vmatprep.subr.mxu0 0.0
        %5415 = vmatpush1.msra.mxu0 0.0
        %5416 = vmatprep.subr.mxu0 0.0
        %5417 = vmatpush1.msra.mxu0 0.0
        %5418 = vmatprep.subr.mxu0 0.0
        %5419 = vmatpush1.msra.mxu0 0.0
        %5420 = vmatprep.subr.mxu0 0.0
        %5421 = vmatpush1.msra.mxu0 0.0
        %5422 = vmatprep.subr.mxu0 0.0
        %5423 = vmatpush1.msra.mxu0 0.0
        %5424 = vmatprep.subr.mxu0 0.0
        %5425 = vmatpush1.msra.mxu0 0.0
        %5426 = vmatprep.subr.mxu0 0.0
        %5427 = vmatpush1.msra.mxu0 0.0
        %5428 = vmatprep.subr.mxu0 0.0
        %5429 = vmatpush1.msra.mxu0 0.0
        %5430 = vmatprep.subr.mxu0 0.0
        %5431 = vmatpush1.msra.mxu0 0.0
        %5432 = vmatprep.subr.mxu0 0.0
        %5433 = vmatpush1.msra.mxu0 0.0
        %5434 = vmatprep.subr.mxu0 0.0
        %5435 = vmatpush1.msra.mxu0 0.0
        %5436 = vmatprep.subr.mxu0 0.0
        %5437 = vmatpush1.msra.mxu0 0.0
        %5438 = vmatprep.subr.mxu0 0.0
        %5439 = vmatpush1.msra.mxu0 0.0
        %5440 = vmatprep.subr.mxu0 0.0
        %5441 = vmatpush1.msra.mxu0 0.0
        %5442 = vmatprep.subr.mxu0 0.0
        %5443 = vmatpush1.msra.mxu0 0.0
        %5444 = vmatprep.subr.mxu0 0.0
        %5445 = vmatpush1.msra.mxu0 0.0
        %5446 = vmatprep.subr.mxu0 0.0
        %5447 = vmatpush1.msra.mxu0 0.0
        %5448 = vmatprep.subr.mxu0 0.0
        %5449 = vmatpush1.msra.mxu0 0.0
        %5450 = vmatprep.subr.mxu0 0.0
        %5451 = vmatpush1.msra.mxu0 0.0
        %5452 = vmatprep.subr.mxu0 0.0
        %5453 = vmatpush1.msra.mxu0 0.0
        %5454 = vmatprep.subr.mxu0 0.0
        %5455 = vmatpush1.msra.mxu0 0.0
        %5456 = vmatprep.subr.mxu0 0.0
        %5457 = vmatpush1.msra.mxu0 0.0
        %5458 = vmatprep.mubr.f32.mxu0 0.0
        %v5459 = vand.u32 %v5165, 4294901760
        %v5460 = vsub.f32 %v5165, %v5459
        %v5461 = vand.u32 %v5460, 4294901760
        %5462 = vmatmul.mubr.f32.gmra.mrb[0].mxu0 %v5461
        %v5463 = vpop.f32.mrb[0].mxu0
        %v5464 = vadd.f32 %v5390, %v5463
        %v5465 = vpop.f32.mrb[0].mxu0
        %5466 = vdwg.mxu0
        %5467 = vmatprep.subr.mxu0 0.0
        %v5468 = vand.u32 %v5163, 4294901760
        %v5469 = vsub.f32 %v5163, %v5468
        %v5470 = vand.u32 %v5469, 4294901760
        %5471 = vmatpush1.msra.mxu0 %v5470
        %5472 = vmatprep.subr.mxu0 0.0
        %5473 = vmatpush1.msra.mxu0 0.0
        %5474 = vmatprep.subr.mxu0 0.0
        %5475 = vmatpush1.msra.mxu0 0.0
        %5476 = vmatprep.subr.mxu0 0.0
        %5477 = vmatpush1.msra.mxu0 0.0
        %5478 = vmatprep.subr.mxu0 0.0
        %5479 = vmatpush1.msra.mxu0 0.0
        %5480 = vmatprep.subr.mxu0 0.0
        %5481 = vmatpush1.msra.mxu0 0.0
        %5482 = vmatprep.subr.mxu0 0.0
        %5483 = vmatpush1.msra.mxu0 0.0
        %5484 = vmatprep.subr.mxu0 0.0
        %5485 = vmatpush1.msra.mxu0 0.0
        %5486 = vmatprep.subr.mxu0 0.0
        %5487 = vmatpush1.msra.mxu0 0.0
        %5488 = vmatprep.subr.mxu0 0.0
        %5489 = vmatpush1.msra.mxu0 0.0
        %5490 = vmatprep.subr.mxu0 0.0
        %5491 = vmatpush1.msra.mxu0 0.0
        %5492 = vmatprep.subr.mxu0 0.0
        %5493 = vmatpush1.msra.mxu0 0.0
        %5494 = vmatprep.subr.mxu0 0.0
        %5495 = vmatpush1.msra.mxu0 0.0
        %5496 = vmatprep.subr.mxu0 0.0
        %5497 = vmatpush1.msra.mxu0 0.0
        %5498 = vmatprep.subr.mxu0 0.0
        %5499 = vmatpush1.msra.mxu0 0.0
        %5500 = vmatprep.subr.mxu0 0.0
        %5501 = vmatpush1.msra.mxu0 0.0
        %5502 = vmatprep.subr.mxu0 0.0
        %5503 = vmatpush1.msra.mxu0 0.0
        %5504 = vmatprep.subr.mxu0 0.0
        %5505 = vmatpush1.msra.mxu0 0.0
        %5506 = vmatprep.subr.mxu0 0.0
        %5507 = vmatpush1.msra.mxu0 0.0
        %5508 = vmatprep.subr.mxu0 0.0
        %5509 = vmatpush1.msra.mxu0 0.0
        %5510 = vmatprep.subr.mxu0 0.0
        %5511 = vmatpush1.msra.mxu0 0.0
        %5512 = vmatprep.subr.mxu0 0.0
        %5513 = vmatpush1.msra.mxu0 0.0
        %5514 = vmatprep.subr.mxu0 0.0
        %5515 = vmatpush1.msra.mxu0 0.0
        %5516 = vmatprep.subr.mxu0 0.0
        %5517 = vmatpush1.msra.mxu0 0.0
        %5518 = vmatprep.subr.mxu0 0.0
        %5519 = vmatpush1.msra.mxu0 0.0
        %5520 = vmatprep.subr.mxu0 0.0
        %5521 = vmatpush1.msra.mxu0 0.0
        %5522 = vmatprep.subr.mxu0 0.0
        %5523 = vmatpush1.msra.mxu0 0.0
        %5524 = vmatprep.subr.mxu0 0.0
        %5525 = vmatpush1.msra.mxu0 0.0
        %5526 = vmatprep.subr.mxu0 0.0
        %5527 = vmatpush1.msra.mxu0 0.0
        %5528 = vmatprep.subr.mxu0 0.0
        %5529 = vmatpush1.msra.mxu0 0.0
        %5530 = vmatprep.subr.mxu0 0.0
        %5531 = vmatpush1.msra.mxu0 0.0
        %5532 = vmatprep.subr.mxu0 0.0
        %5533 = vmatpush1.msra.mxu0 0.0
        %5534 = vmatprep.mubr.f32.mxu0 0.0
        %v5535 = vand.u32 %v5165, 4294901760
        %5536 = vmatmul.mubr.f32.gmra.mrb[0].mxu0 %v5535
        %v5537 = vpop.f32.mrb[0].mxu0
        %v5538 = vadd.f32 %v5464, %v5537
        %v5539 = vpop.f32.mrb[0].mxu0
        %5540 = vdwg.mxu0
        %5541 = vmatprep.subr.mxu0 0.0
        %v5542 = vand.u32 %v5163, 4294901760
        %5543 = vmatpush1.msra.mxu0 %v5542
        %5544 = vmatprep.subr.mxu0 0.0
        %5545 = vmatpush1.msra.mxu0 0.0
        %5546 = vmatprep.subr.mxu0 0.0
        %5547 = vmatpush1.msra.mxu0 0.0
        %5548 = vmatprep.subr.mxu0 0.0
        %5549 = vmatpush1.msra.mxu0 0.0
        %5550 = vmatprep.subr.mxu0 0.0
        %5551 = vmatpush1.msra.mxu0 0.0
        %5552 = vmatprep.subr.mxu0 0.0
        %5553 = vmatpush1.msra.mxu0 0.0
        %5554 = vmatprep.subr.mxu0 0.0
        %5555 = vmatpush1.msra.mxu0 0.0
        %5556 = vmatprep.subr.mxu0 0.0
        %5557 = vmatpush1.msra.mxu0 0.0
        %5558 = vmatprep.subr.mxu0 0.0
        %5559 = vmatpush1.msra.mxu0 0.0
        %5560 = vmatprep.subr.mxu0 0.0
        %5561 = vmatpush1.msra.mxu0 0.0
        %5562 = vmatprep.subr.mxu0 0.0
        %5563 = vmatpush1.msra.mxu0 0.0
        %5564 = vmatprep.subr.mxu0 0.0
        %5565 = vmatpush1.msra.mxu0 0.0
        %5566 = vmatprep.subr.mxu0 0.0
        %5567 = vmatpush1.msra.mxu0 0.0
        %5568 = vmatprep.subr.mxu0 0.0
        %5569 = vmatpush1.msra.mxu0 0.0
        %5570 = vmatprep.subr.mxu0 0.0
        %5571 = vmatpush1.msra.mxu0 0.0
        %5572 = vmatprep.subr.mxu0 0.0
        %5573 = vmatpush1.msra.mxu0 0.0
        %5574 = vmatprep.subr.mxu0 0.0
        %5575 = vmatpush1.msra.mxu0 0.0
        %5576 = vmatprep.subr.mxu0 0.0
        %5577 = vmatpush1.msra.mxu0 0.0
        %5578 = vmatprep.subr.mxu0 0.0
        %5579 = vmatpush1.msra.mxu0 0.0
        %5580 = vmatprep.subr.mxu0 0.0
        %5581 = vmatpush1.msra.mxu0 0.0
        %5582 = vmatprep.subr.mxu0 0.0
        %5583 = vmatpush1.msra.mxu0 0.0
        %5584 = vmatprep.subr.mxu0 0.0
        %5585 = vmatpush1.msra.mxu0 0.0
        %5586 = vmatprep.subr.mxu0 0.0
        %5587 = vmatpush1.msra.mxu0 0.0
        %5588 = vmatprep.subr.mxu0 0.0
        %5589 = vmatpush1.msra.mxu0 0.0
        %5590 = vmatprep.subr.mxu0 0.0
        %5591 = vmatpush1.msra.mxu0 0.0
        %5592 = vmatprep.subr.mxu0 0.0
        %5593 = vmatpush1.msra.mxu0 0.0
        %5594 = vmatprep.subr.mxu0 0.0
        %5595 = vmatpush1.msra.mxu0 0.0
        %5596 = vmatprep.subr.mxu0 0.0
        %5597 = vmatpush1.msra.mxu0 0.0
        %5598 = vmatprep.subr.mxu0 0.0
        %5599 = vmatpush1.msra.mxu0 0.0
        %5600 = vmatprep.subr.mxu0 0.0
        %5601 = vmatpush1.msra.mxu0 0.0
        %5602 = vmatprep.subr.mxu0 0.0
        %5603 = vmatpush1.msra.mxu0 0.0
        %5604 = vmatprep.subr.mxu0 0.0
        %5605 = vmatpush1.msra.mxu0 0.0
        %5606 = vmatprep.mubr.f32.mxu0 0.0
        %v5607 = vand.u32 %v5165, 4294901760
        %5608 = vmatmul.mubr.f32.gmra.mrb[0].mxu0 %v5607
        %v5609 = vpop.f32.mrb[0].mxu0
        %v5610 = vadd.f32 %v5538, %v5609
        %v5611 = vpop.f32.mrb[0].mxu0
        %5612 = vdwg.mxu0
        %v5613 = vadd.f32 %v5159, %v5610
        %s5614 = scalar_lea.vmem %s6, 24
        %v5615 = vld [vmem:[%s5614] sm:$0xff]
        %v5617 = vsel %vm479, %v4260, 0
        %5619 = vmatprep.subr.mxu0 0.0
        %v5620 = vand.u32 %v5615, 4294901760
        %5621 = vmatpush1.msra.mxu0 %v5620
        %5622 = vmatprep.subr.mxu0 0.0
        %5623 = vmatpush1.msra.mxu0 0.0
        %5624 = vmatprep.subr.mxu0 0.0
        %5625 = vmatpush1.msra.mxu0 0.0
        %5626 = vmatprep.subr.mxu0 0.0
        %5627 = vmatpush1.msra.mxu0 0.0
        %5628 = vmatprep.subr.mxu0 0.0
        %5629 = vmatpush1.msra.mxu0 0.0
        %5630 = vmatprep.subr.mxu0 0.0
        %5631 = vmatpush1.msra.mxu0 0.0
        %5632 = vmatprep.subr.mxu0 0.0
        %5633 = vmatpush1.msra.mxu0 0.0
        %5634 = vmatprep.subr.mxu0 0.0
        %5635 = vmatpush1.msra.mxu0 0.0
        %5636 = vmatprep.subr.mxu0 0.0
        %5637 = vmatpush1.msra.mxu0 0.0
        %5638 = vmatprep.subr.mxu0 0.0
        %5639 = vmatpush1.msra.mxu0 0.0
        %5640 = vmatprep.subr.mxu0 0.0
        %5641 = vmatpush1.msra.mxu0 0.0
        %5642 = vmatprep.subr.mxu0 0.0
        %5643 = vmatpush1.msra.mxu0 0.0
        %5644 = vmatprep.subr.mxu0 0.0
        %5645 = vmatpush1.msra.mxu0 0.0
        %5646 = vmatprep.subr.mxu0 0.0
        %5647 = vmatpush1.msra.mxu0 0.0
        %5648 = vmatprep.subr.mxu0 0.0
        %5649 = vmatpush1.msra.mxu0 0.0
        %5650 = vmatprep.subr.mxu0 0.0
        %5651 = vmatpush1.msra.mxu0 0.0
        %5652 = vmatprep.subr.mxu0 0.0
        %5653 = vmatpush1.msra.mxu0 0.0
        %5654 = vmatprep.subr.mxu0 0.0
        %5655 = vmatpush1.msra.mxu0 0.0
        %5656 = vmatprep.subr.mxu0 0.0
        %5657 = vmatpush1.msra.mxu0 0.0
        %5658 = vmatprep.subr.mxu0 0.0
        %5659 = vmatpush1.msra.mxu0 0.0
        %5660 = vmatprep.subr.mxu0 0.0
        %5661 = vmatpush1.msra.mxu0 0.0
        %5662 = vmatprep.subr.mxu0 0.0
        %5663 = vmatpush1.msra.mxu0 0.0
        %5664 = vmatprep.subr.mxu0 0.0
        %5665 = vmatpush1.msra.mxu0 0.0
        %5666 = vmatprep.subr.mxu0 0.0
        %5667 = vmatpush1.msra.mxu0 0.0
        %5668 = vmatprep.subr.mxu0 0.0
        %5669 = vmatpush1.msra.mxu0 0.0
        %5670 = vmatprep.subr.mxu0 0.0
        %5671 = vmatpush1.msra.mxu0 0.0
        %5672 = vmatprep.subr.mxu0 0.0
        %5673 = vmatpush1.msra.mxu0 0.0
        %5674 = vmatprep.subr.mxu0 0.0
        %5675 = vmatpush1.msra.mxu0 0.0
        %5676 = vmatprep.subr.mxu0 0.0
        %5677 = vmatpush1.msra.mxu0 0.0
        %5678 = vmatprep.subr.mxu0 0.0
        %5679 = vmatpush1.msra.mxu0 0.0
        %5680 = vmatprep.subr.mxu0 0.0
        %5681 = vmatpush1.msra.mxu0 0.0
        %5682 = vmatprep.subr.mxu0 0.0
        %5683 = vmatpush1.msra.mxu0 0.0
        %5684 = vmatprep.mubr.f32.mxu0 0.0
        %v5685 = vand.u32 %v5617, 4294901760
        %v5686 = vsub.f32 %v5617, %v5685
        %v5687 = vand.u32 %v5686, 4294901760
        %v5688 = vsub.f32 %v5686, %v5687
        %v5689 = vand.u32 %v5688, 4294901760
        %5690 = vmatmul.mubr.f32.gmra.mrb[0].mxu0 %v5689
        %v5691 = vpop.f32.mrb[0].mxu0
        %v5692 = vadd.f32 0.0, %v5691
        %v5693 = vpop.f32.mrb[0].mxu0
        %5694 = vdwg.mxu0
        %5695 = vmatprep.subr.mxu0 0.0
        %v5696 = vand.u32 %v5615, 4294901760
        %v5697 = vsub.f32 %v5615, %v5696
        %v5698 = vand.u32 %v5697, 4294901760
        %v5699 = vsub.f32 %v5697, %v5698
        %v5700 = vand.u32 %v5699, 4294901760
        %5701 = vmatpush1.msra.mxu0 %v5700
        %5702 = vmatprep.subr.mxu0 0.0
        %5703 = vmatpush1.msra.mxu0 0.0
        %5704 = vmatprep.subr.mxu0 0.0
        %5705 = vmatpush1.msra.mxu0 0.0
        %5706 = vmatprep.subr.mxu0 0.0
        %5707 = vmatpush1.msra.mxu0 0.0
        %5708 = vmatprep.subr.mxu0 0.0
        %5709 = vmatpush1.msra.mxu0 0.0
        %5710 = vmatprep.subr.mxu0 0.0
        %5711 = vmatpush1.msra.mxu0 0.0
        %5712 = vmatprep.subr.mxu0 0.0
        %5713 = vmatpush1.msra.mxu0 0.0
        %5714 = vmatprep.subr.mxu0 0.0
        %5715 = vmatpush1.msra.mxu0 0.0
        %5716 = vmatprep.subr.mxu0 0.0
        %5717 = vmatpush1.msra.mxu0 0.0
        %5718 = vmatprep.subr.mxu0 0.0
        %5719 = vmatpush1.msra.mxu0 0.0
        %5720 = vmatprep.subr.mxu0 0.0
        %5721 = vmatpush1.msra.mxu0 0.0
        %5722 = vmatprep.subr.mxu0 0.0
        %5723 = vmatpush1.msra.mxu0 0.0
        %5724 = vmatprep.subr.mxu0 0.0
        %5725 = vmatpush1.msra.mxu0 0.0
        %5726 = vmatprep.subr.mxu0 0.0
        %5727 = vmatpush1.msra.mxu0 0.0
        %5728 = vmatprep.subr.mxu0 0.0
        %5729 = vmatpush1.msra.mxu0 0.0
        %5730 = vmatprep.subr.mxu0 0.0
        %5731 = vmatpush1.msra.mxu0 0.0
        %5732 = vmatprep.subr.mxu0 0.0
        %5733 = vmatpush1.msra.mxu0 0.0
        %5734 = vmatprep.subr.mxu0 0.0
        %5735 = vmatpush1.msra.mxu0 0.0
        %5736 = vmatprep.subr.mxu0 0.0
        %5737 = vmatpush1.msra.mxu0 0.0
        %5738 = vmatprep.subr.mxu0 0.0
        %5739 = vmatpush1.msra.mxu0 0.0
        %5740 = vmatprep.subr.mxu0 0.0
        %5741 = vmatpush1.msra.mxu0 0.0
        %5742 = vmatprep.subr.mxu0 0.0
        %5743 = vmatpush1.msra.mxu0 0.0
        %5744 = vmatprep.subr.mxu0 0.0
        %5745 = vmatpush1.msra.mxu0 0.0
        %5746 = vmatprep.subr.mxu0 0.0
        %5747 = vmatpush1.msra.mxu0 0.0
        %5748 = vmatprep.subr.mxu0 0.0
        %5749 = vmatpush1.msra.mxu0 0.0
        %5750 = vmatprep.subr.mxu0 0.0
        %5751 = vmatpush1.msra.mxu0 0.0
        %5752 = vmatprep.subr.mxu0 0.0
        %5753 = vmatpush1.msra.mxu0 0.0
        %5754 = vmatprep.subr.mxu0 0.0
        %5755 = vmatpush1.msra.mxu0 0.0
        %5756 = vmatprep.subr.mxu0 0.0
        %5757 = vmatpush1.msra.mxu0 0.0
        %5758 = vmatprep.subr.mxu0 0.0
        %5759 = vmatpush1.msra.mxu0 0.0
        %5760 = vmatprep.subr.mxu0 0.0
        %5761 = vmatpush1.msra.mxu0 0.0
        %5762 = vmatprep.subr.mxu0 0.0
        %5763 = vmatpush1.msra.mxu0 0.0
        %5764 = vmatprep.mubr.f32.mxu0 0.0
        %v5765 = vand.u32 %v5617, 4294901760
        %5766 = vmatmul.mubr.f32.gmra.mrb[0].mxu0 %v5765
        %v5767 = vpop.f32.mrb[0].mxu0
        %v5768 = vadd.f32 %v5692, %v5767
        %v5769 = vpop.f32.mrb[0].mxu0
        %5770 = vdwg.mxu0
        %5771 = vmatprep.subr.mxu0 0.0
        %v5772 = vand.u32 %v5615, 4294901760
        %v5773 = vsub.f32 %v5615, %v5772
        %5774 = vmatpush1.msra.mxu0 %v5773
        %5775 = vmatprep.subr.mxu0 0.0
        %5776 = vmatpush1.msra.mxu0 0.0
        %5777 = vmatprep.subr.mxu0 0.0
        %5778 = vmatpush1.msra.mxu0 0.0
        %5779 = vmatprep.subr.mxu0 0.0
        %5780 = vmatpush1.msra.mxu0 0.0
        %5781 = vmatprep.subr.mxu0 0.0
        %5782 = vmatpush1.msra.mxu0 0.0
        %5783 = vmatprep.subr.mxu0 0.0
        %5784 = vmatpush1.msra.mxu0 0.0
        %5785 = vmatprep.subr.mxu0 0.0
        %5786 = vmatpush1.msra.mxu0 0.0
        %5787 = vmatprep.subr.mxu0 0.0
        %5788 = vmatpush1.msra.mxu0 0.0
        %5789 = vmatprep.subr.mxu0 0.0
        %5790 = vmatpush1.msra.mxu0 0.0
        %5791 = vmatprep.subr.mxu0 0.0
        %5792 = vmatpush1.msra.mxu0 0.0
        %5793 = vmatprep.subr.mxu0 0.0
        %5794 = vmatpush1.msra.mxu0 0.0
        %5795 = vmatprep.subr.mxu0 0.0
        %5796 = vmatpush1.msra.mxu0 0.0
        %5797 = vmatprep.subr.mxu0 0.0
        %5798 = vmatpush1.msra.mxu0 0.0
        %5799 = vmatprep.subr.mxu0 0.0
        %5800 = vmatpush1.msra.mxu0 0.0
        %5801 = vmatprep.subr.mxu0 0.0
        %5802 = vmatpush1.msra.mxu0 0.0
        %5803 = vmatprep.subr.mxu0 0.0
        %5804 = vmatpush1.msra.mxu0 0.0
        %5805 = vmatprep.subr.mxu0 0.0
        %5806 = vmatpush1.msra.mxu0 0.0
        %5807 = vmatprep.subr.mxu0 0.0
        %5808 = vmatpush1.msra.mxu0 0.0
        %5809 = vmatprep.subr.mxu0 0.0
        %5810 = vmatpush1.msra.mxu0 0.0
        %5811 = vmatprep.subr.mxu0 0.0
        %5812 = vmatpush1.msra.mxu0 0.0
        %5813 = vmatprep.subr.mxu0 0.0
        %5814 = vmatpush1.msra.mxu0 0.0
        %5815 = vmatprep.subr.mxu0 0.0
        %5816 = vmatpush1.msra.mxu0 0.0
        %5817 = vmatprep.subr.mxu0 0.0
        %5818 = vmatpush1.msra.mxu0 0.0
        %5819 = vmatprep.subr.mxu0 0.0
        %5820 = vmatpush1.msra.mxu0 0.0
        %5821 = vmatprep.subr.mxu0 0.0
        %5822 = vmatpush1.msra.mxu0 0.0
        %5823 = vmatprep.subr.mxu0 0.0
        %5824 = vmatpush1.msra.mxu0 0.0
        %5825 = vmatprep.subr.mxu0 0.0
        %5826 = vmatpush1.msra.mxu0 0.0
        %5827 = vmatprep.subr.mxu0 0.0
        %5828 = vmatpush1.msra.mxu0 0.0
        %5829 = vmatprep.subr.mxu0 0.0
        %5830 = vmatpush1.msra.mxu0 0.0
        %5831 = vmatprep.subr.mxu0 0.0
        %5832 = vmatpush1.msra.mxu0 0.0
        %5833 = vmatprep.subr.mxu0 0.0
        %5834 = vmatpush1.msra.mxu0 0.0
        %5835 = vmatprep.subr.mxu0 0.0
        %5836 = vmatpush1.msra.mxu0 0.0
        %5837 = vmatprep.mubr.f32.mxu0 0.0
        %v5838 = vand.u32 %v5617, 4294901760
        %v5839 = vsub.f32 %v5617, %v5838
        %5840 = vmatmul.mubr.f32.gmra.mrb[0].mxu0 %v5839
        %v5841 = vpop.f32.mrb[0].mxu0
        %v5842 = vadd.f32 %v5768, %v5841
        %v5843 = vpop.f32.mrb[0].mxu0
        %5844 = vdwg.mxu0
        %5845 = vmatprep.subr.mxu0 0.0
        %v5846 = vand.u32 %v5615, 4294901760
        %5847 = vmatpush1.msra.mxu0 %v5846
        %5848 = vmatprep.subr.mxu0 0.0
        %5849 = vmatpush1.msra.mxu0 0.0
        %5850 = vmatprep.subr.mxu0 0.0
        %5851 = vmatpush1.msra.mxu0 0.0
        %5852 = vmatprep.subr.mxu0 0.0
        %5853 = vmatpush1.msra.mxu0 0.0
        %5854 = vmatprep.subr.mxu0 0.0
        %5855 = vmatpush1.msra.mxu0 0.0
        %5856 = vmatprep.subr.mxu0 0.0
        %5857 = vmatpush1.msra.mxu0 0.0
        %5858 = vmatprep.subr.mxu0 0.0
        %5859 = vmatpush1.msra.mxu0 0.0
        %5860 = vmatprep.subr.mxu0 0.0
        %5861 = vmatpush1.msra.mxu0 0.0
        %5862 = vmatprep.subr.mxu0 0.0
        %5863 = vmatpush1.msra.mxu0 0.0
        %5864 = vmatprep.subr.mxu0 0.0
        %5865 = vmatpush1.msra.mxu0 0.0
        %5866 = vmatprep.subr.mxu0 0.0
        %5867 = vmatpush1.msra.mxu0 0.0
        %5868 = vmatprep.subr.mxu0 0.0
        %5869 = vmatpush1.msra.mxu0 0.0
        %5870 = vmatprep.subr.mxu0 0.0
        %5871 = vmatpush1.msra.mxu0 0.0
        %5872 = vmatprep.subr.mxu0 0.0
        %5873 = vmatpush1.msra.mxu0 0.0
        %5874 = vmatprep.subr.mxu0 0.0
        %5875 = vmatpush1.msra.mxu0 0.0
        %5876 = vmatprep.subr.mxu0 0.0
        %5877 = vmatpush1.msra.mxu0 0.0
        %5878 = vmatprep.subr.mxu0 0.0
        %5879 = vmatpush1.msra.mxu0 0.0
        %5880 = vmatprep.subr.mxu0 0.0
        %5881 = vmatpush1.msra.mxu0 0.0
        %5882 = vmatprep.subr.mxu0 0.0
        %5883 = vmatpush1.msra.mxu0 0.0
        %5884 = vmatprep.subr.mxu0 0.0
        %5885 = vmatpush1.msra.mxu0 0.0
        %5886 = vmatprep.subr.mxu0 0.0
        %5887 = vmatpush1.msra.mxu0 0.0
        %5888 = vmatprep.subr.mxu0 0.0
        %5889 = vmatpush1.msra.mxu0 0.0
        %5890 = vmatprep.subr.mxu0 0.0
        %5891 = vmatpush1.msra.mxu0 0.0
        %5892 = vmatprep.subr.mxu0 0.0
        %5893 = vmatpush1.msra.mxu0 0.0
        %5894 = vmatprep.subr.mxu0 0.0
        %5895 = vmatpush1.msra.mxu0 0.0
        %5896 = vmatprep.subr.mxu0 0.0
        %5897 = vmatpush1.msra.mxu0 0.0
        %5898 = vmatprep.subr.mxu0 0.0
        %5899 = vmatpush1.msra.mxu0 0.0
        %5900 = vmatprep.subr.mxu0 0.0
        %5901 = vmatpush1.msra.mxu0 0.0
        %5902 = vmatprep.subr.mxu0 0.0
        %5903 = vmatpush1.msra.mxu0 0.0
        %5904 = vmatprep.subr.mxu0 0.0
        %5905 = vmatpush1.msra.mxu0 0.0
        %5906 = vmatprep.subr.mxu0 0.0
        %5907 = vmatpush1.msra.mxu0 0.0
        %5908 = vmatprep.subr.mxu0 0.0
        %5909 = vmatpush1.msra.mxu0 0.0
        %5910 = vmatprep.mubr.f32.mxu0 0.0
        %v5911 = vand.u32 %v5617, 4294901760
        %v5912 = vsub.f32 %v5617, %v5911
        %v5913 = vand.u32 %v5912, 4294901760
        %5914 = vmatmul.mubr.f32.gmra.mrb[0].mxu0 %v5913
        %v5915 = vpop.f32.mrb[0].mxu0
        %v5916 = vadd.f32 %v5842, %v5915
        %v5917 = vpop.f32.mrb[0].mxu0
        %5918 = vdwg.mxu0
        %5919 = vmatprep.subr.mxu0 0.0
        %v5920 = vand.u32 %v5615, 4294901760
        %v5921 = vsub.f32 %v5615, %v5920
        %v5922 = vand.u32 %v5921, 4294901760
        %5923 = vmatpush1.msra.mxu0 %v5922
        %5924 = vmatprep.subr.mxu0 0.0
        %5925 = vmatpush1.msra.mxu0 0.0
        %5926 = vmatprep.subr.mxu0 0.0
        %5927 = vmatpush1.msra.mxu0 0.0
        %5928 = vmatprep.subr.mxu0 0.0
        %5929 = vmatpush1.msra.mxu0 0.0
        %5930 = vmatprep.subr.mxu0 0.0
        %5931 = vmatpush1.msra.mxu0 0.0
        %5932 = vmatprep.subr.mxu0 0.0
        %5933 = vmatpush1.msra.mxu0 0.0
        %5934 = vmatprep.subr.mxu0 0.0
        %5935 = vmatpush1.msra.mxu0 0.0
        %5936 = vmatprep.subr.mxu0 0.0
        %5937 = vmatpush1.msra.mxu0 0.0
        %5938 = vmatprep.subr.mxu0 0.0
        %5939 = vmatpush1.msra.mxu0 0.0
        %5940 = vmatprep.subr.mxu0 0.0
        %5941 = vmatpush1.msra.mxu0 0.0
        %5942 = vmatprep.subr.mxu0 0.0
        %5943 = vmatpush1.msra.mxu0 0.0
        %5944 = vmatprep.subr.mxu0 0.0
        %5945 = vmatpush1.msra.mxu0 0.0
        %5946 = vmatprep.subr.mxu0 0.0
        %5947 = vmatpush1.msra.mxu0 0.0
        %5948 = vmatprep.subr.mxu0 0.0
        %5949 = vmatpush1.msra.mxu0 0.0
        %5950 = vmatprep.subr.mxu0 0.0
        %5951 = vmatpush1.msra.mxu0 0.0
        %5952 = vmatprep.subr.mxu0 0.0
        %5953 = vmatpush1.msra.mxu0 0.0
        %5954 = vmatprep.subr.mxu0 0.0
        %5955 = vmatpush1.msra.mxu0 0.0
        %5956 = vmatprep.subr.mxu0 0.0
        %5957 = vmatpush1.msra.mxu0 0.0
        %5958 = vmatprep.subr.mxu0 0.0
        %5959 = vmatpush1.msra.mxu0 0.0
        %5960 = vmatprep.subr.mxu0 0.0
        %5961 = vmatpush1.msra.mxu0 0.0
        %5962 = vmatprep.subr.mxu0 0.0
        %5963 = vmatpush1.msra.mxu0 0.0
        %5964 = vmatprep.subr.mxu0 0.0
        %5965 = vmatpush1.msra.mxu0 0.0
        %5966 = vmatprep.subr.mxu0 0.0
        %5967 = vmatpush1.msra.mxu0 0.0
        %5968 = vmatprep.subr.mxu0 0.0
        %5969 = vmatpush1.msra.mxu0 0.0
        %5970 = vmatprep.subr.mxu0 0.0
        %5971 = vmatpush1.msra.mxu0 0.0
        %5972 = vmatprep.subr.mxu0 0.0
        %5973 = vmatpush1.msra.mxu0 0.0
        %5974 = vmatprep.subr.mxu0 0.0
        %5975 = vmatpush1.msra.mxu0 0.0
        %5976 = vmatprep.subr.mxu0 0.0
        %5977 = vmatpush1.msra.mxu0 0.0
        %5978 = vmatprep.subr.mxu0 0.0
        %5979 = vmatpush1.msra.mxu0 0.0
        %5980 = vmatprep.subr.mxu0 0.0
        %5981 = vmatpush1.msra.mxu0 0.0
        %5982 = vmatprep.subr.mxu0 0.0
        %5983 = vmatpush1.msra.mxu0 0.0
        %5984 = vmatprep.subr.mxu0 0.0
        %5985 = vmatpush1.msra.mxu0 0.0
        %5986 = vmatprep.mubr.f32.mxu0 0.0
        %v5987 = vand.u32 %v5617, 4294901760
        %5988 = vmatmul.mubr.f32.gmra.mrb[0].mxu0 %v5987
        %v5989 = vpop.f32.mrb[0].mxu0
        %v5990 = vadd.f32 %v5916, %v5989
        %v5991 = vpop.f32.mrb[0].mxu0
        %5992 = vdwg.mxu0
        %5993 = vmatprep.subr.mxu0 0.0
        %v5994 = vand.u32 %v5615, 4294901760
        %5995 = vmatpush1.msra.mxu0 %v5994
        %5996 = vmatprep.subr.mxu0 0.0
        %5997 = vmatpush1.msra.mxu0 0.0
        %5998 = vmatprep.subr.mxu0 0.0
        %5999 = vmatpush1.msra.mxu0 0.0
        %6000 = vmatprep.subr.mxu0 0.0
        %6001 = vmatpush1.msra.mxu0 0.0
        %6002 = vmatprep.subr.mxu0 0.0
        %6003 = vmatpush1.msra.mxu0 0.0
        %6004 = vmatprep.subr.mxu0 0.0
        %6005 = vmatpush1.msra.mxu0 0.0
        %6006 = vmatprep.subr.mxu0 0.0
        %6007 = vmatpush1.msra.mxu0 0.0
        %6008 = vmatprep.subr.mxu0 0.0
        %6009 = vmatpush1.msra.mxu0 0.0
        %6010 = vmatprep.subr.mxu0 0.0
        %6011 = vmatpush1.msra.mxu0 0.0
        %6012 = vmatprep.subr.mxu0 0.0
        %6013 = vmatpush1.msra.mxu0 0.0
        %6014 = vmatprep.subr.mxu0 0.0
        %6015 = vmatpush1.msra.mxu0 0.0
        %6016 = vmatprep.subr.mxu0 0.0
        %6017 = vmatpush1.msra.mxu0 0.0
        %6018 = vmatprep.subr.mxu0 0.0
        %6019 = vmatpush1.msra.mxu0 0.0
        %6020 = vmatprep.subr.mxu0 0.0
        %6021 = vmatpush1.msra.mxu0 0.0
        %6022 = vmatprep.subr.mxu0 0.0
        %6023 = vmatpush1.msra.mxu0 0.0
        %6024 = vmatprep.subr.mxu0 0.0
        %6025 = vmatpush1.msra.mxu0 0.0
        %6026 = vmatprep.subr.mxu0 0.0
        %6027 = vmatpush1.msra.mxu0 0.0
        %6028 = vmatprep.subr.mxu0 0.0
        %6029 = vmatpush1.msra.mxu0 0.0
        %6030 = vmatprep.subr.mxu0 0.0
        %6031 = vmatpush1.msra.mxu0 0.0
        %6032 = vmatprep.subr.mxu0 0.0
        %6033 = vmatpush1.msra.mxu0 0.0
        %6034 = vmatprep.subr.mxu0 0.0
        %6035 = vmatpush1.msra.mxu0 0.0
        %6036 = vmatprep.subr.mxu0 0.0
        %6037 = vmatpush1.msra.mxu0 0.0
        %6038 = vmatprep.subr.mxu0 0.0
        %6039 = vmatpush1.msra.mxu0 0.0
        %6040 = vmatprep.subr.mxu0 0.0
        %6041 = vmatpush1.msra.mxu0 0.0
        %6042 = vmatprep.subr.mxu0 0.0
        %6043 = vmatpush1.msra.mxu0 0.0
        %6044 = vmatprep.subr.mxu0 0.0
        %6045 = vmatpush1.msra.mxu0 0.0
        %6046 = vmatprep.subr.mxu0 0.0
        %6047 = vmatpush1.msra.mxu0 0.0
        %6048 = vmatprep.subr.mxu0 0.0
        %6049 = vmatpush1.msra.mxu0 0.0
        %6050 = vmatprep.subr.mxu0 0.0
        %6051 = vmatpush1.msra.mxu0 0.0
        %6052 = vmatprep.subr.mxu0 0.0
        %6053 = vmatpush1.msra.mxu0 0.0
        %6054 = vmatprep.subr.mxu0 0.0
        %6055 = vmatpush1.msra.mxu0 0.0
        %6056 = vmatprep.subr.mxu0 0.0
        %6057 = vmatpush1.msra.mxu0 0.0
        %6058 = vmatprep.mubr.f32.mxu0 0.0
        %v6059 = vand.u32 %v5617, 4294901760
        %6060 = vmatmul.mubr.f32.gmra.mrb[0].mxu0 %v6059
        %v6061 = vpop.f32.mrb[0].mxu0
        %v6062 = vadd.f32 %v5990, %v6061
        %v6063 = vpop.f32.mrb[0].mxu0
        %6064 = vdwg.mxu0
        %v6065 = vadd.f32 %v5613, %v6062
        %v6066 = vld [vmem:[%s7] sm:$0x1]
        %v6067 = vld [vmem:[%s8] sm:$0x1]
        %vm6068 = vcmask 261120
        %v6069 = vsel %vm6068, %v6065, 0.0
        %6070 = vadd.xlane.f32.xlu0 %v6069
        %v6071 = vpop.xlane.xlu0 %6070
        %v6072 = vrcp.pop 32.0
        %v6073 = vmul.f32 %v6071, %v6072
        %v6074 = vsub.f32 %v6065, %v6073
        %v6075 = vmul.f32 %v6074, %v6074
        %v6076 = vsel %vm6068, %v6075, 0.0
        %6077 = vadd.xlane.f32.xlu0 %v6076
        %v6078 = vpop.xlane.xlu0 %6077
        %v6079 = vmul.f32 %v6078, %v6072
        %v6080 = vadd.f32 %v6079, 1e-05
        %v6081 = vrsqrt.pop %v6080
        %v6082 = vmul.f32 %v6074, %v6081
        %v6084 = vlaneseq
        %v6085 = vshrl.u32 %v6084, 7
        %v6086 = vsub.s32 0, %v6085
        %v6087 = vrot.slane %v6066, %v6086
        %v6089 = vmul.f32 %v6082, %v6087
        %v6091 = vlaneseq
        %v6092 = vshrl.u32 %v6091, 7
        %v6093 = vsub.s32 0, %v6092
        %v6094 = vrot.slane %v6067, %v6093
        %v6096 = vadd.f32 %v6089, %v6094
        %v6097 = vld [vmem:[%s394] sm:$0xff]
        %v6098 = vadd.f32 %v6097, %v6096
        %6099 = vst.msk [vmem:[%s433] sm:$0xff] %vm6068, %v6098
      $region56: #{_lambda_.9} parent=47 // pred_fallthru
        _
      %s6100 = sld [smem:[#allocation6 + %s27]]
      %p6101 = scmp.lt.s32.totalorder %s26, 1
      %s6102 = scalar_select %p6101, %s26, 1
      %p6103 = scmp.lt.s32.totalorder %s6100, 0
      %s6104 = scalar_select %p6103, %s6100, 0
      %s6105 = sadd.s32 %s6104, %s6102
      %s6106 = smul.addr %s6105, 8
      %s6107 = scalar_lea.vmem %s9, %s6106
      // Predicated region
      $region57: #{_lambda_.9} parent=47 // pred_check
        %p6108 = pneg %p239
      $region58: #{_lambda_.9} parent=47 // pred_check_branch
        %6110 = sbr.rel (%p6108) target = $region60
      $region59: #{_lambda_.9} parent=47 // pred_region
        %s6111 = sld [smem:[#allocation6 + %s27]]
      $region60: #{_lambda_.9} parent=47 // pred_fallthru
        _
    $region48: #{_lambda_.9} parent=5 // pred_fallthru
      _
    %p6112 = scmp.le.s32.totalorder 2, %s17
    // Predicated region
    $region61: #{_lambda_.9} parent=5 // pred_check
      %p6113 = pneg %p6112
    $region62: #{_lambda_.9} parent=5 // pred_check_branch
      %6115 = sbr.rel (%p6113) target = $region64
    $region63: #{_lambda_.9} parent=5 // pred_region
      %s6116 = ssub.s32 %s17, 2
      // Predicated region
      $region65: #{_lambda_.9} parent=63 // pred_check
        %p6117 = pneg %p245
      $region66: #{_lambda_.9} parent=63 // pred_check_branch
        %6119 = sbr.rel (%p6117) target = $region68
      $region67: #{_lambda_.9} parent=63 // pred_region
        %s6120 = sld [smem:[#allocation6 + %s29]]
        %p6121 = scmp.lt.s32.totalorder %s28, 1
        %s6122 = scalar_select %p6121, %s28, 1
        %p6123 = scmp.lt.s32.totalorder %s6120, 0
        %s6124 = scalar_select %p6123, %s6120, 0
        %s6125 = sadd.s32 %s6124, %s6122
        %s6126 = smul.addr %s6125, 8
        %s6127 = scalar_lea.vmem %s9, %s6126
      $region68: #{_lambda_.9} parent=63 // pred_fallthru
        _
    $region64: #{_lambda_.9} parent=5 // pred_fallthru
      _
  $region6: #{_lambda_.9} parent=0 // loop_footer
    %s21 = sadd.s32 1, %s17
  $region7: #{_lambda_.9} parent=0 // loop_footer_branch
    %16 = sbr.rel target = $region3
  $region8: #{_lambda_.9} parent=0 // loop_exit
    _

</llo_original>
